<compile_context>
chip_gen: v5e
topology: v5e:2x2
jax: 0.10.0
libtpu: 0.0.40
codegen_flags: <defaults>
</compile_context>

<pallas_src>
import functools

import jax
import jax.numpy as jnp
import numpy as np
from jax.experimental import pallas as pl
from jax.experimental.pallas import tpu as pltpu


# ----------------------------------------------------------------------------- kernels


def _conv_kernel(*refs, taps, l_out, wp, w_valid, relu, pool, hn, wn,
                 out_wp, out_off0, zero_fill, has_sel):
    """Fused stride-1 conv + bias + ReLU + (maxpool) + re-pad for the next layer.

    Refs (in order):
      x_ref   (Cin, Lin)    f32  zero-padded, row-major-flattened activation
      w_ref   (T, Ct, Cin)  bf16 per-tap weight matrices
      b_ref   (Ct, 1)       f32  bias
      sel_ref (2, Wv, Wn)   f32  even/odd column selectors (only if has_sel)
      o_ref   (Ct, Lnext)   f32  next layer's flat activation (padding included)
      xb_ref  (Cin, Lin)    bf16 scratch: single bf16 cast of the input block
    """
    if has_sel:
        x_ref, w_ref, b_ref, sel_ref, o_ref, xb_ref = refs
    else:
        x_ref, w_ref, b_ref, o_ref, xb_ref = refs
        sel_ref = None

    # One bf16 cast of the whole input block; every tap slices this scratch.
    xb_ref[...] = x_ref[...].astype(jnp.bfloat16)

    # Register-accumulated shifted matmuls (no VMEM accumulator round trips).
    acc = None
    for t, off in enumerate(taps):
        xs = xb_ref[:, pl.ds(off, l_out)]                        # (Cin, Lout) bf16
        p = jax.lax.dot_general(
            w_ref[t], xs, dimension_numbers=(((1,), (0,)), ((), ())),
            preferred_element_type=jnp.float32)                  # (Ct, Lout) f32
        acc = p if acc is None else acc + p

    acc = acc + b_ref[...]                                       # f32 epilogue
    if relu:
        acc = jnp.maximum(acc, 0.0)

    if zero_fill:
        o_ref[...] = jnp.zeros(o_ref.shape, o_ref.dtype)

    ph, pw = pool if pool is not None else (1, 1)
    for ho in range(hn):
        m = acc[:, ho * ph * wp: ho * ph * wp + w_valid]
        for i in range(1, ph):
            r = acc[:, (ho * ph + i) * wp: (ho * ph + i) * wp + w_valid]
            m = jnp.maximum(m, r)
        if pw == 2:
            # Width-2 pooling: pick even / odd valid columns with tiny constant
            # 0/1 matmuls (exact; MXU is idle) and take the elementwise max.
            m = jnp.maximum(
                jax.lax.dot_general(m, sel_ref[0], (((1,), (0,)), ((), ())),
                                    preferred_element_type=jnp.float32),
                jax.lax.dot_general(m, sel_ref[1], (((1,), (0,)), ((), ())),
                                    preferred_element_type=jnp.float32))
        o_ref[:, pl.ds(out_off0 + ho * out_wp, wn)] = m.astype(o_ref.dtype)


def _bn_relu_kernel(x_ref, g_ref, b_ref, o_ref, *, eps, inv_count, w_sp, hn,
                    pool_h, out_wp, out_off0, zero_fill):
    """Training-mode BatchNorm2d + ReLU + optional (2,1) maxpool + re-pad, fused."""
    x = x_ref[...].astype(jnp.float32)                           # (N, Ct, L)
    s = jnp.sum(jnp.sum(x, axis=2, keepdims=True), axis=0, keepdims=True)
    mean = s * inv_count
    d = x - mean
    v = jnp.sum(jnp.sum(d * d, axis=2, keepdims=True), axis=0, keepdims=True)
    scale = g_ref[...] * jax.lax.rsqrt(v * inv_count + eps)      # (1, Ct, 1)
    y = jnp.maximum(d * scale + b_ref[...], 0.0)                 # BN + ReLU, f32

    if zero_fill:
        o_ref[...] = jnp.zeros(o_ref.shape, o_ref.dtype)
    for ho in range(hn):
        m = y[:, :, ho * pool_h * w_sp: ho * pool_h * w_sp + w_sp]
        for i in range(1, pool_h):
            r = y[:, :, (ho * pool_h + i) * w_sp: (ho * pool_h + i) * w_sp + w_sp]
            m = jnp.maximum(m, r)
        o_ref[:, :, pl.ds(out_off0 + ho * out_wp, w_sp)] = m.astype(o_ref.dtype)


# ----------------------------------------------------------------------------- wrappers


def conv_layer(x_flat, w, b, *, h, w_sp, pad, relu, pool, out_pad, out_tail):
    """One Conv2d(+ReLU)(+MaxPool) layer on flat (N, Cin, Lin) activations.

    Returns the NEXT layer's flat activation (zero padding / tail already
    included), shape (N, Cout, Lnext)."""
    n = x_flat.shape[0]
    kh, kw, cin, cout = w.shape
    hp, wp = h + 2 * pad, w_sp + 2 * pad
    lin = hp * wp + (kw - 1)
    h_out, w_valid = hp - kh + 1, wp - kw + 1
    l_out = h_out * wp
    assert x_flat.shape == (n, cin, lin), (x_flat.shape, (n, cin, lin))

    ph, pw = pool if pool is not None else (1, 1)
    hn, wn = h_out // ph, w_valid // pw
    out_wp = wn + 2 * out_pad
    out_off0 = out_pad * out_wp + out_pad
    lnext = (hn + 2 * out_pad) * out_wp + out_tail
    zero_fill = (out_pad > 0) or (out_tail > 0)

    # Per-tap (Cout, Cin) weights in bf16 for the MXU; bias stays f32.
    wt = jnp.transpose(w, (0, 1, 3, 2)).reshape(kh * kw, cout, cin)
    wt = wt.astype(jnp.bfloat16)
    b2 = b.reshape(cout, 1).astype(jnp.float32)
    taps = tuple(i * wp + j for i in range(kh) for j in range(kw))

    cout_t = 128 if (cout > 128 and cout % 128 == 0) else cout
    grid = (n, cout // cout_t)

    in_specs = [
        pl.BlockSpec((None, cin, lin), lambda ni, ci: (ni, 0, 0)),
        pl.BlockSpec((kh * kw, cout_t, cin), lambda ni, ci: (0, ci, 0)),
        pl.BlockSpec((cout_t, 1), lambda ni, ci: (ci, 0)),
    ]
    args = [x_flat, wt, b2]
    has_sel = pool is not None and pw == 2
    if has_sel:
        cols = np.arange(w_valid)[:, None]
        sel = np.stack([
            (cols == 2 * np.arange(wn)[None, :]).astype(np.float32),
            (cols == 2 * np.arange(wn)[None, :] + 1).astype(np.float32)])
        in_specs.append(pl.BlockSpec((2, w_valid, wn), lambda ni, ci: (0, 0, 0)))
        args.append(jnp.asarray(sel))

    return pl.pallas_call(
        functools.partial(
            _conv_kernel, taps=taps, l_out=l_out, wp=wp, w_valid=w_valid,
            relu=relu, pool=pool, hn=hn, wn=wn, out_wp=out_wp,
            out_off0=out_off0, zero_fill=zero_fill, has_sel=has_sel),
        out_shape=jax.ShapeDtypeStruct((n, cout, lnext), jnp.float32),
        grid=grid,
        in_specs=in_specs,
        out_specs=pl.BlockSpec((None, cout_t, lnext), lambda ni, ci: (ni, ci, 0)),
        scratch_shapes=[pltpu.VMEM((cin, lin), jnp.bfloat16)],
        compiler_params=pltpu.CompilerParams(
            dimension_semantics=("parallel", "parallel"),
            vmem_limit_bytes=32 * 1024 * 1024),
    )(*args)


def batchnorm_relu_layer(x_flat, gamma, beta, *, h, w_sp, pool_h, out_pad,
                         out_tail, eps=1e-5):
    """Fused BN(+ReLU)(+2x1 pool) on valid flat (N, C, H*W) activations."""
    n, c, l = x_flat.shape
    assert l == h * w_sp
    hn = h // pool_h
    out_wp = w_sp + 2 * out_pad
    out_off0 = out_pad * out_wp + out_pad
    lnext = (hn + 2 * out_pad) * out_wp + out_tail
    zero_fill = (out_pad > 0) or (out_tail > 0)
    ct = c // 2 if (c % 2 == 0 and (c // 2) % 8 == 0) else c
    g = gamma.reshape(1, c, 1).astype(jnp.float32)
    be = beta.reshape(1, c, 1).astype(jnp.float32)
    return pl.pallas_call(
        functools.partial(
            _bn_relu_kernel, eps=eps, inv_count=1.0 / float(n * h * w_sp),
            w_sp=w_sp, hn=hn, pool_h=pool_h, out_wp=out_wp, out_off0=out_off0,
            zero_fill=zero_fill),
        out_shape=jax.ShapeDtypeStruct((n, c, lnext), jnp.float32),
        grid=(c // ct,),
        in_specs=[
            pl.BlockSpec((n, ct, l), lambda ci: (0, ci, 0)),
            pl.BlockSpec((1, ct, 1), lambda ci: (0, ci, 0)),
            pl.BlockSpec((1, ct, 1), lambda ci: (0, ci, 0)),
        ],
        out_specs=pl.BlockSpec((n, ct, lnext), lambda ci: (0, ci, 0)),
        compiler_params=pltpu.CompilerParams(
            dimension_semantics=("parallel",),
            vmem_limit_bytes=32 * 1024 * 1024),
    )(x_flat, g, be)


# ----------------------------------------------------------------------------- model


def init_params(key, input_channel, output_channel):
    oc = [output_channel // 8, output_channel // 4, output_channel // 2, output_channel]
    specs = [
        # (cin, cout, k, has_bias)
        (input_channel, oc[0], 3, True),
        (oc[0], oc[1], 3, True),
        (oc[1], oc[2], 3, True),
        (oc[2], oc[2], 3, True),
        (oc[2], oc[3], 3, False),
        (oc[3], oc[3], 3, False),
        (oc[3], oc[3], 2, True),
    ]
    convs = []
    for (ci, co, k, has_b) in specs:
        key, kw_, kb_ = jax.random.split(key, 3)
        w = jax.random.normal(kw_, (k, k, ci, co), jnp.float32) / np.sqrt(ci * k * k)
        b = (0.05 * jax.random.normal(kb_, (co,), jnp.float32) if has_b
             else jnp.zeros((co,), jnp.float32))
        convs.append({"w": w, "b": b})
    bns = []
    for _ in range(2):
        key, kg, kb = jax.random.split(key, 3)
        bns.append({
            "gamma": 1.0 + 0.1 * jax.random.normal(kg, (oc[3],), jnp.float32),
            "beta": 0.1 * jax.random.normal(kb, (oc[3],), jnp.float32),
        })
    return {"convs": convs, "bns": bns}


def vgg_backbone_forward(x, params):
    """Matches VGGBackBone.forward; input/output are NCHW like PyTorch."""
    c, bn = params["convs"], params["bns"]
    n, cin, h, w = x.shape

    # Single boundary conversion: NCHW -> zero-padded flat (N, C, Hp*Wp + 2).
    xf = jnp.pad(x, ((0, 0), (0, 0), (1, 1), (1, 1)))
    xf = xf.reshape(n, cin, (h + 2) * (w + 2))
    xf = jnp.pad(xf, ((0, 0), (0, 0), (0, 2)))

    # conv1 + ReLU + pool(2,2)            (output re-padded for conv2)
    xf = conv_layer(xf, c[0]["w"], c[0]["b"], h=h, w_sp=w, pad=1, relu=True,
                    pool=(2, 2), out_pad=1, out_tail=2)
    h, w = h // 2, w // 2
    # conv2 + ReLU + pool(2,2)
    xf = conv_layer(xf, c[1]["w"], c[1]["b"], h=h, w_sp=w, pad=1, relu=True,
                    pool=(2, 2), out_pad=1, out_tail=2)
    h, w = h // 2, w // 2
    # conv3 + ReLU
    xf = conv_layer(xf, c[2]["w"], c[2]["b"], h=h, w_sp=w, pad=1, relu=True,
                    pool=None, out_pad=1, out_tail=2)
    # conv4 + ReLU + pool(2,1)
    xf = conv_layer(xf, c[3]["w"], c[3]["b"], h=h, w_sp=w, pad=1, relu=True,
                    pool=(2, 1), out_pad=1, out_tail=2)
    h = h // 2
    # conv5 (bias=False) -> valid flat for BN1
    xf = conv_layer(xf, c[4]["w"], c[4]["b"], h=h, w_sp=w, pad=1, relu=False,
                    pool=None, out_pad=0, out_tail=0)
    # BN1 + ReLU                          (output re-padded for conv6)
    xf = batchnorm_relu_layer(xf, bn[0]["gamma"], bn[0]["beta"], h=h, w_sp=w,
                              pool_h=1, out_pad=1, out_tail=2)
    # conv6 (bias=False) -> valid flat for BN2
    xf = conv_layer(xf, c[5]["w"], c[5]["b"], h=h, w_sp=w, pad=1, relu=False,
                    pool=None, out_pad=0, out_tail=0)
    # BN2 + ReLU + pool(2,1)              (output is conv7's flat input + tail)
    xf = batchnorm_relu_layer(xf, bn[1]["gamma"], bn[1]["beta"], h=h, w_sp=w,
                              pool_h=2, out_pad=0, out_tail=1)
    h = h // 2
    # conv7 (2x2, valid) + ReLU -> valid flat (N, Cout, (h-1)*(w-1))
    xf = conv_layer(xf, c[6]["w"], c[6]["b"], h=h, w_sp=w, pad=0, relu=True,
                    pool=None, out_pad=0, out_tail=0)
    return xf.reshape(n, -1, h - 1, w - 1)


# ----------------------------------------------------------------------------- reference


def reference_forward(x, params):
    """Pure-JAX (XLA conv / reduce_window) reference with the SAME precision
    policy as the kernels (bf16 matmul operands, f32 accumulation/epilogue) so
    the check isolates implementation correctness."""
    c, bn = params["convs"], params["bns"]

    def conv(x, w, b, pad, relu):
        y = jax.lax.conv_general_dilated(
            x.astype(jnp.bfloat16), w.astype(jnp.bfloat16), (1, 1),
            [(pad, pad), (pad, pad)],
            dimension_numbers=("NCHW", "HWIO", "NCHW"),
            preferred_element_type=jnp.float32)
        y = y + b.reshape(1, -1, 1, 1)
        return jnp.maximum(y, 0.0) if relu else y

    def pool(x, ph, pw):
        return jax.lax.reduce_window(
            x, jnp.array(-jnp.inf, x.dtype), jax.lax.max,
            (1, 1, ph, pw), (1, 1, ph, pw), "VALID")

    def bnrelu(x, g, be, eps=1e-5):
        m = x.mean(axis=(0, 2, 3), keepdims=True)
        v = jnp.mean((x - m) ** 2, axis=(0, 2, 3), keepdims=True)
        y = (x - m) * jax.lax.rsqrt(v + eps) * g.reshape(1, -1, 1, 1) + be.reshape(1, -1, 1, 1)
        return jnp.maximum(y, 0.0)

    x = conv(x, c[0]["w"], c[0]["b"], 1, True)
    x = pool(x, 2, 2)
    x = conv(x, c[1]["w"], c[1]["b"], 1, True)
    x = pool(x, 2, 2)
    x = conv(x, c[2]["w"], c[2]["b"], 1, True)
    x = conv(x, c[3]["w"], c[3]["b"], 1, True)
    x = pool(x, 2, 1)
    x = conv(x, c[4]["w"], c[4]["b"], 1, False)
    x = bnrelu(x, bn[0]["gamma"], bn[0]["beta"])
    x = conv(x, c[5]["w"], c[5]["b"], 1, False)
    x = bnrelu(x, bn[1]["gamma"], bn[1]["beta"])
    x = pool(x, 2, 1)
    x = conv(x, c[6]["w"], c[6]["b"], 0, True)
    return x


# ----------------------------------------------------------------------------- main

if __name__ == "__main__":
    key = jax.random.PRNGKey(0)
    key, kx, kp = jax.random.split(key, 3)

    # Small shapes consistent with the module (NCHW): H=32 survives the three
    # H-halving pools plus the final 2x2 valid conv (-> H_out = 1, W_out = 3).
    N, C_IN, H, W = 2, 4, 32, 16
    OUTPUT_CHANNEL = 32              # channel progression [4, 8, 16, 32]

    x = jax.random.normal(kx, (N, C_IN, H, W), jnp.float32)
    params = init_params(kp, C_IN, OUTPUT_CHANNEL)

    fwd = jax.jit(vgg_backbone_forward)
    out = jax.block_until_ready(fwd(x, params))
    assert out.shape == (N, OUTPUT_CHANNEL, 1, 3), out.shape

    ref = jax.block_until_ready(jax.jit(reference_forward)(x, params))
    np.testing.assert_allclose(np.asarray(out), np.asarray(ref), rtol=1e-2, atol=1e-2)

    print("KERNEL_OK")
</pallas_src>

<mosaic_0001>
module attributes {stable_mosaic.version = 11 : i64} {
  func.func @_conv_kernel(%arg0: i32, %arg1: i32, %arg2: memref<1x4x182xf32, #tpu.memory_space<vmem>>, %arg3: memref<9x8x4xbf16, #tpu.memory_space<vmem>>, %arg4: memref<8x1xf32, #tpu.memory_space<vmem>>, %arg5: memref<2x8x4xf32, #tpu.memory_space<vmem>>, %arg6: memref<1x8x62xf32, #tpu.memory_space<vmem>>, %arg7: memref<4x182xbf16, #tpu.memory_space<vmem>>) attributes {dimension_semantics = [#tpu.dimension_semantics<parallel>, #tpu.dimension_semantics<parallel>], iteration_bounds = array<i64: 2, 1>, scalar_prefetch = 0 : i64, scratch_operands = 1 : i64, tpu.core_type = #tpu.core_type<tc>, window_params = [{transform_indices = @transform_0, window_bounds = array<i64: 1, 4, 182>}, {transform_indices = @transform_1, window_bounds = array<i64: 9, 8, 4>}, {transform_indices = @transform_2, window_bounds = array<i64: 8, 1>}, {pipeline_mode = #tpu.pipeline_mode<synchronous>, transform_indices = @transform_3, window_bounds = array<i64: 2, 8, 4>}, {transform_indices = @transform_4, window_bounds = array<i64: 1, 8, 62>}]} {
    %c0 = arith.constant 0 : index
    %c0_0 = arith.constant 0 : index
    %c0_1 = arith.constant 0 : index
    %0 = vector.load %arg2[%c0, %c0_0, %c0_1] : memref<1x4x182xf32, #tpu.memory_space<vmem>>, vector<1x4x182xf32>
    %1 = vector.shape_cast %0 : vector<1x4x182xf32> to vector<4x182xf32>
    %2 = arith.truncf %1 : vector<4x182xf32> to vector<4x182xbf16>
    %c0_2 = arith.constant 0 : index
    %c0_3 = arith.constant 0 : index
    %3 = vector.load %arg7[%c0_2, %c0_3] : memref<4x182xbf16, #tpu.memory_space<vmem>>, vector<4x182xbf16>
    tpu.vector_store %arg7[%c0_2, %c0_3], %2 {strides = array<i32>} : memref<4x182xbf16, #tpu.memory_space<vmem>>, vector<4x182xbf16>,
    %c0_4 = arith.constant 0 : index
    %c0_5 = arith.constant 0 : index
    %4 = vector.load %arg7[%c0_4, %c0_5] : memref<4x182xbf16, #tpu.memory_space<vmem>>, vector<4x160xbf16>
    %c0_6 = arith.constant 0 : index
    %c0_7 = arith.constant 0 : index
    %c0_8 = arith.constant 0 : index
    %5 = vector.load %arg3[%c0_6, %c0_7, %c0_8] : memref<9x8x4xbf16, #tpu.memory_space<vmem>>, vector<1x8x4xbf16>
    %6 = vector.shape_cast %5 : vector<1x8x4xbf16> to vector<8x4xbf16>
    %cst = arith.constant dense<0.000000e+00> : vector<8x160xf32>
    %7 = tpu.matmul %6, %4, %cst {dimension_numbers = #tpu.dot_dimension_numbers<[1], [0], [0], [1], [0, 0, 1, 1], [], []>} : vector<8x4xbf16>, vector<4x160xbf16>, vector<8x160xf32> -> vector<8x160xf32>
    %c0_9 = arith.constant 0 : index
    %c1 = arith.constant 1 : index
    %8 = vector.load %arg7[%c0_9, %c1] : memref<4x182xbf16, #tpu.memory_space<vmem>>, vector<4x160xbf16>
    %c1_10 = arith.constant 1 : index
    %c0_11 = arith.constant 0 : index
    %c0_12 = arith.constant 0 : index
    %9 = vector.load %arg3[%c1_10, %c0_11, %c0_12] : memref<9x8x4xbf16, #tpu.memory_space<vmem>>, vector<1x8x4xbf16>
    %10 = vector.shape_cast %9 : vector<1x8x4xbf16> to vector<8x4xbf16>
    %cst_13 = arith.constant dense<0.000000e+00> : vector<8x160xf32>
    %11 = tpu.matmul %10, %8, %cst_13 {dimension_numbers = #tpu.dot_dimension_numbers<[1], [0], [0], [1], [0, 0, 1, 1], [], []>} : vector<8x4xbf16>, vector<4x160xbf16>, vector<8x160xf32> -> vector<8x160xf32>
    %12 = arith.addf %7, %11 : vector<8x160xf32>
    %c0_14 = arith.constant 0 : index
    %c2 = arith.constant 2 : index
    %13 = vector.load %arg7[%c0_14, %c2] : memref<4x182xbf16, #tpu.memory_space<vmem>>, vector<4x160xbf16>
    %c2_15 = arith.constant 2 : index
    %c0_16 = arith.constant 0 : index
    %c0_17 = arith.constant 0 : index
    %14 = vector.load %arg3[%c2_15, %c0_16, %c0_17] : memref<9x8x4xbf16, #tpu.memory_space<vmem>>, vector<1x8x4xbf16>
    %15 = vector.shape_cast %14 : vector<1x8x4xbf16> to vector<8x4xbf16>
    %cst_18 = arith.constant dense<0.000000e+00> : vector<8x160xf32>
    %16 = tpu.matmul %15, %13, %cst_18 {dimension_numbers = #tpu.dot_dimension_numbers<[1], [0], [0], [1], [0, 0, 1, 1], [], []>} : vector<8x4xbf16>, vector<4x160xbf16>, vector<8x160xf32> -> vector<8x160xf32>
    %17 = arith.addf %12, %16 : vector<8x160xf32>
    %c0_19 = arith.constant 0 : index
    %c10 = arith.constant 10 : index
    %18 = vector.load %arg7[%c0_19, %c10] : memref<4x182xbf16, #tpu.memory_space<vmem>>, vector<4x160xbf16>
    %c3 = arith.constant 3 : index
    %c0_20 = arith.constant 0 : index
    %c0_21 = arith.constant 0 : index
    %19 = vector.load %arg3[%c3, %c0_20, %c0_21] : memref<9x8x4xbf16, #tpu.memory_space<vmem>>, vector<1x8x4xbf16>
    %20 = vector.shape_cast %19 : vector<1x8x4xbf16> to vector<8x4xbf16>
    %cst_22 = arith.constant dense<0.000000e+00> : vector<8x160xf32>
    %21 = tpu.matmul %20, %18, %cst_22 {dimension_numbers = #tpu.dot_dimension_numbers<[1], [0], [0], [1], [0, 0, 1, 1], [], []>} : vector<8x4xbf16>, vector<4x160xbf16>, vector<8x160xf32> -> vector<8x160xf32>
    %22 = arith.addf %17, %21 : vector<8x160xf32>
    %c0_23 = arith.constant 0 : index
    %c11 = arith.constant 11 : index
    %23 = vector.load %arg7[%c0_23, %c11] : memref<4x182xbf16, #tpu.memory_space<vmem>>, vector<4x160xbf16>
    %c4 = arith.constant 4 : index
    %c0_24 = arith.constant 0 : index
    %c0_25 = arith.constant 0 : index
    %24 = vector.load %arg3[%c4, %c0_24, %c0_25] : memref<9x8x4xbf16, #tpu.memory_space<vmem>>, vector<1x8x4xbf16>
    %25 = vector.shape_cast %24 : vector<1x8x4xbf16> to vector<8x4xbf16>
    %cst_26 = arith.constant dense<0.000000e+00> : vector<8x160xf32>
    %26 = tpu.matmul %25, %23, %cst_26 {dimension_numbers = #tpu.dot_dimension_numbers<[1], [0], [0], [1], [0, 0, 1, 1], [], []>} : vector<8x4xbf16>, vector<4x160xbf16>, vector<8x160xf32> -> vector<8x160xf32>
    %27 = arith.addf %22, %26 : vector<8x160xf32>
    %c0_27 = arith.constant 0 : index
    %c12 = arith.constant 12 : index
    %28 = vector.load %arg7[%c0_27, %c12] : memref<4x182xbf16, #tpu.memory_space<vmem>>, vector<4x160xbf16>
    %c5 = arith.constant 5 : index
    %c0_28 = arith.constant 0 : index
    %c0_29 = arith.constant 0 : index
    %29 = vector.load %arg3[%c5, %c0_28, %c0_29] : memref<9x8x4xbf16, #tpu.memory_space<vmem>>, vector<1x8x4xbf16>
    %30 = vector.shape_cast %29 : vector<1x8x4xbf16> to vector<8x4xbf16>
    %cst_30 = arith.constant dense<0.000000e+00> : vector<8x160xf32>
    %31 = tpu.matmul %30, %28, %cst_30 {dimension_numbers = #tpu.dot_dimension_numbers<[1], [0], [0], [1], [0, 0, 1, 1], [], []>} : vector<8x4xbf16>, vector<4x160xbf16>, vector<8x160xf32> -> vector<8x160xf32>
    %32 = arith.addf %27, %31 : vector<8x160xf32>
    %c0_31 = arith.constant 0 : index
    %c20 = arith.constant 20 : index
    %33 = vector.load %arg7[%c0_31, %c20] : memref<4x182xbf16, #tpu.memory_space<vmem>>, vector<4x160xbf16>
    %c6 = arith.constant 6 : index
    %c0_32 = arith.constant 0 : index
    %c0_33 = arith.constant 0 : index
    %34 = vector.load %arg3[%c6, %c0_32, %c0_33] : memref<9x8x4xbf16, #tpu.memory_space<vmem>>, vector<1x8x4xbf16>
    %35 = vector.shape_cast %34 : vector<1x8x4xbf16> to vector<8x4xbf16>
    %cst_34 = arith.constant dense<0.000000e+00> : vector<8x160xf32>
    %36 = tpu.matmul %35, %33, %cst_34 {dimension_numbers = #tpu.dot_dimension_numbers<[1], [0], [0], [1], [0, 0, 1, 1], [], []>} : vector<8x4xbf16>, vector<4x160xbf16>, vector<8x160xf32> -> vector<8x160xf32>
    %37 = arith.addf %32, %36 : vector<8x160xf32>
    %c0_35 = arith.constant 0 : index
    %c21 = arith.constant 21 : index
    %38 = vector.load %arg7[%c0_35, %c21] : memref<4x182xbf16, #tpu.memory_space<vmem>>, vector<4x160xbf16>
    %c7 = arith.constant 7 : index
    %c0_36 = arith.constant 0 : index
    %c0_37 = arith.constant 0 : index
    %39 = vector.load %arg3[%c7, %c0_36, %c0_37] : memref<9x8x4xbf16, #tpu.memory_space<vmem>>, vector<1x8x4xbf16>
    %40 = vector.shape_cast %39 : vector<1x8x4xbf16> to vector<8x4xbf16>
    %cst_38 = arith.constant dense<0.000000e+00> : vector<8x160xf32>
    %41 = tpu.matmul %40, %38, %cst_38 {dimension_numbers = #tpu.dot_dimension_numbers<[1], [0], [0], [1], [0, 0, 1, 1], [], []>} : vector<8x4xbf16>, vector<4x160xbf16>, vector<8x160xf32> -> vector<8x160xf32>
    %42 = arith.addf %37, %41 : vector<8x160xf32>
    %c0_39 = arith.constant 0 : index
    %c22 = arith.constant 22 : index
    %43 = vector.load %arg7[%c0_39, %c22] : memref<4x182xbf16, #tpu.memory_space<vmem>>, vector<4x160xbf16>
    %c8 = arith.constant 8 : index
    %c0_40 = arith.constant 0 : index
    %c0_41 = arith.constant 0 : index
    %44 = vector.load %arg3[%c8, %c0_40, %c0_41] : memref<9x8x4xbf16, #tpu.memory_space<vmem>>, vector<1x8x4xbf16>
    %45 = vector.shape_cast %44 : vector<1x8x4xbf16> to vector<8x4xbf16>
    %cst_42 = arith.constant dense<0.000000e+00> : vector<8x160xf32>
    %46 = tpu.matmul %45, %43, %cst_42 {dimension_numbers = #tpu.dot_dimension_numbers<[1], [0], [0], [1], [0, 0, 1, 1], [], []>} : vector<8x4xbf16>, vector<4x160xbf16>, vector<8x160xf32> -> vector<8x160xf32>
    %47 = arith.addf %42, %46 : vector<8x160xf32>
    %c0_43 = arith.constant 0 : index
    %c0_44 = arith.constant 0 : index
    %48 = vector.load %arg4[%c0_43, %c0_44] : memref<8x1xf32, #tpu.memory_space<vmem>>, vector<8x1xf32>
    %49 = vector.broadcast %48 : vector<8x1xf32> to vector<8x160xf32>
    %50 = arith.addf %47, %49 : vector<8x160xf32>
    %cst_45 = arith.constant 0.000000e+00 : f32
    %51 = vector.broadcast %cst_45 : f32 to vector<8x160xf32>
    %52 = arith.maximumf %50, %51 : vector<8x160xf32>
    %cst_46 = arith.constant 0.000000e+00 : f32
    %53 = vector.broadcast %cst_46 : f32 to vector<8x62xf32>
    %c0_47 = arith.constant 0 : index
    %c0_48 = arith.constant 0 : index
    %c0_49 = arith.constant 0 : index
    %54 = vector.load %arg6[%c0_47, %c0_48, %c0_49] : memref<1x8x62xf32, #tpu.memory_space<vmem>>, vector<1x8x62xf32>
    %55 = vector.shape_cast %54 : vector<1x8x62xf32> to vector<8x62xf32>
    %56 = vector.shape_cast %53 : vector<8x62xf32> to vector<1x8x62xf32>
    tpu.vector_store %arg6[%c0_47, %c0_48, %c0_49], %56 {strides = array<i32>} : memref<1x8x62xf32, #tpu.memory_space<vmem>>, vector<1x8x62xf32>,
    %57 = vector.extract_strided_slice %52 {offsets = [0, 0], sizes = [8, 8], strides = [1, 1]} : vector<8x160xf32> to vector<8x8xf32>
    %58 = vector.extract_strided_slice %52 {offsets = [0, 10], sizes = [8, 8], strides = [1, 1]} : vector<8x160xf32> to vector<8x8xf32>
    %59 = arith.maximumf %57, %58 : vector<8x8xf32>
    %c0_50 = arith.constant 0 : index
    %c0_51 = arith.constant 0 : index
    %c0_52 = arith.constant 0 : index
    %60 = vector.load %arg5[%c0_50, %c0_51, %c0_52] : memref<2x8x4xf32, #tpu.memory_space<vmem>>, vector<1x8x4xf32>
    %61 = vector.shape_cast %60 : vector<1x8x4xf32> to vector<8x4xf32>
    %cst_53 = arith.constant dense<0.000000e+00> : vector<8x4xf32>
    %62 = tpu.matmul %59, %61, %cst_53 {dimension_numbers = #tpu.dot_dimension_numbers<[1], [0], [0], [1], [0, 0, 1, 1], [], []>} : vector<8x8xf32>, vector<8x4xf32>, vector<8x4xf32> -> vector<8x4xf32>
    %c1_54 = arith.constant 1 : index
    %c0_55 = arith.constant 0 : index
    %c0_56 = arith.constant 0 : index
    %63 = vector.load %arg5[%c1_54, %c0_55, %c0_56] : memref<2x8x4xf32, #tpu.memory_space<vmem>>, vector<1x8x4xf32>
    %64 = vector.shape_cast %63 : vector<1x8x4xf32> to vector<8x4xf32>
    %cst_57 = arith.constant dense<0.000000e+00> : vector<8x4xf32>
    %65 = tpu.matmul %59, %64, %cst_57 {dimension_numbers = #tpu.dot_dimension_numbers<[1], [0], [0], [1], [0, 0, 1, 1], [], []>} : vector<8x8xf32>, vector<8x4xf32>, vector<8x4xf32> -> vector<8x4xf32>
    %66 = arith.maximumf %62, %65 : vector<8x4xf32>
    %c0_58 = arith.constant 0 : index
    %c0_59 = arith.constant 0 : index
    %c7_60 = arith.constant 7 : index
    %67 = vector.load %arg6[%c0_58, %c0_59, %c7_60] : memref<1x8x62xf32, #tpu.memory_space<vmem>>, vector<1x8x4xf32>
    %68 = vector.shape_cast %67 : vector<1x8x4xf32> to vector<8x4xf32>
    %69 = vector.shape_cast %66 : vector<8x4xf32> to vector<1x8x4xf32>
    tpu.vector_store %arg6[%c0_58, %c0_59, %c7_60], %69 {strides = array<i32>} : memref<1x8x62xf32, #tpu.memory_space<vmem>>, vector<1x8x4xf32>,
    %70 = vector.extract_strided_slice %52 {offsets = [0, 20], sizes = [8, 8], strides = [1, 1]} : vector<8x160xf32> to vector<8x8xf32>
    %71 = vector.extract_strided_slice %52 {offsets = [0, 30], sizes = [8, 8], strides = [1, 1]} : vector<8x160xf32> to vector<8x8xf32>
    %72 = arith.maximumf %70, %71 : vector<8x8xf32>
    %c0_61 = arith.constant 0 : index
    %c0_62 = arith.constant 0 : index
    %c0_63 = arith.constant 0 : index
    %73 = vector.load %arg5[%c0_61, %c0_62, %c0_63] : memref<2x8x4xf32, #tpu.memory_space<vmem>>, vector<1x8x4xf32>
    %74 = vector.shape_cast %73 : vector<1x8x4xf32> to vector<8x4xf32>
    %cst_64 = arith.constant dense<0.000000e+00> : vector<8x4xf32>
    %75 = tpu.matmul %72, %74, %cst_64 {dimension_numbers = #tpu.dot_dimension_numbers<[1], [0], [0], [1], [0, 0, 1, 1], [], []>} : vector<8x8xf32>, vector<8x4xf32>, vector<8x4xf32> -> vector<8x4xf32>
    %c1_65 = arith.constant 1 : index
    %c0_66 = arith.constant 0 : index
    %c0_67 = arith.constant 0 : index
    %76 = vector.load %arg5[%c1_65, %c0_66, %c0_67] : memref<2x8x4xf32, #tpu.memory_space<vmem>>, vector<1x8x4xf32>
    %77 = vector.shape_cast %76 : vector<1x8x4xf32> to vector<8x4xf32>
    %cst_68 = arith.constant dense<0.000000e+00> : vector<8x4xf32>
    %78 = tpu.matmul %72, %77, %cst_68 {dimension_numbers = #tpu.dot_dimension_numbers<[1], [0], [0], [1], [0, 0, 1, 1], [], []>} : vector<8x8xf32>, vector<8x4xf32>, vector<8x4xf32> -> vector<8x4xf32>
    %79 = arith.maximumf %75, %78 : vector<8x4xf32>
    %c0_69 = arith.constant 0 : index
    %c0_70 = arith.constant 0 : index
    %c13 = arith.constant 13 : index
    %80 = vector.load %arg6[%c0_69, %c0_70, %c13] : memref<1x8x62xf32, #tpu.memory_space<vmem>>, vector<1x8x4xf32>
    %81 = vector.shape_cast %80 : vector<1x8x4xf32> to vector<8x4xf32>
    %82 = vector.shape_cast %79 : vector<8x4xf32> to vector<1x8x4xf32>
    tpu.vector_store %arg6[%c0_69, %c0_70, %c13], %82 {strides = array<i32>} : memref<1x8x62xf32, #tpu.memory_space<vmem>>, vector<1x8x4xf32>,
    %83 = vector.extract_strided_slice %52 {offsets = [0, 40], sizes = [8, 8], strides = [1, 1]} : vector<8x160xf32> to vector<8x8xf32>
    %84 = vector.extract_strided_slice %52 {offsets = [0, 50], sizes = [8, 8], strides = [1, 1]} : vector<8x160xf32> to vector<8x8xf32>
    %85 = arith.maximumf %83, %84 : vector<8x8xf32>
    %c0_71 = arith.constant 0 : index
    %c0_72 = arith.constant 0 : index
    %c0_73 = arith.constant 0 : index
    %86 = vector.load %arg5[%c0_71, %c0_72, %c0_73] : memref<2x8x4xf32, #tpu.memory_space<vmem>>, vector<1x8x4xf32>
    %87 = vector.shape_cast %86 : vector<1x8x4xf32> to vector<8x4xf32>
    %cst_74 = arith.constant dense<0.000000e+00> : vector<8x4xf32>
    %88 = tpu.matmul %85, %87, %cst_74 {dimension_numbers = #tpu.dot_dimension_numbers<[1], [0], [0], [1], [0, 0, 1, 1], [], []>} : vector<8x8xf32>, vector<8x4xf32>, vector<8x4xf32> -> vector<8x4xf32>
    %c1_75 = arith.constant 1 : index
    %c0_76 = arith.constant 0 : index
    %c0_77 = arith.constant 0 : index
    %89 = vector.load %arg5[%c1_75, %c0_76, %c0_77] : memref<2x8x4xf32, #tpu.memory_space<vmem>>, vector<1x8x4xf32>
    %90 = vector.shape_cast %89 : vector<1x8x4xf32> to vector<8x4xf32>
    %cst_78 = arith.constant dense<0.000000e+00> : vector<8x4xf32>
    %91 = tpu.matmul %85, %90, %cst_78 {dimension_numbers = #tpu.dot_dimension_numbers<[1], [0], [0], [1], [0, 0, 1, 1], [], []>} : vector<8x8xf32>, vector<8x4xf32>, vector<8x4xf32> -> vector<8x4xf32>
    %92 = arith.maximumf %88, %91 : vector<8x4xf32>
    %c0_79 = arith.constant 0 : index
    %c0_80 = arith.constant 0 : index
    %c19 = arith.constant 19 : index
    %93 = vector.load %arg6[%c0_79, %c0_80, %c19] : memref<1x8x62xf32, #tpu.memory_space<vmem>>, vector<1x8x4xf32>
    %94 = vector.shape_cast %93 : vector<1x8x4xf32> to vector<8x4xf32>
    %95 = vector.shape_cast %92 : vector<8x4xf32> to vector<1x8x4xf32>
    tpu.vector_store %arg6[%c0_79, %c0_80, %c19], %95 {strides = array<i32>} : memref<1x8x62xf32, #tpu.memory_space<vmem>>, vector<1x8x4xf32>,
    %96 = vector.extract_strided_slice %52 {offsets = [0, 60], sizes = [8, 8], strides = [1, 1]} : vector<8x160xf32> to vector<8x8xf32>
    %97 = vector.extract_strided_slice %52 {offsets = [0, 70], sizes = [8, 8], strides = [1, 1]} : vector<8x160xf32> to vector<8x8xf32>
    %98 = arith.maximumf %96, %97 : vector<8x8xf32>
    %c0_81 = arith.constant 0 : index
    %c0_82 = arith.constant 0 : index
    %c0_83 = arith.constant 0 : index
    %99 = vector.load %arg5[%c0_81, %c0_82, %c0_83] : memref<2x8x4xf32, #tpu.memory_space<vmem>>, vector<1x8x4xf32>
    %100 = vector.shape_cast %99 : vector<1x8x4xf32> to vector<8x4xf32>
    %cst_84 = arith.constant dense<0.000000e+00> : vector<8x4xf32>
    %101 = tpu.matmul %98, %100, %cst_84 {dimension_numbers = #tpu.dot_dimension_numbers<[1], [0], [0], [1], [0, 0, 1, 1], [], []>} : vector<8x8xf32>, vector<8x4xf32>, vector<8x4xf32> -> vector<8x4xf32>
    %c1_85 = arith.constant 1 : index
    %c0_86 = arith.constant 0 : index
    %c0_87 = arith.constant 0 : index
    %102 = vector.load %arg5[%c1_85, %c0_86, %c0_87] : memref<2x8x4xf32, #tpu.memory_space<vmem>>, vector<1x8x4xf32>
    %103 = vector.shape_cast %102 : vector<1x8x4xf32> to vector<8x4xf32>
    %cst_88 = arith.constant dense<0.000000e+00> : vector<8x4xf32>
    %104 = tpu.matmul %98, %103, %cst_88 {dimension_numbers = #tpu.dot_dimension_numbers<[1], [0], [0], [1], [0, 0, 1, 1], [], []>} : vector<8x8xf32>, vector<8x4xf32>, vector<8x4xf32> -> vector<8x4xf32>
    %105 = arith.maximumf %101, %104 : vector<8x4xf32>
    %c0_89 = arith.constant 0 : index
    %c0_90 = arith.constant 0 : index
    %c25 = arith.constant 25 : index
    %106 = vector.load %arg6[%c0_89, %c0_90, %c25] : memref<1x8x62xf32, #tpu.memory_space<vmem>>, vector<1x8x4xf32>
    %107 = vector.shape_cast %106 : vector<1x8x4xf32> to vector<8x4xf32>
    %108 = vector.shape_cast %105 : vector<8x4xf32> to vector<1x8x4xf32>
    tpu.vector_store %arg6[%c0_89, %c0_90, %c25], %108 {strides = array<i32>} : memref<1x8x62xf32, #tpu.memory_space<vmem>>, vector<1x8x4xf32>,
    %109 = vector.extract_strided_slice %52 {offsets = [0, 80], sizes = [8, 8], strides = [1, 1]} : vector<8x160xf32> to vector<8x8xf32>
    %110 = vector.extract_strided_slice %52 {offsets = [0, 90], sizes = [8, 8], strides = [1, 1]} : vector<8x160xf32> to vector<8x8xf32>
    %111 = arith.maximumf %109, %110 : vector<8x8xf32>
    %c0_91 = arith.constant 0 : index
    %c0_92 = arith.constant 0 : index
    %c0_93 = arith.constant 0 : index
    %112 = vector.load %arg5[%c0_91, %c0_92, %c0_93] : memref<2x8x4xf32, #tpu.memory_space<vmem>>, vector<1x8x4xf32>
    %113 = vector.shape_cast %112 : vector<1x8x4xf32> to vector<8x4xf32>
    %cst_94 = arith.constant dense<0.000000e+00> : vector<8x4xf32>
    %114 = tpu.matmul %111, %113, %cst_94 {dimension_numbers = #tpu.dot_dimension_numbers<[1], [0], [0], [1], [0, 0, 1, 1], [], []>} : vector<8x8xf32>, vector<8x4xf32>, vector<8x4xf32> -> vector<8x4xf32>
    %c1_95 = arith.constant 1 : index
    %c0_96 = arith.constant 0 : index
    %c0_97 = arith.constant 0 : index
    %115 = vector.load %arg5[%c1_95, %c0_96, %c0_97] : memref<2x8x4xf32, #tpu.memory_space<vmem>>, vector<1x8x4xf32>
    %116 = vector.shape_cast %115 : vector<1x8x4xf32> to vector<8x4xf32>
    %cst_98 = arith.constant dense<0.000000e+00> : vector<8x4xf32>
    %117 = tpu.matmul %111, %116, %cst_98 {dimension_numbers = #tpu.dot_dimension_numbers<[1], [0], [0], [1], [0, 0, 1, 1], [], []>} : vector<8x8xf32>, vector<8x4xf32>, vector<8x4xf32> -> vector<8x4xf32>
    %118 = arith.maximumf %114, %117 : vector<8x4xf32>
    %c0_99 = arith.constant 0 : index
    %c0_100 = arith.constant 0 : index
    %c31 = arith.constant 31 : index
    %119 = vector.load %arg6[%c0_99, %c0_100, %c31] : memref<1x8x62xf32, #tpu.memory_space<vmem>>, vector<1x8x4xf32>
    %120 = vector.shape_cast %119 : vector<1x8x4xf32> to vector<8x4xf32>
    %121 = vector.shape_cast %118 : vector<8x4xf32> to vector<1x8x4xf32>
    tpu.vector_store %arg6[%c0_99, %c0_100, %c31], %121 {strides = array<i32>} : memref<1x8x62xf32, #tpu.memory_space<vmem>>, vector<1x8x4xf32>,
    %122 = vector.extract_strided_slice %52 {offsets = [0, 100], sizes = [8, 8], strides = [1, 1]} : vector<8x160xf32> to vector<8x8xf32>
    %123 = vector.extract_strided_slice %52 {offsets = [0, 110], sizes = [8, 8], strides = [1, 1]} : vector<8x160xf32> to vector<8x8xf32>
    %124 = arith.maximumf %122, %123 : vector<8x8xf32>
    %c0_101 = arith.constant 0 : index
    %c0_102 = arith.constant 0 : index
    %c0_103 = arith.constant 0 : index
    %125 = vector.load %arg5[%c0_101, %c0_102, %c0_103] : memref<2x8x4xf32, #tpu.memory_space<vmem>>, vector<1x8x4xf32>
    %126 = vector.shape_cast %125 : vector<1x8x4xf32> to vector<8x4xf32>
    %cst_104 = arith.constant dense<0.000000e+00> : vector<8x4xf32>
    %127 = tpu.matmul %124, %126, %cst_104 {dimension_numbers = #tpu.dot_dimension_numbers<[1], [0], [0], [1], [0, 0, 1, 1], [], []>} : vector<8x8xf32>, vector<8x4xf32>, vector<8x4xf32> -> vector<8x4xf32>
    %c1_105 = arith.constant 1 : index
    %c0_106 = arith.constant 0 : index
    %c0_107 = arith.constant 0 : index
    %128 = vector.load %arg5[%c1_105, %c0_106, %c0_107] : memref<2x8x4xf32, #tpu.memory_space<vmem>>, vector<1x8x4xf32>
    %129 = vector.shape_cast %128 : vector<1x8x4xf32> to vector<8x4xf32>
    %cst_108 = arith.constant dense<0.000000e+00> : vector<8x4xf32>
    %130 = tpu.matmul %124, %129, %cst_108 {dimension_numbers = #tpu.dot_dimension_numbers<[1], [0], [0], [1], [0, 0, 1, 1], [], []>} : vector<8x8xf32>, vector<8x4xf32>, vector<8x4xf32> -> vector<8x4xf32>
    %131 = arith.maximumf %127, %130 : vector<8x4xf32>
    %c0_109 = arith.constant 0 : index
    %c0_110 = arith.constant 0 : index
    %c37 = arith.constant 37 : index
    %132 = vector.load %arg6[%c0_109, %c0_110, %c37] : memref<1x8x62xf32, #tpu.memory_space<vmem>>, vector<1x8x4xf32>
    %133 = vector.shape_cast %132 : vector<1x8x4xf32> to vector<8x4xf32>
    %134 = vector.shape_cast %131 : vector<8x4xf32> to vector<1x8x4xf32>
    tpu.vector_store %arg6[%c0_109, %c0_110, %c37], %134 {strides = array<i32>} : memref<1x8x62xf32, #tpu.memory_space<vmem>>, vector<1x8x4xf32>,
    %135 = vector.extract_strided_slice %52 {offsets = [0, 120], sizes = [8, 8], strides = [1, 1]} : vector<8x160xf32> to vector<8x8xf32>
    %136 = vector.extract_strided_slice %52 {offsets = [0, 130], sizes = [8, 8], strides = [1, 1]} : vector<8x160xf32> to vector<8x8xf32>
    %137 = arith.maximumf %135, %136 : vector<8x8xf32>
    %c0_111 = arith.constant 0 : index
    %c0_112 = arith.constant 0 : index
    %c0_113 = arith.constant 0 : index
    %138 = vector.load %arg5[%c0_111, %c0_112, %c0_113] : memref<2x8x4xf32, #tpu.memory_space<vmem>>, vector<1x8x4xf32>
    %139 = vector.shape_cast %138 : vector<1x8x4xf32> to vector<8x4xf32>
    %cst_114 = arith.constant dense<0.000000e+00> : vector<8x4xf32>
    %140 = tpu.matmul %137, %139, %cst_114 {dimension_numbers = #tpu.dot_dimension_numbers<[1], [0], [0], [1], [0, 0, 1, 1], [], []>} : vector<8x8xf32>, vector<8x4xf32>, vector<8x4xf32> -> vector<8x4xf32>
    %c1_115 = arith.constant 1 : index
    %c0_116 = arith.constant 0 : index
    %c0_117 = arith.constant 0 : index
    %141 = vector.load %arg5[%c1_115, %c0_116, %c0_117] : memref<2x8x4xf32, #tpu.memory_space<vmem>>, vector<1x8x4xf32>
    %142 = vector.shape_cast %141 : vector<1x8x4xf32> to vector<8x4xf32>
    %cst_118 = arith.constant dense<0.000000e+00> : vector<8x4xf32>
    %143 = tpu.matmul %137, %142, %cst_118 {dimension_numbers = #tpu.dot_dimension_numbers<[1], [0], [0], [1], [0, 0, 1, 1], [], []>} : vector<8x8xf32>, vector<8x4xf32>, vector<8x4xf32> -> vector<8x4xf32>
    %144 = arith.maximumf %140, %143 : vector<8x4xf32>
    %c0_119 = arith.constant 0 : index
    %c0_120 = arith.constant 0 : index
    %c43 = arith.constant 43 : index
    %145 = vector.load %arg6[%c0_119, %c0_120, %c43] : memref<1x8x62xf32, #tpu.memory_space<vmem>>, vector<1x8x4xf32>
    %146 = vector.shape_cast %145 : vector<1x8x4xf32> to vector<8x4xf32>
    %147 = vector.shape_cast %144 : vector<8x4xf32> to vector<1x8x4xf32>
    tpu.vector_store %arg6[%c0_119, %c0_120, %c43], %147 {strides = array<i32>} : memref<1x8x62xf32, #tpu.memory_space<vmem>>, vector<1x8x4xf32>,
    %148 = vector.extract_strided_slice %52 {offsets = [0, 140], sizes = [8, 8], strides = [1, 1]} : vector<8x160xf32> to vector<8x8xf32>
    %149 = vector.extract_strided_slice %52 {offsets = [0, 150], sizes = [8, 8], strides = [1, 1]} : vector<8x160xf32> to vector<8x8xf32>
    %150 = arith.maximumf %148, %149 : vector<8x8xf32>
    %c0_121 = arith.constant 0 : index
    %c0_122 = arith.constant 0 : index
    %c0_123 = arith.constant 0 : index
    %151 = vector.load %arg5[%c0_121, %c0_122, %c0_123] : memref<2x8x4xf32, #tpu.memory_space<vmem>>, vector<1x8x4xf32>
    %152 = vector.shape_cast %151 : vector<1x8x4xf32> to vector<8x4xf32>
    %cst_124 = arith.constant dense<0.000000e+00> : vector<8x4xf32>
    %153 = tpu.matmul %150, %152, %cst_124 {dimension_numbers = #tpu.dot_dimension_numbers<[1], [0], [0], [1], [0, 0, 1, 1], [], []>} : vector<8x8xf32>, vector<8x4xf32>, vector<8x4xf32> -> vector<8x4xf32>
    %c1_125 = arith.constant 1 : index
    %c0_126 = arith.constant 0 : index
    %c0_127 = arith.constant 0 : index
    %154 = vector.load %arg5[%c1_125, %c0_126, %c0_127] : memref<2x8x4xf32, #tpu.memory_space<vmem>>, vector<1x8x4xf32>
    %155 = vector.shape_cast %154 : vector<1x8x4xf32> to vector<8x4xf32>
    %cst_128 = arith.constant dense<0.000000e+00> : vector<8x4xf32>
    %156 = tpu.matmul %150, %155, %cst_128 {dimension_numbers = #tpu.dot_dimension_numbers<[1], [0], [0], [1], [0, 0, 1, 1], [], []>} : vector<8x8xf32>, vector<8x4xf32>, vector<8x4xf32> -> vector<8x4xf32>
    %157 = arith.maximumf %153, %156 : vector<8x4xf32>
    %c0_129 = arith.constant 0 : index
    %c0_130 = arith.constant 0 : index
    %c49 = arith.constant 49 : index
    %158 = vector.load %arg6[%c0_129, %c0_130, %c49] : memref<1x8x62xf32, #tpu.memory_space<vmem>>, vector<1x8x4xf32>
    %159 = vector.shape_cast %158 : vector<1x8x4xf32> to vector<8x4xf32>
    %160 = vector.shape_cast %157 : vector<8x4xf32> to vector<1x8x4xf32>
    tpu.vector_store %arg6[%c0_129, %c0_130, %c49], %160 {strides = array<i32>} : memref<1x8x62xf32, #tpu.memory_space<vmem>>, vector<1x8x4xf32>,
    return
  }
  func.func @transform_0(%arg0: i32, %arg1: i32) -> (i32, i32, i32) {
    %c0_i32 = arith.constant 0 : i32
    %c0_i32_0 = arith.constant 0 : i32
    %c0_i32_1 = arith.constant 0 : i32
    return %arg0, %c0_i32, %c0_i32_0 : i32, i32, i32
  }
  func.func @transform_1(%arg0: i32, %arg1: i32) -> (i32, i32, i32) {
    %c0_i32 = arith.constant 0 : i32
    %c0_i32_0 = arith.constant 0 : i32
    %c0_i32_1 = arith.constant 0 : i32
    return %c0_i32, %arg1, %c0_i32_0 : i32, i32, i32
  }
  func.func @transform_2(%arg0: i32, %arg1: i32) -> (i32, i32) {
    %c0_i32 = arith.constant 0 : i32
    %c0_i32_0 = arith.constant 0 : i32
    return %arg1, %c0_i32 : i32, i32
  }
  func.func @transform_3(%arg0: i32, %arg1: i32) -> (i32, i32, i32) {
    %c0_i32 = arith.constant 0 : i32
    %c0_i32_0 = arith.constant 0 : i32
    %c0_i32_1 = arith.constant 0 : i32
    %c0_i32_2 = arith.constant 0 : i32
    return %c0_i32, %c0_i32_0, %c0_i32_1 : i32, i32, i32
  }
  func.func @transform_4(%arg0: i32, %arg1: i32) -> (i32, i32, i32) {
    %c0_i32 = arith.constant 0 : i32
    %c0_i32_0 = arith.constant 0 : i32
    return %arg0, %arg1, %c0_i32 : i32, i32, i32
  }
}

module attributes {stable_mosaic.version = 11 : i64} {
  func.func @_conv_kernel(%arg0: i32, %arg1: i32, %arg2: memref<1x4x614xf32, #tpu.memory_space<vmem>>, %arg3: memref<9x4x4xbf16, #tpu.memory_space<vmem>>, %arg4: memref<4x1xf32, #tpu.memory_space<vmem>>, %arg5: memref<2x16x8xf32, #tpu.memory_space<vmem>>, %arg6: memref<1x4x182xf32, #tpu.memory_space<vmem>>, %arg7: memref<4x614xbf16, #tpu.memory_space<vmem>>) attributes {dimension_semantics = [#tpu.dimension_semantics<parallel>, #tpu.dimension_semantics<parallel>], iteration_bounds = array<i64: 2, 1>, scalar_prefetch = 0 : i64, scratch_operands = 1 : i64, tpu.core_type = #tpu.core_type<tc>, window_params = [{transform_indices = @transform_0, window_bounds = array<i64: 1, 4, 614>}, {transform_indices = @transform_1, window_bounds = array<i64: 9, 4, 4>}, {transform_indices = @transform_2, window_bounds = array<i64: 4, 1>}, {pipeline_mode = #tpu.pipeline_mode<synchronous>, transform_indices = @transform_3, window_bounds = array<i64: 2, 16, 8>}, {transform_indices = @transform_4, window_bounds = array<i64: 1, 4, 182>}]} {
    %c0 = arith.constant 0 : index
    %c0_0 = arith.constant 0 : index
    %c0_1 = arith.constant 0 : index
    %0 = vector.load %arg2[%c0, %c0_0, %c0_1] : memref<1x4x614xf32, #tpu.memory_space<vmem>>, vector<1x4x614xf32>
    %1 = vector.shape_cast %0 : vector<1x4x614xf32> to vector<4x614xf32>
    %2 = arith.truncf %1 : vector<4x614xf32> to vector<4x614xbf16>
    %c0_2 = arith.constant 0 : index
    %c0_3 = arith.constant 0 : index
    %3 = vector.load %arg7[%c0_2, %c0_3] : memref<4x614xbf16, #tpu.memory_space<vmem>>, vector<4x614xbf16>
    tpu.vector_store %arg7[%c0_2, %c0_3], %2 {strides = array<i32>} : memref<4x614xbf16, #tpu.memory_space<vmem>>, vector<4x614xbf16>,
    %c0_4 = arith.constant 0 : index
    %c0_5 = arith.constant 0 : index
    %4 = vector.load %arg7[%c0_4, %c0_5] : memref<4x614xbf16, #tpu.memory_space<vmem>>, vector<4x576xbf16>
    %c0_6 = arith.constant 0 : index
    %c0_7 = arith.constant 0 : index
    %c0_8 = arith.constant 0 : index
    %5 = vector.load %arg3[%c0_6, %c0_7, %c0_8] : memref<9x4x4xbf16, #tpu.memory_space<vmem>>, vector<1x4x4xbf16>
    %6 = vector.shape_cast %5 : vector<1x4x4xbf16> to vector<4x4xbf16>
    %cst = arith.constant dense<0.000000e+00> : vector<4x576xf32>
    %7 = tpu.matmul %6, %4, %cst {dimension_numbers = #tpu.dot_dimension_numbers<[1], [0], [0], [1], [0, 0, 1, 1], [], []>} : vector<4x4xbf16>, vector<4x576xbf16>, vector<4x576xf32> -> vector<4x576xf32>
    %c0_9 = arith.constant 0 : index
    %c1 = arith.constant 1 : index
    %8 = vector.load %arg7[%c0_9, %c1] : memref<4x614xbf16, #tpu.memory_space<vmem>>, vector<4x576xbf16>
    %c1_10 = arith.constant 1 : index
    %c0_11 = arith.constant 0 : index
    %c0_12 = arith.constant 0 : index
    %9 = vector.load %arg3[%c1_10, %c0_11, %c0_12] : memref<9x4x4xbf16, #tpu.memory_space<vmem>>, vector<1x4x4xbf16>
    %10 = vector.shape_cast %9 : vector<1x4x4xbf16> to vector<4x4xbf16>
    %cst_13 = arith.constant dense<0.000000e+00> : vector<4x576xf32>
    %11 = tpu.matmul %10, %8, %cst_13 {dimension_numbers = #tpu.dot_dimension_numbers<[1], [0], [0], [1], [0, 0, 1, 1], [], []>} : vector<4x4xbf16>, vector<4x576xbf16>, vector<4x576xf32> -> vector<4x576xf32>
    %12 = arith.addf %7, %11 : vector<4x576xf32>
    %c0_14 = arith.constant 0 : index
    %c2 = arith.constant 2 : index
    %13 = vector.load %arg7[%c0_14, %c2] : memref<4x614xbf16, #tpu.memory_space<vmem>>, vector<4x576xbf16>
    %c2_15 = arith.constant 2 : index
    %c0_16 = arith.constant 0 : index
    %c0_17 = arith.constant 0 : index
    %14 = vector.load %arg3[%c2_15, %c0_16, %c0_17] : memref<9x4x4xbf16, #tpu.memory_space<vmem>>, vector<1x4x4xbf16>
    %15 = vector.shape_cast %14 : vector<1x4x4xbf16> to vector<4x4xbf16>
    %cst_18 = arith.constant dense<0.000000e+00> : vector<4x576xf32>
    %16 = tpu.matmul %15, %13, %cst_18 {dimension_numbers = #tpu.dot_dimension_numbers<[1], [0], [0], [1], [0, 0, 1, 1], [], []>} : vector<4x4xbf16>, vector<4x576xbf16>, vector<4x576xf32> -> vector<4x576xf32>
    %17 = arith.addf %12, %16 : vector<4x576xf32>
    %c0_19 = arith.constant 0 : index
    %c18 = arith.constant 18 : index
    %18 = vector.load %arg7[%c0_19, %c18] : memref<4x614xbf16, #tpu.memory_space<vmem>>, vector<4x576xbf16>
    %c3 = arith.constant 3 : index
    %c0_20 = arith.constant 0 : index
    %c0_21 = arith.constant 0 : index
    %19 = vector.load %arg3[%c3, %c0_20, %c0_21] : memref<9x4x4xbf16, #tpu.memory_space<vmem>>, vector<1x4x4xbf16>
    %20 = vector.shape_cast %19 : vector<1x4x4xbf16> to vector<4x4xbf16>
    %cst_22 = arith.constant dense<0.000000e+00> : vector<4x576xf32>
    %21 = tpu.matmul %20, %18, %cst_22 {dimension_numbers = #tpu.dot_dimension_numbers<[1], [0], [0], [1], [0, 0, 1, 1], [], []>} : vector<4x4xbf16>, vector<4x576xbf16>, vector<4x576xf32> -> vector<4x576xf32>
    %22 = arith.addf %17, %21 : vector<4x576xf32>
    %c0_23 = arith.constant 0 : index
    %c19 = arith.constant 19 : index
    %23 = vector.load %arg7[%c0_23, %c19] : memref<4x614xbf16, #tpu.memory_space<vmem>>, vector<4x576xbf16>
    %c4 = arith.constant 4 : index
    %c0_24 = arith.constant 0 : index
    %c0_25 = arith.constant 0 : index
    %24 = vector.load %arg3[%c4, %c0_24, %c0_25] : memref<9x4x4xbf16, #tpu.memory_space<vmem>>, vector<1x4x4xbf16>
    %25 = vector.shape_cast %24 : vector<1x4x4xbf16> to vector<4x4xbf16>
    %cst_26 = arith.constant dense<0.000000e+00> : vector<4x576xf32>
    %26 = tpu.matmul %25, %23, %cst_26 {dimension_numbers = #tpu.dot_dimension_numbers<[1], [0], [0], [1], [0, 0, 1, 1], [], []>} : vector<4x4xbf16>, vector<4x576xbf16>, vector<4x576xf32> -> vector<4x576xf32>
    %27 = arith.addf %22, %26 : vector<4x576xf32>
    %c0_27 = arith.constant 0 : index
    %c20 = arith.constant 20 : index
    %28 = vector.load %arg7[%c0_27, %c20] : memref<4x614xbf16, #tpu.memory_space<vmem>>, vector<4x576xbf16>
    %c5 = arith.constant 5 : index
    %c0_28 = arith.constant 0 : index
    %c0_29 = arith.constant 0 : index
    %29 = vector.load %arg3[%c5, %c0_28, %c0_29] : memref<9x4x4xbf16, #tpu.memory_space<vmem>>, vector<1x4x4xbf16>
    %30 = vector.shape_cast %29 : vector<1x4x4xbf16> to vector<4x4xbf16>
    %cst_30 = arith.constant dense<0.000000e+00> : vector<4x576xf32>
    %31 = tpu.matmul %30, %28, %cst_30 {dimension_numbers = #tpu.dot_dimension_numbers<[1], [0], [0], [1], [0, 0, 1, 1], [], []>} : vector<4x4xbf16>, vector<4x576xbf16>, vector<4x576xf32> -> vector<4x576xf32>
    %32 = arith.addf %27, %31 : vector<4x576xf32>
    %c0_31 = arith.constant 0 : index
    %c36 = arith.constant 36 : index
    %33 = vector.load %arg7[%c0_31, %c36] : memref<4x614xbf16, #tpu.memory_space<vmem>>, vector<4x576xbf16>
    %c6 = arith.constant 6 : index
    %c0_32 = arith.constant 0 : index
    %c0_33 = arith.constant 0 : index
    %34 = vector.load %arg3[%c6, %c0_32, %c0_33] : memref<9x4x4xbf16, #tpu.memory_space<vmem>>, vector<1x4x4xbf16>
    %35 = vector.shape_cast %34 : vector<1x4x4xbf16> to vector<4x4xbf16>
    %cst_34 = arith.constant dense<0.000000e+00> : vector<4x576xf32>
    %36 = tpu.matmul %35, %33, %cst_34 {dimension_numbers = #tpu.dot_dimension_numbers<[1], [0], [0], [1], [0, 0, 1, 1], [], []>} : vector<4x4xbf16>, vector<4x576xbf16>, vector<4x576xf32> -> vector<4x576xf32>
    %37 = arith.addf %32, %36 : vector<4x576xf32>
    %c0_35 = arith.constant 0 : index
    %c37 = arith.constant 37 : index
    %38 = vector.load %arg7[%c0_35, %c37] : memref<4x614xbf16, #tpu.memory_space<vmem>>, vector<4x576xbf16>
    %c7 = arith.constant 7 : index
    %c0_36 = arith.constant 0 : index
    %c0_37 = arith.constant 0 : index
    %39 = vector.load %arg3[%c7, %c0_36, %c0_37] : memref<9x4x4xbf16, #tpu.memory_space<vmem>>, vector<1x4x4xbf16>
    %40 = vector.shape_cast %39 : vector<1x4x4xbf16> to vector<4x4xbf16>
    %cst_38 = arith.constant dense<0.000000e+00> : vector<4x576xf32>
    %41 = tpu.matmul %40, %38, %cst_38 {dimension_numbers = #tpu.dot_dimension_numbers<[1], [0], [0], [1], [0, 0, 1, 1], [], []>} : vector<4x4xbf16>, vector<4x576xbf16>, vector<4x576xf32> -> vector<4x576xf32>
    %42 = arith.addf %37, %41 : vector<4x576xf32>
    %c0_39 = arith.constant 0 : index
    %c38 = arith.constant 38 : index
    %43 = vector.load %arg7[%c0_39, %c38] : memref<4x614xbf16, #tpu.memory_space<vmem>>, vector<4x576xbf16>
    %c8 = arith.constant 8 : index
    %c0_40 = arith.constant 0 : index
    %c0_41 = arith.constant 0 : index
    %44 = vector.load %arg3[%c8, %c0_40, %c0_41] : memref<9x4x4xbf16, #tpu.memory_space<vmem>>, vector<1x4x4xbf16>
    %45 = vector.shape_cast %44 : vector<1x4x4xbf16> to vector<4x4xbf16>
    %cst_42 = arith.constant dense<0.000000e+00> : vector<4x576xf32>
    %46 = tpu.matmul %45, %43, %cst_42 {dimension_numbers = #tpu.dot_dimension_numbers<[1], [0], [0], [1], [0, 0, 1, 1], [], []>} : vector<4x4xbf16>, vector<4x576xbf16>, vector<4x576xf32> -> vector<4x576xf32>
    %47 = arith.addf %42, %46 : vector<4x576xf32>
    %c0_43 = arith.constant 0 : index
    %c0_44 = arith.constant 0 : index
    %48 = vector.load %arg4[%c0_43, %c0_44] : memref<4x1xf32, #tpu.memory_space<vmem>>, vector<4x1xf32>
    %49 = vector.broadcast %48 : vector<4x1xf32> to vector<4x576xf32>
    %50 = arith.addf %47, %49 : vector<4x576xf32>
    %cst_45 = arith.constant 0.000000e+00 : f32
    %51 = vector.broadcast %cst_45 : f32 to vector<4x576xf32>
    %52 = arith.maximumf %50, %51 : vector<4x576xf32>
    %cst_46 = arith.constant 0.000000e+00 : f32
    %53 = vector.broadcast %cst_46 : f32 to vector<4x182xf32>
    %c0_47 = arith.constant 0 : index
    %c0_48 = arith.constant 0 : index
    %c0_49 = arith.constant 0 : index
    %54 = vector.load %arg6[%c0_47, %c0_48, %c0_49] : memref<1x4x182xf32, #tpu.memory_space<vmem>>, vector<1x4x182xf32>
    %55 = vector.shape_cast %54 : vector<1x4x182xf32> to vector<4x182xf32>
    %56 = vector.shape_cast %53 : vector<4x182xf32> to vector<1x4x182xf32>
    tpu.vector_store %arg6[%c0_47, %c0_48, %c0_49], %56 {strides = array<i32>} : memref<1x4x182xf32, #tpu.memory_space<vmem>>, vector<1x4x182xf32>,
    %57 = vector.extract_strided_slice %52 {offsets = [0, 0], sizes = [4, 16], strides = [1, 1]} : vector<4x576xf32> to vector<4x16xf32>
    %58 = vector.extract_strided_slice %52 {offsets = [0, 18], sizes = [4, 16], strides = [1, 1]} : vector<4x576xf32> to vector<4x16xf32>
    %59 = arith.maximumf %57, %58 : vector<4x16xf32>
    %c0_50 = arith.constant 0 : index
    %c0_51 = arith.constant 0 : index
    %c0_52 = arith.constant 0 : index
    %60 = vector.load %arg5[%c0_50, %c0_51, %c0_52] : memref<2x16x8xf32, #tpu.memory_space<vmem>>, vector<1x16x8xf32>
    %61 = vector.shape_cast %60 : vector<1x16x8xf32> to vector<16x8xf32>
    %cst_53 = arith.constant dense<0.000000e+00> : vector<4x8xf32>
    %62 = tpu.matmul %59, %61, %cst_53 {dimension_numbers = #tpu.dot_dimension_numbers<[1], [0], [0], [1], [0, 0, 1, 1], [], []>} : vector<4x16xf32>, vector<16x8xf32>, vector<4x8xf32> -> vector<4x8xf32>
    %c1_54 = arith.constant 1 : index
    %c0_55 = arith.constant 0 : index
    %c0_56 = arith.constant 0 : index
    %63 = vector.load %arg5[%c1_54, %c0_55, %c0_56] : memref<2x16x8xf32, #tpu.memory_space<vmem>>, vector<1x16x8xf32>
    %64 = vector.shape_cast %63 : vector<1x16x8xf32> to vector<16x8xf32>
    %cst_57 = arith.constant dense<0.000000e+00> : vector<4x8xf32>
    %65 = tpu.matmul %59, %64, %cst_57 {dimension_numbers = #tpu.dot_dimension_numbers<[1], [0], [0], [1], [0, 0, 1, 1], [], []>} : vector<4x16xf32>, vector<16x8xf32>, vector<4x8xf32> -> vector<4x8xf32>
    %66 = arith.maximumf %62, %65 : vector<4x8xf32>
    %c0_58 = arith.constant 0 : index
    %c0_59 = arith.constant 0 : index
    %c11 = arith.constant 11 : index
    %67 = vector.load %arg6[%c0_58, %c0_59, %c11] : memref<1x4x182xf32, #tpu.memory_space<vmem>>, vector<1x4x8xf32>
    %68 = vector.shape_cast %67 : vector<1x4x8xf32> to vector<4x8xf32>
    %69 = vector.shape_cast %66 : vector<4x8xf32> to vector<1x4x8xf32>
    tpu.vector_store %arg6[%c0_58, %c0_59, %c11], %69 {strides = array<i32>} : memref<1x4x182xf32, #tpu.memory_space<vmem>>, vector<1x4x8xf32>,
    %70 = vector.extract_strided_slice %52 {offsets = [0, 36], sizes = [4, 16], strides = [1, 1]} : vector<4x576xf32> to vector<4x16xf32>
    %71 = vector.extract_strided_slice %52 {offsets = [0, 54], sizes = [4, 16], strides = [1, 1]} : vector<4x576xf32> to vector<4x16xf32>
    %72 = arith.maximumf %70, %71 : vector<4x16xf32>
    %c0_60 = arith.constant 0 : index
    %c0_61 = arith.constant 0 : index
    %c0_62 = arith.constant 0 : index
    %73 = vector.load %arg5[%c0_60, %c0_61, %c0_62] : memref<2x16x8xf32, #tpu.memory_space<vmem>>, vector<1x16x8xf32>
    %74 = vector.shape_cast %73 : vector<1x16x8xf32> to vector<16x8xf32>
    %cst_63 = arith.constant dense<0.000000e+00> : vector<4x8xf32>
    %75 = tpu.matmul %72, %74, %cst_63 {dimension_numbers = #tpu.dot_dimension_numbers<[1], [0], [0], [1], [0, 0, 1, 1], [], []>} : vector<4x16xf32>, vector<16x8xf32>, vector<4x8xf32> -> vector<4x8xf32>
    %c1_64 = arith.constant 1 : index
    %c0_65 = arith.constant 0 : index
    %c0_66 = arith.constant 0 : index
    %76 = vector.load %arg5[%c1_64, %c0_65, %c0_66] : memref<2x16x8xf32, #tpu.memory_space<vmem>>, vector<1x16x8xf32>
    %77 = vector.shape_cast %76 : vector<1x16x8xf32> to vector<16x8xf32>
    %cst_67 = arith.constant dense<0.000000e+00> : vector<4x8xf32>
    %78 = tpu.matmul %72, %77, %cst_67 {dimension_numbers = #tpu.dot_dimension_numbers<[1], [0], [0], [1], [0, 0, 1, 1], [], []>} : vector<4x16xf32>, vector<16x8xf32>, vector<4x8xf32> -> vector<4x8xf32>
    %79 = arith.maximumf %75, %78 : vector<4x8xf32>
    %c0_68 = arith.constant 0 : index
    %c0_69 = arith.constant 0 : index
    %c21 = arith.constant 21 : index
    %80 = vector.load %arg6[%c0_68, %c0_69, %c21] : memref<1x4x182xf32, #tpu.memory_space<vmem>>, vector<1x4x8xf32>
    %81 = vector.shape_cast %80 : vector<1x4x8xf32> to vector<4x8xf32>
    %82 = vector.shape_cast %79 : vector<4x8xf32> to vector<1x4x8xf32>
    tpu.vector_store %arg6[%c0_68, %c0_69, %c21], %82 {strides = array<i32>} : memref<1x4x182xf32, #tpu.memory_space<vmem>>, vector<1x4x8xf32>,
    %83 = vector.extract_strided_slice %52 {offsets = [0, 72], sizes = [4, 16], strides = [1, 1]} : vector<4x576xf32> to vector<4x16xf32>
    %84 = vector.extract_strided_slice %52 {offsets = [0, 90], sizes = [4, 16], strides = [1, 1]} : vector<4x576xf32> to vector<4x16xf32>
    %85 = arith.maximumf %83, %84 : vector<4x16xf32>
    %c0_70 = arith.constant 0 : index
    %c0_71 = arith.constant 0 : index
    %c0_72 = arith.constant 0 : index
    %86 = vector.load %arg5[%c0_70, %c0_71, %c0_72] : memref<2x16x8xf32, #tpu.memory_space<vmem>>, vector<1x16x8xf32>
    %87 = vector.shape_cast %86 : vector<1x16x8xf32> to vector<16x8xf32>
    %cst_73 = arith.constant dense<0.000000e+00> : vector<4x8xf32>
    %88 = tpu.matmul %85, %87, %cst_73 {dimension_numbers = #tpu.dot_dimension_numbers<[1], [0], [0], [1], [0, 0, 1, 1], [], []>} : vector<4x16xf32>, vector<16x8xf32>, vector<4x8xf32> -> vector<4x8xf32>
    %c1_74 = arith.constant 1 : index
    %c0_75 = arith.constant 0 : index
    %c0_76 = arith.constant 0 : index
    %89 = vector.load %arg5[%c1_74, %c0_75, %c0_76] : memref<2x16x8xf32, #tpu.memory_space<vmem>>, vector<1x16x8xf32>
    %90 = vector.shape_cast %89 : vector<1x16x8xf32> to vector<16x8xf32>
    %cst_77 = arith.constant dense<0.000000e+00> : vector<4x8xf32>
    %91 = tpu.matmul %85, %90, %cst_77 {dimension_numbers = #tpu.dot_dimension_numbers<[1], [0], [0], [1], [0, 0, 1, 1], [], []>} : vector<4x16xf32>, vector<16x8xf32>, vector<4x8xf32> -> vector<4x8xf32>
    %92 = arith.maximumf %88, %91 : vector<4x8xf32>
    %c0_78 = arith.constant 0 : index
    %c0_79 = arith.constant 0 : index
    %c31 = arith.constant 31 : index
    %93 = vector.load %arg6[%c0_78, %c0_79, %c31] : memref<1x4x182xf32, #tpu.memory_space<vmem>>, vector<1x4x8xf32>
    %94 = vector.shape_cast %93 : vector<1x4x8xf32> to vector<4x8xf32>
    %95 = vector.shape_cast %92 : vector<4x8xf32> to vector<1x4x8xf32>
    tpu.vector_store %arg6[%c0_78, %c0_79, %c31], %95 {strides = array<i32>} : memref<1x4x182xf32, #tpu.memory_space<vmem>>, vector<1x4x8xf32>,
    %96 = vector.extract_strided_slice %52 {offsets = [0, 108], sizes = [4, 16], strides = [1, 1]} : vector<4x576xf32> to vector<4x16xf32>
    %97 = vector.extract_strided_slice %52 {offsets = [0, 126], sizes = [4, 16], strides = [1, 1]} : vector<4x576xf32> to vector<4x16xf32>
    %98 = arith.maximumf %96, %97 : vector<4x16xf32>
    %c0_80 = arith.constant 0 : index
    %c0_81 = arith.constant 0 : index
    %c0_82 = arith.constant 0 : index
    %99 = vector.load %arg5[%c0_80, %c0_81, %c0_82] : memref<2x16x8xf32, #tpu.memory_space<vmem>>, vector<1x16x8xf32>
    %100 = vector.shape_cast %99 : vector<1x16x8xf32> to vector<16x8xf32>
    %cst_83 = arith.constant dense<0.000000e+00> : vector<4x8xf32>
    %101 = tpu.matmul %98, %100, %cst_83 {dimension_numbers = #tpu.dot_dimension_numbers<[1], [0], [0], [1], [0, 0, 1, 1], [], []>} : vector<4x16xf32>, vector<16x8xf32>, vector<4x8xf32> -> vector<4x8xf32>
    %c1_84 = arith.constant 1 : index
    %c0_85 = arith.constant 0 : index
    %c0_86 = arith.constant 0 : index
    %102 = vector.load %arg5[%c1_84, %c0_85, %c0_86] : memref<2x16x8xf32, #tpu.memory_space<vmem>>, vector<1x16x8xf32>
    %103 = vector.shape_cast %102 : vector<1x16x8xf32> to vector<16x8xf32>
    %cst_87 = arith.constant dense<0.000000e+00> : vector<4x8xf32>
    %104 = tpu.matmul %98, %103, %cst_87 {dimension_numbers = #tpu.dot_dimension_numbers<[1], [0], [0], [1], [0, 0, 1, 1], [], []>} : vector<4x16xf32>, vector<16x8xf32>, vector<4x8xf32> -> vector<4x8xf32>
    %105 = arith.maximumf %101, %104 : vector<4x8xf32>
    %c0_88 = arith.constant 0 : index
    %c0_89 = arith.constant 0 : index
    %c41 = arith.constant 41 : index
    %106 = vector.load %arg6[%c0_88, %c0_89, %c41] : memref<1x4x182xf32, #tpu.memory_space<vmem>>, vector<1x4x8xf32>
    %107 = vector.shape_cast %106 : vector<1x4x8xf32> to vector<4x8xf32>
    %108 = vector.shape_cast %105 : vector<4x8xf32> to vector<1x4x8xf32>
    tpu.vector_store %arg6[%c0_88, %c0_89, %c41], %108 {strides = array<i32>} : memref<1x4x182xf32, #tpu.memory_space<vmem>>, vector<1x4x8xf32>,
    %109 = vector.extract_strided_slice %52 {offsets = [0, 144], sizes = [4, 16], strides = [1, 1]} : vector<4x576xf32> to vector<4x16xf32>
    %110 = vector.extract_strided_slice %52 {offsets = [0, 162], sizes = [4, 16], strides = [1, 1]} : vector<4x576xf32> to vector<4x16xf32>
    %111 = arith.maximumf %109, %110 : vector<4x16xf32>
    %c0_90 = arith.constant 0 : index
    %c0_91 = arith.constant 0 : index
    %c0_92 = arith.constant 0 : index
    %112 = vector.load %arg5[%c0_90, %c0_91, %c0_92] : memref<2x16x8xf32, #tpu.memory_space<vmem>>, vector<1x16x8xf32>
    %113 = vector.shape_cast %112 : vector<1x16x8xf32> to vector<16x8xf32>
    %cst_93 = arith.constant dense<0.000000e+00> : vector<4x8xf32>
    %114 = tpu.matmul %111, %113, %cst_93 {dimension_numbers = #tpu.dot_dimension_numbers<[1], [0], [0], [1], [0, 0, 1, 1], [], []>} : vector<4x16xf32>, vector<16x8xf32>, vector<4x8xf32> -> vector<4x8xf32>
    %c1_94 = arith.constant 1 : index
    %c0_95 = arith.constant 0 : index
    %c0_96 = arith.constant 0 : index
    %115 = vector.load %arg5[%c1_94, %c0_95, %c0_96] : memref<2x16x8xf32, #tpu.memory_space<vmem>>, vector<1x16x8xf32>
    %116 = vector.shape_cast %115 : vector<1x16x8xf32> to vector<16x8xf32>
    %cst_97 = arith.constant dense<0.000000e+00> : vector<4x8xf32>
    %117 = tpu.matmul %111, %116, %cst_97 {dimension_numbers = #tpu.dot_dimension_numbers<[1], [0], [0], [1], [0, 0, 1, 1], [], []>} : vector<4x16xf32>, vector<16x8xf32>, vector<4x8xf32> -> vector<4x8xf32>
    %118 = arith.maximumf %114, %117 : vector<4x8xf32>
    %c0_98 = arith.constant 0 : index
    %c0_99 = arith.constant 0 : index
    %c51 = arith.constant 51 : index
    %119 = vector.load %arg6[%c0_98, %c0_99, %c51] : memref<1x4x182xf32, #tpu.memory_space<vmem>>, vector<1x4x8xf32>
    %120 = vector.shape_cast %119 : vector<1x4x8xf32> to vector<4x8xf32>
    %121 = vector.shape_cast %118 : vector<4x8xf32> to vector<1x4x8xf32>
    tpu.vector_store %arg6[%c0_98, %c0_99, %c51], %121 {strides = array<i32>} : memref<1x4x182xf32, #tpu.memory_space<vmem>>, vector<1x4x8xf32>,
    %122 = vector.extract_strided_slice %52 {offsets = [0, 180], sizes = [4, 16], strides = [1, 1]} : vector<4x576xf32> to vector<4x16xf32>
    %123 = vector.extract_strided_slice %52 {offsets = [0, 198], sizes = [4, 16], strides = [1, 1]} : vector<4x576xf32> to vector<4x16xf32>
    %124 = arith.maximumf %122, %123 : vector<4x16xf32>
    %c0_100 = arith.constant 0 : index
    %c0_101 = arith.constant 0 : index
    %c0_102 = arith.constant 0 : index
    %125 = vector.load %arg5[%c0_100, %c0_101, %c0_102] : memref<2x16x8xf32, #tpu.memory_space<vmem>>, vector<1x16x8xf32>
    %126 = vector.shape_cast %125 : vector<1x16x8xf32> to vector<16x8xf32>
    %cst_103 = arith.constant dense<0.000000e+00> : vector<4x8xf32>
    %127 = tpu.matmul %124, %126, %cst_103 {dimension_numbers = #tpu.dot_dimension_numbers<[1], [0], [0], [1], [0, 0, 1, 1], [], []>} : vector<4x16xf32>, vector<16x8xf32>, vector<4x8xf32> -> vector<4x8xf32>
    %c1_104 = arith.constant 1 : index
    %c0_105 = arith.constant 0 : index
    %c0_106 = arith.constant 0 : index
    %128 = vector.load %arg5[%c1_104, %c0_105, %c0_106] : memref<2x16x8xf32, #tpu.memory_space<vmem>>, vector<1x16x8xf32>
    %129 = vector.shape_cast %128 : vector<1x16x8xf32> to vector<16x8xf32>
    %cst_107 = arith.constant dense<0.000000e+00> : vector<4x8xf32>
    %130 = tpu.matmul %124, %129, %cst_107 {dimension_numbers = #tpu.dot_dimension_numbers<[1], [0], [0], [1], [0, 0, 1, 1], [], []>} : vector<4x16xf32>, vector<16x8xf32>, vector<4x8xf32> -> vector<4x8xf32>
    %131 = arith.maximumf %127, %130 : vector<4x8xf32>
    %c0_108 = arith.constant 0 : index
    %c0_109 = arith.constant 0 : index
    %c61 = arith.constant 61 : index
    %132 = vector.load %arg6[%c0_108, %c0_109, %c61] : memref<1x4x182xf32, #tpu.memory_space<vmem>>, vector<1x4x8xf32>
    %133 = vector.shape_cast %132 : vector<1x4x8xf32> to vector<4x8xf32>
    %134 = vector.shape_cast %131 : vector<4x8xf32> to vector<1x4x8xf32>
    tpu.vector_store %arg6[%c0_108, %c0_109, %c61], %134 {strides = array<i32>} : memref<1x4x182xf32, #tpu.memory_space<vmem>>, vector<1x4x8xf32>,
    %135 = vector.extract_strided_slice %52 {offsets = [0, 216], sizes = [4, 16], strides = [1, 1]} : vector<4x576xf32> to vector<4x16xf32>
    %136 = vector.extract_strided_slice %52 {offsets = [0, 234], sizes = [4, 16], strides = [1, 1]} : vector<4x576xf32> to vector<4x16xf32>
    %137 = arith.maximumf %135, %136 : vector<4x16xf32>
    %c0_110 = arith.constant 0 : index
    %c0_111 = arith.constant 0 : index
    %c0_112 = arith.constant 0 : index
    %138 = vector.load %arg5[%c0_110, %c0_111, %c0_112] : memref<2x16x8xf32, #tpu.memory_space<vmem>>, vector<1x16x8xf32>
    %139 = vector.shape_cast %138 : vector<1x16x8xf32> to vector<16x8xf32>
    %cst_113 = arith.constant dense<0.000000e+00> : vector<4x8xf32>
    %140 = tpu.matmul %137, %139, %cst_113 {dimension_numbers = #tpu.dot_dimension_numbers<[1], [0], [0], [1], [0, 0, 1, 1], [], []>} : vector<4x16xf32>, vector<16x8xf32>, vector<4x8xf32> -> vector<4x8xf32>
    %c1_114 = arith.constant 1 : index
    %c0_115 = arith.constant 0 : index
    %c0_116 = arith.constant 0 : index
    %141 = vector.load %arg5[%c1_114, %c0_115, %c0_116] : memref<2x16x8xf32, #tpu.memory_space<vmem>>, vector<1x16x8xf32>
    %142 = vector.shape_cast %141 : vector<1x16x8xf32> to vector<16x8xf32>
    %cst_117 = arith.constant dense<0.000000e+00> : vector<4x8xf32>
    %143 = tpu.matmul %137, %142, %cst_117 {dimension_numbers = #tpu.dot_dimension_numbers<[1], [0], [0], [1], [0, 0, 1, 1], [], []>} : vector<4x16xf32>, vector<16x8xf32>, vector<4x8xf32> -> vector<4x8xf32>
    %144 = arith.maximumf %140, %143 : vector<4x8xf32>
    %c0_118 = arith.constant 0 : index
    %c0_119 = arith.constant 0 : index
    %c71 = arith.constant 71 : index
    %145 = vector.load %arg6[%c0_118, %c0_119, %c71] : memref<1x4x182xf32, #tpu.memory_space<vmem>>, vector<1x4x8xf32>
    %146 = vector.shape_cast %145 : vector<1x4x8xf32> to vector<4x8xf32>
    %147 = vector.shape_cast %144 : vector<4x8xf32> to vector<1x4x8xf32>
    tpu.vector_store %arg6[%c0_118, %c0_119, %c71], %147 {strides = array<i32>} : memref<1x4x182xf32, #tpu.memory_space<vmem>>, vector<1x4x8xf32>,
    %148 = vector.extract_strided_slice %52 {offsets = [0, 252], sizes = [4, 16], strides = [1, 1]} : vector<4x576xf32> to vector<4x16xf32>
    %149 = vector.extract_strided_slice %52 {offsets = [0, 270], sizes = [4, 16], strides = [1, 1]} : vector<4x576xf32> to vector<4x16xf32>
    %150 = arith.maximumf %148, %149 : vector<4x16xf32>
    %c0_120 = arith.constant 0 : index
    %c0_121 = arith.constant 0 : index
    %c0_122 = arith.constant 0 : index
    %151 = vector.load %arg5[%c0_120, %c0_121, %c0_122] : memref<2x16x8xf32, #tpu.memory_space<vmem>>, vector<1x16x8xf32>
    %152 = vector.shape_cast %151 : vector<1x16x8xf32> to vector<16x8xf32>
    %cst_123 = arith.constant dense<0.000000e+00> : vector<4x8xf32>
    %153 = tpu.matmul %150, %152, %cst_123 {dimension_numbers = #tpu.dot_dimension_numbers<[1], [0], [0], [1], [0, 0, 1, 1], [], []>} : vector<4x16xf32>, vector<16x8xf32>, vector<4x8xf32> -> vector<4x8xf32>
    %c1_124 = arith.constant 1 : index
    %c0_125 = arith.constant 0 : index
    %c0_126 = arith.constant 0 : index
    %154 = vector.load %arg5[%c1_124, %c0_125, %c0_126] : memref<2x16x8xf32, #tpu.memory_space<vmem>>, vector<1x16x8xf32>
    %155 = vector.shape_cast %154 : vector<1x16x8xf32> to vector<16x8xf32>
    %cst_127 = arith.constant dense<0.000000e+00> : vector<4x8xf32>
    %156 = tpu.matmul %150, %155, %cst_127 {dimension_numbers = #tpu.dot_dimension_numbers<[1], [0], [0], [1], [0, 0, 1, 1], [], []>} : vector<4x16xf32>, vector<16x8xf32>, vector<4x8xf32> -> vector<4x8xf32>
    %157 = arith.maximumf %153, %156 : vector<4x8xf32>
    %c0_128 = arith.constant 0 : index
    %c0_129 = arith.constant 0 : index
    %c81 = arith.constant 81 : index
    %158 = vector.load %arg6[%c0_128, %c0_129, %c81] : memref<1x4x182xf32, #tpu.memory_space<vmem>>, vector<1x4x8xf32>
    %159 = vector.shape_cast %158 : vector<1x4x8xf32> to vector<4x8xf32>
    %160 = vector.shape_cast %157 : vector<4x8xf32> to vector<1x4x8xf32>
    tpu.vector_store %arg6[%c0_128, %c0_129, %c81], %160 {strides = array<i32>} : memref<1x4x182xf32, #tpu.memory_space<vmem>>, vector<1x4x8xf32>,
    %161 = vector.extract_strided_slice %52 {offsets = [0, 288], sizes = [4, 16], strides = [1, 1]} : vector<4x576xf32> to vector<4x16xf32>
    %162 = vector.extract_strided_slice %52 {offsets = [0, 306], sizes = [4, 16], strides = [1, 1]} : vector<4x576xf32> to vector<4x16xf32>
    %163 = arith.maximumf %161, %162 : vector<4x16xf32>
    %c0_130 = arith.constant 0 : index
    %c0_131 = arith.constant 0 : index
    %c0_132 = arith.constant 0 : index
    %164 = vector.load %arg5[%c0_130, %c0_131, %c0_132] : memref<2x16x8xf32, #tpu.memory_space<vmem>>, vector<1x16x8xf32>
    %165 = vector.shape_cast %164 : vector<1x16x8xf32> to vector<16x8xf32>
    %cst_133 = arith.constant dense<0.000000e+00> : vector<4x8xf32>
    %166 = tpu.matmul %163, %165, %cst_133 {dimension_numbers = #tpu.dot_dimension_numbers<[1], [0], [0], [1], [0, 0, 1, 1], [], []>} : vector<4x16xf32>, vector<16x8xf32>, vector<4x8xf32> -> vector<4x8xf32>
    %c1_134 = arith.constant 1 : index
    %c0_135 = arith.constant 0 : index
    %c0_136 = arith.constant 0 : index
    %167 = vector.load %arg5[%c1_134, %c0_135, %c0_136] : memref<2x16x8xf32, #tpu.memory_space<vmem>>, vector<1x16x8xf32>
    %168 = vector.shape_cast %167 : vector<1x16x8xf32> to vector<16x8xf32>
    %cst_137 = arith.constant dense<0.000000e+00> : vector<4x8xf32>
    %169 = tpu.matmul %163, %168, %cst_137 {dimension_numbers = #tpu.dot_dimension_numbers<[1], [0], [0], [1], [0, 0, 1, 1], [], []>} : vector<4x16xf32>, vector<16x8xf32>, vector<4x8xf32> -> vector<4x8xf32>
    %170 = arith.maximumf %166, %169 : vector<4x8xf32>
    %c0_138 = arith.constant 0 : index
    %c0_139 = arith.constant 0 : index
    %c91 = arith.constant 91 : index
    %171 = vector.load %arg6[%c0_138, %c0_139, %c91] : memref<1x4x182xf32, #tpu.memory_space<vmem>>, vector<1x4x8xf32>
    %172 = vector.shape_cast %171 : vector<1x4x8xf32> to vector<4x8xf32>
    %173 = vector.shape_cast %170 : vector<4x8xf32> to vector<1x4x8xf32>
    tpu.vector_store %arg6[%c0_138, %c0_139, %c91], %173 {strides = array<i32>} : memref<1x4x182xf32, #tpu.memory_space<vmem>>, vector<1x4x8xf32>,
    %174 = vector.extract_strided_slice %52 {offsets = [0, 324], sizes = [4, 16], strides = [1, 1]} : vector<4x576xf32> to vector<4x16xf32>
    %175 = vector.extract_strided_slice %52 {offsets = [0, 342], sizes = [4, 16], strides = [1, 1]} : vector<4x576xf32> to vector<4x16xf32>
    %176 = arith.maximumf %174, %175 : vector<4x16xf32>
    %c0_140 = arith.constant 0 : index
    %c0_141 = arith.constant 0 : index
    %c0_142 = arith.constant 0 : index
    %177 = vector.load %arg5[%c0_140, %c0_141, %c0_142] : memref<2x16x8xf32, #tpu.memory_space<vmem>>, vector<1x16x8xf32>
    %178 = vector.shape_cast %177 : vector<1x16x8xf32> to vector<16x8xf32>
    %cst_143 = arith.constant dense<0.000000e+00> : vector<4x8xf32>
    %179 = tpu.matmul %176, %178, %cst_143 {dimension_numbers = #tpu.dot_dimension_numbers<[1], [0], [0], [1], [0, 0, 1, 1], [], []>} : vector<4x16xf32>, vector<16x8xf32>, vector<4x8xf32> -> vector<4x8xf32>
    %c1_144 = arith.constant 1 : index
    %c0_145 = arith.constant 0 : index
    %c0_146 = arith.constant 0 : index
    %180 = vector.load %arg5[%c1_144, %c0_145, %c0_146] : memref<2x16x8xf32, #tpu.memory_space<vmem>>, vector<1x16x8xf32>
    %181 = vector.shape_cast %180 : vector<1x16x8xf32> to vector<16x8xf32>
    %cst_147 = arith.constant dense<0.000000e+00> : vector<4x8xf32>
    %182 = tpu.matmul %176, %181, %cst_147 {dimension_numbers = #tpu.dot_dimension_numbers<[1], [0], [0], [1], [0, 0, 1, 1], [], []>} : vector<4x16xf32>, vector<16x8xf32>, vector<4x8xf32> -> vector<4x8xf32>
    %183 = arith.maximumf %179, %182 : vector<4x8xf32>
    %c0_148 = arith.constant 0 : index
    %c0_149 = arith.constant 0 : index
    %c101 = arith.constant 101 : index
    %184 = vector.load %arg6[%c0_148, %c0_149, %c101] : memref<1x4x182xf32, #tpu.memory_space<vmem>>, vector<1x4x8xf32>
    %185 = vector.shape_cast %184 : vector<1x4x8xf32> to vector<4x8xf32>
    %186 = vector.shape_cast %183 : vector<4x8xf32> to vector<1x4x8xf32>
    tpu.vector_store %arg6[%c0_148, %c0_149, %c101], %186 {strides = array<i32>} : memref<1x4x182xf32, #tpu.memory_space<vmem>>, vector<1x4x8xf32>,
    %187 = vector.extract_strided_slice %52 {offsets = [0, 360], sizes = [4, 16], strides = [1, 1]} : vector<4x576xf32> to vector<4x16xf32>
    %188 = vector.extract_strided_slice %52 {offsets = [0, 378], sizes = [4, 16], strides = [1, 1]} : vector<4x576xf32> to vector<4x16xf32>
    %189 = arith.maximumf %187, %188 : vector<4x16xf32>
    %c0_150 = arith.constant 0 : index
    %c0_151 = arith.constant 0 : index
    %c0_152 = arith.constant 0 : index
    %190 = vector.load %arg5[%c0_150, %c0_151, %c0_152] : memref<2x16x8xf32, #tpu.memory_space<vmem>>, vector<1x16x8xf32>
    %191 = vector.shape_cast %190 : vector<1x16x8xf32> to vector<16x8xf32>
    %cst_153 = arith.constant dense<0.000000e+00> : vector<4x8xf32>
    %192 = tpu.matmul %189, %191, %cst_153 {dimension_numbers = #tpu.dot_dimension_numbers<[1], [0], [0], [1], [0, 0, 1, 1], [], []>} : vector<4x16xf32>, vector<16x8xf32>, vector<4x8xf32> -> vector<4x8xf32>
    %c1_154 = arith.constant 1 : index
    %c0_155 = arith.constant 0 : index
    %c0_156 = arith.constant 0 : index
    %193 = vector.load %arg5[%c1_154, %c0_155, %c0_156] : memref<2x16x8xf32, #tpu.memory_space<vmem>>, vector<1x16x8xf32>
    %194 = vector.shape_cast %193 : vector<1x16x8xf32> to vector<16x8xf32>
    %cst_157 = arith.constant dense<0.000000e+00> : vector<4x8xf32>
    %195 = tpu.matmul %189, %194, %cst_157 {dimension_numbers = #tpu.dot_dimension_numbers<[1], [0], [0], [1], [0, 0, 1, 1], [], []>} : vector<4x16xf32>, vector<16x8xf32>, vector<4x8xf32> -> vector<4x8xf32>
    %196 = arith.maximumf %192, %195 : vector<4x8xf32>
    %c0_158 = arith.constant 0 : index
    %c0_159 = arith.constant 0 : index
    %c111 = arith.constant 111 : index
    %197 = vector.load %arg6[%c0_158, %c0_159, %c111] : memref<1x4x182xf32, #tpu.memory_space<vmem>>, vector<1x4x8xf32>
    %198 = vector.shape_cast %197 : vector<1x4x8xf32> to vector<4x8xf32>
    %199 = vector.shape_cast %196 : vector<4x8xf32> to vector<1x4x8xf32>
    tpu.vector_store %arg6[%c0_158, %c0_159, %c111], %199 {strides = array<i32>} : memref<1x4x182xf32, #tpu.memory_space<vmem>>, vector<1x4x8xf32>,
    %200 = vector.extract_strided_slice %52 {offsets = [0, 396], sizes = [4, 16], strides = [1, 1]} : vector<4x576xf32> to vector<4x16xf32>
    %201 = vector.extract_strided_slice %52 {offsets = [0, 414], sizes = [4, 16], strides = [1, 1]} : vector<4x576xf32> to vector<4x16xf32>
    %202 = arith.maximumf %200, %201 : vector<4x16xf32>
    %c0_160 = arith.constant 0 : index
    %c0_161 = arith.constant 0 : index
    %c0_162 = arith.constant 0 : index
    %203 = vector.load %arg5[%c0_160, %c0_161, %c0_162] : memref<2x16x8xf32, #tpu.memory_space<vmem>>, vector<1x16x8xf32>
    %204 = vector.shape_cast %203 : vector<1x16x8xf32> to vector<16x8xf32>
    %cst_163 = arith.constant dense<0.000000e+00> : vector<4x8xf32>
    %205 = tpu.matmul %202, %204, %cst_163 {dimension_numbers = #tpu.dot_dimension_numbers<[1], [0], [0], [1], [0, 0, 1, 1], [], []>} : vector<4x16xf32>, vector<16x8xf32>, vector<4x8xf32> -> vector<4x8xf32>
    %c1_164 = arith.constant 1 : index
    %c0_165 = arith.constant 0 : index
    %c0_166 = arith.constant 0 : index
    %206 = vector.load %arg5[%c1_164, %c0_165, %c0_166] : memref<2x16x8xf32, #tpu.memory_space<vmem>>, vector<1x16x8xf32>
    %207 = vector.shape_cast %206 : vector<1x16x8xf32> to vector<16x8xf32>
    %cst_167 = arith.constant dense<0.000000e+00> : vector<4x8xf32>
    %208 = tpu.matmul %202, %207, %cst_167 {dimension_numbers = #tpu.dot_dimension_numbers<[1], [0], [0], [1], [0, 0, 1, 1], [], []>} : vector<4x16xf32>, vector<16x8xf32>, vector<4x8xf32> -> vector<4x8xf32>
    %209 = arith.maximumf %205, %208 : vector<4x8xf32>
    %c0_168 = arith.constant 0 : index
    %c0_169 = arith.constant 0 : index
    %c121 = arith.constant 121 : index
    %210 = vector.load %arg6[%c0_168, %c0_169, %c121] : memref<1x4x182xf32, #tpu.memory_space<vmem>>, vector<1x4x8xf32>
    %211 = vector.shape_cast %210 : vector<1x4x8xf32> to vector<4x8xf32>
    %212 = vector.shape_cast %209 : vector<4x8xf32> to vector<1x4x8xf32>
    tpu.vector_store %arg6[%c0_168, %c0_169, %c121], %212 {strides = array<i32>} : memref<1x4x182xf32, #tpu.memory_space<vmem>>, vector<1x4x8xf32>,
    %213 = vector.extract_strided_slice %52 {offsets = [0, 432], sizes = [4, 16], strides = [1, 1]} : vector<4x576xf32> to vector<4x16xf32>
    %214 = vector.extract_strided_slice %52 {offsets = [0, 450], sizes = [4, 16], strides = [1, 1]} : vector<4x576xf32> to vector<4x16xf32>
    %215 = arith.maximumf %213, %214 : vector<4x16xf32>
    %c0_170 = arith.constant 0 : index
    %c0_171 = arith.constant 0 : index
    %c0_172 = arith.constant 0 : index
    %216 = vector.load %arg5[%c0_170, %c0_171, %c0_172] : memref<2x16x8xf32, #tpu.memory_space<vmem>>, vector<1x16x8xf32>
    %217 = vector.shape_cast %216 : vector<1x16x8xf32> to vector<16x8xf32>
    %cst_173 = arith.constant dense<0.000000e+00> : vector<4x8xf32>
    %218 = tpu.matmul %215, %217, %cst_173 {dimension_numbers = #tpu.dot_dimension_numbers<[1], [0], [0], [1], [0, 0, 1, 1], [], []>} : vector<4x16xf32>, vector<16x8xf32>, vector<4x8xf32> -> vector<4x8xf32>
    %c1_174 = arith.constant 1 : index
    %c0_175 = arith.constant 0 : index
    %c0_176 = arith.constant 0 : index
    %219 = vector.load %arg5[%c1_174, %c0_175, %c0_176] : memref<2x16x8xf32, #tpu.memory_space<vmem>>, vector<1x16x8xf32>
    %220 = vector.shape_cast %219 : vector<1x16x8xf32> to vector<16x8xf32>
    %cst_177 = arith.constant dense<0.000000e+00> : vector<4x8xf32>
    %221 = tpu.matmul %215, %220, %cst_177 {dimension_numbers = #tpu.dot_dimension_numbers<[1], [0], [0], [1], [0, 0, 1, 1], [], []>} : vector<4x16xf32>, vector<16x8xf32>, vector<4x8xf32> -> vector<4x8xf32>
    %222 = arith.maximumf %218, %221 : vector<4x8xf32>
    %c0_178 = arith.constant 0 : index
    %c0_179 = arith.constant 0 : index
    %c131 = arith.constant 131 : index
    %223 = vector.load %arg6[%c0_178, %c0_179, %c131] : memref<1x4x182xf32, #tpu.memory_space<vmem>>, vector<1x4x8xf32>
    %224 = vector.shape_cast %223 : vector<1x4x8xf32> to vector<4x8xf32>
    %225 = vector.shape_cast %222 : vector<4x8xf32> to vector<1x4x8xf32>
    tpu.vector_store %arg6[%c0_178, %c0_179, %c131], %225 {strides = array<i32>} : memref<1x4x182xf32, #tpu.memory_space<vmem>>, vector<1x4x8xf32>,
    %226 = vector.extract_strided_slice %52 {offsets = [0, 468], sizes = [4, 16], strides = [1, 1]} : vector<4x576xf32> to vector<4x16xf32>
    %227 = vector.extract_strided_slice %52 {offsets = [0, 486], sizes = [4, 16], strides = [1, 1]} : vector<4x576xf32> to vector<4x16xf32>
    %228 = arith.maximumf %226, %227 : vector<4x16xf32>
    %c0_180 = arith.constant 0 : index
    %c0_181 = arith.constant 0 : index
    %c0_182 = arith.constant 0 : index
    %229 = vector.load %arg5[%c0_180, %c0_181, %c0_182] : memref<2x16x8xf32, #tpu.memory_space<vmem>>, vector<1x16x8xf32>
    %230 = vector.shape_cast %229 : vector<1x16x8xf32> to vector<16x8xf32>
    %cst_183 = arith.constant dense<0.000000e+00> : vector<4x8xf32>
    %231 = tpu.matmul %228, %230, %cst_183 {dimension_numbers = #tpu.dot_dimension_numbers<[1], [0], [0], [1], [0, 0, 1, 1], [], []>} : vector<4x16xf32>, vector<16x8xf32>, vector<4x8xf32> -> vector<4x8xf32>
    %c1_184 = arith.constant 1 : index
    %c0_185 = arith.constant 0 : index
    %c0_186 = arith.constant 0 : index
    %232 = vector.load %arg5[%c1_184, %c0_185, %c0_186] : memref<2x16x8xf32, #tpu.memory_space<vmem>>, vector<1x16x8xf32>
    %233 = vector.shape_cast %232 : vector<1x16x8xf32> to vector<16x8xf32>
    %cst_187 = arith.constant dense<0.000000e+00> : vector<4x8xf32>
    %234 = tpu.matmul %228, %233, %cst_187 {dimension_numbers = #tpu.dot_dimension_numbers<[1], [0], [0], [1], [0, 0, 1, 1], [], []>} : vector<4x16xf32>, vector<16x8xf32>, vector<4x8xf32> -> vector<4x8xf32>
    %235 = arith.maximumf %231, %234 : vector<4x8xf32>
    %c0_188 = arith.constant 0 : index
    %c0_189 = arith.constant 0 : index
    %c141 = arith.constant 141 : index
    %236 = vector.load %arg6[%c0_188, %c0_189, %c141] : memref<1x4x182xf32, #tpu.memory_space<vmem>>, vector<1x4x8xf32>
    %237 = vector.shape_cast %236 : vector<1x4x8xf32> to vector<4x8xf32>
    %238 = vector.shape_cast %235 : vector<4x8xf32> to vector<1x4x8xf32>
    tpu.vector_store %arg6[%c0_188, %c0_189, %c141], %238 {strides = array<i32>} : memref<1x4x182xf32, #tpu.memory_space<vmem>>, vector<1x4x8xf32>,
    %239 = vector.extract_strided_slice %52 {offsets = [0, 504], sizes = [4, 16], strides = [1, 1]} : vector<4x576xf32> to vector<4x16xf32>
    %240 = vector.extract_strided_slice %52 {offsets = [0, 522], sizes = [4, 16], strides = [1, 1]} : vector<4x576xf32> to vector<4x16xf32>
    %241 = arith.maximumf %239, %240 : vector<4x16xf32>
    %c0_190 = arith.constant 0 : index
    %c0_191 = arith.constant 0 : index
    %c0_192 = arith.constant 0 : index
    %242 = vector.load %arg5[%c0_190, %c0_191, %c0_192] : memref<2x16x8xf32, #tpu.memory_space<vmem>>, vector<1x16x8xf32>
    %243 = vector.shape_cast %242 : vector<1x16x8xf32> to vector<16x8xf32>
    %cst_193 = arith.constant dense<0.000000e+00> : vector<4x8xf32>
    %244 = tpu.matmul %241, %243, %cst_193 {dimension_numbers = #tpu.dot_dimension_numbers<[1], [0], [0], [1], [0, 0, 1, 1], [], []>} : vector<4x16xf32>, vector<16x8xf32>, vector<4x8xf32> -> vector<4x8xf32>
    %c1_194 = arith.constant 1 : index
    %c0_195 = arith.constant 0 : index
    %c0_196 = arith.constant 0 : index
    %245 = vector.load %arg5[%c1_194, %c0_195, %c0_196] : memref<2x16x8xf32, #tpu.memory_space<vmem>>, vector<1x16x8xf32>
    %246 = vector.shape_cast %245 : vector<1x16x8xf32> to vector<16x8xf32>
    %cst_197 = arith.constant dense<0.000000e+00> : vector<4x8xf32>
    %247 = tpu.matmul %241, %246, %cst_197 {dimension_numbers = #tpu.dot_dimension_numbers<[1], [0], [0], [1], [0, 0, 1, 1], [], []>} : vector<4x16xf32>, vector<16x8xf32>, vector<4x8xf32> -> vector<4x8xf32>
    %248 = arith.maximumf %244, %247 : vector<4x8xf32>
    %c0_198 = arith.constant 0 : index
    %c0_199 = arith.constant 0 : index
    %c151 = arith.constant 151 : index
    %249 = vector.load %arg6[%c0_198, %c0_199, %c151] : memref<1x4x182xf32, #tpu.memory_space<vmem>>, vector<1x4x8xf32>
    %250 = vector.shape_cast %249 : vector<1x4x8xf32> to vector<4x8xf32>
    %251 = vector.shape_cast %248 : vector<4x8xf32> to vector<1x4x8xf32>
    tpu.vector_store %arg6[%c0_198, %c0_199, %c151], %251 {strides = array<i32>} : memref<1x4x182xf32, #tpu.memory_space<vmem>>, vector<1x4x8xf32>,
    %252 = vector.extract_strided_slice %52 {offsets = [0, 540], sizes = [4, 16], strides = [1, 1]} : vector<4x576xf32> to vector<4x16xf32>
    %253 = vector.extract_strided_slice %52 {offsets = [0, 558], sizes = [4, 16], strides = [1, 1]} : vector<4x576xf32> to vector<4x16xf32>
    %254 = arith.maximumf %252, %253 : vector<4x16xf32>
    %c0_200 = arith.constant 0 : index
    %c0_201 = arith.constant 0 : index
    %c0_202 = arith.constant 0 : index
    %255 = vector.load %arg5[%c0_200, %c0_201, %c0_202] : memref<2x16x8xf32, #tpu.memory_space<vmem>>, vector<1x16x8xf32>
    %256 = vector.shape_cast %255 : vector<1x16x8xf32> to vector<16x8xf32>
    %cst_203 = arith.constant dense<0.000000e+00> : vector<4x8xf32>
    %257 = tpu.matmul %254, %256, %cst_203 {dimension_numbers = #tpu.dot_dimension_numbers<[1], [0], [0], [1], [0, 0, 1, 1], [], []>} : vector<4x16xf32>, vector<16x8xf32>, vector<4x8xf32> -> vector<4x8xf32>
    %c1_204 = arith.constant 1 : index
    %c0_205 = arith.constant 0 : index
    %c0_206 = arith.constant 0 : index
    %258 = vector.load %arg5[%c1_204, %c0_205, %c0_206] : memref<2x16x8xf32, #tpu.memory_space<vmem>>, vector<1x16x8xf32>
    %259 = vector.shape_cast %258 : vector<1x16x8xf32> to vector<16x8xf32>
    %cst_207 = arith.constant dense<0.000000e+00> : vector<4x8xf32>
    %260 = tpu.matmul %254, %259, %cst_207 {dimension_numbers = #tpu.dot_dimension_numbers<[1], [0], [0], [1], [0, 0, 1, 1], [], []>} : vector<4x16xf32>, vector<16x8xf32>, vector<4x8xf32> -> vector<4x8xf32>
    %261 = arith.maximumf %257, %260 : vector<4x8xf32>
    %c0_208 = arith.constant 0 : index
    %c0_209 = arith.constant 0 : index
    %c161 = arith.constant 161 : index
    %262 = vector.load %arg6[%c0_208, %c0_209, %c161] : memref<1x4x182xf32, #tpu.memory_space<vmem>>, vector<1x4x8xf32>
    %263 = vector.shape_cast %262 : vector<1x4x8xf32> to vector<4x8xf32>
    %264 = vector.shape_cast %261 : vector<4x8xf32> to vector<1x4x8xf32>
    tpu.vector_store %arg6[%c0_208, %c0_209, %c161], %264 {strides = array<i32>} : memref<1x4x182xf32, #tpu.memory_space<vmem>>, vector<1x4x8xf32>,
    return
  }
  func.func @transform_0(%arg0: i32, %arg1: i32) -> (i32, i32, i32) {
    %c0_i32 = arith.constant 0 : i32
    %c0_i32_0 = arith.constant 0 : i32
    %c0_i32_1 = arith.constant 0 : i32
    return %arg0, %c0_i32, %c0_i32_0 : i32, i32, i32
  }
  func.func @transform_1(%arg0: i32, %arg1: i32) -> (i32, i32, i32) {
    %c0_i32 = arith.constant 0 : i32
    %c0_i32_0 = arith.constant 0 : i32
    %c0_i32_1 = arith.constant 0 : i32
    return %c0_i32, %arg1, %c0_i32_0 : i32, i32, i32
  }
  func.func @transform_2(%arg0: i32, %arg1: i32) -> (i32, i32) {
    %c0_i32 = arith.constant 0 : i32
    %c0_i32_0 = arith.constant 0 : i32
    return %arg1, %c0_i32 : i32, i32
  }
  func.func @transform_3(%arg0: i32, %arg1: i32) -> (i32, i32, i32) {
    %c0_i32 = arith.constant 0 : i32
    %c0_i32_0 = arith.constant 0 : i32
    %c0_i32_1 = arith.constant 0 : i32
    %c0_i32_2 = arith.constant 0 : i32
    return %c0_i32, %c0_i32_0, %c0_i32_1 : i32, i32, i32
  }
  func.func @transform_4(%arg0: i32, %arg1: i32) -> (i32, i32, i32) {
    %c0_i32 = arith.constant 0 : i32
    %c0_i32_0 = arith.constant 0 : i32
    return %arg0, %arg1, %c0_i32 : i32, i32, i32
  }
}

module attributes {stable_mosaic.version = 11 : i64} {
  func.func @_conv_kernel(%arg0: i32, %arg1: i32, %arg2: memref<1x8x62xf32, #tpu.memory_space<vmem>>, %arg3: memref<9x16x8xbf16, #tpu.memory_space<vmem>>, %arg4: memref<16x1xf32, #tpu.memory_space<vmem>>, %arg5: memref<1x16x62xf32, #tpu.memory_space<vmem>>, %arg6: memref<8x62xbf16, #tpu.memory_space<vmem>>) attributes {dimension_semantics = [#tpu.dimension_semantics<parallel>, #tpu.dimension_semantics<parallel>], iteration_bounds = array<i64: 2, 1>, scalar_prefetch = 0 : i64, scratch_operands = 1 : i64, tpu.core_type = #tpu.core_type<tc>, window_params = [{transform_indices = @transform_0, window_bounds = array<i64: 1, 8, 62>}, {transform_indices = @transform_1, window_bounds = array<i64: 9, 16, 8>}, {transform_indices = @transform_2, window_bounds = array<i64: 16, 1>}, {transform_indices = @transform_3, window_bounds = array<i64: 1, 16, 62>}]} {
    %c0 = arith.constant 0 : index
    %c0_0 = arith.constant 0 : index
    %c0_1 = arith.constant 0 : index
    %0 = vector.load %arg2[%c0, %c0_0, %c0_1] : memref<1x8x62xf32, #tpu.memory_space<vmem>>, vector<1x8x62xf32>
    %1 = vector.shape_cast %0 : vector<1x8x62xf32> to vector<8x62xf32>
    %2 = arith.truncf %1 : vector<8x62xf32> to vector<8x62xbf16>
    %c0_2 = arith.constant 0 : index
    %c0_3 = arith.constant 0 : index
    %3 = vector.load %arg6[%c0_2, %c0_3] : memref<8x62xbf16, #tpu.memory_space<vmem>>, vector<8x62xbf16>
    tpu.vector_store %arg6[%c0_2, %c0_3], %2 {strides = array<i32>} : memref<8x62xbf16, #tpu.memory_space<vmem>>, vector<8x62xbf16>,
    %c0_4 = arith.constant 0 : index
    %c0_5 = arith.constant 0 : index
    %4 = vector.load %arg6[%c0_4, %c0_5] : memref<8x62xbf16, #tpu.memory_space<vmem>>, vector<8x48xbf16>
    %c0_6 = arith.constant 0 : index
    %c0_7 = arith.constant 0 : index
    %c0_8 = arith.constant 0 : index
    %5 = vector.load %arg3[%c0_6, %c0_7, %c0_8] : memref<9x16x8xbf16, #tpu.memory_space<vmem>>, vector<1x16x8xbf16>
    %6 = vector.shape_cast %5 : vector<1x16x8xbf16> to vector<16x8xbf16>
    %cst = arith.constant dense<0.000000e+00> : vector<16x48xf32>
    %7 = tpu.matmul %6, %4, %cst {dimension_numbers = #tpu.dot_dimension_numbers<[1], [0], [0], [1], [0, 0, 1, 1], [], []>} : vector<16x8xbf16>, vector<8x48xbf16>, vector<16x48xf32> -> vector<16x48xf32>
    %c0_9 = arith.constant 0 : index
    %c1 = arith.constant 1 : index
    %8 = vector.load %arg6[%c0_9, %c1] : memref<8x62xbf16, #tpu.memory_space<vmem>>, vector<8x48xbf16>
    %c1_10 = arith.constant 1 : index
    %c0_11 = arith.constant 0 : index
    %c0_12 = arith.constant 0 : index
    %9 = vector.load %arg3[%c1_10, %c0_11, %c0_12] : memref<9x16x8xbf16, #tpu.memory_space<vmem>>, vector<1x16x8xbf16>
    %10 = vector.shape_cast %9 : vector<1x16x8xbf16> to vector<16x8xbf16>
    %cst_13 = arith.constant dense<0.000000e+00> : vector<16x48xf32>
    %11 = tpu.matmul %10, %8, %cst_13 {dimension_numbers = #tpu.dot_dimension_numbers<[1], [0], [0], [1], [0, 0, 1, 1], [], []>} : vector<16x8xbf16>, vector<8x48xbf16>, vector<16x48xf32> -> vector<16x48xf32>
    %12 = arith.addf %7, %11 : vector<16x48xf32>
    %c0_14 = arith.constant 0 : index
    %c2 = arith.constant 2 : index
    %13 = vector.load %arg6[%c0_14, %c2] : memref<8x62xbf16, #tpu.memory_space<vmem>>, vector<8x48xbf16>
    %c2_15 = arith.constant 2 : index
    %c0_16 = arith.constant 0 : index
    %c0_17 = arith.constant 0 : index
    %14 = vector.load %arg3[%c2_15, %c0_16, %c0_17] : memref<9x16x8xbf16, #tpu.memory_space<vmem>>, vector<1x16x8xbf16>
    %15 = vector.shape_cast %14 : vector<1x16x8xbf16> to vector<16x8xbf16>
    %cst_18 = arith.constant dense<0.000000e+00> : vector<16x48xf32>
    %16 = tpu.matmul %15, %13, %cst_18 {dimension_numbers = #tpu.dot_dimension_numbers<[1], [0], [0], [1], [0, 0, 1, 1], [], []>} : vector<16x8xbf16>, vector<8x48xbf16>, vector<16x48xf32> -> vector<16x48xf32>
    %17 = arith.addf %12, %16 : vector<16x48xf32>
    %c0_19 = arith.constant 0 : index
    %c6 = arith.constant 6 : index
    %18 = vector.load %arg6[%c0_19, %c6] : memref<8x62xbf16, #tpu.memory_space<vmem>>, vector<8x48xbf16>
    %c3 = arith.constant 3 : index
    %c0_20 = arith.constant 0 : index
    %c0_21 = arith.constant 0 : index
    %19 = vector.load %arg3[%c3, %c0_20, %c0_21] : memref<9x16x8xbf16, #tpu.memory_space<vmem>>, vector<1x16x8xbf16>
    %20 = vector.shape_cast %19 : vector<1x16x8xbf16> to vector<16x8xbf16>
    %cst_22 = arith.constant dense<0.000000e+00> : vector<16x48xf32>
    %21 = tpu.matmul %20, %18, %cst_22 {dimension_numbers = #tpu.dot_dimension_numbers<[1], [0], [0], [1], [0, 0, 1, 1], [], []>} : vector<16x8xbf16>, vector<8x48xbf16>, vector<16x48xf32> -> vector<16x48xf32>
    %22 = arith.addf %17, %21 : vector<16x48xf32>
    %c0_23 = arith.constant 0 : index
    %c7 = arith.constant 7 : index
    %23 = vector.load %arg6[%c0_23, %c7] : memref<8x62xbf16, #tpu.memory_space<vmem>>, vector<8x48xbf16>
    %c4 = arith.constant 4 : index
    %c0_24 = arith.constant 0 : index
    %c0_25 = arith.constant 0 : index
    %24 = vector.load %arg3[%c4, %c0_24, %c0_25] : memref<9x16x8xbf16, #tpu.memory_space<vmem>>, vector<1x16x8xbf16>
    %25 = vector.shape_cast %24 : vector<1x16x8xbf16> to vector<16x8xbf16>
    %cst_26 = arith.constant dense<0.000000e+00> : vector<16x48xf32>
    %26 = tpu.matmul %25, %23, %cst_26 {dimension_numbers = #tpu.dot_dimension_numbers<[1], [0], [0], [1], [0, 0, 1, 1], [], []>} : vector<16x8xbf16>, vector<8x48xbf16>, vector<16x48xf32> -> vector<16x48xf32>
    %27 = arith.addf %22, %26 : vector<16x48xf32>
    %c0_27 = arith.constant 0 : index
    %c8 = arith.constant 8 : index
    %28 = vector.load %arg6[%c0_27, %c8] : memref<8x62xbf16, #tpu.memory_space<vmem>>, vector<8x48xbf16>
    %c5 = arith.constant 5 : index
    %c0_28 = arith.constant 0 : index
    %c0_29 = arith.constant 0 : index
    %29 = vector.load %arg3[%c5, %c0_28, %c0_29] : memref<9x16x8xbf16, #tpu.memory_space<vmem>>, vector<1x16x8xbf16>
    %30 = vector.shape_cast %29 : vector<1x16x8xbf16> to vector<16x8xbf16>
    %cst_30 = arith.constant dense<0.000000e+00> : vector<16x48xf32>
    %31 = tpu.matmul %30, %28, %cst_30 {dimension_numbers = #tpu.dot_dimension_numbers<[1], [0], [0], [1], [0, 0, 1, 1], [], []>} : vector<16x8xbf16>, vector<8x48xbf16>, vector<16x48xf32> -> vector<16x48xf32>
    %32 = arith.addf %27, %31 : vector<16x48xf32>
    %c0_31 = arith.constant 0 : index
    %c12 = arith.constant 12 : index
    %33 = vector.load %arg6[%c0_31, %c12] : memref<8x62xbf16, #tpu.memory_space<vmem>>, vector<8x48xbf16>
    %c6_32 = arith.constant 6 : index
    %c0_33 = arith.constant 0 : index
    %c0_34 = arith.constant 0 : index
    %34 = vector.load %arg3[%c6_32, %c0_33, %c0_34] : memref<9x16x8xbf16, #tpu.memory_space<vmem>>, vector<1x16x8xbf16>
    %35 = vector.shape_cast %34 : vector<1x16x8xbf16> to vector<16x8xbf16>
    %cst_35 = arith.constant dense<0.000000e+00> : vector<16x48xf32>
    %36 = tpu.matmul %35, %33, %cst_35 {dimension_numbers = #tpu.dot_dimension_numbers<[1], [0], [0], [1], [0, 0, 1, 1], [], []>} : vector<16x8xbf16>, vector<8x48xbf16>, vector<16x48xf32> -> vector<16x48xf32>
    %37 = arith.addf %32, %36 : vector<16x48xf32>
    %c0_36 = arith.constant 0 : index
    %c13 = arith.constant 13 : index
    %38 = vector.load %arg6[%c0_36, %c13] : memref<8x62xbf16, #tpu.memory_space<vmem>>, vector<8x48xbf16>
    %c7_37 = arith.constant 7 : index
    %c0_38 = arith.constant 0 : index
    %c0_39 = arith.constant 0 : index
    %39 = vector.load %arg3[%c7_37, %c0_38, %c0_39] : memref<9x16x8xbf16, #tpu.memory_space<vmem>>, vector<1x16x8xbf16>
    %40 = vector.shape_cast %39 : vector<1x16x8xbf16> to vector<16x8xbf16>
    %cst_40 = arith.constant dense<0.000000e+00> : vector<16x48xf32>
    %41 = tpu.matmul %40, %38, %cst_40 {dimension_numbers = #tpu.dot_dimension_numbers<[1], [0], [0], [1], [0, 0, 1, 1], [], []>} : vector<16x8xbf16>, vector<8x48xbf16>, vector<16x48xf32> -> vector<16x48xf32>
    %42 = arith.addf %37, %41 : vector<16x48xf32>
    %c0_41 = arith.constant 0 : index
    %c14 = arith.constant 14 : index
    %43 = vector.load %arg6[%c0_41, %c14] : memref<8x62xbf16, #tpu.memory_space<vmem>>, vector<8x48xbf16>
    %c8_42 = arith.constant 8 : index
    %c0_43 = arith.constant 0 : index
    %c0_44 = arith.constant 0 : index
    %44 = vector.load %arg3[%c8_42, %c0_43, %c0_44] : memref<9x16x8xbf16, #tpu.memory_space<vmem>>, vector<1x16x8xbf16>
    %45 = vector.shape_cast %44 : vector<1x16x8xbf16> to vector<16x8xbf16>
    %cst_45 = arith.constant dense<0.000000e+00> : vector<16x48xf32>
    %46 = tpu.matmul %45, %43, %cst_45 {dimension_numbers = #tpu.dot_dimension_numbers<[1], [0], [0], [1], [0, 0, 1, 1], [], []>} : vector<16x8xbf16>, vector<8x48xbf16>, vector<16x48xf32> -> vector<16x48xf32>
    %47 = arith.addf %42, %46 : vector<16x48xf32>
    %c0_46 = arith.constant 0 : index
    %c0_47 = arith.constant 0 : index
    %48 = vector.load %arg4[%c0_46, %c0_47] : memref<16x1xf32, #tpu.memory_space<vmem>>, vector<16x1xf32>
    %49 = vector.broadcast %48 : vector<16x1xf32> to vector<16x48xf32>
    %50 = arith.addf %47, %49 : vector<16x48xf32>
    %cst_48 = arith.constant 0.000000e+00 : f32
    %51 = vector.broadcast %cst_48 : f32 to vector<16x48xf32>
    %52 = arith.maximumf %50, %51 : vector<16x48xf32>
    %cst_49 = arith.constant 0.000000e+00 : f32
    %53 = vector.broadcast %cst_49 : f32 to vector<16x62xf32>
    %c0_50 = arith.constant 0 : index
    %c0_51 = arith.constant 0 : index
    %c0_52 = arith.constant 0 : index
    %54 = vector.load %arg5[%c0_50, %c0_51, %c0_52] : memref<1x16x62xf32, #tpu.memory_space<vmem>>, vector<1x16x62xf32>
    %55 = vector.shape_cast %54 : vector<1x16x62xf32> to vector<16x62xf32>
    %56 = vector.shape_cast %53 : vector<16x62xf32> to vector<1x16x62xf32>
    tpu.vector_store %arg5[%c0_50, %c0_51, %c0_52], %56 {strides = array<i32>} : memref<1x16x62xf32, #tpu.memory_space<vmem>>, vector<1x16x62xf32>,
    %57 = vector.extract_strided_slice %52 {offsets = [0, 0], sizes = [16, 4], strides = [1, 1]} : vector<16x48xf32> to vector<16x4xf32>
    %c0_53 = arith.constant 0 : index
    %c0_54 = arith.constant 0 : index
    %c7_55 = arith.constant 7 : index
    %58 = vector.load %arg5[%c0_53, %c0_54, %c7_55] : memref<1x16x62xf32, #tpu.memory_space<vmem>>, vector<1x16x4xf32>
    %59 = vector.shape_cast %58 : vector<1x16x4xf32> to vector<16x4xf32>
    %60 = vector.shape_cast %57 : vector<16x4xf32> to vector<1x16x4xf32>
    tpu.vector_store %arg5[%c0_53, %c0_54, %c7_55], %60 {strides = array<i32>} : memref<1x16x62xf32, #tpu.memory_space<vmem>>, vector<1x16x4xf32>,
    %61 = vector.extract_strided_slice %52 {offsets = [0, 6], sizes = [16, 4], strides = [1, 1]} : vector<16x48xf32> to vector<16x4xf32>
    %c0_56 = arith.constant 0 : index
    %c0_57 = arith.constant 0 : index
    %c13_58 = arith.constant 13 : index
    %62 = vector.load %arg5[%c0_56, %c0_57, %c13_58] : memref<1x16x62xf32, #tpu.memory_space<vmem>>, vector<1x16x4xf32>
    %63 = vector.shape_cast %62 : vector<1x16x4xf32> to vector<16x4xf32>
    %64 = vector.shape_cast %61 : vector<16x4xf32> to vector<1x16x4xf32>
    tpu.vector_store %arg5[%c0_56, %c0_57, %c13_58], %64 {strides = array<i32>} : memref<1x16x62xf32, #tpu.memory_space<vmem>>, vector<1x16x4xf32>,
    %65 = vector.extract_strided_slice %52 {offsets = [0, 12], sizes = [16, 4], strides = [1, 1]} : vector<16x48xf32> to vector<16x4xf32>
    %c0_59 = arith.constant 0 : index
    %c0_60 = arith.constant 0 : index
    %c19 = arith.constant 19 : index
    %66 = vector.load %arg5[%c0_59, %c0_60, %c19] : memref<1x16x62xf32, #tpu.memory_space<vmem>>, vector<1x16x4xf32>
    %67 = vector.shape_cast %66 : vector<1x16x4xf32> to vector<16x4xf32>
    %68 = vector.shape_cast %65 : vector<16x4xf32> to vector<1x16x4xf32>
    tpu.vector_store %arg5[%c0_59, %c0_60, %c19], %68 {strides = array<i32>} : memref<1x16x62xf32, #tpu.memory_space<vmem>>, vector<1x16x4xf32>,
    %69 = vector.extract_strided_slice %52 {offsets = [0, 18], sizes = [16, 4], strides = [1, 1]} : vector<16x48xf32> to vector<16x4xf32>
    %c0_61 = arith.constant 0 : index
    %c0_62 = arith.constant 0 : index
    %c25 = arith.constant 25 : index
    %70 = vector.load %arg5[%c0_61, %c0_62, %c25] : memref<1x16x62xf32, #tpu.memory_space<vmem>>, vector<1x16x4xf32>
    %71 = vector.shape_cast %70 : vector<1x16x4xf32> to vector<16x4xf32>
    %72 = vector.shape_cast %69 : vector<16x4xf32> to vector<1x16x4xf32>
    tpu.vector_store %arg5[%c0_61, %c0_62, %c25], %72 {strides = array<i32>} : memref<1x16x62xf32, #tpu.memory_space<vmem>>, vector<1x16x4xf32>,
    %73 = vector.extract_strided_slice %52 {offsets = [0, 24], sizes = [16, 4], strides = [1, 1]} : vector<16x48xf32> to vector<16x4xf32>
    %c0_63 = arith.constant 0 : index
    %c0_64 = arith.constant 0 : index
    %c31 = arith.constant 31 : index
    %74 = vector.load %arg5[%c0_63, %c0_64, %c31] : memref<1x16x62xf32, #tpu.memory_space<vmem>>, vector<1x16x4xf32>
    %75 = vector.shape_cast %74 : vector<1x16x4xf32> to vector<16x4xf32>
    %76 = vector.shape_cast %73 : vector<16x4xf32> to vector<1x16x4xf32>
    tpu.vector_store %arg5[%c0_63, %c0_64, %c31], %76 {strides = array<i32>} : memref<1x16x62xf32, #tpu.memory_space<vmem>>, vector<1x16x4xf32>,
    %77 = vector.extract_strided_slice %52 {offsets = [0, 30], sizes = [16, 4], strides = [1, 1]} : vector<16x48xf32> to vector<16x4xf32>
    %c0_65 = arith.constant 0 : index
    %c0_66 = arith.constant 0 : index
    %c37 = arith.constant 37 : index
    %78 = vector.load %arg5[%c0_65, %c0_66, %c37] : memref<1x16x62xf32, #tpu.memory_space<vmem>>, vector<1x16x4xf32>
    %79 = vector.shape_cast %78 : vector<1x16x4xf32> to vector<16x4xf32>
    %80 = vector.shape_cast %77 : vector<16x4xf32> to vector<1x16x4xf32>
    tpu.vector_store %arg5[%c0_65, %c0_66, %c37], %80 {strides = array<i32>} : memref<1x16x62xf32, #tpu.memory_space<vmem>>, vector<1x16x4xf32>,
    %81 = vector.extract_strided_slice %52 {offsets = [0, 36], sizes = [16, 4], strides = [1, 1]} : vector<16x48xf32> to vector<16x4xf32>
    %c0_67 = arith.constant 0 : index
    %c0_68 = arith.constant 0 : index
    %c43 = arith.constant 43 : index
    %82 = vector.load %arg5[%c0_67, %c0_68, %c43] : memref<1x16x62xf32, #tpu.memory_space<vmem>>, vector<1x16x4xf32>
    %83 = vector.shape_cast %82 : vector<1x16x4xf32> to vector<16x4xf32>
    %84 = vector.shape_cast %81 : vector<16x4xf32> to vector<1x16x4xf32>
    tpu.vector_store %arg5[%c0_67, %c0_68, %c43], %84 {strides = array<i32>} : memref<1x16x62xf32, #tpu.memory_space<vmem>>, vector<1x16x4xf32>,
    %85 = vector.extract_strided_slice %52 {offsets = [0, 42], sizes = [16, 4], strides = [1, 1]} : vector<16x48xf32> to vector<16x4xf32>
    %c0_69 = arith.constant 0 : index
    %c0_70 = arith.constant 0 : index
    %c49 = arith.constant 49 : index
    %86 = vector.load %arg5[%c0_69, %c0_70, %c49] : memref<1x16x62xf32, #tpu.memory_space<vmem>>, vector<1x16x4xf32>
    %87 = vector.shape_cast %86 : vector<1x16x4xf32> to vector<16x4xf32>
    %88 = vector.shape_cast %85 : vector<16x4xf32> to vector<1x16x4xf32>
    tpu.vector_store %arg5[%c0_69, %c0_70, %c49], %88 {strides = array<i32>} : memref<1x16x62xf32, #tpu.memory_space<vmem>>, vector<1x16x4xf32>,
    return
  }
  func.func @transform_0(%arg0: i32, %arg1: i32) -> (i32, i32, i32) {
    %c0_i32 = arith.constant 0 : i32
    %c0_i32_0 = arith.constant 0 : i32
    %c0_i32_1 = arith.constant 0 : i32
    return %arg0, %c0_i32, %c0_i32_0 : i32, i32, i32
  }
  func.func @transform_1(%arg0: i32, %arg1: i32) -> (i32, i32, i32) {
    %c0_i32 = arith.constant 0 : i32
    %c0_i32_0 = arith.constant 0 : i32
    %c0_i32_1 = arith.constant 0 : i32
    return %c0_i32, %arg1, %c0_i32_0 : i32, i32, i32
  }
  func.func @transform_2(%arg0: i32, %arg1: i32) -> (i32, i32) {
    %c0_i32 = arith.constant 0 : i32
    %c0_i32_0 = arith.constant 0 : i32
    return %arg1, %c0_i32 : i32, i32
  }
  func.func @transform_3(%arg0: i32, %arg1: i32) -> (i32, i32, i32) {
    %c0_i32 = arith.constant 0 : i32
    %c0_i32_0 = arith.constant 0 : i32
    return %arg0, %arg1, %c0_i32 : i32, i32, i32
  }
}

module attributes {stable_mosaic.version = 11 : i64} {
  func.func @_conv_kernel(%arg0: i32, %arg1: i32, %arg2: memref<1x16x62xf32, #tpu.memory_space<vmem>>, %arg3: memref<9x16x16xbf16, #tpu.memory_space<vmem>>, %arg4: memref<16x1xf32, #tpu.memory_space<vmem>>, %arg5: memref<1x16x38xf32, #tpu.memory_space<vmem>>, %arg6: memref<16x62xbf16, #tpu.memory_space<vmem>>) attributes {dimension_semantics = [#tpu.dimension_semantics<parallel>, #tpu.dimension_semantics<parallel>], iteration_bounds = array<i64: 2, 1>, scalar_prefetch = 0 : i64, scratch_operands = 1 : i64, tpu.core_type = #tpu.core_type<tc>, window_params = [{transform_indices = @transform_0, window_bounds = array<i64: 1, 16, 62>}, {transform_indices = @transform_1, window_bounds = array<i64: 9, 16, 16>}, {transform_indices = @transform_2, window_bounds = array<i64: 16, 1>}, {transform_indices = @transform_3, window_bounds = array<i64: 1, 16, 38>}]} {
    %c0 = arith.constant 0 : index
    %c0_0 = arith.constant 0 : index
    %c0_1 = arith.constant 0 : index
    %0 = vector.load %arg2[%c0, %c0_0, %c0_1] : memref<1x16x62xf32, #tpu.memory_space<vmem>>, vector<1x16x62xf32>
    %1 = vector.shape_cast %0 : vector<1x16x62xf32> to vector<16x62xf32>
    %2 = arith.truncf %1 : vector<16x62xf32> to vector<16x62xbf16>
    %c0_2 = arith.constant 0 : index
    %c0_3 = arith.constant 0 : index
    %3 = vector.load %arg6[%c0_2, %c0_3] : memref<16x62xbf16, #tpu.memory_space<vmem>>, vector<16x62xbf16>
    tpu.vector_store %arg6[%c0_2, %c0_3], %2 {strides = array<i32>} : memref<16x62xbf16, #tpu.memory_space<vmem>>, vector<16x62xbf16>,
    %c0_4 = arith.constant 0 : index
    %c0_5 = arith.constant 0 : index
    %4 = vector.load %arg6[%c0_4, %c0_5] : memref<16x62xbf16, #tpu.memory_space<vmem>>, vector<16x48xbf16>
    %c0_6 = arith.constant 0 : index
    %c0_7 = arith.constant 0 : index
    %c0_8 = arith.constant 0 : index
    %5 = vector.load %arg3[%c0_6, %c0_7, %c0_8] : memref<9x16x16xbf16, #tpu.memory_space<vmem>>, vector<1x16x16xbf16>
    %6 = vector.shape_cast %5 : vector<1x16x16xbf16> to vector<16x16xbf16>
    %cst = arith.constant dense<0.000000e+00> : vector<16x48xf32>
    %7 = tpu.matmul %6, %4, %cst {dimension_numbers = #tpu.dot_dimension_numbers<[1], [0], [0], [1], [0, 0, 1, 1], [], []>} : vector<16x16xbf16>, vector<16x48xbf16>, vector<16x48xf32> -> vector<16x48xf32>
    %c0_9 = arith.constant 0 : index
    %c1 = arith.constant 1 : index
    %8 = vector.load %arg6[%c0_9, %c1] : memref<16x62xbf16, #tpu.memory_space<vmem>>, vector<16x48xbf16>
    %c1_10 = arith.constant 1 : index
    %c0_11 = arith.constant 0 : index
    %c0_12 = arith.constant 0 : index
    %9 = vector.load %arg3[%c1_10, %c0_11, %c0_12] : memref<9x16x16xbf16, #tpu.memory_space<vmem>>, vector<1x16x16xbf16>
    %10 = vector.shape_cast %9 : vector<1x16x16xbf16> to vector<16x16xbf16>
    %cst_13 = arith.constant dense<0.000000e+00> : vector<16x48xf32>
    %11 = tpu.matmul %10, %8, %cst_13 {dimension_numbers = #tpu.dot_dimension_numbers<[1], [0], [0], [1], [0, 0, 1, 1], [], []>} : vector<16x16xbf16>, vector<16x48xbf16>, vector<16x48xf32> -> vector<16x48xf32>
    %12 = arith.addf %7, %11 : vector<16x48xf32>
    %c0_14 = arith.constant 0 : index
    %c2 = arith.constant 2 : index
    %13 = vector.load %arg6[%c0_14, %c2] : memref<16x62xbf16, #tpu.memory_space<vmem>>, vector<16x48xbf16>
    %c2_15 = arith.constant 2 : index
    %c0_16 = arith.constant 0 : index
    %c0_17 = arith.constant 0 : index
    %14 = vector.load %arg3[%c2_15, %c0_16, %c0_17] : memref<9x16x16xbf16, #tpu.memory_space<vmem>>, vector<1x16x16xbf16>
    %15 = vector.shape_cast %14 : vector<1x16x16xbf16> to vector<16x16xbf16>
    %cst_18 = arith.constant dense<0.000000e+00> : vector<16x48xf32>
    %16 = tpu.matmul %15, %13, %cst_18 {dimension_numbers = #tpu.dot_dimension_numbers<[1], [0], [0], [1], [0, 0, 1, 1], [], []>} : vector<16x16xbf16>, vector<16x48xbf16>, vector<16x48xf32> -> vector<16x48xf32>
    %17 = arith.addf %12, %16 : vector<16x48xf32>
    %c0_19 = arith.constant 0 : index
    %c6 = arith.constant 6 : index
    %18 = vector.load %arg6[%c0_19, %c6] : memref<16x62xbf16, #tpu.memory_space<vmem>>, vector<16x48xbf16>
    %c3 = arith.constant 3 : index
    %c0_20 = arith.constant 0 : index
    %c0_21 = arith.constant 0 : index
    %19 = vector.load %arg3[%c3, %c0_20, %c0_21] : memref<9x16x16xbf16, #tpu.memory_space<vmem>>, vector<1x16x16xbf16>
    %20 = vector.shape_cast %19 : vector<1x16x16xbf16> to vector<16x16xbf16>
    %cst_22 = arith.constant dense<0.000000e+00> : vector<16x48xf32>
    %21 = tpu.matmul %20, %18, %cst_22 {dimension_numbers = #tpu.dot_dimension_numbers<[1], [0], [0], [1], [0, 0, 1, 1], [], []>} : vector<16x16xbf16>, vector<16x48xbf16>, vector<16x48xf32> -> vector<16x48xf32>
    %22 = arith.addf %17, %21 : vector<16x48xf32>
    %c0_23 = arith.constant 0 : index
    %c7 = arith.constant 7 : index
    %23 = vector.load %arg6[%c0_23, %c7] : memref<16x62xbf16, #tpu.memory_space<vmem>>, vector<16x48xbf16>
    %c4 = arith.constant 4 : index
    %c0_24 = arith.constant 0 : index
    %c0_25 = arith.constant 0 : index
    %24 = vector.load %arg3[%c4, %c0_24, %c0_25] : memref<9x16x16xbf16, #tpu.memory_space<vmem>>, vector<1x16x16xbf16>
    %25 = vector.shape_cast %24 : vector<1x16x16xbf16> to vector<16x16xbf16>
    %cst_26 = arith.constant dense<0.000000e+00> : vector<16x48xf32>
    %26 = tpu.matmul %25, %23, %cst_26 {dimension_numbers = #tpu.dot_dimension_numbers<[1], [0], [0], [1], [0, 0, 1, 1], [], []>} : vector<16x16xbf16>, vector<16x48xbf16>, vector<16x48xf32> -> vector<16x48xf32>
    %27 = arith.addf %22, %26 : vector<16x48xf32>
    %c0_27 = arith.constant 0 : index
    %c8 = arith.constant 8 : index
    %28 = vector.load %arg6[%c0_27, %c8] : memref<16x62xbf16, #tpu.memory_space<vmem>>, vector<16x48xbf16>
    %c5 = arith.constant 5 : index
    %c0_28 = arith.constant 0 : index
    %c0_29 = arith.constant 0 : index
    %29 = vector.load %arg3[%c5, %c0_28, %c0_29] : memref<9x16x16xbf16, #tpu.memory_space<vmem>>, vector<1x16x16xbf16>
    %30 = vector.shape_cast %29 : vector<1x16x16xbf16> to vector<16x16xbf16>
    %cst_30 = arith.constant dense<0.000000e+00> : vector<16x48xf32>
    %31 = tpu.matmul %30, %28, %cst_30 {dimension_numbers = #tpu.dot_dimension_numbers<[1], [0], [0], [1], [0, 0, 1, 1], [], []>} : vector<16x16xbf16>, vector<16x48xbf16>, vector<16x48xf32> -> vector<16x48xf32>
    %32 = arith.addf %27, %31 : vector<16x48xf32>
    %c0_31 = arith.constant 0 : index
    %c12 = arith.constant 12 : index
    %33 = vector.load %arg6[%c0_31, %c12] : memref<16x62xbf16, #tpu.memory_space<vmem>>, vector<16x48xbf16>
    %c6_32 = arith.constant 6 : index
    %c0_33 = arith.constant 0 : index
    %c0_34 = arith.constant 0 : index
    %34 = vector.load %arg3[%c6_32, %c0_33, %c0_34] : memref<9x16x16xbf16, #tpu.memory_space<vmem>>, vector<1x16x16xbf16>
    %35 = vector.shape_cast %34 : vector<1x16x16xbf16> to vector<16x16xbf16>
    %cst_35 = arith.constant dense<0.000000e+00> : vector<16x48xf32>
    %36 = tpu.matmul %35, %33, %cst_35 {dimension_numbers = #tpu.dot_dimension_numbers<[1], [0], [0], [1], [0, 0, 1, 1], [], []>} : vector<16x16xbf16>, vector<16x48xbf16>, vector<16x48xf32> -> vector<16x48xf32>
    %37 = arith.addf %32, %36 : vector<16x48xf32>
    %c0_36 = arith.constant 0 : index
    %c13 = arith.constant 13 : index
    %38 = vector.load %arg6[%c0_36, %c13] : memref<16x62xbf16, #tpu.memory_space<vmem>>, vector<16x48xbf16>
    %c7_37 = arith.constant 7 : index
    %c0_38 = arith.constant 0 : index
    %c0_39 = arith.constant 0 : index
    %39 = vector.load %arg3[%c7_37, %c0_38, %c0_39] : memref<9x16x16xbf16, #tpu.memory_space<vmem>>, vector<1x16x16xbf16>
    %40 = vector.shape_cast %39 : vector<1x16x16xbf16> to vector<16x16xbf16>
    %cst_40 = arith.constant dense<0.000000e+00> : vector<16x48xf32>
    %41 = tpu.matmul %40, %38, %cst_40 {dimension_numbers = #tpu.dot_dimension_numbers<[1], [0], [0], [1], [0, 0, 1, 1], [], []>} : vector<16x16xbf16>, vector<16x48xbf16>, vector<16x48xf32> -> vector<16x48xf32>
    %42 = arith.addf %37, %41 : vector<16x48xf32>
    %c0_41 = arith.constant 0 : index
    %c14 = arith.constant 14 : index
    %43 = vector.load %arg6[%c0_41, %c14] : memref<16x62xbf16, #tpu.memory_space<vmem>>, vector<16x48xbf16>
    %c8_42 = arith.constant 8 : index
    %c0_43 = arith.constant 0 : index
    %c0_44 = arith.constant 0 : index
    %44 = vector.load %arg3[%c8_42, %c0_43, %c0_44] : memref<9x16x16xbf16, #tpu.memory_space<vmem>>, vector<1x16x16xbf16>
    %45 = vector.shape_cast %44 : vector<1x16x16xbf16> to vector<16x16xbf16>
    %cst_45 = arith.constant dense<0.000000e+00> : vector<16x48xf32>
    %46 = tpu.matmul %45, %43, %cst_45 {dimension_numbers = #tpu.dot_dimension_numbers<[1], [0], [0], [1], [0, 0, 1, 1], [], []>} : vector<16x16xbf16>, vector<16x48xbf16>, vector<16x48xf32> -> vector<16x48xf32>
    %47 = arith.addf %42, %46 : vector<16x48xf32>
    %c0_46 = arith.constant 0 : index
    %c0_47 = arith.constant 0 : index
    %48 = vector.load %arg4[%c0_46, %c0_47] : memref<16x1xf32, #tpu.memory_space<vmem>>, vector<16x1xf32>
    %49 = vector.broadcast %48 : vector<16x1xf32> to vector<16x48xf32>
    %50 = arith.addf %47, %49 : vector<16x48xf32>
    %cst_48 = arith.constant 0.000000e+00 : f32
    %51 = vector.broadcast %cst_48 : f32 to vector<16x48xf32>
    %52 = arith.maximumf %50, %51 : vector<16x48xf32>
    %cst_49 = arith.constant 0.000000e+00 : f32
    %53 = vector.broadcast %cst_49 : f32 to vector<16x38xf32>
    %c0_50 = arith.constant 0 : index
    %c0_51 = arith.constant 0 : index
    %c0_52 = arith.constant 0 : index
    %54 = vector.load %arg5[%c0_50, %c0_51, %c0_52] : memref<1x16x38xf32, #tpu.memory_space<vmem>>, vector<1x16x38xf32>
    %55 = vector.shape_cast %54 : vector<1x16x38xf32> to vector<16x38xf32>
    %56 = vector.shape_cast %53 : vector<16x38xf32> to vector<1x16x38xf32>
    tpu.vector_store %arg5[%c0_50, %c0_51, %c0_52], %56 {strides = array<i32>} : memref<1x16x38xf32, #tpu.memory_space<vmem>>, vector<1x16x38xf32>,
    %57 = vector.extract_strided_slice %52 {offsets = [0, 0], sizes = [16, 4], strides = [1, 1]} : vector<16x48xf32> to vector<16x4xf32>
    %58 = vector.extract_strided_slice %52 {offsets = [0, 6], sizes = [16, 4], strides = [1, 1]} : vector<16x48xf32> to vector<16x4xf32>
    %59 = arith.maximumf %57, %58 : vector<16x4xf32>
    %c0_53 = arith.constant 0 : index
    %c0_54 = arith.constant 0 : index
    %c7_55 = arith.constant 7 : index
    %60 = vector.load %arg5[%c0_53, %c0_54, %c7_55] : memref<1x16x38xf32, #tpu.memory_space<vmem>>, vector<1x16x4xf32>
    %61 = vector.shape_cast %60 : vector<1x16x4xf32> to vector<16x4xf32>
    %62 = vector.shape_cast %59 : vector<16x4xf32> to vector<1x16x4xf32>
    tpu.vector_store %arg5[%c0_53, %c0_54, %c7_55], %62 {strides = array<i32>} : memref<1x16x38xf32, #tpu.memory_space<vmem>>, vector<1x16x4xf32>,
    %63 = vector.extract_strided_slice %52 {offsets = [0, 12], sizes = [16, 4], strides = [1, 1]} : vector<16x48xf32> to vector<16x4xf32>
    %64 = vector.extract_strided_slice %52 {offsets = [0, 18], sizes = [16, 4], strides = [1, 1]} : vector<16x48xf32> to vector<16x4xf32>
    %65 = arith.maximumf %63, %64 : vector<16x4xf32>
    %c0_56 = arith.constant 0 : index
    %c0_57 = arith.constant 0 : index
    %c13_58 = arith.constant 13 : index
    %66 = vector.load %arg5[%c0_56, %c0_57, %c13_58] : memref<1x16x38xf32, #tpu.memory_space<vmem>>, vector<1x16x4xf32>
    %67 = vector.shape_cast %66 : vector<1x16x4xf32> to vector<16x4xf32>
    %68 = vector.shape_cast %65 : vector<16x4xf32> to vector<1x16x4xf32>
    tpu.vector_store %arg5[%c0_56, %c0_57, %c13_58], %68 {strides = array<i32>} : memref<1x16x38xf32, #tpu.memory_space<vmem>>, vector<1x16x4xf32>,
    %69 = vector.extract_strided_slice %52 {offsets = [0, 24], sizes = [16, 4], strides = [1, 1]} : vector<16x48xf32> to vector<16x4xf32>
    %70 = vector.extract_strided_slice %52 {offsets = [0, 30], sizes = [16, 4], strides = [1, 1]} : vector<16x48xf32> to vector<16x4xf32>
    %71 = arith.maximumf %69, %70 : vector<16x4xf32>
    %c0_59 = arith.constant 0 : index
    %c0_60 = arith.constant 0 : index
    %c19 = arith.constant 19 : index
    %72 = vector.load %arg5[%c0_59, %c0_60, %c19] : memref<1x16x38xf32, #tpu.memory_space<vmem>>, vector<1x16x4xf32>
    %73 = vector.shape_cast %72 : vector<1x16x4xf32> to vector<16x4xf32>
    %74 = vector.shape_cast %71 : vector<16x4xf32> to vector<1x16x4xf32>
    tpu.vector_store %arg5[%c0_59, %c0_60, %c19], %74 {strides = array<i32>} : memref<1x16x38xf32, #tpu.memory_space<vmem>>, vector<1x16x4xf32>,
    %75 = vector.extract_strided_slice %52 {offsets = [0, 36], sizes = [16, 4], strides = [1, 1]} : vector<16x48xf32> to vector<16x4xf32>
    %76 = vector.extract_strided_slice %52 {offsets = [0, 42], sizes = [16, 4], strides = [1, 1]} : vector<16x48xf32> to vector<16x4xf32>
    %77 = arith.maximumf %75, %76 : vector<16x4xf32>
    %c0_61 = arith.constant 0 : index
    %c0_62 = arith.constant 0 : index
    %c25 = arith.constant 25 : index
    %78 = vector.load %arg5[%c0_61, %c0_62, %c25] : memref<1x16x38xf32, #tpu.memory_space<vmem>>, vector<1x16x4xf32>
    %79 = vector.shape_cast %78 : vector<1x16x4xf32> to vector<16x4xf32>
    %80 = vector.shape_cast %77 : vector<16x4xf32> to vector<1x16x4xf32>
    tpu.vector_store %arg5[%c0_61, %c0_62, %c25], %80 {strides = array<i32>} : memref<1x16x38xf32, #tpu.memory_space<vmem>>, vector<1x16x4xf32>,
    return
  }
  func.func @transform_0(%arg0: i32, %arg1: i32) -> (i32, i32, i32) {
    %c0_i32 = arith.constant 0 : i32
    %c0_i32_0 = arith.constant 0 : i32
    %c0_i32_1 = arith.constant 0 : i32
    return %arg0, %c0_i32, %c0_i32_0 : i32, i32, i32
  }
  func.func @transform_1(%arg0: i32, %arg1: i32) -> (i32, i32, i32) {
    %c0_i32 = arith.constant 0 : i32
    %c0_i32_0 = arith.constant 0 : i32
    %c0_i32_1 = arith.constant 0 : i32
    return %c0_i32, %arg1, %c0_i32_0 : i32, i32, i32
  }
  func.func @transform_2(%arg0: i32, %arg1: i32) -> (i32, i32) {
    %c0_i32 = arith.constant 0 : i32
    %c0_i32_0 = arith.constant 0 : i32
    return %arg1, %c0_i32 : i32, i32
  }
  func.func @transform_3(%arg0: i32, %arg1: i32) -> (i32, i32, i32) {
    %c0_i32 = arith.constant 0 : i32
    %c0_i32_0 = arith.constant 0 : i32
    return %arg0, %arg1, %c0_i32 : i32, i32, i32
  }
}

module attributes {stable_mosaic.version = 11 : i64} {
  func.func @_conv_kernel(%arg0: i32, %arg1: i32, %arg2: memref<1x16x38xf32, #tpu.memory_space<vmem>>, %arg3: memref<9x32x16xbf16, #tpu.memory_space<vmem>>, %arg4: memref<32x1xf32, #tpu.memory_space<vmem>>, %arg5: memref<1x32x16xf32, #tpu.memory_space<vmem>>, %arg6: memref<16x38xbf16, #tpu.memory_space<vmem>>) attributes {dimension_semantics = [#tpu.dimension_semantics<parallel>, #tpu.dimension_semantics<parallel>], iteration_bounds = array<i64: 2, 1>, scalar_prefetch = 0 : i64, scratch_operands = 1 : i64, tpu.core_type = #tpu.core_type<tc>, window_params = [{transform_indices = @transform_0, window_bounds = array<i64: 1, 16, 38>}, {transform_indices = @transform_1, window_bounds = array<i64: 9, 32, 16>}, {transform_indices = @transform_2, window_bounds = array<i64: 32, 1>}, {transform_indices = @transform_3, window_bounds = array<i64: 1, 32, 16>}]} {
    %c0 = arith.constant 0 : index
    %c0_0 = arith.constant 0 : index
    %c0_1 = arith.constant 0 : index
    %0 = vector.load %arg2[%c0, %c0_0, %c0_1] : memref<1x16x38xf32, #tpu.memory_space<vmem>>, vector<1x16x38xf32>
    %1 = vector.shape_cast %0 : vector<1x16x38xf32> to vector<16x38xf32>
    %2 = arith.truncf %1 : vector<16x38xf32> to vector<16x38xbf16>
    %c0_2 = arith.constant 0 : index
    %c0_3 = arith.constant 0 : index
    %3 = vector.load %arg6[%c0_2, %c0_3] : memref<16x38xbf16, #tpu.memory_space<vmem>>, vector<16x38xbf16>
    tpu.vector_store %arg6[%c0_2, %c0_3], %2 {strides = array<i32>} : memref<16x38xbf16, #tpu.memory_space<vmem>>, vector<16x38xbf16>,
    %c0_4 = arith.constant 0 : index
    %c0_5 = arith.constant 0 : index
    %4 = vector.load %arg6[%c0_4, %c0_5] : memref<16x38xbf16, #tpu.memory_space<vmem>>, vector<16x24xbf16>
    %c0_6 = arith.constant 0 : index
    %c0_7 = arith.constant 0 : index
    %c0_8 = arith.constant 0 : index
    %5 = vector.load %arg3[%c0_6, %c0_7, %c0_8] : memref<9x32x16xbf16, #tpu.memory_space<vmem>>, vector<1x32x16xbf16>
    %6 = vector.shape_cast %5 : vector<1x32x16xbf16> to vector<32x16xbf16>
    %cst = arith.constant dense<0.000000e+00> : vector<32x24xf32>
    %7 = tpu.matmul %6, %4, %cst {dimension_numbers = #tpu.dot_dimension_numbers<[1], [0], [0], [1], [0, 0, 1, 1], [], []>} : vector<32x16xbf16>, vector<16x24xbf16>, vector<32x24xf32> -> vector<32x24xf32>
    %c0_9 = arith.constant 0 : index
    %c1 = arith.constant 1 : index
    %8 = vector.load %arg6[%c0_9, %c1] : memref<16x38xbf16, #tpu.memory_space<vmem>>, vector<16x24xbf16>
    %c1_10 = arith.constant 1 : index
    %c0_11 = arith.constant 0 : index
    %c0_12 = arith.constant 0 : index
    %9 = vector.load %arg3[%c1_10, %c0_11, %c0_12] : memref<9x32x16xbf16, #tpu.memory_space<vmem>>, vector<1x32x16xbf16>
    %10 = vector.shape_cast %9 : vector<1x32x16xbf16> to vector<32x16xbf16>
    %cst_13 = arith.constant dense<0.000000e+00> : vector<32x24xf32>
    %11 = tpu.matmul %10, %8, %cst_13 {dimension_numbers = #tpu.dot_dimension_numbers<[1], [0], [0], [1], [0, 0, 1, 1], [], []>} : vector<32x16xbf16>, vector<16x24xbf16>, vector<32x24xf32> -> vector<32x24xf32>
    %12 = arith.addf %7, %11 : vector<32x24xf32>
    %c0_14 = arith.constant 0 : index
    %c2 = arith.constant 2 : index
    %13 = vector.load %arg6[%c0_14, %c2] : memref<16x38xbf16, #tpu.memory_space<vmem>>, vector<16x24xbf16>
    %c2_15 = arith.constant 2 : index
    %c0_16 = arith.constant 0 : index
    %c0_17 = arith.constant 0 : index
    %14 = vector.load %arg3[%c2_15, %c0_16, %c0_17] : memref<9x32x16xbf16, #tpu.memory_space<vmem>>, vector<1x32x16xbf16>
    %15 = vector.shape_cast %14 : vector<1x32x16xbf16> to vector<32x16xbf16>
    %cst_18 = arith.constant dense<0.000000e+00> : vector<32x24xf32>
    %16 = tpu.matmul %15, %13, %cst_18 {dimension_numbers = #tpu.dot_dimension_numbers<[1], [0], [0], [1], [0, 0, 1, 1], [], []>} : vector<32x16xbf16>, vector<16x24xbf16>, vector<32x24xf32> -> vector<32x24xf32>
    %17 = arith.addf %12, %16 : vector<32x24xf32>
    %c0_19 = arith.constant 0 : index
    %c6 = arith.constant 6 : index
    %18 = vector.load %arg6[%c0_19, %c6] : memref<16x38xbf16, #tpu.memory_space<vmem>>, vector<16x24xbf16>
    %c3 = arith.constant 3 : index
    %c0_20 = arith.constant 0 : index
    %c0_21 = arith.constant 0 : index
    %19 = vector.load %arg3[%c3, %c0_20, %c0_21] : memref<9x32x16xbf16, #tpu.memory_space<vmem>>, vector<1x32x16xbf16>
    %20 = vector.shape_cast %19 : vector<1x32x16xbf16> to vector<32x16xbf16>
    %cst_22 = arith.constant dense<0.000000e+00> : vector<32x24xf32>
    %21 = tpu.matmul %20, %18, %cst_22 {dimension_numbers = #tpu.dot_dimension_numbers<[1], [0], [0], [1], [0, 0, 1, 1], [], []>} : vector<32x16xbf16>, vector<16x24xbf16>, vector<32x24xf32> -> vector<32x24xf32>
    %22 = arith.addf %17, %21 : vector<32x24xf32>
    %c0_23 = arith.constant 0 : index
    %c7 = arith.constant 7 : index
    %23 = vector.load %arg6[%c0_23, %c7] : memref<16x38xbf16, #tpu.memory_space<vmem>>, vector<16x24xbf16>
    %c4 = arith.constant 4 : index
    %c0_24 = arith.constant 0 : index
    %c0_25 = arith.constant 0 : index
    %24 = vector.load %arg3[%c4, %c0_24, %c0_25] : memref<9x32x16xbf16, #tpu.memory_space<vmem>>, vector<1x32x16xbf16>
    %25 = vector.shape_cast %24 : vector<1x32x16xbf16> to vector<32x16xbf16>
    %cst_26 = arith.constant dense<0.000000e+00> : vector<32x24xf32>
    %26 = tpu.matmul %25, %23, %cst_26 {dimension_numbers = #tpu.dot_dimension_numbers<[1], [0], [0], [1], [0, 0, 1, 1], [], []>} : vector<32x16xbf16>, vector<16x24xbf16>, vector<32x24xf32> -> vector<32x24xf32>
    %27 = arith.addf %22, %26 : vector<32x24xf32>
    %c0_27 = arith.constant 0 : index
    %c8 = arith.constant 8 : index
    %28 = vector.load %arg6[%c0_27, %c8] : memref<16x38xbf16, #tpu.memory_space<vmem>>, vector<16x24xbf16>
    %c5 = arith.constant 5 : index
    %c0_28 = arith.constant 0 : index
    %c0_29 = arith.constant 0 : index
    %29 = vector.load %arg3[%c5, %c0_28, %c0_29] : memref<9x32x16xbf16, #tpu.memory_space<vmem>>, vector<1x32x16xbf16>
    %30 = vector.shape_cast %29 : vector<1x32x16xbf16> to vector<32x16xbf16>
    %cst_30 = arith.constant dense<0.000000e+00> : vector<32x24xf32>
    %31 = tpu.matmul %30, %28, %cst_30 {dimension_numbers = #tpu.dot_dimension_numbers<[1], [0], [0], [1], [0, 0, 1, 1], [], []>} : vector<32x16xbf16>, vector<16x24xbf16>, vector<32x24xf32> -> vector<32x24xf32>
    %32 = arith.addf %27, %31 : vector<32x24xf32>
    %c0_31 = arith.constant 0 : index
    %c12 = arith.constant 12 : index
    %33 = vector.load %arg6[%c0_31, %c12] : memref<16x38xbf16, #tpu.memory_space<vmem>>, vector<16x24xbf16>
    %c6_32 = arith.constant 6 : index
    %c0_33 = arith.constant 0 : index
    %c0_34 = arith.constant 0 : index
    %34 = vector.load %arg3[%c6_32, %c0_33, %c0_34] : memref<9x32x16xbf16, #tpu.memory_space<vmem>>, vector<1x32x16xbf16>
    %35 = vector.shape_cast %34 : vector<1x32x16xbf16> to vector<32x16xbf16>
    %cst_35 = arith.constant dense<0.000000e+00> : vector<32x24xf32>
    %36 = tpu.matmul %35, %33, %cst_35 {dimension_numbers = #tpu.dot_dimension_numbers<[1], [0], [0], [1], [0, 0, 1, 1], [], []>} : vector<32x16xbf16>, vector<16x24xbf16>, vector<32x24xf32> -> vector<32x24xf32>
    %37 = arith.addf %32, %36 : vector<32x24xf32>
    %c0_36 = arith.constant 0 : index
    %c13 = arith.constant 13 : index
    %38 = vector.load %arg6[%c0_36, %c13] : memref<16x38xbf16, #tpu.memory_space<vmem>>, vector<16x24xbf16>
    %c7_37 = arith.constant 7 : index
    %c0_38 = arith.constant 0 : index
    %c0_39 = arith.constant 0 : index
    %39 = vector.load %arg3[%c7_37, %c0_38, %c0_39] : memref<9x32x16xbf16, #tpu.memory_space<vmem>>, vector<1x32x16xbf16>
    %40 = vector.shape_cast %39 : vector<1x32x16xbf16> to vector<32x16xbf16>
    %cst_40 = arith.constant dense<0.000000e+00> : vector<32x24xf32>
    %41 = tpu.matmul %40, %38, %cst_40 {dimension_numbers = #tpu.dot_dimension_numbers<[1], [0], [0], [1], [0, 0, 1, 1], [], []>} : vector<32x16xbf16>, vector<16x24xbf16>, vector<32x24xf32> -> vector<32x24xf32>
    %42 = arith.addf %37, %41 : vector<32x24xf32>
    %c0_41 = arith.constant 0 : index
    %c14 = arith.constant 14 : index
    %43 = vector.load %arg6[%c0_41, %c14] : memref<16x38xbf16, #tpu.memory_space<vmem>>, vector<16x24xbf16>
    %c8_42 = arith.constant 8 : index
    %c0_43 = arith.constant 0 : index
    %c0_44 = arith.constant 0 : index
    %44 = vector.load %arg3[%c8_42, %c0_43, %c0_44] : memref<9x32x16xbf16, #tpu.memory_space<vmem>>, vector<1x32x16xbf16>
    %45 = vector.shape_cast %44 : vector<1x32x16xbf16> to vector<32x16xbf16>
    %cst_45 = arith.constant dense<0.000000e+00> : vector<32x24xf32>
    %46 = tpu.matmul %45, %43, %cst_45 {dimension_numbers = #tpu.dot_dimension_numbers<[1], [0], [0], [1], [0, 0, 1, 1], [], []>} : vector<32x16xbf16>, vector<16x24xbf16>, vector<32x24xf32> -> vector<32x24xf32>
    %47 = arith.addf %42, %46 : vector<32x24xf32>
    %c0_46 = arith.constant 0 : index
    %c0_47 = arith.constant 0 : index
    %48 = vector.load %arg4[%c0_46, %c0_47] : memref<32x1xf32, #tpu.memory_space<vmem>>, vector<32x1xf32>
    %49 = vector.broadcast %48 : vector<32x1xf32> to vector<32x24xf32>
    %50 = arith.addf %47, %49 : vector<32x24xf32>
    %51 = vector.extract_strided_slice %50 {offsets = [0, 0], sizes = [32, 4], strides = [1, 1]} : vector<32x24xf32> to vector<32x4xf32>
    %c0_48 = arith.constant 0 : index
    %c0_49 = arith.constant 0 : index
    %c0_50 = arith.constant 0 : index
    %52 = vector.load %arg5[%c0_48, %c0_49, %c0_50] : memref<1x32x16xf32, #tpu.memory_space<vmem>>, vector<1x32x4xf32>
    %53 = vector.shape_cast %52 : vector<1x32x4xf32> to vector<32x4xf32>
    %54 = vector.shape_cast %51 : vector<32x4xf32> to vector<1x32x4xf32>
    tpu.vector_store %arg5[%c0_48, %c0_49, %c0_50], %54 {strides = array<i32>} : memref<1x32x16xf32, #tpu.memory_space<vmem>>, vector<1x32x4xf32>,
    %55 = vector.extract_strided_slice %50 {offsets = [0, 6], sizes = [32, 4], strides = [1, 1]} : vector<32x24xf32> to vector<32x4xf32>
    %c0_51 = arith.constant 0 : index
    %c0_52 = arith.constant 0 : index
    %c4_53 = arith.constant 4 : index
    %56 = vector.load %arg5[%c0_51, %c0_52, %c4_53] : memref<1x32x16xf32, #tpu.memory_space<vmem>>, vector<1x32x4xf32>
    %57 = vector.shape_cast %56 : vector<1x32x4xf32> to vector<32x4xf32>
    %58 = vector.shape_cast %55 : vector<32x4xf32> to vector<1x32x4xf32>
    tpu.vector_store %arg5[%c0_51, %c0_52, %c4_53], %58 {strides = array<i32>} : memref<1x32x16xf32, #tpu.memory_space<vmem>>, vector<1x32x4xf32>,
    %59 = vector.extract_strided_slice %50 {offsets = [0, 12], sizes = [32, 4], strides = [1, 1]} : vector<32x24xf32> to vector<32x4xf32>
    %c0_54 = arith.constant 0 : index
    %c0_55 = arith.constant 0 : index
    %c8_56 = arith.constant 8 : index
    %60 = vector.load %arg5[%c0_54, %c0_55, %c8_56] : memref<1x32x16xf32, #tpu.memory_space<vmem>>, vector<1x32x4xf32>
    %61 = vector.shape_cast %60 : vector<1x32x4xf32> to vector<32x4xf32>
    %62 = vector.shape_cast %59 : vector<32x4xf32> to vector<1x32x4xf32>
    tpu.vector_store %arg5[%c0_54, %c0_55, %c8_56], %62 {strides = array<i32>} : memref<1x32x16xf32, #tpu.memory_space<vmem>>, vector<1x32x4xf32>,
    %63 = vector.extract_strided_slice %50 {offsets = [0, 18], sizes = [32, 4], strides = [1, 1]} : vector<32x24xf32> to vector<32x4xf32>
    %c0_57 = arith.constant 0 : index
    %c0_58 = arith.constant 0 : index
    %c12_59 = arith.constant 12 : index
    %64 = vector.load %arg5[%c0_57, %c0_58, %c12_59] : memref<1x32x16xf32, #tpu.memory_space<vmem>>, vector<1x32x4xf32>
    %65 = vector.shape_cast %64 : vector<1x32x4xf32> to vector<32x4xf32>
    %66 = vector.shape_cast %63 : vector<32x4xf32> to vector<1x32x4xf32>
    tpu.vector_store %arg5[%c0_57, %c0_58, %c12_59], %66 {strides = array<i32>} : memref<1x32x16xf32, #tpu.memory_space<vmem>>, vector<1x32x4xf32>,
    return
  }
  func.func @transform_0(%arg0: i32, %arg1: i32) -> (i32, i32, i32) {
    %c0_i32 = arith.constant 0 : i32
    %c0_i32_0 = arith.constant 0 : i32
    %c0_i32_1 = arith.constant 0 : i32
    return %arg0, %c0_i32, %c0_i32_0 : i32, i32, i32
  }
  func.func @transform_1(%arg0: i32, %arg1: i32) -> (i32, i32, i32) {
    %c0_i32 = arith.constant 0 : i32
    %c0_i32_0 = arith.constant 0 : i32
    %c0_i32_1 = arith.constant 0 : i32
    return %c0_i32, %arg1, %c0_i32_0 : i32, i32, i32
  }
  func.func @transform_2(%arg0: i32, %arg1: i32) -> (i32, i32) {
    %c0_i32 = arith.constant 0 : i32
    %c0_i32_0 = arith.constant 0 : i32
    return %arg1, %c0_i32 : i32, i32
  }
  func.func @transform_3(%arg0: i32, %arg1: i32) -> (i32, i32, i32) {
    %c0_i32 = arith.constant 0 : i32
    %c0_i32_0 = arith.constant 0 : i32
    return %arg0, %arg1, %c0_i32 : i32, i32, i32
  }
}

module attributes {stable_mosaic.version = 11 : i64} {
  func.func @_bn_relu_kernel(%arg0: i32, %arg1: memref<2x16x16xf32, #tpu.memory_space<vmem>>, %arg2: memref<1x16x1xf32, #tpu.memory_space<vmem>>, %arg3: memref<1x16x1xf32, #tpu.memory_space<vmem>>, %arg4: memref<2x16x38xf32, #tpu.memory_space<vmem>>) attributes {dimension_semantics = [#tpu.dimension_semantics<parallel>], iteration_bounds = array<i64: 2>, scalar_prefetch = 0 : i64, scratch_operands = 0 : i64, tpu.core_type = #tpu.core_type<tc>, window_params = [{transform_indices = @transform_0, window_bounds = array<i64: 2, 16, 16>}, {transform_indices = @transform_1, window_bounds = array<i64: 1, 16, 1>}, {transform_indices = @transform_2, window_bounds = array<i64: 1, 16, 1>}, {transform_indices = @transform_3, window_bounds = array<i64: 2, 16, 38>}]} {
    %c0 = arith.constant 0 : index
    %c0_0 = arith.constant 0 : index
    %c0_1 = arith.constant 0 : index
    %0 = vector.load %arg1[%c0, %c0_0, %c0_1] : memref<2x16x16xf32, #tpu.memory_space<vmem>>, vector<2x16x16xf32>
    %cst = arith.constant dense<0.000000e+00> : vector<2x16xf32>
    %1 = vector.multi_reduction <add>, %0, %cst [2] : vector<2x16x16xf32> to vector<2x16xf32>
    %2 = vector.shape_cast %1 : vector<2x16xf32> to vector<2x16x1xf32>
    %cst_2 = arith.constant dense<0.000000e+00> : vector<16x1xf32>
    %3 = vector.multi_reduction <add>, %2, %cst_2 [0] : vector<2x16x1xf32> to vector<16x1xf32>
    %4 = vector.shape_cast %3 : vector<16x1xf32> to vector<1x16x1xf32>
    %cst_3 = arith.constant 3.125000e-02 : f32
    %5 = vector.broadcast %cst_3 : f32 to vector<1x16x1xf32>
    %6 = arith.mulf %4, %5 : vector<1x16x1xf32>
    %7 = vector.broadcast %6 : vector<1x16x1xf32> to vector<2x16x16xf32>
    %8 = arith.subf %0, %7 : vector<2x16x16xf32>
    %9 = arith.mulf %8, %8 : vector<2x16x16xf32>
    %cst_4 = arith.constant dense<0.000000e+00> : vector<2x16xf32>
    %10 = vector.multi_reduction <add>, %9, %cst_4 [2] : vector<2x16x16xf32> to vector<2x16xf32>
    %11 = vector.shape_cast %10 : vector<2x16xf32> to vector<2x16x1xf32>
    %cst_5 = arith.constant dense<0.000000e+00> : vector<16x1xf32>
    %12 = vector.multi_reduction <add>, %11, %cst_5 [0] : vector<2x16x1xf32> to vector<16x1xf32>
    %13 = vector.shape_cast %12 : vector<16x1xf32> to vector<1x16x1xf32>
    %c0_6 = arith.constant 0 : index
    %c0_7 = arith.constant 0 : index
    %c0_8 = arith.constant 0 : index
    %14 = vector.load %arg2[%c0_6, %c0_7, %c0_8] : memref<1x16x1xf32, #tpu.memory_space<vmem>>, vector<1x16x1xf32>
    %cst_9 = arith.constant 3.125000e-02 : f32
    %15 = vector.broadcast %cst_9 : f32 to vector<1x16x1xf32>
    %16 = arith.mulf %13, %15 : vector<1x16x1xf32>
    %cst_10 = arith.constant 9.99999974E-6 : f32
    %17 = vector.broadcast %cst_10 : f32 to vector<1x16x1xf32>
    %18 = arith.addf %16, %17 : vector<1x16x1xf32>
    %19 = math.rsqrt %18 : vector<1x16x1xf32>
    %20 = arith.mulf %14, %19 : vector<1x16x1xf32>
    %21 = vector.broadcast %20 : vector<1x16x1xf32> to vector<2x16x16xf32>
    %22 = arith.mulf %8, %21 : vector<2x16x16xf32>
    %c0_11 = arith.constant 0 : index
    %c0_12 = arith.constant 0 : index
    %c0_13 = arith.constant 0 : index
    %23 = vector.load %arg3[%c0_11, %c0_12, %c0_13] : memref<1x16x1xf32, #tpu.memory_space<vmem>>, vector<1x16x1xf32>
    %24 = vector.broadcast %23 : vector<1x16x1xf32> to vector<2x16x16xf32>
    %25 = arith.addf %22, %24 : vector<2x16x16xf32>
    %cst_14 = arith.constant 0.000000e+00 : f32
    %26 = vector.broadcast %cst_14 : f32 to vector<2x16x16xf32>
    %27 = arith.maximumf %25, %26 : vector<2x16x16xf32>
    %cst_15 = arith.constant 0.000000e+00 : f32
    %28 = vector.broadcast %cst_15 : f32 to vector<2x16x38xf32>
    %c0_16 = arith.constant 0 : index
    %c0_17 = arith.constant 0 : index
    %c0_18 = arith.constant 0 : index
    %29 = vector.load %arg4[%c0_16, %c0_17, %c0_18] : memref<2x16x38xf32, #tpu.memory_space<vmem>>, vector<2x16x38xf32>
    tpu.vector_store %arg4[%c0_16, %c0_17, %c0_18], %28 {strides = array<i32>} : memref<2x16x38xf32, #tpu.memory_space<vmem>>, vector<2x16x38xf32>,
    %30 = vector.extract_strided_slice %27 {offsets = [0, 0, 0], sizes = [2, 16, 4], strides = [1, 1, 1]} : vector<2x16x16xf32> to vector<2x16x4xf32>
    %c0_19 = arith.constant 0 : index
    %c0_20 = arith.constant 0 : index
    %c7 = arith.constant 7 : index
    %31 = vector.load %arg4[%c0_19, %c0_20, %c7] : memref<2x16x38xf32, #tpu.memory_space<vmem>>, vector<2x16x4xf32>
    tpu.vector_store %arg4[%c0_19, %c0_20, %c7], %30 {strides = array<i32>} : memref<2x16x38xf32, #tpu.memory_space<vmem>>, vector<2x16x4xf32>,
    %32 = vector.extract_strided_slice %27 {offsets = [0, 0, 4], sizes = [2, 16, 4], strides = [1, 1, 1]} : vector<2x16x16xf32> to vector<2x16x4xf32>
    %c0_21 = arith.constant 0 : index
    %c0_22 = arith.constant 0 : index
    %c13 = arith.constant 13 : index
    %33 = vector.load %arg4[%c0_21, %c0_22, %c13] : memref<2x16x38xf32, #tpu.memory_space<vmem>>, vector<2x16x4xf32>
    tpu.vector_store %arg4[%c0_21, %c0_22, %c13], %32 {strides = array<i32>} : memref<2x16x38xf32, #tpu.memory_space<vmem>>, vector<2x16x4xf32>,
    %34 = vector.extract_strided_slice %27 {offsets = [0, 0, 8], sizes = [2, 16, 4], strides = [1, 1, 1]} : vector<2x16x16xf32> to vector<2x16x4xf32>
    %c0_23 = arith.constant 0 : index
    %c0_24 = arith.constant 0 : index
    %c19 = arith.constant 19 : index
    %35 = vector.load %arg4[%c0_23, %c0_24, %c19] : memref<2x16x38xf32, #tpu.memory_space<vmem>>, vector<2x16x4xf32>
    tpu.vector_store %arg4[%c0_23, %c0_24, %c19], %34 {strides = array<i32>} : memref<2x16x38xf32, #tpu.memory_space<vmem>>, vector<2x16x4xf32>,
    %36 = vector.extract_strided_slice %27 {offsets = [0, 0, 12], sizes = [2, 16, 4], strides = [1, 1, 1]} : vector<2x16x16xf32> to vector<2x16x4xf32>
    %c0_25 = arith.constant 0 : index
    %c0_26 = arith.constant 0 : index
    %c25 = arith.constant 25 : index
    %37 = vector.load %arg4[%c0_25, %c0_26, %c25] : memref<2x16x38xf32, #tpu.memory_space<vmem>>, vector<2x16x4xf32>
    tpu.vector_store %arg4[%c0_25, %c0_26, %c25], %36 {strides = array<i32>} : memref<2x16x38xf32, #tpu.memory_space<vmem>>, vector<2x16x4xf32>,
    return
  }
  func.func @transform_0(%arg0: i32) -> (i32, i32, i32) {
    %c0_i32 = arith.constant 0 : i32
    %c0_i32_0 = arith.constant 0 : i32
    %c0_i32_1 = arith.constant 0 : i32
    return %c0_i32, %arg0, %c0_i32_0 : i32, i32, i32
  }
  func.func @transform_1(%arg0: i32) -> (i32, i32, i32) {
    %c0_i32 = arith.constant 0 : i32
    %c0_i32_0 = arith.constant 0 : i32
    %c0_i32_1 = arith.constant 0 : i32
    return %c0_i32, %arg0, %c0_i32_0 : i32, i32, i32
  }
  func.func @transform_2(%arg0: i32) -> (i32, i32, i32) {
    %c0_i32 = arith.constant 0 : i32
    %c0_i32_0 = arith.constant 0 : i32
    %c0_i32_1 = arith.constant 0 : i32
    return %c0_i32, %arg0, %c0_i32_0 : i32, i32, i32
  }
  func.func @transform_3(%arg0: i32) -> (i32, i32, i32) {
    %c0_i32 = arith.constant 0 : i32
    %c0_i32_0 = arith.constant 0 : i32
    %c0_i32_1 = arith.constant 0 : i32
    return %c0_i32, %arg0, %c0_i32_0 : i32, i32, i32
  }
}

module attributes {stable_mosaic.version = 11 : i64} {
  func.func @_conv_kernel(%arg0: i32, %arg1: i32, %arg2: memref<1x32x38xf32, #tpu.memory_space<vmem>>, %arg3: memref<9x32x32xbf16, #tpu.memory_space<vmem>>, %arg4: memref<32x1xf32, #tpu.memory_space<vmem>>, %arg5: memref<1x32x16xf32, #tpu.memory_space<vmem>>, %arg6: memref<32x38xbf16, #tpu.memory_space<vmem>>) attributes {dimension_semantics = [#tpu.dimension_semantics<parallel>, #tpu.dimension_semantics<parallel>], iteration_bounds = array<i64: 2, 1>, scalar_prefetch = 0 : i64, scratch_operands = 1 : i64, tpu.core_type = #tpu.core_type<tc>, window_params = [{transform_indices = @transform_0, window_bounds = array<i64: 1, 32, 38>}, {transform_indices = @transform_1, window_bounds = array<i64: 9, 32, 32>}, {transform_indices = @transform_2, window_bounds = array<i64: 32, 1>}, {transform_indices = @transform_3, window_bounds = array<i64: 1, 32, 16>}]} {
    %c0 = arith.constant 0 : index
    %c0_0 = arith.constant 0 : index
    %c0_1 = arith.constant 0 : index
    %0 = vector.load %arg2[%c0, %c0_0, %c0_1] : memref<1x32x38xf32, #tpu.memory_space<vmem>>, vector<1x32x38xf32>
    %1 = vector.shape_cast %0 : vector<1x32x38xf32> to vector<32x38xf32>
    %2 = arith.truncf %1 : vector<32x38xf32> to vector<32x38xbf16>
    %c0_2 = arith.constant 0 : index
    %c0_3 = arith.constant 0 : index
    %3 = vector.load %arg6[%c0_2, %c0_3] : memref<32x38xbf16, #tpu.memory_space<vmem>>, vector<32x38xbf16>
    tpu.vector_store %arg6[%c0_2, %c0_3], %2 {strides = array<i32>} : memref<32x38xbf16, #tpu.memory_space<vmem>>, vector<32x38xbf16>,
    %c0_4 = arith.constant 0 : index
    %c0_5 = arith.constant 0 : index
    %4 = vector.load %arg6[%c0_4, %c0_5] : memref<32x38xbf16, #tpu.memory_space<vmem>>, vector<32x24xbf16>
    %c0_6 = arith.constant 0 : index
    %c0_7 = arith.constant 0 : index
    %c0_8 = arith.constant 0 : index
    %5 = vector.load %arg3[%c0_6, %c0_7, %c0_8] : memref<9x32x32xbf16, #tpu.memory_space<vmem>>, vector<1x32x32xbf16>
    %6 = vector.shape_cast %5 : vector<1x32x32xbf16> to vector<32x32xbf16>
    %cst = arith.constant dense<0.000000e+00> : vector<32x24xf32>
    %7 = tpu.matmul %6, %4, %cst {dimension_numbers = #tpu.dot_dimension_numbers<[1], [0], [0], [1], [0, 0, 1, 1], [], []>} : vector<32x32xbf16>, vector<32x24xbf16>, vector<32x24xf32> -> vector<32x24xf32>
    %c0_9 = arith.constant 0 : index
    %c1 = arith.constant 1 : index
    %8 = vector.load %arg6[%c0_9, %c1] : memref<32x38xbf16, #tpu.memory_space<vmem>>, vector<32x24xbf16>
    %c1_10 = arith.constant 1 : index
    %c0_11 = arith.constant 0 : index
    %c0_12 = arith.constant 0 : index
    %9 = vector.load %arg3[%c1_10, %c0_11, %c0_12] : memref<9x32x32xbf16, #tpu.memory_space<vmem>>, vector<1x32x32xbf16>
    %10 = vector.shape_cast %9 : vector<1x32x32xbf16> to vector<32x32xbf16>
    %cst_13 = arith.constant dense<0.000000e+00> : vector<32x24xf32>
    %11 = tpu.matmul %10, %8, %cst_13 {dimension_numbers = #tpu.dot_dimension_numbers<[1], [0], [0], [1], [0, 0, 1, 1], [], []>} : vector<32x32xbf16>, vector<32x24xbf16>, vector<32x24xf32> -> vector<32x24xf32>
    %12 = arith.addf %7, %11 : vector<32x24xf32>
    %c0_14 = arith.constant 0 : index
    %c2 = arith.constant 2 : index
    %13 = vector.load %arg6[%c0_14, %c2] : memref<32x38xbf16, #tpu.memory_space<vmem>>, vector<32x24xbf16>
    %c2_15 = arith.constant 2 : index
    %c0_16 = arith.constant 0 : index
    %c0_17 = arith.constant 0 : index
    %14 = vector.load %arg3[%c2_15, %c0_16, %c0_17] : memref<9x32x32xbf16, #tpu.memory_space<vmem>>, vector<1x32x32xbf16>
    %15 = vector.shape_cast %14 : vector<1x32x32xbf16> to vector<32x32xbf16>
    %cst_18 = arith.constant dense<0.000000e+00> : vector<32x24xf32>
    %16 = tpu.matmul %15, %13, %cst_18 {dimension_numbers = #tpu.dot_dimension_numbers<[1], [0], [0], [1], [0, 0, 1, 1], [], []>} : vector<32x32xbf16>, vector<32x24xbf16>, vector<32x24xf32> -> vector<32x24xf32>
    %17 = arith.addf %12, %16 : vector<32x24xf32>
    %c0_19 = arith.constant 0 : index
    %c6 = arith.constant 6 : index
    %18 = vector.load %arg6[%c0_19, %c6] : memref<32x38xbf16, #tpu.memory_space<vmem>>, vector<32x24xbf16>
    %c3 = arith.constant 3 : index
    %c0_20 = arith.constant 0 : index
    %c0_21 = arith.constant 0 : index
    %19 = vector.load %arg3[%c3, %c0_20, %c0_21] : memref<9x32x32xbf16, #tpu.memory_space<vmem>>, vector<1x32x32xbf16>
    %20 = vector.shape_cast %19 : vector<1x32x32xbf16> to vector<32x32xbf16>
    %cst_22 = arith.constant dense<0.000000e+00> : vector<32x24xf32>
    %21 = tpu.matmul %20, %18, %cst_22 {dimension_numbers = #tpu.dot_dimension_numbers<[1], [0], [0], [1], [0, 0, 1, 1], [], []>} : vector<32x32xbf16>, vector<32x24xbf16>, vector<32x24xf32> -> vector<32x24xf32>
    %22 = arith.addf %17, %21 : vector<32x24xf32>
    %c0_23 = arith.constant 0 : index
    %c7 = arith.constant 7 : index
    %23 = vector.load %arg6[%c0_23, %c7] : memref<32x38xbf16, #tpu.memory_space<vmem>>, vector<32x24xbf16>
    %c4 = arith.constant 4 : index
    %c0_24 = arith.constant 0 : index
    %c0_25 = arith.constant 0 : index
    %24 = vector.load %arg3[%c4, %c0_24, %c0_25] : memref<9x32x32xbf16, #tpu.memory_space<vmem>>, vector<1x32x32xbf16>
    %25 = vector.shape_cast %24 : vector<1x32x32xbf16> to vector<32x32xbf16>
    %cst_26 = arith.constant dense<0.000000e+00> : vector<32x24xf32>
    %26 = tpu.matmul %25, %23, %cst_26 {dimension_numbers = #tpu.dot_dimension_numbers<[1], [0], [0], [1], [0, 0, 1, 1], [], []>} : vector<32x32xbf16>, vector<32x24xbf16>, vector<32x24xf32> -> vector<32x24xf32>
    %27 = arith.addf %22, %26 : vector<32x24xf32>
    %c0_27 = arith.constant 0 : index
    %c8 = arith.constant 8 : index
    %28 = vector.load %arg6[%c0_27, %c8] : memref<32x38xbf16, #tpu.memory_space<vmem>>, vector<32x24xbf16>
    %c5 = arith.constant 5 : index
    %c0_28 = arith.constant 0 : index
    %c0_29 = arith.constant 0 : index
    %29 = vector.load %arg3[%c5, %c0_28, %c0_29] : memref<9x32x32xbf16, #tpu.memory_space<vmem>>, vector<1x32x32xbf16>
    %30 = vector.shape_cast %29 : vector<1x32x32xbf16> to vector<32x32xbf16>
    %cst_30 = arith.constant dense<0.000000e+00> : vector<32x24xf32>
    %31 = tpu.matmul %30, %28, %cst_30 {dimension_numbers = #tpu.dot_dimension_numbers<[1], [0], [0], [1], [0, 0, 1, 1], [], []>} : vector<32x32xbf16>, vector<32x24xbf16>, vector<32x24xf32> -> vector<32x24xf32>
    %32 = arith.addf %27, %31 : vector<32x24xf32>
    %c0_31 = arith.constant 0 : index
    %c12 = arith.constant 12 : index
    %33 = vector.load %arg6[%c0_31, %c12] : memref<32x38xbf16, #tpu.memory_space<vmem>>, vector<32x24xbf16>
    %c6_32 = arith.constant 6 : index
    %c0_33 = arith.constant 0 : index
    %c0_34 = arith.constant 0 : index
    %34 = vector.load %arg3[%c6_32, %c0_33, %c0_34] : memref<9x32x32xbf16, #tpu.memory_space<vmem>>, vector<1x32x32xbf16>
    %35 = vector.shape_cast %34 : vector<1x32x32xbf16> to vector<32x32xbf16>
    %cst_35 = arith.constant dense<0.000000e+00> : vector<32x24xf32>
    %36 = tpu.matmul %35, %33, %cst_35 {dimension_numbers = #tpu.dot_dimension_numbers<[1], [0], [0], [1], [0, 0, 1, 1], [], []>} : vector<32x32xbf16>, vector<32x24xbf16>, vector<32x24xf32> -> vector<32x24xf32>
    %37 = arith.addf %32, %36 : vector<32x24xf32>
    %c0_36 = arith.constant 0 : index
    %c13 = arith.constant 13 : index
    %38 = vector.load %arg6[%c0_36, %c13] : memref<32x38xbf16, #tpu.memory_space<vmem>>, vector<32x24xbf16>
    %c7_37 = arith.constant 7 : index
    %c0_38 = arith.constant 0 : index
    %c0_39 = arith.constant 0 : index
    %39 = vector.load %arg3[%c7_37, %c0_38, %c0_39] : memref<9x32x32xbf16, #tpu.memory_space<vmem>>, vector<1x32x32xbf16>
    %40 = vector.shape_cast %39 : vector<1x32x32xbf16> to vector<32x32xbf16>
    %cst_40 = arith.constant dense<0.000000e+00> : vector<32x24xf32>
    %41 = tpu.matmul %40, %38, %cst_40 {dimension_numbers = #tpu.dot_dimension_numbers<[1], [0], [0], [1], [0, 0, 1, 1], [], []>} : vector<32x32xbf16>, vector<32x24xbf16>, vector<32x24xf32> -> vector<32x24xf32>
    %42 = arith.addf %37, %41 : vector<32x24xf32>
    %c0_41 = arith.constant 0 : index
    %c14 = arith.constant 14 : index
    %43 = vector.load %arg6[%c0_41, %c14] : memref<32x38xbf16, #tpu.memory_space<vmem>>, vector<32x24xbf16>
    %c8_42 = arith.constant 8 : index
    %c0_43 = arith.constant 0 : index
    %c0_44 = arith.constant 0 : index
    %44 = vector.load %arg3[%c8_42, %c0_43, %c0_44] : memref<9x32x32xbf16, #tpu.memory_space<vmem>>, vector<1x32x32xbf16>
    %45 = vector.shape_cast %44 : vector<1x32x32xbf16> to vector<32x32xbf16>
    %cst_45 = arith.constant dense<0.000000e+00> : vector<32x24xf32>
    %46 = tpu.matmul %45, %43, %cst_45 {dimension_numbers = #tpu.dot_dimension_numbers<[1], [0], [0], [1], [0, 0, 1, 1], [], []>} : vector<32x32xbf16>, vector<32x24xbf16>, vector<32x24xf32> -> vector<32x24xf32>
    %47 = arith.addf %42, %46 : vector<32x24xf32>
    %c0_46 = arith.constant 0 : index
    %c0_47 = arith.constant 0 : index
    %48 = vector.load %arg4[%c0_46, %c0_47] : memref<32x1xf32, #tpu.memory_space<vmem>>, vector<32x1xf32>
    %49 = vector.broadcast %48 : vector<32x1xf32> to vector<32x24xf32>
    %50 = arith.addf %47, %49 : vector<32x24xf32>
    %51 = vector.extract_strided_slice %50 {offsets = [0, 0], sizes = [32, 4], strides = [1, 1]} : vector<32x24xf32> to vector<32x4xf32>
    %c0_48 = arith.constant 0 : index
    %c0_49 = arith.constant 0 : index
    %c0_50 = arith.constant 0 : index
    %52 = vector.load %arg5[%c0_48, %c0_49, %c0_50] : memref<1x32x16xf32, #tpu.memory_space<vmem>>, vector<1x32x4xf32>
    %53 = vector.shape_cast %52 : vector<1x32x4xf32> to vector<32x4xf32>
    %54 = vector.shape_cast %51 : vector<32x4xf32> to vector<1x32x4xf32>
    tpu.vector_store %arg5[%c0_48, %c0_49, %c0_50], %54 {strides = array<i32>} : memref<1x32x16xf32, #tpu.memory_space<vmem>>, vector<1x32x4xf32>,
    %55 = vector.extract_strided_slice %50 {offsets = [0, 6], sizes = [32, 4], strides = [1, 1]} : vector<32x24xf32> to vector<32x4xf32>
    %c0_51 = arith.constant 0 : index
    %c0_52 = arith.constant 0 : index
    %c4_53 = arith.constant 4 : index
    %56 = vector.load %arg5[%c0_51, %c0_52, %c4_53] : memref<1x32x16xf32, #tpu.memory_space<vmem>>, vector<1x32x4xf32>
    %57 = vector.shape_cast %56 : vector<1x32x4xf32> to vector<32x4xf32>
    %58 = vector.shape_cast %55 : vector<32x4xf32> to vector<1x32x4xf32>
    tpu.vector_store %arg5[%c0_51, %c0_52, %c4_53], %58 {strides = array<i32>} : memref<1x32x16xf32, #tpu.memory_space<vmem>>, vector<1x32x4xf32>,
    %59 = vector.extract_strided_slice %50 {offsets = [0, 12], sizes = [32, 4], strides = [1, 1]} : vector<32x24xf32> to vector<32x4xf32>
    %c0_54 = arith.constant 0 : index
    %c0_55 = arith.constant 0 : index
    %c8_56 = arith.constant 8 : index
    %60 = vector.load %arg5[%c0_54, %c0_55, %c8_56] : memref<1x32x16xf32, #tpu.memory_space<vmem>>, vector<1x32x4xf32>
    %61 = vector.shape_cast %60 : vector<1x32x4xf32> to vector<32x4xf32>
    %62 = vector.shape_cast %59 : vector<32x4xf32> to vector<1x32x4xf32>
    tpu.vector_store %arg5[%c0_54, %c0_55, %c8_56], %62 {strides = array<i32>} : memref<1x32x16xf32, #tpu.memory_space<vmem>>, vector<1x32x4xf32>,
    %63 = vector.extract_strided_slice %50 {offsets = [0, 18], sizes = [32, 4], strides = [1, 1]} : vector<32x24xf32> to vector<32x4xf32>
    %c0_57 = arith.constant 0 : index
    %c0_58 = arith.constant 0 : index
    %c12_59 = arith.constant 12 : index
    %64 = vector.load %arg5[%c0_57, %c0_58, %c12_59] : memref<1x32x16xf32, #tpu.memory_space<vmem>>, vector<1x32x4xf32>
    %65 = vector.shape_cast %64 : vector<1x32x4xf32> to vector<32x4xf32>
    %66 = vector.shape_cast %63 : vector<32x4xf32> to vector<1x32x4xf32>
    tpu.vector_store %arg5[%c0_57, %c0_58, %c12_59], %66 {strides = array<i32>} : memref<1x32x16xf32, #tpu.memory_space<vmem>>, vector<1x32x4xf32>,
    return
  }
  func.func @transform_0(%arg0: i32, %arg1: i32) -> (i32, i32, i32) {
    %c0_i32 = arith.constant 0 : i32
    %c0_i32_0 = arith.constant 0 : i32
    %c0_i32_1 = arith.constant 0 : i32
    return %arg0, %c0_i32, %c0_i32_0 : i32, i32, i32
  }
  func.func @transform_1(%arg0: i32, %arg1: i32) -> (i32, i32, i32) {
    %c0_i32 = arith.constant 0 : i32
    %c0_i32_0 = arith.constant 0 : i32
    %c0_i32_1 = arith.constant 0 : i32
    return %c0_i32, %arg1, %c0_i32_0 : i32, i32, i32
  }
  func.func @transform_2(%arg0: i32, %arg1: i32) -> (i32, i32) {
    %c0_i32 = arith.constant 0 : i32
    %c0_i32_0 = arith.constant 0 : i32
    return %arg1, %c0_i32 : i32, i32
  }
  func.func @transform_3(%arg0: i32, %arg1: i32) -> (i32, i32, i32) {
    %c0_i32 = arith.constant 0 : i32
    %c0_i32_0 = arith.constant 0 : i32
    return %arg0, %arg1, %c0_i32 : i32, i32, i32
  }
}

module attributes {stable_mosaic.version = 11 : i64} {
  func.func @_bn_relu_kernel(%arg0: i32, %arg1: memref<2x16x16xf32, #tpu.memory_space<vmem>>, %arg2: memref<1x16x1xf32, #tpu.memory_space<vmem>>, %arg3: memref<1x16x1xf32, #tpu.memory_space<vmem>>, %arg4: memref<2x16x9xf32, #tpu.memory_space<vmem>>) attributes {dimension_semantics = [#tpu.dimension_semantics<parallel>], iteration_bounds = array<i64: 2>, scalar_prefetch = 0 : i64, scratch_operands = 0 : i64, tpu.core_type = #tpu.core_type<tc>, window_params = [{transform_indices = @transform_0, window_bounds = array<i64: 2, 16, 16>}, {transform_indices = @transform_1, window_bounds = array<i64: 1, 16, 1>}, {transform_indices = @transform_2, window_bounds = array<i64: 1, 16, 1>}, {transform_indices = @transform_3, window_bounds = array<i64: 2, 16, 9>}]} {
    %c0 = arith.constant 0 : index
    %c0_0 = arith.constant 0 : index
    %c0_1 = arith.constant 0 : index
    %0 = vector.load %arg1[%c0, %c0_0, %c0_1] : memref<2x16x16xf32, #tpu.memory_space<vmem>>, vector<2x16x16xf32>
    %cst = arith.constant dense<0.000000e+00> : vector<2x16xf32>
    %1 = vector.multi_reduction <add>, %0, %cst [2] : vector<2x16x16xf32> to vector<2x16xf32>
    %2 = vector.shape_cast %1 : vector<2x16xf32> to vector<2x16x1xf32>
    %cst_2 = arith.constant dense<0.000000e+00> : vector<16x1xf32>
    %3 = vector.multi_reduction <add>, %2, %cst_2 [0] : vector<2x16x1xf32> to vector<16x1xf32>
    %4 = vector.shape_cast %3 : vector<16x1xf32> to vector<1x16x1xf32>
    %cst_3 = arith.constant 3.125000e-02 : f32
    %5 = vector.broadcast %cst_3 : f32 to vector<1x16x1xf32>
    %6 = arith.mulf %4, %5 : vector<1x16x1xf32>
    %7 = vector.broadcast %6 : vector<1x16x1xf32> to vector<2x16x16xf32>
    %8 = arith.subf %0, %7 : vector<2x16x16xf32>
    %9 = arith.mulf %8, %8 : vector<2x16x16xf32>
    %cst_4 = arith.constant dense<0.000000e+00> : vector<2x16xf32>
    %10 = vector.multi_reduction <add>, %9, %cst_4 [2] : vector<2x16x16xf32> to vector<2x16xf32>
    %11 = vector.shape_cast %10 : vector<2x16xf32> to vector<2x16x1xf32>
    %cst_5 = arith.constant dense<0.000000e+00> : vector<16x1xf32>
    %12 = vector.multi_reduction <add>, %11, %cst_5 [0] : vector<2x16x1xf32> to vector<16x1xf32>
    %13 = vector.shape_cast %12 : vector<16x1xf32> to vector<1x16x1xf32>
    %c0_6 = arith.constant 0 : index
    %c0_7 = arith.constant 0 : index
    %c0_8 = arith.constant 0 : index
    %14 = vector.load %arg2[%c0_6, %c0_7, %c0_8] : memref<1x16x1xf32, #tpu.memory_space<vmem>>, vector<1x16x1xf32>
    %cst_9 = arith.constant 3.125000e-02 : f32
    %15 = vector.broadcast %cst_9 : f32 to vector<1x16x1xf32>
    %16 = arith.mulf %13, %15 : vector<1x16x1xf32>
    %cst_10 = arith.constant 9.99999974E-6 : f32
    %17 = vector.broadcast %cst_10 : f32 to vector<1x16x1xf32>
    %18 = arith.addf %16, %17 : vector<1x16x1xf32>
    %19 = math.rsqrt %18 : vector<1x16x1xf32>
    %20 = arith.mulf %14, %19 : vector<1x16x1xf32>
    %21 = vector.broadcast %20 : vector<1x16x1xf32> to vector<2x16x16xf32>
    %22 = arith.mulf %8, %21 : vector<2x16x16xf32>
    %c0_11 = arith.constant 0 : index
    %c0_12 = arith.constant 0 : index
    %c0_13 = arith.constant 0 : index
    %23 = vector.load %arg3[%c0_11, %c0_12, %c0_13] : memref<1x16x1xf32, #tpu.memory_space<vmem>>, vector<1x16x1xf32>
    %24 = vector.broadcast %23 : vector<1x16x1xf32> to vector<2x16x16xf32>
    %25 = arith.addf %22, %24 : vector<2x16x16xf32>
    %cst_14 = arith.constant 0.000000e+00 : f32
    %26 = vector.broadcast %cst_14 : f32 to vector<2x16x16xf32>
    %27 = arith.maximumf %25, %26 : vector<2x16x16xf32>
    %cst_15 = arith.constant 0.000000e+00 : f32
    %28 = vector.broadcast %cst_15 : f32 to vector<2x16x9xf32>
    %c0_16 = arith.constant 0 : index
    %c0_17 = arith.constant 0 : index
    %c0_18 = arith.constant 0 : index
    %29 = vector.load %arg4[%c0_16, %c0_17, %c0_18] : memref<2x16x9xf32, #tpu.memory_space<vmem>>, vector<2x16x9xf32>
    tpu.vector_store %arg4[%c0_16, %c0_17, %c0_18], %28 {strides = array<i32>} : memref<2x16x9xf32, #tpu.memory_space<vmem>>, vector<2x16x9xf32>,
    %30 = vector.extract_strided_slice %27 {offsets = [0, 0, 0], sizes = [2, 16, 4], strides = [1, 1, 1]} : vector<2x16x16xf32> to vector<2x16x4xf32>
    %31 = vector.extract_strided_slice %27 {offsets = [0, 0, 4], sizes = [2, 16, 4], strides = [1, 1, 1]} : vector<2x16x16xf32> to vector<2x16x4xf32>
    %32 = arith.maximumf %30, %31 : vector<2x16x4xf32>
    %c0_19 = arith.constant 0 : index
    %c0_20 = arith.constant 0 : index
    %c0_21 = arith.constant 0 : index
    %33 = vector.load %arg4[%c0_19, %c0_20, %c0_21] : memref<2x16x9xf32, #tpu.memory_space<vmem>>, vector<2x16x4xf32>
    tpu.vector_store %arg4[%c0_19, %c0_20, %c0_21], %32 {strides = array<i32>} : memref<2x16x9xf32, #tpu.memory_space<vmem>>, vector<2x16x4xf32>,
    %34 = vector.extract_strided_slice %27 {offsets = [0, 0, 8], sizes = [2, 16, 4], strides = [1, 1, 1]} : vector<2x16x16xf32> to vector<2x16x4xf32>
    %35 = vector.extract_strided_slice %27 {offsets = [0, 0, 12], sizes = [2, 16, 4], strides = [1, 1, 1]} : vector<2x16x16xf32> to vector<2x16x4xf32>
    %36 = arith.maximumf %34, %35 : vector<2x16x4xf32>
    %c0_22 = arith.constant 0 : index
    %c0_23 = arith.constant 0 : index
    %c4 = arith.constant 4 : index
    %37 = vector.load %arg4[%c0_22, %c0_23, %c4] : memref<2x16x9xf32, #tpu.memory_space<vmem>>, vector<2x16x4xf32>
    tpu.vector_store %arg4[%c0_22, %c0_23, %c4], %36 {strides = array<i32>} : memref<2x16x9xf32, #tpu.memory_space<vmem>>, vector<2x16x4xf32>,
    return
  }
  func.func @transform_0(%arg0: i32) -> (i32, i32, i32) {
    %c0_i32 = arith.constant 0 : i32
    %c0_i32_0 = arith.constant 0 : i32
    %c0_i32_1 = arith.constant 0 : i32
    return %c0_i32, %arg0, %c0_i32_0 : i32, i32, i32
  }
  func.func @transform_1(%arg0: i32) -> (i32, i32, i32) {
    %c0_i32 = arith.constant 0 : i32
    %c0_i32_0 = arith.constant 0 : i32
    %c0_i32_1 = arith.constant 0 : i32
    return %c0_i32, %arg0, %c0_i32_0 : i32, i32, i32
  }
  func.func @transform_2(%arg0: i32) -> (i32, i32, i32) {
    %c0_i32 = arith.constant 0 : i32
    %c0_i32_0 = arith.constant 0 : i32
    %c0_i32_1 = arith.constant 0 : i32
    return %c0_i32, %arg0, %c0_i32_0 : i32, i32, i32
  }
  func.func @transform_3(%arg0: i32) -> (i32, i32, i32) {
    %c0_i32 = arith.constant 0 : i32
    %c0_i32_0 = arith.constant 0 : i32
    %c0_i32_1 = arith.constant 0 : i32
    return %c0_i32, %arg0, %c0_i32_0 : i32, i32, i32
  }
}

module attributes {stable_mosaic.version = 11 : i64} {
  func.func @_conv_kernel(%arg0: i32, %arg1: i32, %arg2: memref<1x32x9xf32, #tpu.memory_space<vmem>>, %arg3: memref<4x32x32xbf16, #tpu.memory_space<vmem>>, %arg4: memref<32x1xf32, #tpu.memory_space<vmem>>, %arg5: memref<1x32x3xf32, #tpu.memory_space<vmem>>, %arg6: memref<32x9xbf16, #tpu.memory_space<vmem>>) attributes {dimension_semantics = [#tpu.dimension_semantics<parallel>, #tpu.dimension_semantics<parallel>], iteration_bounds = array<i64: 2, 1>, scalar_prefetch = 0 : i64, scratch_operands = 1 : i64, tpu.core_type = #tpu.core_type<tc>, window_params = [{transform_indices = @transform_0, window_bounds = array<i64: 1, 32, 9>}, {transform_indices = @transform_1, window_bounds = array<i64: 4, 32, 32>}, {transform_indices = @transform_2, window_bounds = array<i64: 32, 1>}, {transform_indices = @transform_3, window_bounds = array<i64: 1, 32, 3>}]} {
    %c0 = arith.constant 0 : index
    %c0_0 = arith.constant 0 : index
    %c0_1 = arith.constant 0 : index
    %0 = vector.load %arg2[%c0, %c0_0, %c0_1] : memref<1x32x9xf32, #tpu.memory_space<vmem>>, vector<1x32x9xf32>
    %1 = vector.shape_cast %0 : vector<1x32x9xf32> to vector<32x9xf32>
    %2 = arith.truncf %1 : vector<32x9xf32> to vector<32x9xbf16>
    %c0_2 = arith.constant 0 : index
    %c0_3 = arith.constant 0 : index
    %3 = vector.load %arg6[%c0_2, %c0_3] : memref<32x9xbf16, #tpu.memory_space<vmem>>, vector<32x9xbf16>
    tpu.vector_store %arg6[%c0_2, %c0_3], %2 {strides = array<i32>} : memref<32x9xbf16, #tpu.memory_space<vmem>>, vector<32x9xbf16>,
    %c0_4 = arith.constant 0 : index
    %c0_5 = arith.constant 0 : index
    %4 = vector.load %arg6[%c0_4, %c0_5] : memref<32x9xbf16, #tpu.memory_space<vmem>>, vector<32x4xbf16>
    %c0_6 = arith.constant 0 : index
    %c0_7 = arith.constant 0 : index
    %c0_8 = arith.constant 0 : index
    %5 = vector.load %arg3[%c0_6, %c0_7, %c0_8] : memref<4x32x32xbf16, #tpu.memory_space<vmem>>, vector<1x32x32xbf16>
    %6 = vector.shape_cast %5 : vector<1x32x32xbf16> to vector<32x32xbf16>
    %cst = arith.constant dense<0.000000e+00> : vector<32x4xf32>
    %7 = tpu.matmul %6, %4, %cst {dimension_numbers = #tpu.dot_dimension_numbers<[1], [0], [0], [1], [0, 0, 1, 1], [], []>} : vector<32x32xbf16>, vector<32x4xbf16>, vector<32x4xf32> -> vector<32x4xf32>
    %c0_9 = arith.constant 0 : index
    %c1 = arith.constant 1 : index
    %8 = vector.load %arg6[%c0_9, %c1] : memref<32x9xbf16, #tpu.memory_space<vmem>>, vector<32x4xbf16>
    %c1_10 = arith.constant 1 : index
    %c0_11 = arith.constant 0 : index
    %c0_12 = arith.constant 0 : index
    %9 = vector.load %arg3[%c1_10, %c0_11, %c0_12] : memref<4x32x32xbf16, #tpu.memory_space<vmem>>, vector<1x32x32xbf16>
    %10 = vector.shape_cast %9 : vector<1x32x32xbf16> to vector<32x32xbf16>
    %cst_13 = arith.constant dense<0.000000e+00> : vector<32x4xf32>
    %11 = tpu.matmul %10, %8, %cst_13 {dimension_numbers = #tpu.dot_dimension_numbers<[1], [0], [0], [1], [0, 0, 1, 1], [], []>} : vector<32x32xbf16>, vector<32x4xbf16>, vector<32x4xf32> -> vector<32x4xf32>
    %12 = arith.addf %7, %11 : vector<32x4xf32>
    %c0_14 = arith.constant 0 : index
    %c4 = arith.constant 4 : index
    %13 = vector.load %arg6[%c0_14, %c4] : memref<32x9xbf16, #tpu.memory_space<vmem>>, vector<32x4xbf16>
    %c2 = arith.constant 2 : index
    %c0_15 = arith.constant 0 : index
    %c0_16 = arith.constant 0 : index
    %14 = vector.load %arg3[%c2, %c0_15, %c0_16] : memref<4x32x32xbf16, #tpu.memory_space<vmem>>, vector<1x32x32xbf16>
    %15 = vector.shape_cast %14 : vector<1x32x32xbf16> to vector<32x32xbf16>
    %cst_17 = arith.constant dense<0.000000e+00> : vector<32x4xf32>
    %16 = tpu.matmul %15, %13, %cst_17 {dimension_numbers = #tpu.dot_dimension_numbers<[1], [0], [0], [1], [0, 0, 1, 1], [], []>} : vector<32x32xbf16>, vector<32x4xbf16>, vector<32x4xf32> -> vector<32x4xf32>
    %17 = arith.addf %12, %16 : vector<32x4xf32>
    %c0_18 = arith.constant 0 : index
    %c5 = arith.constant 5 : index
    %18 = vector.load %arg6[%c0_18, %c5] : memref<32x9xbf16, #tpu.memory_space<vmem>>, vector<32x4xbf16>
    %c3 = arith.constant 3 : index
    %c0_19 = arith.constant 0 : index
    %c0_20 = arith.constant 0 : index
    %19 = vector.load %arg3[%c3, %c0_19, %c0_20] : memref<4x32x32xbf16, #tpu.memory_space<vmem>>, vector<1x32x32xbf16>
    %20 = vector.shape_cast %19 : vector<1x32x32xbf16> to vector<32x32xbf16>
    %cst_21 = arith.constant dense<0.000000e+00> : vector<32x4xf32>
    %21 = tpu.matmul %20, %18, %cst_21 {dimension_numbers = #tpu.dot_dimension_numbers<[1], [0], [0], [1], [0, 0, 1, 1], [], []>} : vector<32x32xbf16>, vector<32x4xbf16>, vector<32x4xf32> -> vector<32x4xf32>
    %22 = arith.addf %17, %21 : vector<32x4xf32>
    %c0_22 = arith.constant 0 : index
    %c0_23 = arith.constant 0 : index
    %23 = vector.load %arg4[%c0_22, %c0_23] : memref<32x1xf32, #tpu.memory_space<vmem>>, vector<32x1xf32>
    %24 = vector.broadcast %23 : vector<32x1xf32> to vector<32x4xf32>
    %25 = arith.addf %22, %24 : vector<32x4xf32>
    %cst_24 = arith.constant 0.000000e+00 : f32
    %26 = vector.broadcast %cst_24 : f32 to vector<32x4xf32>
    %27 = arith.maximumf %25, %26 : vector<32x4xf32>
    %28 = vector.extract_strided_slice %27 {offsets = [0, 0], sizes = [32, 3], strides = [1, 1]} : vector<32x4xf32> to vector<32x3xf32>
    %c0_25 = arith.constant 0 : index
    %c0_26 = arith.constant 0 : index
    %c0_27 = arith.constant 0 : index
    %29 = vector.load %arg5[%c0_25, %c0_26, %c0_27] : memref<1x32x3xf32, #tpu.memory_space<vmem>>, vector<1x32x3xf32>
    %30 = vector.shape_cast %29 : vector<1x32x3xf32> to vector<32x3xf32>
    %31 = vector.shape_cast %28 : vector<32x3xf32> to vector<1x32x3xf32>
    tpu.vector_store %arg5[%c0_25, %c0_26, %c0_27], %31 {strides = array<i32>} : memref<1x32x3xf32, #tpu.memory_space<vmem>>, vector<1x32x3xf32>,
    return
  }
  func.func @transform_0(%arg0: i32, %arg1: i32) -> (i32, i32, i32) {
    %c0_i32 = arith.constant 0 : i32
    %c0_i32_0 = arith.constant 0 : i32
    %c0_i32_1 = arith.constant 0 : i32
    return %arg0, %c0_i32, %c0_i32_0 : i32, i32, i32
  }
  func.func @transform_1(%arg0: i32, %arg1: i32) -> (i32, i32, i32) {
    %c0_i32 = arith.constant 0 : i32
    %c0_i32_0 = arith.constant 0 : i32
    %c0_i32_1 = arith.constant 0 : i32
    return %c0_i32, %arg1, %c0_i32_0 : i32, i32, i32
  }
  func.func @transform_2(%arg0: i32, %arg1: i32) -> (i32, i32) {
    %c0_i32 = arith.constant 0 : i32
    %c0_i32_0 = arith.constant 0 : i32
    return %arg1, %c0_i32 : i32, i32
  }
  func.func @transform_3(%arg0: i32, %arg1: i32) -> (i32, i32, i32) {
    %c0_i32 = arith.constant 0 : i32
    %c0_i32_0 = arith.constant 0 : i32
    return %arg0, %arg1, %c0_i32 : i32, i32, i32
  }
}

</mosaic_0001>

<llo_original>
// kernel: vgg_backbone_forward.12
$region0: #{vgg_backbone_forward.12}
  #allocation0 [shape = 'u32[]', space=smem, size = 0x4, offset = 0x4, fixed_abs, tag = 'smem constant byte address 0x4 - core index']
  #allocation1 [shape = 'u32[72,128]{1,0:T(1,128)}', space=vmem, size = 0x9000, scoped, tag = 'internal scratch']
  #allocation2 [shape = 'bf16[16,62]{1,0:T(8,128)(2,1)}', space=vmem, size = 0x1000, scoped, tag = 'scratch operand']
  %s0 = inlined_call_operand.vmem [shape: f32[2,16,62], index: 0, kind: input, shape index: {}]
  %s1 = inlined_call_operand.vmem [shape: bf16[9,16,16], index: 1, kind: input, shape index: {}]
  %s2 = inlined_call_operand.vmem [shape: f32[16,1], index: 2, kind: input, shape index: {}]
  %s3 = inlined_call_operand.vmem [shape: f32[2,16,38], index: 3, kind: output, shape index: {}]
  %s4 = sld [smem:[#allocation0]]
  $region45: #{vgg_backbone_forward.12} parent=0
    _
  %s6 = ssub.s32 1, %s4
  %s7 = scalar_select 0, %s6, %s4
  loop: start=0, step=1, limit=4
  $region2: #{vgg_backbone_forward.12} parent=0 // loop_pre_header
    _
  $region3: #{vgg_backbone_forward.12} parent=0 // loop_header
    %s9 = sphi 0, %s13
    %p10 = scmp.ge.s32.totalorder %s9, 4
    %s16 = sphi 0, %s28
    %s17 = sphi 0, %s24
    %s18 = sphi 0, %s16
    %s19 = sphi 0, %s17
    %s20 = sphi 0, %s18
    %s21 = sphi 0, %s19
    %s31 = sphi 0, %s33
    %s34 = sphi 0, %s31
    %s35 = sphi 0, %s34
    %s51 = sphi 0, %s35
    %s57 = sphi 0, %s59
    %s60 = sphi 0, %s57
    %s61 = sphi 0, %s60
    %s77 = sphi 0, %s61
    %s83 = sphi 0, %s85
    %s86 = sphi 0, %s83
    %s87 = sphi 0, %s86
    %s103 = sphi 0, %s87
    %s111 = sphi 0, %s113
    %s114 = sphi 0, %s111
    %s115 = sphi 0, %s114
    %s131 = sphi 0, %s115
  $region4: #{vgg_backbone_forward.12} parent=0 // loop_header_branch
    %12 = sbr.rel (%p10) target = $region8
  $region5: #{vgg_backbone_forward.12} parent=0 // loop_body
    %s14 = ssub.s32 %s9, 1
    %s15 = ssub.s32 %s9, 2
    %s22 = sadd.s32 1, %s17
    %p23 = scmp.ge.s32.totalorder %s22, 1
    %s24 = scalar_select %p23, 0, %s22
    %s25 = sadd.s32 1, %s16
    %s26 = scalar_select %p23, %s25, %s16
    %p27 = scmp.ge.s32.totalorder %s26, 2
    %s28 = scalar_select %p27, 0, %s26
    %s29 = ssub.s32 %s16, %s28
    %p30 = scmp.eq.s32.totalorder %s29, 0
    %s32 = sadd.s32 %s31, 1
    %s33 = scalar_select %p30, %s31, %s32
    %p36 = pneg %p30
    %p37 = scmp.eq.s32.totalorder %s9, 1
    %p38 = por %p36, %p37
    %p39 = scmp.ne.s32.totalorder %s31, %s34
    %p40 = scmp.eq.s32.totalorder %s9, 0
    %p41 = por %p39, %p40
    %p42 = scmp.ne.s32.totalorder %s31, %s34
    %p43 = scmp.eq.s32.totalorder %s14, 1
    %p44 = por %p42, %p43
    %p45 = scmp.ne.s32.totalorder %s34, %s35
    %p46 = scmp.eq.s32.totalorder %s14, 0
    %p47 = por %p45, %p46
    %p48 = scmp.ne.s32.totalorder %s34, %s35
    %p49 = scmp.eq.s32.totalorder %s15, 1
    %p50 = por %p48, %p49
    %p52 = scmp.ne.s32.totalorder %s35, %s51
    %p53 = scmp.eq.s32.totalorder %s15, 0
    %p54 = por %p52, %p53
    %s55 = ssub.s32 %s17, %s24
    %p56 = scmp.eq.s32.totalorder %s55, 0
    %s58 = sadd.s32 %s57, 1
    %s59 = scalar_select %p56, %s57, %s58
    %p62 = pneg %p56
    %p63 = scmp.eq.s32.totalorder %s9, 1
    %p64 = por %p62, %p63
    %p65 = scmp.ne.s32.totalorder %s57, %s60
    %p66 = scmp.eq.s32.totalorder %s9, 0
    %p67 = por %p65, %p66
    %p68 = scmp.ne.s32.totalorder %s57, %s60
    %p69 = scmp.eq.s32.totalorder %s14, 1
    %p70 = por %p68, %p69
    %p71 = scmp.ne.s32.totalorder %s60, %s61
    %p72 = scmp.eq.s32.totalorder %s14, 0
    %p73 = por %p71, %p72
    %p74 = scmp.ne.s32.totalorder %s60, %s61
    %p75 = scmp.eq.s32.totalorder %s15, 1
    %p76 = por %p74, %p75
    %p78 = scmp.ne.s32.totalorder %s61, %s77
    %p79 = scmp.eq.s32.totalorder %s15, 0
    %p80 = por %p78, %p79
    %s81 = ssub.s32 %s17, %s24
    %p82 = scmp.eq.s32.totalorder %s81, 0
    %s84 = sadd.s32 %s83, 1
    %s85 = scalar_select %p82, %s83, %s84
    %p88 = pneg %p82
    %p89 = scmp.eq.s32.totalorder %s9, 1
    %p90 = por %p88, %p89
    %p91 = scmp.ne.s32.totalorder %s83, %s86
    %p92 = scmp.eq.s32.totalorder %s9, 0
    %p93 = por %p91, %p92
    %p94 = scmp.ne.s32.totalorder %s83, %s86
    %p95 = scmp.eq.s32.totalorder %s14, 1
    %p96 = por %p94, %p95
    %p97 = scmp.ne.s32.totalorder %s86, %s87
    %p98 = scmp.eq.s32.totalorder %s14, 0
    %p99 = por %p97, %p98
    %p100 = scmp.ne.s32.totalorder %s86, %s87
    %p101 = scmp.eq.s32.totalorder %s15, 1
    %p102 = por %p100, %p101
    %p104 = scmp.ne.s32.totalorder %s87, %s103
    %p105 = scmp.eq.s32.totalorder %s15, 0
    %p106 = por %p104, %p105
    %s107 = ssub.s32 %s16, %s28
    %s108 = ssub.s32 %s17, %s24
    %s109 = sor.u32 %s107, %s108
    %p110 = scmp.eq.s32.totalorder %s109, 0
    %s112 = sadd.s32 %s111, 1
    %s113 = scalar_select %p110, %s111, %s112
    %p116 = pneg %p110
    %p117 = scmp.eq.s32.totalorder %s9, 1
    %p118 = por %p116, %p117
    %p119 = scmp.ne.s32.totalorder %s111, %s114
    %p120 = scmp.eq.s32.totalorder %s9, 0
    %p121 = por %p119, %p120
    %p122 = scmp.ne.s32.totalorder %s111, %s114
    %p123 = scmp.eq.s32.totalorder %s14, 1
    %p124 = por %p122, %p123
    %p125 = scmp.ne.s32.totalorder %s114, %s115
    %p126 = scmp.eq.s32.totalorder %s14, 0
    %p127 = por %p125, %p126
    %p128 = scmp.ne.s32.totalorder %s114, %s115
    %p129 = scmp.eq.s32.totalorder %s15, 1
    %p130 = por %p128, %p129
    %p132 = scmp.ne.s32.totalorder %s115, %s131
    %p133 = scmp.eq.s32.totalorder %s15, 0
    %p134 = por %p132, %p133
    %p135 = scmp.le.s32.totalorder 1, %s9
    %p136 = scmp.lt.s32.totalorder %s9, 3
    %p137 = pnand %p135, %p136
    %p138 = pneg %p137
    // Predicated region
    $region9: #{vgg_backbone_forward.12} parent=5 // pred_check
      _
    $region10: #{vgg_backbone_forward.12} parent=5 // pred_check_branch
      %140 = sbr.rel (%p137) target = $region12
    $region11: #{vgg_backbone_forward.12} parent=5 // pred_region
      %s141 = ssub.s32 %s9, 1
      // Predicated region
      $region13: #{vgg_backbone_forward.12} parent=11 // pred_check
        %p142 = pneg %p73
      $region14: #{vgg_backbone_forward.12} parent=11 // pred_check_branch
        %144 = sbr.rel (%p142) target = $region16
      $region15: #{vgg_backbone_forward.12} parent=11 // pred_region
        %s145 = smul.u32 2, %s19
        %p146 = scmp.lt.s32.totalorder %s145, 1
        %s147 = scalar_select %p146, %s145, 1
        %s148 = smul.addr %s147, 4
        %s149 = scalar_lea.vmem %s1, %s148
        %s150 = smul.u32 2, %s19
      $region16: #{vgg_backbone_forward.12} parent=11 // pred_fallthru
        _
      // Predicated region
      $region17: #{vgg_backbone_forward.12} parent=11 // pred_check
        %p151 = pneg %p99
      $region18: #{vgg_backbone_forward.12} parent=11 // pred_check_branch
        %153 = sbr.rel (%p151) target = $region20
      $region19: #{vgg_backbone_forward.12} parent=11 // pred_region
        %s154 = smul.u32 2, %s19
        %p155 = scmp.lt.s32.totalorder %s154, 1
        %s156 = scalar_select %p155, %s154, 1
        %s157 = smul.addr %s156, 8
        %s158 = scalar_lea.vmem %s2, %s157
        %s159 = smul.u32 2, %s19
      $region20: #{vgg_backbone_forward.12} parent=11 // pred_fallthru
        _
    $region12: #{vgg_backbone_forward.12} parent=5 // pred_fallthru
      _
    %p160 = scmp.lt.s32.totalorder %s9, 2
    // Predicated region
    $region21: #{vgg_backbone_forward.12} parent=5 // pred_check
      %p161 = pneg %p160
    $region22: #{vgg_backbone_forward.12} parent=5 // pred_check_branch
      %163 = sbr.rel (%p161) target = $region24
    $region23: #{vgg_backbone_forward.12} parent=5 // pred_region
      // Predicated region
      $region25: #{vgg_backbone_forward.12} parent=23 // pred_check
        %p164 = pneg %p41
      $region26: #{vgg_backbone_forward.12} parent=23 // pred_check_branch
        %166 = sbr.rel (%p164) target = $region28
      $region27: #{vgg_backbone_forward.12} parent=23 // pred_region
        %p167 = scmp.lt.s32.totalorder %s16, 1
        %s168 = scalar_select %p167, %s16, 1
        %s169 = smul.addr %s168, 2
        %s170 = smul.addr %s169, 8
        %s171 = scalar_lea.vmem %s0, %s170
      $region28: #{vgg_backbone_forward.12} parent=23 // pred_fallthru
        _
    $region24: #{vgg_backbone_forward.12} parent=5 // pred_fallthru
      _
    %p172 = scmp.le.s32.totalorder 1, %s9
    %p173 = scmp.lt.s32.totalorder %s9, 3
    %p174 = pnand %p172, %p173
    %p175 = pneg %p174
    // Predicated region
    $region29: #{vgg_backbone_forward.12} parent=5 // pred_check
      _
    $region30: #{vgg_backbone_forward.12} parent=5 // pred_check_branch
      %177 = sbr.rel (%p174) target = $region32
    $region31: #{vgg_backbone_forward.12} parent=5 // pred_region
      %s178 = ssub.s32 %s9, 1
      %p179 = scmp.lt.s32.totalorder %s18, 1
      %s180 = scalar_select %p179, %s18, 1
      %s181 = smul.addr %s180, 2
      %s182 = smul.addr %s181, 8
      %s183 = scalar_lea.vmem %s0, %s182
      %p184 = pneg %p47
      %p185 = pneg %p44
      %s186 = smul.u32 2, %s19
      %p187 = scmp.lt.s32.totalorder %s186, 1
      %s188 = scalar_select %p187, %s186, 1
      %s189 = smul.addr %s188, 4
      %s190 = scalar_lea.vmem %s1, %s189
      %p191 = pneg %p73
      %p192 = pneg %p70
      %s193 = smul.u32 2, %s19
      %p194 = scmp.lt.s32.totalorder %s193, 1
      %s195 = scalar_select %p194, %s193, 1
      %s196 = smul.addr %s195, 8
      %s197 = scalar_lea.vmem %s2, %s196
      %p198 = pneg %p99
      %p199 = pneg %p96
      %p200 = pneg %p127
      %p201 = pneg %p124
      %s202 = smul.u32 2, %s19
      %p203 = scmp.lt.s32.totalorder %s18, 1
      %s204 = scalar_select %p203, %s18, 1
      %p205 = scmp.lt.s32.totalorder %s202, 1
      %s206 = scalar_select %p205, %s202, 1
      %s207 = smul.addr %s204, 2
      %s208 = sadd.s32 %s206, %s207
      %s209 = smul.addr %s208, 8
      %s210 = scalar_lea.vmem %s3, %s209
      %p211 = scmp.lt.s32.totalorder %s18, 1
      %s212 = scalar_select %p211, %s18, 1
      %s213 = smul.addr %s212, 2
      %s214 = smul.addr %s213, 8
      %s215 = scalar_lea.vmem %s0, %s214
      %s216 = smul.u32 2, %s19
      %p217 = scmp.lt.s32.totalorder %s216, 1
      %s218 = scalar_select %p217, %s216, 1
      %s219 = smul.addr %s218, 4
      %s220 = scalar_lea.vmem %s1, %s219
      %s221 = smul.u32 2, %s19
      %s222 = smul.u32 2, %s19
      %p223 = scmp.lt.s32.totalorder %s222, 1
      %s224 = scalar_select %p223, %s222, 1
      %s225 = smul.addr %s224, 8
      %s226 = scalar_lea.vmem %s2, %s225
      %s227 = smul.u32 2, %s19
      %s228 = smul.u32 2, %s19
      %p229 = scmp.lt.s32.totalorder %s18, 1
      %s230 = scalar_select %p229, %s18, 1
      %p231 = scmp.lt.s32.totalorder %s228, 1
      %s232 = scalar_select %p231, %s228, 1
      %s233 = smul.addr %s230, 2
      %s234 = sadd.s32 %s232, %s233
      %s235 = smul.addr %s234, 8
      %s236 = scalar_lea.vmem %s3, %s235
      %s237 = smul.u32 2, %s19
      %v239 = vld [vmem:[%s215] sm:$0xff]
      %v240 = vld [vmem:[%s215 + $0x8] sm:$0xff]
      %v241 = vpack.c.bf16 %v239, %v239
      %v242 = vpack.c.bf16 %v240, %v240
      %vm243 = vcmask 502784
      %244 = vst.msk [vmem:[#allocation2] sm:$0xf] %vm243, %v241
      %245 = vst.msk [vmem:[#allocation2 + $0x4] sm:$0xf] %vm243, %v242
      %v246 = vld [vmem:[#allocation2] sm:$0xf]
      %v247 = vld [vmem:[#allocation2 + $0x4] sm:$0xf]
      %v248 = vld [vmem:[%s220] sm:$0xf]
      %v249 = vld [vmem:[%s220 + $0x4] sm:$0xf]
      %s250 = scalar_lea.vmem %s220, 8
      %v251 = vld [vmem:[%s250] sm:$0xf]
      %v252 = vld [vmem:[%s250 + $0x4] sm:$0xf]
      %v255 = vunpack.c.l.b16 %v251
      %v256 = vunpack.c.l.b16 %v252
      %v257 = vpack.c.b16 %v256, %v255
      %v260 = vunpack.c.l.b16 %v246
      %v261 = vunpack.c.l.b16 %v247
      %v262 = vpack.c.b16 %v261, %v260
      %263 = vrot.lane.b32.xlu0 %v262, 127
      %v264 = vpop.permute.xlu0 %263
      %vm266 = vcmask 130048
      %v268 = vsel %vm266, %v257, 0
      %270 = vmatpush.bf16.msra.mxu0 0
      %271 = vmatpush.bf16.msra.mxu0 0
      %272 = vmatpush.bf16.msra.mxu0 0
      %273 = vmatpush.bf16.msra.mxu0 0
      %274 = vmatpush.bf16.msra.mxu0 0
      %275 = vmatpush.bf16.msra.mxu0 0
      %276 = vmatpush.bf16.msra.mxu0 0
      %277 = vmatpush.bf16.msra.mxu0 %v264
      %278 = vmatmul.bf16.gmra.mxu0 %v268
      %v279 = vpop.f32.mrf.mxu0
      %v280 = vadd.f32 0.0, %v279
      %v281 = vpop.f32.mrf.mxu0
      %v282 = vadd.f32 0.0, %v281
      %283 = vdwg.mxu0
      %v286 = vunpack.c.l.b16 %v248
      %v287 = vunpack.c.l.b16 %v249
      %v288 = vpack.c.b16 %v287, %v286
      %v291 = vsel %vm266, %v288, 0
      %293 = vmatpush.bf16.msra.mxu0 0
      %294 = vmatpush.bf16.msra.mxu0 0
      %295 = vmatpush.bf16.msra.mxu0 0
      %296 = vmatpush.bf16.msra.mxu0 0
      %297 = vmatpush.bf16.msra.mxu0 0
      %298 = vmatpush.bf16.msra.mxu0 0
      %299 = vmatpush.bf16.msra.mxu0 0
      %300 = vmatpush.bf16.msra.mxu0 %v262
      %301 = vmatmul.bf16.gmra.mxu0 %v291
      %v302 = vpop.f32.mrf.mxu0
      %v303 = vadd.f32 %v280, %v302
      %v304 = vpop.f32.mrf.mxu0
      %v305 = vadd.f32 %v282, %v304
      %306 = vdwg.mxu0
      %s307 = scalar_lea.vmem %s220, 16
      %v308 = vld [vmem:[%s307] sm:$0xf]
      %v309 = vld [vmem:[%s307 + $0x4] sm:$0xf]
      %v312 = vunpack.c.l.b16 %v308
      %v313 = vunpack.c.l.b16 %v309
      %v314 = vpack.c.b16 %v313, %v312
      %315 = vrot.lane.b32.xlu0 %v262, 126
      %v316 = vpop.permute.xlu0 %315
      %v319 = vsel %vm266, %v314, 0
      %321 = vmatpush.bf16.msra.mxu0 0
      %322 = vmatpush.bf16.msra.mxu0 0
      %323 = vmatpush.bf16.msra.mxu0 0
      %324 = vmatpush.bf16.msra.mxu0 0
      %325 = vmatpush.bf16.msra.mxu0 0
      %326 = vmatpush.bf16.msra.mxu0 0
      %327 = vmatpush.bf16.msra.mxu0 0
      %328 = vmatpush.bf16.msra.mxu0 %v316
      %329 = vmatmul.bf16.gmra.mxu0 %v319
      %v330 = vpop.f32.mrf.mxu0
      %v331 = vadd.f32 0.0, %v330
      %v332 = vpop.f32.mrf.mxu0
      %v333 = vadd.f32 0.0, %v332
      %334 = vdwg.mxu0
      %v335 = vadd.f32 %v303, %v331
      %v336 = vadd.f32 %v305, %v333
      %s337 = scalar_lea.vmem %s220, 24
      %v338 = vld [vmem:[%s337] sm:$0xf]
      %v339 = vld [vmem:[%s337 + $0x4] sm:$0xf]
      %v342 = vunpack.c.l.b16 %v338
      %v343 = vunpack.c.l.b16 %v339
      %v344 = vpack.c.b16 %v343, %v342
      %345 = vrot.lane.b32.xlu0 %v262, 122
      %v346 = vpop.permute.xlu0 %345
      %v349 = vsel %vm266, %v344, 0
      %351 = vmatpush.bf16.msra.mxu0 0
      %352 = vmatpush.bf16.msra.mxu0 0
      %353 = vmatpush.bf16.msra.mxu0 0
      %354 = vmatpush.bf16.msra.mxu0 0
      %355 = vmatpush.bf16.msra.mxu0 0
      %356 = vmatpush.bf16.msra.mxu0 0
      %357 = vmatpush.bf16.msra.mxu0 0
      %358 = vmatpush.bf16.msra.mxu0 %v346
      %359 = vmatmul.bf16.gmra.mxu0 %v349
      %v360 = vpop.f32.mrf.mxu0
      %v361 = vadd.f32 0.0, %v360
      %v362 = vpop.f32.mrf.mxu0
      %v363 = vadd.f32 0.0, %v362
      %364 = vdwg.mxu0
      %v365 = vadd.f32 %v335, %v361
      %v366 = vadd.f32 %v336, %v363
      %s367 = scalar_lea.vmem %s220, 32
      %v368 = vld [vmem:[%s367] sm:$0xf]
      %v369 = vld [vmem:[%s367 + $0x4] sm:$0xf]
      %v372 = vunpack.c.l.b16 %v368
      %v373 = vunpack.c.l.b16 %v369
      %v374 = vpack.c.b16 %v373, %v372
      %375 = vrot.lane.b32.xlu0 %v262, 121
      %v376 = vpop.permute.xlu0 %375
      %v379 = vsel %vm266, %v374, 0
      %381 = vmatpush.bf16.msra.mxu0 0
      %382 = vmatpush.bf16.msra.mxu0 0
      %383 = vmatpush.bf16.msra.mxu0 0
      %384 = vmatpush.bf16.msra.mxu0 0
      %385 = vmatpush.bf16.msra.mxu0 0
      %386 = vmatpush.bf16.msra.mxu0 0
      %387 = vmatpush.bf16.msra.mxu0 0
      %388 = vmatpush.bf16.msra.mxu0 %v376
      %389 = vmatmul.bf16.gmra.mxu0 %v379
      %v390 = vpop.f32.mrf.mxu0
      %v391 = vadd.f32 0.0, %v390
      %v392 = vpop.f32.mrf.mxu0
      %v393 = vadd.f32 0.0, %v392
      %394 = vdwg.mxu0
      %v395 = vadd.f32 %v365, %v391
      %v396 = vadd.f32 %v366, %v393
      %s397 = scalar_lea.vmem %s220, 40
      %v398 = vld [vmem:[%s397] sm:$0xf]
      %v399 = vld [vmem:[%s397 + $0x4] sm:$0xf]
      %v402 = vunpack.c.l.b16 %v398
      %v403 = vunpack.c.l.b16 %v399
      %v404 = vpack.c.b16 %v403, %v402
      %405 = vrot.lane.b32.xlu0 %v262, 120
      %v406 = vpop.permute.xlu0 %405
      %v409 = vsel %vm266, %v404, 0
      %411 = vmatpush.bf16.msra.mxu0 0
      %412 = vmatpush.bf16.msra.mxu0 0
      %413 = vmatpush.bf16.msra.mxu0 0
      %414 = vmatpush.bf16.msra.mxu0 0
      %415 = vmatpush.bf16.msra.mxu0 0
      %416 = vmatpush.bf16.msra.mxu0 0
      %417 = vmatpush.bf16.msra.mxu0 0
      %418 = vmatpush.bf16.msra.mxu0 %v406
      %419 = vmatmul.bf16.gmra.mxu0 %v409
      %v420 = vpop.f32.mrf.mxu0
      %v421 = vadd.f32 0.0, %v420
      %v422 = vpop.f32.mrf.mxu0
      %v423 = vadd.f32 0.0, %v422
      %424 = vdwg.mxu0
      %v425 = vadd.f32 %v395, %v421
      %v426 = vadd.f32 %v396, %v423
      %s427 = scalar_lea.vmem %s220, 48
      %v428 = vld [vmem:[%s427] sm:$0xf]
      %v429 = vld [vmem:[%s427 + $0x4] sm:$0xf]
      %v432 = vunpack.c.l.b16 %v428
      %v433 = vunpack.c.l.b16 %v429
      %v434 = vpack.c.b16 %v433, %v432
      %435 = vrot.lane.b32.xlu0 %v262, 116
      %v436 = vpop.permute.xlu0 %435
      %v439 = vsel %vm266, %v434, 0
      %441 = vmatpush.bf16.msra.mxu0 0
      %442 = vmatpush.bf16.msra.mxu0 0
      %443 = vmatpush.bf16.msra.mxu0 0
      %444 = vmatpush.bf16.msra.mxu0 0
      %445 = vmatpush.bf16.msra.mxu0 0
      %446 = vmatpush.bf16.msra.mxu0 0
      %447 = vmatpush.bf16.msra.mxu0 0
      %448 = vmatpush.bf16.msra.mxu0 %v436
      %449 = vmatmul.bf16.gmra.mxu0 %v439
      %v450 = vpop.f32.mrf.mxu0
      %v451 = vadd.f32 0.0, %v450
      %v452 = vpop.f32.mrf.mxu0
      %v453 = vadd.f32 0.0, %v452
      %454 = vdwg.mxu0
      %v455 = vadd.f32 %v425, %v451
      %v456 = vadd.f32 %v426, %v453
      %s457 = scalar_lea.vmem %s220, 56
      %v458 = vld [vmem:[%s457] sm:$0xf]
      %v459 = vld [vmem:[%s457 + $0x4] sm:$0xf]
      %v462 = vunpack.c.l.b16 %v458
      %v463 = vunpack.c.l.b16 %v459
      %v464 = vpack.c.b16 %v463, %v462
      %465 = vrot.lane.b32.xlu0 %v262, 115
      %v466 = vpop.permute.xlu0 %465
      %v469 = vsel %vm266, %v464, 0
      %471 = vmatpush.bf16.msra.mxu0 0
      %472 = vmatpush.bf16.msra.mxu0 0
      %473 = vmatpush.bf16.msra.mxu0 0
      %474 = vmatpush.bf16.msra.mxu0 0
      %475 = vmatpush.bf16.msra.mxu0 0
      %476 = vmatpush.bf16.msra.mxu0 0
      %477 = vmatpush.bf16.msra.mxu0 0
      %478 = vmatpush.bf16.msra.mxu0 %v466
      %479 = vmatmul.bf16.gmra.mxu0 %v469
      %v480 = vpop.f32.mrf.mxu0
      %v481 = vadd.f32 0.0, %v480
      %v482 = vpop.f32.mrf.mxu0
      %v483 = vadd.f32 0.0, %v482
      %484 = vdwg.mxu0
      %v485 = vadd.f32 %v455, %v481
      %v486 = vadd.f32 %v456, %v483
      %s487 = scalar_lea.vmem %s220, 64
      %v488 = vld [vmem:[%s487] sm:$0xf]
      %v489 = vld [vmem:[%s487 + $0x4] sm:$0xf]
      %v492 = vunpack.c.l.b16 %v488
      %v493 = vunpack.c.l.b16 %v489
      %v494 = vpack.c.b16 %v493, %v492
      %495 = vrot.lane.b32.xlu0 %v262, 114
      %v496 = vpop.permute.xlu0 %495
      %v499 = vsel %vm266, %v494, 0
      %501 = vmatpush.bf16.msra.mxu0 0
      %502 = vmatpush.bf16.msra.mxu0 0
      %503 = vmatpush.bf16.msra.mxu0 0
      %504 = vmatpush.bf16.msra.mxu0 0
      %505 = vmatpush.bf16.msra.mxu0 0
      %506 = vmatpush.bf16.msra.mxu0 0
      %507 = vmatpush.bf16.msra.mxu0 0
      %508 = vmatpush.bf16.msra.mxu0 %v496
      %509 = vmatmul.bf16.gmra.mxu0 %v499
      %v510 = vpop.f32.mrf.mxu0
      %v511 = vadd.f32 0.0, %v510
      %v512 = vpop.f32.mrf.mxu0
      %v513 = vadd.f32 0.0, %v512
      %514 = vdwg.mxu0
      %v515 = vadd.f32 %v485, %v511
      %v516 = vadd.f32 %v486, %v513
      %v517 = vld [vmem:[%s226] sm:$0xff]
      %v518 = vld [vmem:[%s226 + $0x8] sm:$0xff]
      %520 = vset.pattern.permute.xlu0 0
      %521 = vperm.xlu0 %520, %v517
      %v522 = vpop.permute.xlu0 %521
      %525 = vset.pattern.permute.xlu0 0
      %526 = vperm.xlu0 %525, %v518
      %v527 = vpop.permute.xlu0 %526
      %v529 = vadd.f32 %v515, %v522
      %v530 = vadd.f32 %v516, %v527
      %v531 = vmax.f32 %v529, 0.0
      %v532 = vmax.f32 %v530, 0.0
      %vm533 = vcmask 310272
      %534 = vst.msk [vmem:[%s236] sm:$0xff] %vm533, 0.0
      %535 = vst.msk [vmem:[%s236 + $0x8] sm:$0xff] %vm533, 0.0
      %538 = vrot.lane.b32.xlu0 %v531, 122
      %v539 = vpop.permute.xlu0 %538
      %540 = vrot.lane.b32.xlu0 %v532, 122
      %v541 = vpop.permute.xlu0 %540
      %v544 = vmax.f32 %v531, %v539
      %v545 = vmax.f32 %v532, %v541
      %548 = vrot.lane.b32.xlu0 %v544, 7
      %v549 = vpop.permute.xlu0 %548
      %550 = vrot.lane.b32.xlu0 %v545, 7
      %v551 = vpop.permute.xlu0 %550
      %vm554 = vcmask 89144
      %555 = vst.msk [vmem:[%s236] sm:$0xff] %vm554, %v549
      %556 = vst.msk [vmem:[%s236 + $0x8] sm:$0xff] %vm554, %v551
      %557 = vrot.lane.b32.xlu0 %v544, 1
      %v558 = vpop.permute.xlu0 %557
      %559 = vrot.lane.b32.xlu0 %v545, 1
      %v560 = vpop.permute.xlu0 %559
      %vm563 = vcmask 138344
      %564 = vst.msk [vmem:[%s236] sm:$0xff] %vm563, %v558
      %565 = vst.msk [vmem:[%s236 + $0x8] sm:$0xff] %vm563, %v560
      %566 = vrot.lane.b32.xlu0 %v544, 123
      %v567 = vpop.permute.xlu0 %566
      %568 = vrot.lane.b32.xlu0 %v545, 123
      %v569 = vpop.permute.xlu0 %568
      %vm572 = vcmask 187544
      %573 = vst.msk [vmem:[%s236] sm:$0xff] %vm572, %v567
      %574 = vst.msk [vmem:[%s236 + $0x8] sm:$0xff] %vm572, %v569
      %575 = vrot.lane.b32.xlu0 %v544, 117
      %v576 = vpop.permute.xlu0 %575
      %577 = vrot.lane.b32.xlu0 %v545, 117
      %v578 = vpop.permute.xlu0 %577
      %vm581 = vcmask 236744
      %582 = vst.msk [vmem:[%s236] sm:$0xff] %vm581, %v576
      %583 = vst.msk [vmem:[%s236 + $0x8] sm:$0xff] %vm581, %v578
      %s584 = smul.u32 2, %s19
      %p585 = scmp.lt.s32.totalorder %s18, 1
      %s586 = scalar_select %p585, %s18, 1
      %p587 = scmp.lt.s32.totalorder %s584, 1
      %s588 = scalar_select %p587, %s584, 1
      %s589 = smul.addr %s586, 2
      %s590 = sadd.s32 %s588, %s589
      %s591 = smul.addr %s590, 8
      %s592 = scalar_lea.vmem %s3, %s591
      // Predicated region
      $region33: #{vgg_backbone_forward.12} parent=31 // pred_check
        %p593 = pneg %p124
      $region34: #{vgg_backbone_forward.12} parent=31 // pred_check_branch
        %595 = sbr.rel (%p593) target = $region36
      $region35: #{vgg_backbone_forward.12} parent=31 // pred_region
        %s596 = smul.u32 2, %s19
      $region36: #{vgg_backbone_forward.12} parent=31 // pred_fallthru
        _
    $region32: #{vgg_backbone_forward.12} parent=5 // pred_fallthru
      _
    %p597 = scmp.le.s32.totalorder 2, %s9
    // Predicated region
    $region37: #{vgg_backbone_forward.12} parent=5 // pred_check
      %p598 = pneg %p597
    $region38: #{vgg_backbone_forward.12} parent=5 // pred_check_branch
      %600 = sbr.rel (%p598) target = $region40
    $region39: #{vgg_backbone_forward.12} parent=5 // pred_region
      %s601 = ssub.s32 %s9, 2
      // Predicated region
      $region41: #{vgg_backbone_forward.12} parent=39 // pred_check
        %p602 = pneg %p130
      $region42: #{vgg_backbone_forward.12} parent=39 // pred_check_branch
        %604 = sbr.rel (%p602) target = $region44
      $region43: #{vgg_backbone_forward.12} parent=39 // pred_region
        %s605 = smul.u32 2, %s21
        %p606 = scmp.lt.s32.totalorder %s20, 1
        %s607 = scalar_select %p606, %s20, 1
        %p608 = scmp.lt.s32.totalorder %s605, 1
        %s609 = scalar_select %p608, %s605, 1
        %s610 = smul.addr %s607, 2
        %s611 = sadd.s32 %s609, %s610
        %s612 = smul.addr %s611, 8
        %s613 = scalar_lea.vmem %s3, %s612
      $region44: #{vgg_backbone_forward.12} parent=39 // pred_fallthru
        _
    $region40: #{vgg_backbone_forward.12} parent=5 // pred_fallthru
      _
  $region6: #{vgg_backbone_forward.12} parent=0 // loop_footer
    %s13 = sadd.s32 1, %s9
  $region7: #{vgg_backbone_forward.12} parent=0 // loop_footer_branch
    %8 = sbr.rel target = $region3
  $region8: #{vgg_backbone_forward.12} parent=0 // loop_exit
    _

// kernel: vgg_backbone_forward.11
$region0: #{vgg_backbone_forward.11}
  #allocation0 [shape = 'u32[]', space=smem, size = 0x4, offset = 0x4, fixed_abs, tag = 'smem constant byte address 0x4 - core index']
  #allocation1 [shape = 'u32[72,128]{1,0:T(1,128)}', space=vmem, size = 0x9000, scoped, tag = 'internal scratch']
  #allocation2 [shape = 'bf16[8,62]{1,0:T(8,128)(2,1)}', space=vmem, size = 0x800, scoped, tag = 'scratch operand']
  %s0 = inlined_call_operand.vmem [shape: f32[2,8,62], index: 0, kind: input, shape index: {}]
  %s1 = inlined_call_operand.vmem [shape: bf16[9,16,8], index: 1, kind: input, shape index: {}]
  %s2 = inlined_call_operand.vmem [shape: f32[16,1], index: 2, kind: input, shape index: {}]
  %s3 = inlined_call_operand.vmem [shape: f32[2,16,62], index: 3, kind: output, shape index: {}]
  %s4 = sld [smem:[#allocation0]]
  $region45: #{vgg_backbone_forward.11} parent=0
    _
  %s6 = ssub.s32 1, %s4
  %s7 = scalar_select 0, %s6, %s4
  loop: start=0, step=1, limit=4
  $region2: #{vgg_backbone_forward.11} parent=0 // loop_pre_header
    _
  $region3: #{vgg_backbone_forward.11} parent=0 // loop_header
    %s9 = sphi 0, %s13
    %p10 = scmp.ge.s32.totalorder %s9, 4
    %s16 = sphi 0, %s28
    %s17 = sphi 0, %s24
    %s18 = sphi 0, %s16
    %s19 = sphi 0, %s17
    %s20 = sphi 0, %s18
    %s21 = sphi 0, %s19
    %s31 = sphi 0, %s33
    %s34 = sphi 0, %s31
    %s35 = sphi 0, %s34
    %s51 = sphi 0, %s35
    %s57 = sphi 0, %s59
    %s60 = sphi 0, %s57
    %s61 = sphi 0, %s60
    %s77 = sphi 0, %s61
    %s83 = sphi 0, %s85
    %s86 = sphi 0, %s83
    %s87 = sphi 0, %s86
    %s103 = sphi 0, %s87
    %s111 = sphi 0, %s113
    %s114 = sphi 0, %s111
    %s115 = sphi 0, %s114
    %s131 = sphi 0, %s115
  $region4: #{vgg_backbone_forward.11} parent=0 // loop_header_branch
    %12 = sbr.rel (%p10) target = $region8
  $region5: #{vgg_backbone_forward.11} parent=0 // loop_body
    %s14 = ssub.s32 %s9, 1
    %s15 = ssub.s32 %s9, 2
    %s22 = sadd.s32 1, %s17
    %p23 = scmp.ge.s32.totalorder %s22, 1
    %s24 = scalar_select %p23, 0, %s22
    %s25 = sadd.s32 1, %s16
    %s26 = scalar_select %p23, %s25, %s16
    %p27 = scmp.ge.s32.totalorder %s26, 2
    %s28 = scalar_select %p27, 0, %s26
    %s29 = ssub.s32 %s16, %s28
    %p30 = scmp.eq.s32.totalorder %s29, 0
    %s32 = sadd.s32 %s31, 1
    %s33 = scalar_select %p30, %s31, %s32
    %p36 = pneg %p30
    %p37 = scmp.eq.s32.totalorder %s9, 1
    %p38 = por %p36, %p37
    %p39 = scmp.ne.s32.totalorder %s31, %s34
    %p40 = scmp.eq.s32.totalorder %s9, 0
    %p41 = por %p39, %p40
    %p42 = scmp.ne.s32.totalorder %s31, %s34
    %p43 = scmp.eq.s32.totalorder %s14, 1
    %p44 = por %p42, %p43
    %p45 = scmp.ne.s32.totalorder %s34, %s35
    %p46 = scmp.eq.s32.totalorder %s14, 0
    %p47 = por %p45, %p46
    %p48 = scmp.ne.s32.totalorder %s34, %s35
    %p49 = scmp.eq.s32.totalorder %s15, 1
    %p50 = por %p48, %p49
    %p52 = scmp.ne.s32.totalorder %s35, %s51
    %p53 = scmp.eq.s32.totalorder %s15, 0
    %p54 = por %p52, %p53
    %s55 = ssub.s32 %s17, %s24
    %p56 = scmp.eq.s32.totalorder %s55, 0
    %s58 = sadd.s32 %s57, 1
    %s59 = scalar_select %p56, %s57, %s58
    %p62 = pneg %p56
    %p63 = scmp.eq.s32.totalorder %s9, 1
    %p64 = por %p62, %p63
    %p65 = scmp.ne.s32.totalorder %s57, %s60
    %p66 = scmp.eq.s32.totalorder %s9, 0
    %p67 = por %p65, %p66
    %p68 = scmp.ne.s32.totalorder %s57, %s60
    %p69 = scmp.eq.s32.totalorder %s14, 1
    %p70 = por %p68, %p69
    %p71 = scmp.ne.s32.totalorder %s60, %s61
    %p72 = scmp.eq.s32.totalorder %s14, 0
    %p73 = por %p71, %p72
    %p74 = scmp.ne.s32.totalorder %s60, %s61
    %p75 = scmp.eq.s32.totalorder %s15, 1
    %p76 = por %p74, %p75
    %p78 = scmp.ne.s32.totalorder %s61, %s77
    %p79 = scmp.eq.s32.totalorder %s15, 0
    %p80 = por %p78, %p79
    %s81 = ssub.s32 %s17, %s24
    %p82 = scmp.eq.s32.totalorder %s81, 0
    %s84 = sadd.s32 %s83, 1
    %s85 = scalar_select %p82, %s83, %s84
    %p88 = pneg %p82
    %p89 = scmp.eq.s32.totalorder %s9, 1
    %p90 = por %p88, %p89
    %p91 = scmp.ne.s32.totalorder %s83, %s86
    %p92 = scmp.eq.s32.totalorder %s9, 0
    %p93 = por %p91, %p92
    %p94 = scmp.ne.s32.totalorder %s83, %s86
    %p95 = scmp.eq.s32.totalorder %s14, 1
    %p96 = por %p94, %p95
    %p97 = scmp.ne.s32.totalorder %s86, %s87
    %p98 = scmp.eq.s32.totalorder %s14, 0
    %p99 = por %p97, %p98
    %p100 = scmp.ne.s32.totalorder %s86, %s87
    %p101 = scmp.eq.s32.totalorder %s15, 1
    %p102 = por %p100, %p101
    %p104 = scmp.ne.s32.totalorder %s87, %s103
    %p105 = scmp.eq.s32.totalorder %s15, 0
    %p106 = por %p104, %p105
    %s107 = ssub.s32 %s16, %s28
    %s108 = ssub.s32 %s17, %s24
    %s109 = sor.u32 %s107, %s108
    %p110 = scmp.eq.s32.totalorder %s109, 0
    %s112 = sadd.s32 %s111, 1
    %s113 = scalar_select %p110, %s111, %s112
    %p116 = pneg %p110
    %p117 = scmp.eq.s32.totalorder %s9, 1
    %p118 = por %p116, %p117
    %p119 = scmp.ne.s32.totalorder %s111, %s114
    %p120 = scmp.eq.s32.totalorder %s9, 0
    %p121 = por %p119, %p120
    %p122 = scmp.ne.s32.totalorder %s111, %s114
    %p123 = scmp.eq.s32.totalorder %s14, 1
    %p124 = por %p122, %p123
    %p125 = scmp.ne.s32.totalorder %s114, %s115
    %p126 = scmp.eq.s32.totalorder %s14, 0
    %p127 = por %p125, %p126
    %p128 = scmp.ne.s32.totalorder %s114, %s115
    %p129 = scmp.eq.s32.totalorder %s15, 1
    %p130 = por %p128, %p129
    %p132 = scmp.ne.s32.totalorder %s115, %s131
    %p133 = scmp.eq.s32.totalorder %s15, 0
    %p134 = por %p132, %p133
    %p135 = scmp.le.s32.totalorder 1, %s9
    %p136 = scmp.lt.s32.totalorder %s9, 3
    %p137 = pnand %p135, %p136
    %p138 = pneg %p137
    // Predicated region
    $region9: #{vgg_backbone_forward.11} parent=5 // pred_check
      _
    $region10: #{vgg_backbone_forward.11} parent=5 // pred_check_branch
      %140 = sbr.rel (%p137) target = $region12
    $region11: #{vgg_backbone_forward.11} parent=5 // pred_region
      %s141 = ssub.s32 %s9, 1
      // Predicated region
      $region13: #{vgg_backbone_forward.11} parent=11 // pred_check
        %p142 = pneg %p73
      $region14: #{vgg_backbone_forward.11} parent=11 // pred_check_branch
        %144 = sbr.rel (%p142) target = $region16
      $region15: #{vgg_backbone_forward.11} parent=11 // pred_region
        %s145 = smul.u32 2, %s19
        %p146 = scmp.lt.s32.totalorder %s145, 1
        %s147 = scalar_select %p146, %s145, 1
        %s148 = smul.addr %s147, 4
        %s149 = scalar_lea.vmem %s1, %s148
        %s150 = smul.u32 2, %s19
      $region16: #{vgg_backbone_forward.11} parent=11 // pred_fallthru
        _
      // Predicated region
      $region17: #{vgg_backbone_forward.11} parent=11 // pred_check
        %p151 = pneg %p99
      $region18: #{vgg_backbone_forward.11} parent=11 // pred_check_branch
        %153 = sbr.rel (%p151) target = $region20
      $region19: #{vgg_backbone_forward.11} parent=11 // pred_region
        %s154 = smul.u32 2, %s19
        %p155 = scmp.lt.s32.totalorder %s154, 1
        %s156 = scalar_select %p155, %s154, 1
        %s157 = smul.addr %s156, 8
        %s158 = scalar_lea.vmem %s2, %s157
        %s159 = smul.u32 2, %s19
      $region20: #{vgg_backbone_forward.11} parent=11 // pred_fallthru
        _
    $region12: #{vgg_backbone_forward.11} parent=5 // pred_fallthru
      _
    %p160 = scmp.lt.s32.totalorder %s9, 2
    // Predicated region
    $region21: #{vgg_backbone_forward.11} parent=5 // pred_check
      %p161 = pneg %p160
    $region22: #{vgg_backbone_forward.11} parent=5 // pred_check_branch
      %163 = sbr.rel (%p161) target = $region24
    $region23: #{vgg_backbone_forward.11} parent=5 // pred_region
      // Predicated region
      $region25: #{vgg_backbone_forward.11} parent=23 // pred_check
        %p164 = pneg %p41
      $region26: #{vgg_backbone_forward.11} parent=23 // pred_check_branch
        %166 = sbr.rel (%p164) target = $region28
      $region27: #{vgg_backbone_forward.11} parent=23 // pred_region
        %p167 = scmp.lt.s32.totalorder %s16, 1
        %s168 = scalar_select %p167, %s16, 1
        %s169 = smul.addr %s168, 8
        %s170 = scalar_lea.vmem %s0, %s169
      $region28: #{vgg_backbone_forward.11} parent=23 // pred_fallthru
        _
    $region24: #{vgg_backbone_forward.11} parent=5 // pred_fallthru
      _
    %p171 = scmp.le.s32.totalorder 1, %s9
    %p172 = scmp.lt.s32.totalorder %s9, 3
    %p173 = pnand %p171, %p172
    %p174 = pneg %p173
    // Predicated region
    $region29: #{vgg_backbone_forward.11} parent=5 // pred_check
      _
    $region30: #{vgg_backbone_forward.11} parent=5 // pred_check_branch
      %176 = sbr.rel (%p173) target = $region32
    $region31: #{vgg_backbone_forward.11} parent=5 // pred_region
      %s177 = ssub.s32 %s9, 1
      %p178 = scmp.lt.s32.totalorder %s18, 1
      %s179 = scalar_select %p178, %s18, 1
      %s180 = smul.addr %s179, 8
      %s181 = scalar_lea.vmem %s0, %s180
      %p182 = pneg %p47
      %p183 = pneg %p44
      %s184 = smul.u32 2, %s19
      %p185 = scmp.lt.s32.totalorder %s184, 1
      %s186 = scalar_select %p185, %s184, 1
      %s187 = smul.addr %s186, 4
      %s188 = scalar_lea.vmem %s1, %s187
      %p189 = pneg %p73
      %p190 = pneg %p70
      %s191 = smul.u32 2, %s19
      %p192 = scmp.lt.s32.totalorder %s191, 1
      %s193 = scalar_select %p192, %s191, 1
      %s194 = smul.addr %s193, 8
      %s195 = scalar_lea.vmem %s2, %s194
      %p196 = pneg %p99
      %p197 = pneg %p96
      %p198 = pneg %p127
      %p199 = pneg %p124
      %s200 = smul.u32 2, %s19
      %p201 = scmp.lt.s32.totalorder %s18, 1
      %s202 = scalar_select %p201, %s18, 1
      %p203 = scmp.lt.s32.totalorder %s200, 1
      %s204 = scalar_select %p203, %s200, 1
      %s205 = smul.addr %s202, 2
      %s206 = sadd.s32 %s204, %s205
      %s207 = smul.addr %s206, 8
      %s208 = scalar_lea.vmem %s3, %s207
      %p209 = scmp.lt.s32.totalorder %s18, 1
      %s210 = scalar_select %p209, %s18, 1
      %s211 = smul.addr %s210, 8
      %s212 = scalar_lea.vmem %s0, %s211
      %s213 = smul.u32 2, %s19
      %p214 = scmp.lt.s32.totalorder %s213, 1
      %s215 = scalar_select %p214, %s213, 1
      %s216 = smul.addr %s215, 4
      %s217 = scalar_lea.vmem %s1, %s216
      %s218 = smul.u32 2, %s19
      %s219 = smul.u32 2, %s19
      %p220 = scmp.lt.s32.totalorder %s219, 1
      %s221 = scalar_select %p220, %s219, 1
      %s222 = smul.addr %s221, 8
      %s223 = scalar_lea.vmem %s2, %s222
      %s224 = smul.u32 2, %s19
      %s225 = smul.u32 2, %s19
      %p226 = scmp.lt.s32.totalorder %s18, 1
      %s227 = scalar_select %p226, %s18, 1
      %p228 = scmp.lt.s32.totalorder %s225, 1
      %s229 = scalar_select %p228, %s225, 1
      %s230 = smul.addr %s227, 2
      %s231 = sadd.s32 %s229, %s230
      %s232 = smul.addr %s231, 8
      %s233 = scalar_lea.vmem %s3, %s232
      %s234 = smul.u32 2, %s19
      %v236 = vld [vmem:[%s212] sm:$0xff]
      %v237 = vpack.c.bf16 %v236, %v236
      %vm238 = vcmask 502784
      %239 = vst.msk [vmem:[#allocation2] sm:$0xf] %vm238, %v237
      %v240 = vld [vmem:[#allocation2] sm:$0xf]
      %v241 = vld [vmem:[%s217] sm:$0xf]
      %v242 = vld [vmem:[%s217 + $0x4] sm:$0xf]
      %s243 = scalar_lea.vmem %s217, 8
      %v244 = vld [vmem:[%s243] sm:$0xf]
      %v245 = vld [vmem:[%s243 + $0x4] sm:$0xf]
      %v248 = vunpack.c.l.b16 %v244
      %v249 = vunpack.c.l.b16 %v245
      %v250 = vpack.c.b16 %v249, %v248
      %v252 = vunpack.c.l.b16 %v240
      %v253 = vpack.c.b16 %v252, %v252
      %254 = vrot.lane.b32.xlu0 %v253, 127
      %v255 = vpop.permute.xlu0 %254
      %vm256 = vcmask 64512
      %v258 = vsel %vm256, %v250, 0
      %vm260 = vcmask 1043456
      %v262 = vsel %vm260, %v255, 0
      %264 = vmatpush.bf16.msra.mxu0 0
      %265 = vmatpush.bf16.msra.mxu0 0
      %266 = vmatpush.bf16.msra.mxu0 0
      %267 = vmatpush.bf16.msra.mxu0 0
      %268 = vmatpush.bf16.msra.mxu0 0
      %269 = vmatpush.bf16.msra.mxu0 0
      %270 = vmatpush.bf16.msra.mxu0 0
      %271 = vmatpush.bf16.msra.mxu0 %v262
      %272 = vmatmul.bf16.gmra.mxu0 %v258
      %v273 = vpop.f32.mrf.mxu0
      %v274 = vadd.f32 0.0, %v273
      %v275 = vpop.f32.mrf.mxu0
      %v276 = vadd.f32 0.0, %v275
      %277 = vdwg.mxu0
      %v280 = vunpack.c.l.b16 %v241
      %v281 = vunpack.c.l.b16 %v242
      %v282 = vpack.c.b16 %v281, %v280
      %v284 = vsel %vm256, %v282, 0
      %v287 = vsel %vm260, %v240, 0
      %289 = vmatpush.bf16.msra.mxu0 0
      %290 = vmatpush.bf16.msra.mxu0 0
      %291 = vmatpush.bf16.msra.mxu0 0
      %292 = vmatpush.bf16.msra.mxu0 0
      %293 = vmatpush.bf16.msra.mxu0 0
      %294 = vmatpush.bf16.msra.mxu0 0
      %295 = vmatpush.bf16.msra.mxu0 0
      %296 = vmatpush.bf16.msra.mxu0 %v287
      %297 = vmatmul.bf16.gmra.mxu0 %v284
      %v298 = vpop.f32.mrf.mxu0
      %v299 = vadd.f32 %v274, %v298
      %v300 = vpop.f32.mrf.mxu0
      %v301 = vadd.f32 %v276, %v300
      %302 = vdwg.mxu0
      %s303 = scalar_lea.vmem %s217, 16
      %v304 = vld [vmem:[%s303] sm:$0xf]
      %v305 = vld [vmem:[%s303 + $0x4] sm:$0xf]
      %v308 = vunpack.c.l.b16 %v304
      %v309 = vunpack.c.l.b16 %v305
      %v310 = vpack.c.b16 %v309, %v308
      %311 = vrot.lane.b32.xlu0 %v253, 126
      %v312 = vpop.permute.xlu0 %311
      %v314 = vsel %vm256, %v310, 0
      %v317 = vsel %vm260, %v312, 0
      %319 = vmatpush.bf16.msra.mxu0 0
      %320 = vmatpush.bf16.msra.mxu0 0
      %321 = vmatpush.bf16.msra.mxu0 0
      %322 = vmatpush.bf16.msra.mxu0 0
      %323 = vmatpush.bf16.msra.mxu0 0
      %324 = vmatpush.bf16.msra.mxu0 0
      %325 = vmatpush.bf16.msra.mxu0 0
      %326 = vmatpush.bf16.msra.mxu0 %v317
      %327 = vmatmul.bf16.gmra.mxu0 %v314
      %v328 = vpop.f32.mrf.mxu0
      %v329 = vadd.f32 0.0, %v328
      %v330 = vpop.f32.mrf.mxu0
      %v331 = vadd.f32 0.0, %v330
      %332 = vdwg.mxu0
      %v333 = vadd.f32 %v299, %v329
      %v334 = vadd.f32 %v301, %v331
      %s335 = scalar_lea.vmem %s217, 24
      %v336 = vld [vmem:[%s335] sm:$0xf]
      %v337 = vld [vmem:[%s335 + $0x4] sm:$0xf]
      %v340 = vunpack.c.l.b16 %v336
      %v341 = vunpack.c.l.b16 %v337
      %v342 = vpack.c.b16 %v341, %v340
      %343 = vrot.lane.b32.xlu0 %v253, 122
      %v344 = vpop.permute.xlu0 %343
      %v346 = vsel %vm256, %v342, 0
      %v349 = vsel %vm260, %v344, 0
      %351 = vmatpush.bf16.msra.mxu0 0
      %352 = vmatpush.bf16.msra.mxu0 0
      %353 = vmatpush.bf16.msra.mxu0 0
      %354 = vmatpush.bf16.msra.mxu0 0
      %355 = vmatpush.bf16.msra.mxu0 0
      %356 = vmatpush.bf16.msra.mxu0 0
      %357 = vmatpush.bf16.msra.mxu0 0
      %358 = vmatpush.bf16.msra.mxu0 %v349
      %359 = vmatmul.bf16.gmra.mxu0 %v346
      %v360 = vpop.f32.mrf.mxu0
      %v361 = vadd.f32 0.0, %v360
      %v362 = vpop.f32.mrf.mxu0
      %v363 = vadd.f32 0.0, %v362
      %364 = vdwg.mxu0
      %v365 = vadd.f32 %v333, %v361
      %v366 = vadd.f32 %v334, %v363
      %s367 = scalar_lea.vmem %s217, 32
      %v368 = vld [vmem:[%s367] sm:$0xf]
      %v369 = vld [vmem:[%s367 + $0x4] sm:$0xf]
      %v372 = vunpack.c.l.b16 %v368
      %v373 = vunpack.c.l.b16 %v369
      %v374 = vpack.c.b16 %v373, %v372
      %375 = vrot.lane.b32.xlu0 %v253, 121
      %v376 = vpop.permute.xlu0 %375
      %v378 = vsel %vm256, %v374, 0
      %v381 = vsel %vm260, %v376, 0
      %383 = vmatpush.bf16.msra.mxu0 0
      %384 = vmatpush.bf16.msra.mxu0 0
      %385 = vmatpush.bf16.msra.mxu0 0
      %386 = vmatpush.bf16.msra.mxu0 0
      %387 = vmatpush.bf16.msra.mxu0 0
      %388 = vmatpush.bf16.msra.mxu0 0
      %389 = vmatpush.bf16.msra.mxu0 0
      %390 = vmatpush.bf16.msra.mxu0 %v381
      %391 = vmatmul.bf16.gmra.mxu0 %v378
      %v392 = vpop.f32.mrf.mxu0
      %v393 = vadd.f32 0.0, %v392
      %v394 = vpop.f32.mrf.mxu0
      %v395 = vadd.f32 0.0, %v394
      %396 = vdwg.mxu0
      %v397 = vadd.f32 %v365, %v393
      %v398 = vadd.f32 %v366, %v395
      %s399 = scalar_lea.vmem %s217, 40
      %v400 = vld [vmem:[%s399] sm:$0xf]
      %v401 = vld [vmem:[%s399 + $0x4] sm:$0xf]
      %v404 = vunpack.c.l.b16 %v400
      %v405 = vunpack.c.l.b16 %v401
      %v406 = vpack.c.b16 %v405, %v404
      %407 = vrot.lane.b32.xlu0 %v253, 120
      %v408 = vpop.permute.xlu0 %407
      %v410 = vsel %vm256, %v406, 0
      %v413 = vsel %vm260, %v408, 0
      %415 = vmatpush.bf16.msra.mxu0 0
      %416 = vmatpush.bf16.msra.mxu0 0
      %417 = vmatpush.bf16.msra.mxu0 0
      %418 = vmatpush.bf16.msra.mxu0 0
      %419 = vmatpush.bf16.msra.mxu0 0
      %420 = vmatpush.bf16.msra.mxu0 0
      %421 = vmatpush.bf16.msra.mxu0 0
      %422 = vmatpush.bf16.msra.mxu0 %v413
      %423 = vmatmul.bf16.gmra.mxu0 %v410
      %v424 = vpop.f32.mrf.mxu0
      %v425 = vadd.f32 0.0, %v424
      %v426 = vpop.f32.mrf.mxu0
      %v427 = vadd.f32 0.0, %v426
      %428 = vdwg.mxu0
      %v429 = vadd.f32 %v397, %v425
      %v430 = vadd.f32 %v398, %v427
      %s431 = scalar_lea.vmem %s217, 48
      %v432 = vld [vmem:[%s431] sm:$0xf]
      %v433 = vld [vmem:[%s431 + $0x4] sm:$0xf]
      %v436 = vunpack.c.l.b16 %v432
      %v437 = vunpack.c.l.b16 %v433
      %v438 = vpack.c.b16 %v437, %v436
      %439 = vrot.lane.b32.xlu0 %v253, 116
      %v440 = vpop.permute.xlu0 %439
      %v442 = vsel %vm256, %v438, 0
      %v445 = vsel %vm260, %v440, 0
      %447 = vmatpush.bf16.msra.mxu0 0
      %448 = vmatpush.bf16.msra.mxu0 0
      %449 = vmatpush.bf16.msra.mxu0 0
      %450 = vmatpush.bf16.msra.mxu0 0
      %451 = vmatpush.bf16.msra.mxu0 0
      %452 = vmatpush.bf16.msra.mxu0 0
      %453 = vmatpush.bf16.msra.mxu0 0
      %454 = vmatpush.bf16.msra.mxu0 %v445
      %455 = vmatmul.bf16.gmra.mxu0 %v442
      %v456 = vpop.f32.mrf.mxu0
      %v457 = vadd.f32 0.0, %v456
      %v458 = vpop.f32.mrf.mxu0
      %v459 = vadd.f32 0.0, %v458
      %460 = vdwg.mxu0
      %v461 = vadd.f32 %v429, %v457
      %v462 = vadd.f32 %v430, %v459
      %s463 = scalar_lea.vmem %s217, 56
      %v464 = vld [vmem:[%s463] sm:$0xf]
      %v465 = vld [vmem:[%s463 + $0x4] sm:$0xf]
      %v468 = vunpack.c.l.b16 %v464
      %v469 = vunpack.c.l.b16 %v465
      %v470 = vpack.c.b16 %v469, %v468
      %471 = vrot.lane.b32.xlu0 %v253, 115
      %v472 = vpop.permute.xlu0 %471
      %v474 = vsel %vm256, %v470, 0
      %v477 = vsel %vm260, %v472, 0
      %479 = vmatpush.bf16.msra.mxu0 0
      %480 = vmatpush.bf16.msra.mxu0 0
      %481 = vmatpush.bf16.msra.mxu0 0
      %482 = vmatpush.bf16.msra.mxu0 0
      %483 = vmatpush.bf16.msra.mxu0 0
      %484 = vmatpush.bf16.msra.mxu0 0
      %485 = vmatpush.bf16.msra.mxu0 0
      %486 = vmatpush.bf16.msra.mxu0 %v477
      %487 = vmatmul.bf16.gmra.mxu0 %v474
      %v488 = vpop.f32.mrf.mxu0
      %v489 = vadd.f32 0.0, %v488
      %v490 = vpop.f32.mrf.mxu0
      %v491 = vadd.f32 0.0, %v490
      %492 = vdwg.mxu0
      %v493 = vadd.f32 %v461, %v489
      %v494 = vadd.f32 %v462, %v491
      %s495 = scalar_lea.vmem %s217, 64
      %v496 = vld [vmem:[%s495] sm:$0xf]
      %v497 = vld [vmem:[%s495 + $0x4] sm:$0xf]
      %v500 = vunpack.c.l.b16 %v496
      %v501 = vunpack.c.l.b16 %v497
      %v502 = vpack.c.b16 %v501, %v500
      %503 = vrot.lane.b32.xlu0 %v253, 114
      %v504 = vpop.permute.xlu0 %503
      %v506 = vsel %vm256, %v502, 0
      %v509 = vsel %vm260, %v504, 0
      %511 = vmatpush.bf16.msra.mxu0 0
      %512 = vmatpush.bf16.msra.mxu0 0
      %513 = vmatpush.bf16.msra.mxu0 0
      %514 = vmatpush.bf16.msra.mxu0 0
      %515 = vmatpush.bf16.msra.mxu0 0
      %516 = vmatpush.bf16.msra.mxu0 0
      %517 = vmatpush.bf16.msra.mxu0 0
      %518 = vmatpush.bf16.msra.mxu0 %v509
      %519 = vmatmul.bf16.gmra.mxu0 %v506
      %v520 = vpop.f32.mrf.mxu0
      %v521 = vadd.f32 0.0, %v520
      %v522 = vpop.f32.mrf.mxu0
      %v523 = vadd.f32 0.0, %v522
      %524 = vdwg.mxu0
      %v525 = vadd.f32 %v493, %v521
      %v526 = vadd.f32 %v494, %v523
      %v527 = vld [vmem:[%s223] sm:$0xff]
      %v528 = vld [vmem:[%s223 + $0x8] sm:$0xff]
      %530 = vset.pattern.permute.xlu0 0
      %531 = vperm.xlu0 %530, %v527
      %v532 = vpop.permute.xlu0 %531
      %535 = vset.pattern.permute.xlu0 0
      %536 = vperm.xlu0 %535, %v528
      %v537 = vpop.permute.xlu0 %536
      %v539 = vadd.f32 %v525, %v532
      %v540 = vadd.f32 %v526, %v537
      %v541 = vmax.f32 %v539, 0.0
      %v542 = vmax.f32 %v540, 0.0
      %vm543 = vcmask 506880
      %544 = vst.msk [vmem:[%s233] sm:$0xff] %vm543, 0.0
      %545 = vst.msk [vmem:[%s233 + $0x8] sm:$0xff] %vm543, 0.0
      %548 = vrot.lane.b32.xlu0 %v541, 7
      %v549 = vpop.permute.xlu0 %548
      %550 = vrot.lane.b32.xlu0 %v542, 7
      %v551 = vpop.permute.xlu0 %550
      %vm554 = vcmask 89144
      %555 = vst.msk [vmem:[%s233] sm:$0xff] %vm554, %v549
      %556 = vst.msk [vmem:[%s233 + $0x8] sm:$0xff] %vm554, %v551
      %vm557 = vcmask 138344
      %558 = vst.msk [vmem:[%s233] sm:$0xff] %vm557, %v549
      %559 = vst.msk [vmem:[%s233 + $0x8] sm:$0xff] %vm557, %v551
      %vm560 = vcmask 187544
      %561 = vst.msk [vmem:[%s233] sm:$0xff] %vm560, %v549
      %562 = vst.msk [vmem:[%s233 + $0x8] sm:$0xff] %vm560, %v551
      %vm563 = vcmask 236744
      %564 = vst.msk [vmem:[%s233] sm:$0xff] %vm563, %v549
      %565 = vst.msk [vmem:[%s233 + $0x8] sm:$0xff] %vm563, %v551
      %vm566 = vcmask 285944
      %567 = vst.msk [vmem:[%s233] sm:$0xff] %vm566, %v549
      %568 = vst.msk [vmem:[%s233 + $0x8] sm:$0xff] %vm566, %v551
      %vm569 = vcmask 335144
      %570 = vst.msk [vmem:[%s233] sm:$0xff] %vm569, %v549
      %571 = vst.msk [vmem:[%s233 + $0x8] sm:$0xff] %vm569, %v551
      %vm572 = vcmask 384344
      %573 = vst.msk [vmem:[%s233] sm:$0xff] %vm572, %v549
      %574 = vst.msk [vmem:[%s233 + $0x8] sm:$0xff] %vm572, %v551
      %vm575 = vcmask 433544
      %576 = vst.msk [vmem:[%s233] sm:$0xff] %vm575, %v549
      %577 = vst.msk [vmem:[%s233 + $0x8] sm:$0xff] %vm575, %v551
      %s578 = smul.u32 2, %s19
      %p579 = scmp.lt.s32.totalorder %s18, 1
      %s580 = scalar_select %p579, %s18, 1
      %p581 = scmp.lt.s32.totalorder %s578, 1
      %s582 = scalar_select %p581, %s578, 1
      %s583 = smul.addr %s580, 2
      %s584 = sadd.s32 %s582, %s583
      %s585 = smul.addr %s584, 8
      %s586 = scalar_lea.vmem %s3, %s585
      // Predicated region
      $region33: #{vgg_backbone_forward.11} parent=31 // pred_check
        %p587 = pneg %p124
      $region34: #{vgg_backbone_forward.11} parent=31 // pred_check_branch
        %589 = sbr.rel (%p587) target = $region36
      $region35: #{vgg_backbone_forward.11} parent=31 // pred_region
        %s590 = smul.u32 2, %s19
      $region36: #{vgg_backbone_forward.11} parent=31 // pred_fallthru
        _
    $region32: #{vgg_backbone_forward.11} parent=5 // pred_fallthru
      _
    %p591 = scmp.le.s32.totalorder 2, %s9
    // Predicated region
    $region37: #{vgg_backbone_forward.11} parent=5 // pred_check
      %p592 = pneg %p591
    $region38: #{vgg_backbone_forward.11} parent=5 // pred_check_branch
      %594 = sbr.rel (%p592) target = $region40
    $region39: #{vgg_backbone_forward.11} parent=5 // pred_region
      %s595 = ssub.s32 %s9, 2
      // Predicated region
      $region41: #{vgg_backbone_forward.11} parent=39 // pred_check
        %p596 = pneg %p130
      $region42: #{vgg_backbone_forward.11} parent=39 // pred_check_branch
        %598 = sbr.rel (%p596) target = $region44
      $region43: #{vgg_backbone_forward.11} parent=39 // pred_region
        %s599 = smul.u32 2, %s21
        %p600 = scmp.lt.s32.totalorder %s20, 1
        %s601 = scalar_select %p600, %s20, 1
        %p602 = scmp.lt.s32.totalorder %s599, 1
        %s603 = scalar_select %p602, %s599, 1
        %s604 = smul.addr %s601, 2
        %s605 = sadd.s32 %s603, %s604
        %s606 = smul.addr %s605, 8
        %s607 = scalar_lea.vmem %s3, %s606
      $region44: #{vgg_backbone_forward.11} parent=39 // pred_fallthru
        _
    $region40: #{vgg_backbone_forward.11} parent=5 // pred_fallthru
      _
  $region6: #{vgg_backbone_forward.11} parent=0 // loop_footer
    %s13 = sadd.s32 1, %s9
  $region7: #{vgg_backbone_forward.11} parent=0 // loop_footer_branch
    %8 = sbr.rel target = $region3
  $region8: #{vgg_backbone_forward.11} parent=0 // loop_exit
    _

// kernel: vgg_backbone_forward.10
$region0: #{vgg_backbone_forward.10}
  #allocation0 [shape = 'u32[]', space=smem, size = 0x4, offset = 0x4, fixed_abs, tag = 'smem constant byte address 0x4 - core index']
  #allocation1 [shape = 'u32[72,128]{1,0:T(1,128)}', space=vmem, size = 0x9000, scoped, tag = 'internal scratch']
  #allocation2 [shape = 'bf16[4,182]{1,0:T(4,128)(2,1)}', space=vmem, size = 0x800, scoped, tag = 'scratch operand']
  %s0 = inlined_call_operand.vmem [shape: f32[2,4,182], index: 0, kind: input, shape index: {}]
  %s1 = inlined_call_operand.vmem [shape: bf16[9,8,4], index: 1, kind: input, shape index: {}]
  %s2 = inlined_call_operand.vmem [shape: f32[8,1], index: 2, kind: input, shape index: {}]
  %s3 = inlined_call_operand.vmem [shape: f32[2,8,4], index: 3, kind: input, shape index: {}]
  %s4 = inlined_call_operand.vmem [shape: f32[2,8,62], index: 4, kind: output, shape index: {}]
  %s5 = sld [smem:[#allocation0]]
  $region49: #{vgg_backbone_forward.10} parent=0
    _
  %s7 = ssub.s32 1, %s5
  %s8 = scalar_select 0, %s7, %s5
  loop: start=0, step=1, limit=4
  $region2: #{vgg_backbone_forward.10} parent=0 // loop_pre_header
    _
  $region3: #{vgg_backbone_forward.10} parent=0 // loop_header
    %s10 = sphi 0, %s14
    %p11 = scmp.ge.s32.totalorder %s10, 4
    %s17 = sphi 0, %s29
    %s18 = sphi 0, %s25
    %s19 = sphi 0, %s17
    %s20 = sphi 0, %s18
    %s21 = sphi 0, %s19
    %s22 = sphi 0, %s20
    %s32 = sphi 0, %s34
    %s35 = sphi 0, %s32
    %s36 = sphi 0, %s35
    %s52 = sphi 0, %s36
    %s58 = sphi 0, %s60
    %s61 = sphi 0, %s58
    %s62 = sphi 0, %s61
    %s78 = sphi 0, %s62
    %s84 = sphi 0, %s86
    %s87 = sphi 0, %s84
    %s88 = sphi 0, %s87
    %s104 = sphi 0, %s88
    %s108 = sphi 0, %s108
    %s110 = sphi 0, %s108
    %s111 = sphi 0, %s110
    %s125 = sphi 0, %s111
    %s133 = sphi 0, %s135
    %s136 = sphi 0, %s133
    %s137 = sphi 0, %s136
    %s153 = sphi 0, %s137
  $region4: #{vgg_backbone_forward.10} parent=0 // loop_header_branch
    %13 = sbr.rel (%p11) target = $region8
  $region5: #{vgg_backbone_forward.10} parent=0 // loop_body
    %s15 = ssub.s32 %s10, 1
    %s16 = ssub.s32 %s10, 2
    %s23 = sadd.s32 1, %s18
    %p24 = scmp.ge.s32.totalorder %s23, 1
    %s25 = scalar_select %p24, 0, %s23
    %s26 = sadd.s32 1, %s17
    %s27 = scalar_select %p24, %s26, %s17
    %p28 = scmp.ge.s32.totalorder %s27, 2
    %s29 = scalar_select %p28, 0, %s27
    %s30 = ssub.s32 %s17, %s29
    %p31 = scmp.eq.s32.totalorder %s30, 0
    %s33 = sadd.s32 %s32, 1
    %s34 = scalar_select %p31, %s32, %s33
    %p37 = pneg %p31
    %p38 = scmp.eq.s32.totalorder %s10, 1
    %p39 = por %p37, %p38
    %p40 = scmp.ne.s32.totalorder %s32, %s35
    %p41 = scmp.eq.s32.totalorder %s10, 0
    %p42 = por %p40, %p41
    %p43 = scmp.ne.s32.totalorder %s32, %s35
    %p44 = scmp.eq.s32.totalorder %s15, 1
    %p45 = por %p43, %p44
    %p46 = scmp.ne.s32.totalorder %s35, %s36
    %p47 = scmp.eq.s32.totalorder %s15, 0
    %p48 = por %p46, %p47
    %p49 = scmp.ne.s32.totalorder %s35, %s36
    %p50 = scmp.eq.s32.totalorder %s16, 1
    %p51 = por %p49, %p50
    %p53 = scmp.ne.s32.totalorder %s36, %s52
    %p54 = scmp.eq.s32.totalorder %s16, 0
    %p55 = por %p53, %p54
    %s56 = ssub.s32 %s18, %s25
    %p57 = scmp.eq.s32.totalorder %s56, 0
    %s59 = sadd.s32 %s58, 1
    %s60 = scalar_select %p57, %s58, %s59
    %p63 = pneg %p57
    %p64 = scmp.eq.s32.totalorder %s10, 1
    %p65 = por %p63, %p64
    %p66 = scmp.ne.s32.totalorder %s58, %s61
    %p67 = scmp.eq.s32.totalorder %s10, 0
    %p68 = por %p66, %p67
    %p69 = scmp.ne.s32.totalorder %s58, %s61
    %p70 = scmp.eq.s32.totalorder %s15, 1
    %p71 = por %p69, %p70
    %p72 = scmp.ne.s32.totalorder %s61, %s62
    %p73 = scmp.eq.s32.totalorder %s15, 0
    %p74 = por %p72, %p73
    %p75 = scmp.ne.s32.totalorder %s61, %s62
    %p76 = scmp.eq.s32.totalorder %s16, 1
    %p77 = por %p75, %p76
    %p79 = scmp.ne.s32.totalorder %s62, %s78
    %p80 = scmp.eq.s32.totalorder %s16, 0
    %p81 = por %p79, %p80
    %s82 = ssub.s32 %s18, %s25
    %p83 = scmp.eq.s32.totalorder %s82, 0
    %s85 = sadd.s32 %s84, 1
    %s86 = scalar_select %p83, %s84, %s85
    %p89 = pneg %p83
    %p90 = scmp.eq.s32.totalorder %s10, 1
    %p91 = por %p89, %p90
    %p92 = scmp.ne.s32.totalorder %s84, %s87
    %p93 = scmp.eq.s32.totalorder %s10, 0
    %p94 = por %p92, %p93
    %p95 = scmp.ne.s32.totalorder %s84, %s87
    %p96 = scmp.eq.s32.totalorder %s15, 1
    %p97 = por %p95, %p96
    %p98 = scmp.ne.s32.totalorder %s87, %s88
    %p99 = scmp.eq.s32.totalorder %s15, 0
    %p100 = por %p98, %p99
    %p101 = scmp.ne.s32.totalorder %s87, %s88
    %p102 = scmp.eq.s32.totalorder %s16, 1
    %p103 = por %p101, %p102
    %p105 = scmp.ne.s32.totalorder %s88, %s104
    %p106 = scmp.eq.s32.totalorder %s16, 0
    %p107 = por %p105, %p106
    %s109 = sadd.s32 %s108, 1
    %p112 = scmp.eq.s32.totalorder %s10, 1
    %p113 = scmp.ne.s32.totalorder %s108, %s110
    %p114 = scmp.eq.s32.totalorder %s10, 0
    %p115 = por %p113, %p114
    %p116 = scmp.ne.s32.totalorder %s108, %s110
    %p117 = scmp.eq.s32.totalorder %s15, 1
    %p118 = por %p116, %p117
    %p119 = scmp.ne.s32.totalorder %s110, %s111
    %p120 = scmp.eq.s32.totalorder %s15, 0
    %p121 = por %p119, %p120
    %p122 = scmp.ne.s32.totalorder %s110, %s111
    %p123 = scmp.eq.s32.totalorder %s16, 1
    %p124 = por %p122, %p123
    %p126 = scmp.ne.s32.totalorder %s111, %s125
    %p127 = scmp.eq.s32.totalorder %s16, 0
    %p128 = por %p126, %p127
    %s129 = ssub.s32 %s17, %s29
    %s130 = ssub.s32 %s18, %s25
    %s131 = sor.u32 %s129, %s130
    %p132 = scmp.eq.s32.totalorder %s131, 0
    %s134 = sadd.s32 %s133, 1
    %s135 = scalar_select %p132, %s133, %s134
    %p138 = pneg %p132
    %p139 = scmp.eq.s32.totalorder %s10, 1
    %p140 = por %p138, %p139
    %p141 = scmp.ne.s32.totalorder %s133, %s136
    %p142 = scmp.eq.s32.totalorder %s10, 0
    %p143 = por %p141, %p142
    %p144 = scmp.ne.s32.totalorder %s133, %s136
    %p145 = scmp.eq.s32.totalorder %s15, 1
    %p146 = por %p144, %p145
    %p147 = scmp.ne.s32.totalorder %s136, %s137
    %p148 = scmp.eq.s32.totalorder %s15, 0
    %p149 = por %p147, %p148
    %p150 = scmp.ne.s32.totalorder %s136, %s137
    %p151 = scmp.eq.s32.totalorder %s16, 1
    %p152 = por %p150, %p151
    %p154 = scmp.ne.s32.totalorder %s137, %s153
    %p155 = scmp.eq.s32.totalorder %s16, 0
    %p156 = por %p154, %p155
    %p157 = scmp.le.s32.totalorder 1, %s10
    %p158 = scmp.lt.s32.totalorder %s10, 3
    %p159 = pnand %p157, %p158
    %p160 = pneg %p159
    // Predicated region
    $region9: #{vgg_backbone_forward.10} parent=5 // pred_check
      _
    $region10: #{vgg_backbone_forward.10} parent=5 // pred_check_branch
      %162 = sbr.rel (%p159) target = $region12
    $region11: #{vgg_backbone_forward.10} parent=5 // pred_region
      %s163 = ssub.s32 %s10, 1
      // Predicated region
      $region13: #{vgg_backbone_forward.10} parent=11 // pred_check
        %p164 = pneg %p74
      $region14: #{vgg_backbone_forward.10} parent=11 // pred_check_branch
        %166 = sbr.rel (%p164) target = $region16
      $region15: #{vgg_backbone_forward.10} parent=11 // pred_region
        %p167 = scmp.lt.s32.totalorder %s20, 0
        %s168 = scalar_select %p167, %s20, 0
        %s169 = smul.addr %s168, 4
        %s170 = scalar_lea.vmem %s1, %s169
      $region16: #{vgg_backbone_forward.10} parent=11 // pred_fallthru
        _
      // Predicated region
      $region17: #{vgg_backbone_forward.10} parent=11 // pred_check
        %p171 = pneg %p100
      $region18: #{vgg_backbone_forward.10} parent=11 // pred_check_branch
        %173 = sbr.rel (%p171) target = $region20
      $region19: #{vgg_backbone_forward.10} parent=11 // pred_region
        %p174 = scmp.lt.s32.totalorder %s20, 0
        %s175 = scalar_select %p174, %s20, 0
        %s176 = smul.addr %s175, 8
        %s177 = scalar_lea.vmem %s2, %s176
      $region20: #{vgg_backbone_forward.10} parent=11 // pred_fallthru
        _
      // Predicated region
      $region21: #{vgg_backbone_forward.10} parent=11 // pred_check
        %p178 = pneg %p121
      $region22: #{vgg_backbone_forward.10} parent=11 // pred_check_branch
        %180 = sbr.rel (%p178) target = $region24
      $region23: #{vgg_backbone_forward.10} parent=11 // pred_region
        _
      $region24: #{vgg_backbone_forward.10} parent=11 // pred_fallthru
        _
    $region12: #{vgg_backbone_forward.10} parent=5 // pred_fallthru
      _
    %p181 = scmp.lt.s32.totalorder %s10, 2
    // Predicated region
    $region25: #{vgg_backbone_forward.10} parent=5 // pred_check
      %p182 = pneg %p181
    $region26: #{vgg_backbone_forward.10} parent=5 // pred_check_branch
      %184 = sbr.rel (%p182) target = $region28
    $region27: #{vgg_backbone_forward.10} parent=5 // pred_region
      // Predicated region
      $region29: #{vgg_backbone_forward.10} parent=27 // pred_check
        %p185 = pneg %p42
      $region30: #{vgg_backbone_forward.10} parent=27 // pred_check_branch
        %187 = sbr.rel (%p185) target = $region32
      $region31: #{vgg_backbone_forward.10} parent=27 // pred_region
        %p188 = scmp.lt.s32.totalorder %s17, 1
        %s189 = scalar_select %p188, %s17, 1
        %s190 = smul.addr %s189, 2
        %s191 = smul.addr %s190, 4
        %s192 = scalar_lea.vmem %s0, %s191
      $region32: #{vgg_backbone_forward.10} parent=27 // pred_fallthru
        _
    $region28: #{vgg_backbone_forward.10} parent=5 // pred_fallthru
      _
    %p193 = scmp.le.s32.totalorder 1, %s10
    %p194 = scmp.lt.s32.totalorder %s10, 3
    %p195 = pnand %p193, %p194
    %p196 = pneg %p195
    // Predicated region
    $region33: #{vgg_backbone_forward.10} parent=5 // pred_check
      _
    $region34: #{vgg_backbone_forward.10} parent=5 // pred_check_branch
      %198 = sbr.rel (%p195) target = $region36
    $region35: #{vgg_backbone_forward.10} parent=5 // pred_region
      %s199 = ssub.s32 %s10, 1
      %p200 = scmp.lt.s32.totalorder %s19, 1
      %s201 = scalar_select %p200, %s19, 1
      %s202 = smul.addr %s201, 2
      %s203 = smul.addr %s202, 4
      %s204 = scalar_lea.vmem %s0, %s203
      %p205 = pneg %p48
      %p206 = pneg %p45
      %p207 = scmp.lt.s32.totalorder %s20, 0
      %s208 = scalar_select %p207, %s20, 0
      %s209 = smul.addr %s208, 4
      %s210 = scalar_lea.vmem %s1, %s209
      %p211 = pneg %p74
      %p212 = pneg %p71
      %p213 = scmp.lt.s32.totalorder %s20, 0
      %s214 = scalar_select %p213, %s20, 0
      %s215 = smul.addr %s214, 8
      %s216 = scalar_lea.vmem %s2, %s215
      %p217 = pneg %p100
      %p218 = pneg %p97
      %p219 = pneg %p121
      %p220 = pneg %p118
      %p221 = pneg %p149
      %p222 = pneg %p146
      %p223 = scmp.lt.s32.totalorder %s19, 1
      %s224 = scalar_select %p223, %s19, 1
      %p225 = scmp.lt.s32.totalorder %s20, 0
      %s226 = scalar_select %p225, %s20, 0
      %s227 = sadd.s32 %s226, %s224
      %s228 = smul.addr %s227, 8
      %s229 = scalar_lea.vmem %s4, %s228
      %p230 = scmp.lt.s32.totalorder %s19, 1
      %s231 = scalar_select %p230, %s19, 1
      %s232 = smul.addr %s231, 2
      %s233 = smul.addr %s232, 4
      %s234 = scalar_lea.vmem %s0, %s233
      %p235 = scmp.lt.s32.totalorder %s20, 0
      %s236 = scalar_select %p235, %s20, 0
      %s237 = smul.addr %s236, 4
      %s238 = scalar_lea.vmem %s1, %s237
      %p239 = scmp.lt.s32.totalorder %s20, 0
      %s240 = scalar_select %p239, %s20, 0
      %s241 = smul.addr %s240, 8
      %s242 = scalar_lea.vmem %s2, %s241
      %p243 = scmp.lt.s32.totalorder %s19, 1
      %s244 = scalar_select %p243, %s19, 1
      %p245 = scmp.lt.s32.totalorder %s20, 0
      %s246 = scalar_select %p245, %s20, 0
      %s247 = sadd.s32 %s246, %s244
      %s248 = smul.addr %s247, 8
      %s249 = scalar_lea.vmem %s4, %s248
      %v251 = vld [vmem:[%s234] sm:$0xff]
      %253 = vst [vmem:[#allocation1] ss:$2 sm:$0xff] %v251
      %v254 = vld.sshfl [vmem:[#allocation1] sm:$0xff pattern:$0x75316420]
      %v255 = vld.sshfl [vmem:[#allocation1 + $0x8] sm:$0xff pattern:$0x75316420]
      %v258 = vpack.c.bf16 %v255, %v254
      %v260 = vrot.slane %v258, 2
      %vm261 = vcmask 1041408
      %v264 = vsel %vm261, %v258, %v260
      %vm266 = vcmask 437250
      %vm267 = vmor %vm266, %vm261
      %268 = vst.msk [vmem:[#allocation2] sm:$0xf] %vm267, %v264
      %v269 = vld [vmem:[#allocation2] sm:$0xf]
      %v270 = vld [vmem:[%s238] sm:$0xf]
      %s271 = scalar_lea.vmem %s238, 4
      %v272 = vld [vmem:[%s271] sm:$0xf]
      %274 = vst [vmem:[#allocation1] ss:$4 sm:$0xff] %v269
      %v275 = vld.sshfl [vmem:[#allocation1] sm:$0xff pattern:$0x73625140]
      %v277 = vld.sshfl [vmem:[#allocation1 + $0x8] sm:$0xff pattern:$0x73625140]
      %279 = vrot.lane.b32.xlu0 %v275, 127
      %v280 = vpop.permute.xlu0 %279
      %281 = vrot.lane.b32.xlu0 %v277, 127
      %v282 = vpop.permute.xlu0 %281
      %vm283 = vcmask 1039360
      %v284 = vsel %vm283, %v280, %v282
      %vm285 = vcmask 31744
      %v287 = vsel %vm285, %v272, 0
      %v290 = vsel %vm261, %v284, 0
      %v293 = vsel %vm261, %v282, 0
      %295 = vmatpush.bf16.msra.mxu0 0
      %296 = vmatpush.bf16.msra.mxu0 0
      %297 = vmatpush.bf16.msra.mxu0 0
      %298 = vmatpush.bf16.msra.mxu0 0
      %299 = vmatpush.bf16.msra.mxu0 0
      %300 = vmatpush.bf16.msra.mxu0 0
      %301 = vmatpush.bf16.msra.mxu0 0
      %302 = vmatpush.bf16.msra.mxu0 %v290
      %303 = vmatmul.bf16.gmra.mxu0 %v287
      %v304 = vpop.f32.mrf.mxu0
      %v305 = vadd.f32 0.0, %v304
      %v306 = vpop.f32.mrf.mxu0
      %307 = vdwg.mxu0
      %308 = vmatpush.bf16.msra.mxu0 0
      %309 = vmatpush.bf16.msra.mxu0 0
      %310 = vmatpush.bf16.msra.mxu0 0
      %311 = vmatpush.bf16.msra.mxu0 0
      %312 = vmatpush.bf16.msra.mxu0 0
      %313 = vmatpush.bf16.msra.mxu0 0
      %314 = vmatpush.bf16.msra.mxu0 0
      %315 = vmatpush.bf16.msra.mxu0 %v293
      %316 = vmatmul.bf16.gmra.mxu0 %v287
      %v317 = vpop.f32.mrf.mxu0
      %v318 = vadd.f32 0.0, %v317
      %v319 = vpop.f32.mrf.mxu0
      %320 = vdwg.mxu0
      %321 = vst [vmem:[#allocation1] ss:$4 sm:$0xff] %v269
      %v322 = vld.sshfl [vmem:[#allocation1] sm:$0xff pattern:$0x73625140]
      %v323 = vld.sshfl [vmem:[#allocation1 + $0x8] sm:$0xff pattern:$0x73625140]
      %v325 = vsel %vm285, %v270, 0
      %v327 = vsel %vm261, %v322, 0
      %v329 = vsel %vm261, %v323, 0
      %331 = vmatpush.bf16.msra.mxu0 0
      %332 = vmatpush.bf16.msra.mxu0 0
      %333 = vmatpush.bf16.msra.mxu0 0
      %334 = vmatpush.bf16.msra.mxu0 0
      %335 = vmatpush.bf16.msra.mxu0 0
      %336 = vmatpush.bf16.msra.mxu0 0
      %337 = vmatpush.bf16.msra.mxu0 0
      %338 = vmatpush.bf16.msra.mxu0 %v327
      %339 = vmatmul.bf16.gmra.mxu0 %v325
      %v340 = vpop.f32.mrf.mxu0
      %v341 = vadd.f32 %v305, %v340
      %v342 = vpop.f32.mrf.mxu0
      %343 = vdwg.mxu0
      %344 = vmatpush.bf16.msra.mxu0 0
      %345 = vmatpush.bf16.msra.mxu0 0
      %346 = vmatpush.bf16.msra.mxu0 0
      %347 = vmatpush.bf16.msra.mxu0 0
      %348 = vmatpush.bf16.msra.mxu0 0
      %349 = vmatpush.bf16.msra.mxu0 0
      %350 = vmatpush.bf16.msra.mxu0 0
      %351 = vmatpush.bf16.msra.mxu0 %v329
      %352 = vmatmul.bf16.gmra.mxu0 %v325
      %v353 = vpop.f32.mrf.mxu0
      %v354 = vadd.f32 %v318, %v353
      %v355 = vpop.f32.mrf.mxu0
      %356 = vdwg.mxu0
      %v357 = vld [vmem:[#allocation2] sm:$0xf]
      %s358 = scalar_lea.vmem %s238, 8
      %v359 = vld [vmem:[%s358] sm:$0xf]
      %361 = vst [vmem:[#allocation1] ss:$4 sm:$0xff] %v357
      %v362 = vld.sshfl [vmem:[#allocation1] sm:$0xff pattern:$0x73625140]
      %v364 = vld.sshfl [vmem:[#allocation1 + $0x8] sm:$0xff pattern:$0x73625140]
      %366 = vrot.lane.b32.xlu0 %v362, 126
      %v367 = vpop.permute.xlu0 %366
      %368 = vrot.lane.b32.xlu0 %v364, 126
      %v369 = vpop.permute.xlu0 %368
      %vm370 = vcmask 1031168
      %v371 = vsel %vm370, %v367, %v369
      %v373 = vsel %vm285, %v359, 0
      %v376 = vsel %vm261, %v371, 0
      %v379 = vsel %vm261, %v369, 0
      %381 = vmatpush.bf16.msra.mxu0 0
      %382 = vmatpush.bf16.msra.mxu0 0
      %383 = vmatpush.bf16.msra.mxu0 0
      %384 = vmatpush.bf16.msra.mxu0 0
      %385 = vmatpush.bf16.msra.mxu0 0
      %386 = vmatpush.bf16.msra.mxu0 0
      %387 = vmatpush.bf16.msra.mxu0 0
      %388 = vmatpush.bf16.msra.mxu0 %v376
      %389 = vmatmul.bf16.gmra.mxu0 %v373
      %v390 = vpop.f32.mrf.mxu0
      %v391 = vadd.f32 0.0, %v390
      %v392 = vpop.f32.mrf.mxu0
      %393 = vdwg.mxu0
      %394 = vmatpush.bf16.msra.mxu0 0
      %395 = vmatpush.bf16.msra.mxu0 0
      %396 = vmatpush.bf16.msra.mxu0 0
      %397 = vmatpush.bf16.msra.mxu0 0
      %398 = vmatpush.bf16.msra.mxu0 0
      %399 = vmatpush.bf16.msra.mxu0 0
      %400 = vmatpush.bf16.msra.mxu0 0
      %401 = vmatpush.bf16.msra.mxu0 %v379
      %402 = vmatmul.bf16.gmra.mxu0 %v373
      %v403 = vpop.f32.mrf.mxu0
      %v404 = vadd.f32 0.0, %v403
      %v405 = vpop.f32.mrf.mxu0
      %406 = vdwg.mxu0
      %v407 = vadd.f32 %v341, %v391
      %v408 = vadd.f32 %v354, %v404
      %v409 = vld [vmem:[#allocation2] sm:$0xf]
      %s410 = scalar_lea.vmem %s238, 12
      %v411 = vld [vmem:[%s410] sm:$0xf]
      %413 = vst [vmem:[#allocation1] ss:$4 sm:$0xff] %v409
      %v414 = vld.sshfl [vmem:[#allocation1] sm:$0xff pattern:$0x73625140]
      %v416 = vld.sshfl [vmem:[#allocation1 + $0x8] sm:$0xff pattern:$0x73625140]
      %418 = vrot.lane.b32.xlu0 %v414, 118
      %v419 = vpop.permute.xlu0 %418
      %420 = vrot.lane.b32.xlu0 %v416, 118
      %v421 = vpop.permute.xlu0 %420
      %vm422 = vcmask 965632
      %v423 = vsel %vm422, %v419, %v421
      %v425 = vsel %vm285, %v411, 0
      %v428 = vsel %vm261, %v423, 0
      %v431 = vsel %vm261, %v421, 0
      %433 = vmatpush.bf16.msra.mxu0 0
      %434 = vmatpush.bf16.msra.mxu0 0
      %435 = vmatpush.bf16.msra.mxu0 0
      %436 = vmatpush.bf16.msra.mxu0 0
      %437 = vmatpush.bf16.msra.mxu0 0
      %438 = vmatpush.bf16.msra.mxu0 0
      %439 = vmatpush.bf16.msra.mxu0 0
      %440 = vmatpush.bf16.msra.mxu0 %v428
      %441 = vmatmul.bf16.gmra.mxu0 %v425
      %v442 = vpop.f32.mrf.mxu0
      %v443 = vadd.f32 0.0, %v442
      %v444 = vpop.f32.mrf.mxu0
      %445 = vdwg.mxu0
      %446 = vmatpush.bf16.msra.mxu0 0
      %447 = vmatpush.bf16.msra.mxu0 0
      %448 = vmatpush.bf16.msra.mxu0 0
      %449 = vmatpush.bf16.msra.mxu0 0
      %450 = vmatpush.bf16.msra.mxu0 0
      %451 = vmatpush.bf16.msra.mxu0 0
      %452 = vmatpush.bf16.msra.mxu0 0
      %453 = vmatpush.bf16.msra.mxu0 %v431
      %454 = vmatmul.bf16.gmra.mxu0 %v425
      %v455 = vpop.f32.mrf.mxu0
      %v456 = vadd.f32 0.0, %v455
      %v457 = vpop.f32.mrf.mxu0
      %458 = vdwg.mxu0
      %v459 = vadd.f32 %v407, %v443
      %v460 = vadd.f32 %v408, %v456
      %v461 = vld [vmem:[#allocation2] sm:$0xf]
      %s462 = scalar_lea.vmem %s238, 16
      %v463 = vld [vmem:[%s462] sm:$0xf]
      %465 = vst [vmem:[#allocation1] ss:$4 sm:$0xff] %v461
      %v466 = vld.sshfl [vmem:[#allocation1] sm:$0xff pattern:$0x73625140]
      %v468 = vld.sshfl [vmem:[#allocation1 + $0x8] sm:$0xff pattern:$0x73625140]
      %470 = vrot.lane.b32.xlu0 %v466, 117
      %v471 = vpop.permute.xlu0 %470
      %472 = vrot.lane.b32.xlu0 %v468, 117
      %v473 = vpop.permute.xlu0 %472
      %vm474 = vcmask 957440
      %v475 = vsel %vm474, %v471, %v473
      %v477 = vsel %vm285, %v463, 0
      %v480 = vsel %vm261, %v475, 0
      %v483 = vsel %vm261, %v473, 0
      %485 = vmatpush.bf16.msra.mxu0 0
      %486 = vmatpush.bf16.msra.mxu0 0
      %487 = vmatpush.bf16.msra.mxu0 0
      %488 = vmatpush.bf16.msra.mxu0 0
      %489 = vmatpush.bf16.msra.mxu0 0
      %490 = vmatpush.bf16.msra.mxu0 0
      %491 = vmatpush.bf16.msra.mxu0 0
      %492 = vmatpush.bf16.msra.mxu0 %v480
      %493 = vmatmul.bf16.gmra.mxu0 %v477
      %v494 = vpop.f32.mrf.mxu0
      %v495 = vadd.f32 0.0, %v494
      %v496 = vpop.f32.mrf.mxu0
      %497 = vdwg.mxu0
      %498 = vmatpush.bf16.msra.mxu0 0
      %499 = vmatpush.bf16.msra.mxu0 0
      %500 = vmatpush.bf16.msra.mxu0 0
      %501 = vmatpush.bf16.msra.mxu0 0
      %502 = vmatpush.bf16.msra.mxu0 0
      %503 = vmatpush.bf16.msra.mxu0 0
      %504 = vmatpush.bf16.msra.mxu0 0
      %505 = vmatpush.bf16.msra.mxu0 %v483
      %506 = vmatmul.bf16.gmra.mxu0 %v477
      %v507 = vpop.f32.mrf.mxu0
      %v508 = vadd.f32 0.0, %v507
      %v509 = vpop.f32.mrf.mxu0
      %510 = vdwg.mxu0
      %v511 = vadd.f32 %v459, %v495
      %v512 = vadd.f32 %v460, %v508
      %v513 = vld [vmem:[#allocation2] sm:$0xf]
      %s514 = scalar_lea.vmem %s238, 20
      %v515 = vld [vmem:[%s514] sm:$0xf]
      %517 = vst [vmem:[#allocation1] ss:$4 sm:$0xff] %v513
      %v518 = vld.sshfl [vmem:[#allocation1] sm:$0xff pattern:$0x73625140]
      %v520 = vld.sshfl [vmem:[#allocation1 + $0x8] sm:$0xff pattern:$0x73625140]
      %522 = vrot.lane.b32.xlu0 %v518, 116
      %v523 = vpop.permute.xlu0 %522
      %524 = vrot.lane.b32.xlu0 %v520, 116
      %v525 = vpop.permute.xlu0 %524
      %vm526 = vcmask 949248
      %v527 = vsel %vm526, %v523, %v525
      %v529 = vsel %vm285, %v515, 0
      %v532 = vsel %vm261, %v527, 0
      %v535 = vsel %vm261, %v525, 0
      %537 = vmatpush.bf16.msra.mxu0 0
      %538 = vmatpush.bf16.msra.mxu0 0
      %539 = vmatpush.bf16.msra.mxu0 0
      %540 = vmatpush.bf16.msra.mxu0 0
      %541 = vmatpush.bf16.msra.mxu0 0
      %542 = vmatpush.bf16.msra.mxu0 0
      %543 = vmatpush.bf16.msra.mxu0 0
      %544 = vmatpush.bf16.msra.mxu0 %v532
      %545 = vmatmul.bf16.gmra.mxu0 %v529
      %v546 = vpop.f32.mrf.mxu0
      %v547 = vadd.f32 0.0, %v546
      %v548 = vpop.f32.mrf.mxu0
      %549 = vdwg.mxu0
      %550 = vmatpush.bf16.msra.mxu0 0
      %551 = vmatpush.bf16.msra.mxu0 0
      %552 = vmatpush.bf16.msra.mxu0 0
      %553 = vmatpush.bf16.msra.mxu0 0
      %554 = vmatpush.bf16.msra.mxu0 0
      %555 = vmatpush.bf16.msra.mxu0 0
      %556 = vmatpush.bf16.msra.mxu0 0
      %557 = vmatpush.bf16.msra.mxu0 %v535
      %558 = vmatmul.bf16.gmra.mxu0 %v529
      %v559 = vpop.f32.mrf.mxu0
      %v560 = vadd.f32 0.0, %v559
      %v561 = vpop.f32.mrf.mxu0
      %562 = vdwg.mxu0
      %v563 = vadd.f32 %v511, %v547
      %v564 = vadd.f32 %v512, %v560
      %v565 = vld [vmem:[#allocation2] sm:$0xf]
      %s566 = scalar_lea.vmem %s238, 24
      %v567 = vld [vmem:[%s566] sm:$0xf]
      %569 = vst [vmem:[#allocation1] ss:$4 sm:$0xff] %v565
      %v570 = vld.sshfl [vmem:[#allocation1] sm:$0xff pattern:$0x73625140]
      %v572 = vld.sshfl [vmem:[#allocation1 + $0x8] sm:$0xff pattern:$0x73625140]
      %574 = vrot.lane.b32.xlu0 %v570, 108
      %v575 = vpop.permute.xlu0 %574
      %576 = vrot.lane.b32.xlu0 %v572, 108
      %v577 = vpop.permute.xlu0 %576
      %vm578 = vcmask 883712
      %v579 = vsel %vm578, %v575, %v577
      %v581 = vsel %vm285, %v567, 0
      %v584 = vsel %vm261, %v579, 0
      %v587 = vsel %vm261, %v577, 0
      %589 = vmatpush.bf16.msra.mxu0 0
      %590 = vmatpush.bf16.msra.mxu0 0
      %591 = vmatpush.bf16.msra.mxu0 0
      %592 = vmatpush.bf16.msra.mxu0 0
      %593 = vmatpush.bf16.msra.mxu0 0
      %594 = vmatpush.bf16.msra.mxu0 0
      %595 = vmatpush.bf16.msra.mxu0 0
      %596 = vmatpush.bf16.msra.mxu0 %v584
      %597 = vmatmul.bf16.gmra.mxu0 %v581
      %v598 = vpop.f32.mrf.mxu0
      %v599 = vadd.f32 0.0, %v598
      %v600 = vpop.f32.mrf.mxu0
      %601 = vdwg.mxu0
      %602 = vmatpush.bf16.msra.mxu0 0
      %603 = vmatpush.bf16.msra.mxu0 0
      %604 = vmatpush.bf16.msra.mxu0 0
      %605 = vmatpush.bf16.msra.mxu0 0
      %606 = vmatpush.bf16.msra.mxu0 0
      %607 = vmatpush.bf16.msra.mxu0 0
      %608 = vmatpush.bf16.msra.mxu0 0
      %609 = vmatpush.bf16.msra.mxu0 %v587
      %610 = vmatmul.bf16.gmra.mxu0 %v581
      %v611 = vpop.f32.mrf.mxu0
      %v612 = vadd.f32 0.0, %v611
      %v613 = vpop.f32.mrf.mxu0
      %614 = vdwg.mxu0
      %v615 = vadd.f32 %v563, %v599
      %v616 = vadd.f32 %v564, %v612
      %v617 = vld [vmem:[#allocation2] sm:$0xf]
      %s618 = scalar_lea.vmem %s238, 28
      %v619 = vld [vmem:[%s618] sm:$0xf]
      %621 = vst [vmem:[#allocation1] ss:$4 sm:$0xff] %v617
      %v622 = vld.sshfl [vmem:[#allocation1] sm:$0xff pattern:$0x73625140]
      %v624 = vld.sshfl [vmem:[#allocation1 + $0x8] sm:$0xff pattern:$0x73625140]
      %626 = vrot.lane.b32.xlu0 %v622, 107
      %v627 = vpop.permute.xlu0 %626
      %628 = vrot.lane.b32.xlu0 %v624, 107
      %v629 = vpop.permute.xlu0 %628
      %vm630 = vcmask 875520
      %v631 = vsel %vm630, %v627, %v629
      %v633 = vsel %vm285, %v619, 0
      %v636 = vsel %vm261, %v631, 0
      %v639 = vsel %vm261, %v629, 0
      %641 = vmatpush.bf16.msra.mxu0 0
      %642 = vmatpush.bf16.msra.mxu0 0
      %643 = vmatpush.bf16.msra.mxu0 0
      %644 = vmatpush.bf16.msra.mxu0 0
      %645 = vmatpush.bf16.msra.mxu0 0
      %646 = vmatpush.bf16.msra.mxu0 0
      %647 = vmatpush.bf16.msra.mxu0 0
      %648 = vmatpush.bf16.msra.mxu0 %v636
      %649 = vmatmul.bf16.gmra.mxu0 %v633
      %v650 = vpop.f32.mrf.mxu0
      %v651 = vadd.f32 0.0, %v650
      %v652 = vpop.f32.mrf.mxu0
      %653 = vdwg.mxu0
      %654 = vmatpush.bf16.msra.mxu0 0
      %655 = vmatpush.bf16.msra.mxu0 0
      %656 = vmatpush.bf16.msra.mxu0 0
      %657 = vmatpush.bf16.msra.mxu0 0
      %658 = vmatpush.bf16.msra.mxu0 0
      %659 = vmatpush.bf16.msra.mxu0 0
      %660 = vmatpush.bf16.msra.mxu0 0
      %661 = vmatpush.bf16.msra.mxu0 %v639
      %662 = vmatmul.bf16.gmra.mxu0 %v633
      %v663 = vpop.f32.mrf.mxu0
      %v664 = vadd.f32 0.0, %v663
      %v665 = vpop.f32.mrf.mxu0
      %666 = vdwg.mxu0
      %v667 = vadd.f32 %v615, %v651
      %v668 = vadd.f32 %v616, %v664
      %v669 = vld [vmem:[#allocation2] sm:$0xf]
      %s670 = scalar_lea.vmem %s238, 32
      %v671 = vld [vmem:[%s670] sm:$0xf]
      %673 = vst [vmem:[#allocation1] ss:$4 sm:$0xff] %v669
      %v674 = vld.sshfl [vmem:[#allocation1] sm:$0xff pattern:$0x73625140]
      %v676 = vld.sshfl [vmem:[#allocation1 + $0x8] sm:$0xff pattern:$0x73625140]
      %678 = vrot.lane.b32.xlu0 %v674, 106
      %v679 = vpop.permute.xlu0 %678
      %680 = vrot.lane.b32.xlu0 %v676, 106
      %v681 = vpop.permute.xlu0 %680
      %vm682 = vcmask 867328
      %v683 = vsel %vm682, %v679, %v681
      %v685 = vsel %vm285, %v671, 0
      %v688 = vsel %vm261, %v683, 0
      %v691 = vsel %vm261, %v681, 0
      %693 = vmatpush.bf16.msra.mxu0 0
      %694 = vmatpush.bf16.msra.mxu0 0
      %695 = vmatpush.bf16.msra.mxu0 0
      %696 = vmatpush.bf16.msra.mxu0 0
      %697 = vmatpush.bf16.msra.mxu0 0
      %698 = vmatpush.bf16.msra.mxu0 0
      %699 = vmatpush.bf16.msra.mxu0 0
      %700 = vmatpush.bf16.msra.mxu0 %v688
      %701 = vmatmul.bf16.gmra.mxu0 %v685
      %v702 = vpop.f32.mrf.mxu0
      %v703 = vadd.f32 0.0, %v702
      %v704 = vpop.f32.mrf.mxu0
      %705 = vdwg.mxu0
      %706 = vmatpush.bf16.msra.mxu0 0
      %707 = vmatpush.bf16.msra.mxu0 0
      %708 = vmatpush.bf16.msra.mxu0 0
      %709 = vmatpush.bf16.msra.mxu0 0
      %710 = vmatpush.bf16.msra.mxu0 0
      %711 = vmatpush.bf16.msra.mxu0 0
      %712 = vmatpush.bf16.msra.mxu0 0
      %713 = vmatpush.bf16.msra.mxu0 %v691
      %714 = vmatmul.bf16.gmra.mxu0 %v685
      %v715 = vpop.f32.mrf.mxu0
      %v716 = vadd.f32 0.0, %v715
      %v717 = vpop.f32.mrf.mxu0
      %718 = vdwg.mxu0
      %v719 = vadd.f32 %v667, %v703
      %v720 = vadd.f32 %v668, %v716
      %v721 = vld [vmem:[%s242] sm:$0xff]
      %723 = vset.pattern.permute.xlu0 0
      %724 = vperm.xlu0 %723, %v721
      %v725 = vpop.permute.xlu0 %724
      %v727 = vadd.f32 %v719, %v725
      %v728 = vadd.f32 %v720, %v725
      %v729 = vmax.f32 %v727, 0.0
      %v730 = vmax.f32 %v728, 0.0
      %vm731 = vcmask 506880
      %732 = vst.msk [vmem:[%s249] sm:$0xff] %vm731, 0.0
      %734 = vrot.lane.b32.xlu0 %v729, 118
      %v735 = vpop.permute.xlu0 %734
      %v737 = vmax.f32 %v729, %v735
      %v738 = vld [vmem:[%s3] sm:$0xff]
      %vm739 = vcmask 64512
      %v741 = vsel %vm739, %v737, 0
      %743 = vmatpush.msra.mxu0 0.0
      %744 = vmatpush.msra.mxu0 0.0
      %745 = vmatpush.msra.mxu0 0.0
      %746 = vmatpush.msra.mxu0 0.0
      %747 = vmatpush.msra.mxu0 0.0
      %748 = vmatpush.msra.mxu0 0.0
      %749 = vmatpush.msra.mxu0 0.0
      %750 = vmatpush.msra.mxu0 0.0
      %751 = vmatpush.msra.mxu0 0.0
      %752 = vmatpush.msra.mxu0 0.0
      %753 = vmatpush.msra.mxu0 0.0
      %754 = vmatpush.msra.mxu0 0.0
      %755 = vmatpush.msra.mxu0 0.0
      %756 = vmatpush.msra.mxu0 0.0
      %757 = vmatpush.msra.mxu0 0.0
      %758 = vmatpush.msra.mxu0 %v738
      %759 = vmatmul.f32.gmra.mxu0 %v741
      %v760 = vpop.f32.mrf.mxu0
      %v761 = vadd.f32 0.0, %v760
      %762 = vdwg.mxu0
      %s763 = scalar_lea.vmem %s3, 8
      %v764 = vld [vmem:[%s763] sm:$0xff]
      %765 = vmatpush.msra.mxu0 0.0
      %766 = vmatpush.msra.mxu0 0.0
      %767 = vmatpush.msra.mxu0 0.0
      %768 = vmatpush.msra.mxu0 0.0
      %769 = vmatpush.msra.mxu0 0.0
      %770 = vmatpush.msra.mxu0 0.0
      %771 = vmatpush.msra.mxu0 0.0
      %772 = vmatpush.msra.mxu0 0.0
      %773 = vmatpush.msra.mxu0 0.0
      %774 = vmatpush.msra.mxu0 0.0
      %775 = vmatpush.msra.mxu0 0.0
      %776 = vmatpush.msra.mxu0 0.0
      %777 = vmatpush.msra.mxu0 0.0
      %778 = vmatpush.msra.mxu0 0.0
      %779 = vmatpush.msra.mxu0 0.0
      %780 = vmatpush.msra.mxu0 %v764
      %781 = vmatmul.f32.gmra.mxu0 %v741
      %v782 = vpop.f32.mrf.mxu0
      %v783 = vadd.f32 0.0, %v782
      %784 = vdwg.mxu0
      %v785 = vmax.f32 %v761, %v783
      %787 = vrot.lane.b32.xlu0 %v785, 7
      %v788 = vpop.permute.xlu0 %787
      %vm790 = vcmask 89144
      %791 = vst.msk [vmem:[%s249] sm:$0xff] %vm790, %v788
      %v792 = vld [vmem:[%s3] sm:$0xff]
      %793 = vrot.lane.b32.xlu0 %v737, 108
      %v794 = vpop.permute.xlu0 %793
      %v795 = vsel %vm739, %v794, 0
      %797 = vmatpush.msra.mxu0 0.0
      %798 = vmatpush.msra.mxu0 0.0
      %799 = vmatpush.msra.mxu0 0.0
      %800 = vmatpush.msra.mxu0 0.0
      %801 = vmatpush.msra.mxu0 0.0
      %802 = vmatpush.msra.mxu0 0.0
      %803 = vmatpush.msra.mxu0 0.0
      %804 = vmatpush.msra.mxu0 0.0
      %805 = vmatpush.msra.mxu0 0.0
      %806 = vmatpush.msra.mxu0 0.0
      %807 = vmatpush.msra.mxu0 0.0
      %808 = vmatpush.msra.mxu0 0.0
      %809 = vmatpush.msra.mxu0 0.0
      %810 = vmatpush.msra.mxu0 0.0
      %811 = vmatpush.msra.mxu0 0.0
      %812 = vmatpush.msra.mxu0 %v792
      %813 = vmatmul.f32.gmra.mxu0 %v795
      %v814 = vpop.f32.mrf.mxu0
      %v815 = vadd.f32 0.0, %v814
      %816 = vdwg.mxu0
      %v817 = vld [vmem:[%s763] sm:$0xff]
      %818 = vmatpush.msra.mxu0 0.0
      %819 = vmatpush.msra.mxu0 0.0
      %820 = vmatpush.msra.mxu0 0.0
      %821 = vmatpush.msra.mxu0 0.0
      %822 = vmatpush.msra.mxu0 0.0
      %823 = vmatpush.msra.mxu0 0.0
      %824 = vmatpush.msra.mxu0 0.0
      %825 = vmatpush.msra.mxu0 0.0
      %826 = vmatpush.msra.mxu0 0.0
      %827 = vmatpush.msra.mxu0 0.0
      %828 = vmatpush.msra.mxu0 0.0
      %829 = vmatpush.msra.mxu0 0.0
      %830 = vmatpush.msra.mxu0 0.0
      %831 = vmatpush.msra.mxu0 0.0
      %832 = vmatpush.msra.mxu0 0.0
      %833 = vmatpush.msra.mxu0 %v817
      %834 = vmatmul.f32.gmra.mxu0 %v795
      %v835 = vpop.f32.mrf.mxu0
      %v836 = vadd.f32 0.0, %v835
      %837 = vdwg.mxu0
      %v838 = vmax.f32 %v815, %v836
      %840 = vrot.lane.b32.xlu0 %v838, 13
      %v841 = vpop.permute.xlu0 %840
      %vm843 = vcmask 138344
      %844 = vst.msk [vmem:[%s249] sm:$0xff] %vm843, %v841
      %v845 = vld [vmem:[%s3] sm:$0xff]
      %846 = vrot.lane.b32.xlu0 %v737, 88
      %v847 = vpop.permute.xlu0 %846
      %v848 = vsel %vm739, %v847, 0
      %850 = vmatpush.msra.mxu0 0.0
      %851 = vmatpush.msra.mxu0 0.0
      %852 = vmatpush.msra.mxu0 0.0
      %853 = vmatpush.msra.mxu0 0.0
      %854 = vmatpush.msra.mxu0 0.0
      %855 = vmatpush.msra.mxu0 0.0
      %856 = vmatpush.msra.mxu0 0.0
      %857 = vmatpush.msra.mxu0 0.0
      %858 = vmatpush.msra.mxu0 0.0
      %859 = vmatpush.msra.mxu0 0.0
      %860 = vmatpush.msra.mxu0 0.0
      %861 = vmatpush.msra.mxu0 0.0
      %862 = vmatpush.msra.mxu0 0.0
      %863 = vmatpush.msra.mxu0 0.0
      %864 = vmatpush.msra.mxu0 0.0
      %865 = vmatpush.msra.mxu0 %v845
      %866 = vmatmul.f32.gmra.mxu0 %v848
      %v867 = vpop.f32.mrf.mxu0
      %v868 = vadd.f32 0.0, %v867
      %869 = vdwg.mxu0
      %v870 = vld [vmem:[%s763] sm:$0xff]
      %871 = vmatpush.msra.mxu0 0.0
      %872 = vmatpush.msra.mxu0 0.0
      %873 = vmatpush.msra.mxu0 0.0
      %874 = vmatpush.msra.mxu0 0.0
      %875 = vmatpush.msra.mxu0 0.0
      %876 = vmatpush.msra.mxu0 0.0
      %877 = vmatpush.msra.mxu0 0.0
      %878 = vmatpush.msra.mxu0 0.0
      %879 = vmatpush.msra.mxu0 0.0
      %880 = vmatpush.msra.mxu0 0.0
      %881 = vmatpush.msra.mxu0 0.0
      %882 = vmatpush.msra.mxu0 0.0
      %883 = vmatpush.msra.mxu0 0.0
      %884 = vmatpush.msra.mxu0 0.0
      %885 = vmatpush.msra.mxu0 0.0
      %886 = vmatpush.msra.mxu0 %v870
      %887 = vmatmul.f32.gmra.mxu0 %v848
      %v888 = vpop.f32.mrf.mxu0
      %v889 = vadd.f32 0.0, %v888
      %890 = vdwg.mxu0
      %v891 = vmax.f32 %v868, %v889
      %893 = vrot.lane.b32.xlu0 %v891, 19
      %v894 = vpop.permute.xlu0 %893
      %vm896 = vcmask 187544
      %897 = vst.msk [vmem:[%s249] sm:$0xff] %vm896, %v894
      %v898 = vld [vmem:[%s3] sm:$0xff]
      %899 = vrot.lane.b32.xlu0 %v737, 68
      %v900 = vpop.permute.xlu0 %899
      %v901 = vsel %vm739, %v900, 0
      %903 = vmatpush.msra.mxu0 0.0
      %904 = vmatpush.msra.mxu0 0.0
      %905 = vmatpush.msra.mxu0 0.0
      %906 = vmatpush.msra.mxu0 0.0
      %907 = vmatpush.msra.mxu0 0.0
      %908 = vmatpush.msra.mxu0 0.0
      %909 = vmatpush.msra.mxu0 0.0
      %910 = vmatpush.msra.mxu0 0.0
      %911 = vmatpush.msra.mxu0 0.0
      %912 = vmatpush.msra.mxu0 0.0
      %913 = vmatpush.msra.mxu0 0.0
      %914 = vmatpush.msra.mxu0 0.0
      %915 = vmatpush.msra.mxu0 0.0
      %916 = vmatpush.msra.mxu0 0.0
      %917 = vmatpush.msra.mxu0 0.0
      %918 = vmatpush.msra.mxu0 %v898
      %919 = vmatmul.f32.gmra.mxu0 %v901
      %v920 = vpop.f32.mrf.mxu0
      %v921 = vadd.f32 0.0, %v920
      %922 = vdwg.mxu0
      %v923 = vld [vmem:[%s763] sm:$0xff]
      %924 = vmatpush.msra.mxu0 0.0
      %925 = vmatpush.msra.mxu0 0.0
      %926 = vmatpush.msra.mxu0 0.0
      %927 = vmatpush.msra.mxu0 0.0
      %928 = vmatpush.msra.mxu0 0.0
      %929 = vmatpush.msra.mxu0 0.0
      %930 = vmatpush.msra.mxu0 0.0
      %931 = vmatpush.msra.mxu0 0.0
      %932 = vmatpush.msra.mxu0 0.0
      %933 = vmatpush.msra.mxu0 0.0
      %934 = vmatpush.msra.mxu0 0.0
      %935 = vmatpush.msra.mxu0 0.0
      %936 = vmatpush.msra.mxu0 0.0
      %937 = vmatpush.msra.mxu0 0.0
      %938 = vmatpush.msra.mxu0 0.0
      %939 = vmatpush.msra.mxu0 %v923
      %940 = vmatmul.f32.gmra.mxu0 %v901
      %v941 = vpop.f32.mrf.mxu0
      %v942 = vadd.f32 0.0, %v941
      %943 = vdwg.mxu0
      %v944 = vmax.f32 %v921, %v942
      %946 = vrot.lane.b32.xlu0 %v944, 25
      %v947 = vpop.permute.xlu0 %946
      %vm949 = vcmask 236744
      %950 = vst.msk [vmem:[%s249] sm:$0xff] %vm949, %v947
      %v951 = vld [vmem:[%s3] sm:$0xff]
      %952 = vrot.lane.b32.xlu0 %v737, 48
      %v953 = vpop.permute.xlu0 %952
      %v954 = vsel %vm739, %v953, 0
      %956 = vmatpush.msra.mxu0 0.0
      %957 = vmatpush.msra.mxu0 0.0
      %958 = vmatpush.msra.mxu0 0.0
      %959 = vmatpush.msra.mxu0 0.0
      %960 = vmatpush.msra.mxu0 0.0
      %961 = vmatpush.msra.mxu0 0.0
      %962 = vmatpush.msra.mxu0 0.0
      %963 = vmatpush.msra.mxu0 0.0
      %964 = vmatpush.msra.mxu0 0.0
      %965 = vmatpush.msra.mxu0 0.0
      %966 = vmatpush.msra.mxu0 0.0
      %967 = vmatpush.msra.mxu0 0.0
      %968 = vmatpush.msra.mxu0 0.0
      %969 = vmatpush.msra.mxu0 0.0
      %970 = vmatpush.msra.mxu0 0.0
      %971 = vmatpush.msra.mxu0 %v951
      %972 = vmatmul.f32.gmra.mxu0 %v954
      %v973 = vpop.f32.mrf.mxu0
      %v974 = vadd.f32 0.0, %v973
      %975 = vdwg.mxu0
      %v976 = vld [vmem:[%s763] sm:$0xff]
      %977 = vmatpush.msra.mxu0 0.0
      %978 = vmatpush.msra.mxu0 0.0
      %979 = vmatpush.msra.mxu0 0.0
      %980 = vmatpush.msra.mxu0 0.0
      %981 = vmatpush.msra.mxu0 0.0
      %982 = vmatpush.msra.mxu0 0.0
      %983 = vmatpush.msra.mxu0 0.0
      %984 = vmatpush.msra.mxu0 0.0
      %985 = vmatpush.msra.mxu0 0.0
      %986 = vmatpush.msra.mxu0 0.0
      %987 = vmatpush.msra.mxu0 0.0
      %988 = vmatpush.msra.mxu0 0.0
      %989 = vmatpush.msra.mxu0 0.0
      %990 = vmatpush.msra.mxu0 0.0
      %991 = vmatpush.msra.mxu0 0.0
      %992 = vmatpush.msra.mxu0 %v976
      %993 = vmatmul.f32.gmra.mxu0 %v954
      %v994 = vpop.f32.mrf.mxu0
      %v995 = vadd.f32 0.0, %v994
      %996 = vdwg.mxu0
      %v997 = vmax.f32 %v974, %v995
      %999 = vrot.lane.b32.xlu0 %v997, 31
      %v1000 = vpop.permute.xlu0 %999
      %vm1002 = vcmask 285944
      %1003 = vst.msk [vmem:[%s249] sm:$0xff] %vm1002, %v1000
      %v1004 = vld [vmem:[%s3] sm:$0xff]
      %1005 = vrot.lane.b32.xlu0 %v737, 28
      %v1006 = vpop.permute.xlu0 %1005
      %v1007 = vsel %vm739, %v1006, 0
      %1009 = vmatpush.msra.mxu0 0.0
      %1010 = vmatpush.msra.mxu0 0.0
      %1011 = vmatpush.msra.mxu0 0.0
      %1012 = vmatpush.msra.mxu0 0.0
      %1013 = vmatpush.msra.mxu0 0.0
      %1014 = vmatpush.msra.mxu0 0.0
      %1015 = vmatpush.msra.mxu0 0.0
      %1016 = vmatpush.msra.mxu0 0.0
      %1017 = vmatpush.msra.mxu0 0.0
      %1018 = vmatpush.msra.mxu0 0.0
      %1019 = vmatpush.msra.mxu0 0.0
      %1020 = vmatpush.msra.mxu0 0.0
      %1021 = vmatpush.msra.mxu0 0.0
      %1022 = vmatpush.msra.mxu0 0.0
      %1023 = vmatpush.msra.mxu0 0.0
      %1024 = vmatpush.msra.mxu0 %v1004
      %1025 = vmatmul.f32.gmra.mxu0 %v1007
      %v1026 = vpop.f32.mrf.mxu0
      %v1027 = vadd.f32 0.0, %v1026
      %1028 = vdwg.mxu0
      %v1029 = vld [vmem:[%s763] sm:$0xff]
      %1030 = vmatpush.msra.mxu0 0.0
      %1031 = vmatpush.msra.mxu0 0.0
      %1032 = vmatpush.msra.mxu0 0.0
      %1033 = vmatpush.msra.mxu0 0.0
      %1034 = vmatpush.msra.mxu0 0.0
      %1035 = vmatpush.msra.mxu0 0.0
      %1036 = vmatpush.msra.mxu0 0.0
      %1037 = vmatpush.msra.mxu0 0.0
      %1038 = vmatpush.msra.mxu0 0.0
      %1039 = vmatpush.msra.mxu0 0.0
      %1040 = vmatpush.msra.mxu0 0.0
      %1041 = vmatpush.msra.mxu0 0.0
      %1042 = vmatpush.msra.mxu0 0.0
      %1043 = vmatpush.msra.mxu0 0.0
      %1044 = vmatpush.msra.mxu0 0.0
      %1045 = vmatpush.msra.mxu0 %v1029
      %1046 = vmatmul.f32.gmra.mxu0 %v1007
      %v1047 = vpop.f32.mrf.mxu0
      %v1048 = vadd.f32 0.0, %v1047
      %1049 = vdwg.mxu0
      %v1050 = vmax.f32 %v1027, %v1048
      %1052 = vrot.lane.b32.xlu0 %v1050, 37
      %v1053 = vpop.permute.xlu0 %1052
      %vm1055 = vcmask 335144
      %1056 = vst.msk [vmem:[%s249] sm:$0xff] %vm1055, %v1053
      %1058 = vrot.lane.b32.xlu0 %v730, 118
      %v1059 = vpop.permute.xlu0 %1058
      %v1061 = vmax.f32 %v729, %v1059
      %v1062 = vld [vmem:[%s3] sm:$0xff]
      %1064 = vrot.lane.b32.xlu0 %v1061, 8
      %v1065 = vpop.permute.xlu0 %1064
      %v1066 = vsel %vm739, %v1065, 0
      %1068 = vmatpush.msra.mxu0 0.0
      %1069 = vmatpush.msra.mxu0 0.0
      %1070 = vmatpush.msra.mxu0 0.0
      %1071 = vmatpush.msra.mxu0 0.0
      %1072 = vmatpush.msra.mxu0 0.0
      %1073 = vmatpush.msra.mxu0 0.0
      %1074 = vmatpush.msra.mxu0 0.0
      %1075 = vmatpush.msra.mxu0 0.0
      %1076 = vmatpush.msra.mxu0 0.0
      %1077 = vmatpush.msra.mxu0 0.0
      %1078 = vmatpush.msra.mxu0 0.0
      %1079 = vmatpush.msra.mxu0 0.0
      %1080 = vmatpush.msra.mxu0 0.0
      %1081 = vmatpush.msra.mxu0 0.0
      %1082 = vmatpush.msra.mxu0 0.0
      %1083 = vmatpush.msra.mxu0 %v1062
      %1084 = vmatmul.f32.gmra.mxu0 %v1066
      %v1085 = vpop.f32.mrf.mxu0
      %v1086 = vadd.f32 0.0, %v1085
      %1087 = vdwg.mxu0
      %v1088 = vld [vmem:[%s763] sm:$0xff]
      %1089 = vmatpush.msra.mxu0 0.0
      %1090 = vmatpush.msra.mxu0 0.0
      %1091 = vmatpush.msra.mxu0 0.0
      %1092 = vmatpush.msra.mxu0 0.0
      %1093 = vmatpush.msra.mxu0 0.0
      %1094 = vmatpush.msra.mxu0 0.0
      %1095 = vmatpush.msra.mxu0 0.0
      %1096 = vmatpush.msra.mxu0 0.0
      %1097 = vmatpush.msra.mxu0 0.0
      %1098 = vmatpush.msra.mxu0 0.0
      %1099 = vmatpush.msra.mxu0 0.0
      %1100 = vmatpush.msra.mxu0 0.0
      %1101 = vmatpush.msra.mxu0 0.0
      %1102 = vmatpush.msra.mxu0 0.0
      %1103 = vmatpush.msra.mxu0 0.0
      %1104 = vmatpush.msra.mxu0 %v1088
      %1105 = vmatmul.f32.gmra.mxu0 %v1066
      %v1106 = vpop.f32.mrf.mxu0
      %v1107 = vadd.f32 0.0, %v1106
      %1108 = vdwg.mxu0
      %v1109 = vmax.f32 %v1086, %v1107
      %1111 = vrot.lane.b32.xlu0 %v1109, 43
      %v1112 = vpop.permute.xlu0 %1111
      %vm1114 = vcmask 384344
      %1115 = vst.msk [vmem:[%s249] sm:$0xff] %vm1114, %v1112
      %v1116 = vmax.f32 %v730, %v1059
      %v1117 = vld [vmem:[%s3] sm:$0xff]
      %1119 = vrot.lane.b32.xlu0 %v1116, 116
      %v1120 = vpop.permute.xlu0 %1119
      %v1121 = vsel %vm739, %v1120, 0
      %1123 = vmatpush.msra.mxu0 0.0
      %1124 = vmatpush.msra.mxu0 0.0
      %1125 = vmatpush.msra.mxu0 0.0
      %1126 = vmatpush.msra.mxu0 0.0
      %1127 = vmatpush.msra.mxu0 0.0
      %1128 = vmatpush.msra.mxu0 0.0
      %1129 = vmatpush.msra.mxu0 0.0
      %1130 = vmatpush.msra.mxu0 0.0
      %1131 = vmatpush.msra.mxu0 0.0
      %1132 = vmatpush.msra.mxu0 0.0
      %1133 = vmatpush.msra.mxu0 0.0
      %1134 = vmatpush.msra.mxu0 0.0
      %1135 = vmatpush.msra.mxu0 0.0
      %1136 = vmatpush.msra.mxu0 0.0
      %1137 = vmatpush.msra.mxu0 0.0
      %1138 = vmatpush.msra.mxu0 %v1117
      %1139 = vmatmul.f32.gmra.mxu0 %v1121
      %v1140 = vpop.f32.mrf.mxu0
      %v1141 = vadd.f32 0.0, %v1140
      %1142 = vdwg.mxu0
      %v1143 = vld [vmem:[%s763] sm:$0xff]
      %1144 = vmatpush.msra.mxu0 0.0
      %1145 = vmatpush.msra.mxu0 0.0
      %1146 = vmatpush.msra.mxu0 0.0
      %1147 = vmatpush.msra.mxu0 0.0
      %1148 = vmatpush.msra.mxu0 0.0
      %1149 = vmatpush.msra.mxu0 0.0
      %1150 = vmatpush.msra.mxu0 0.0
      %1151 = vmatpush.msra.mxu0 0.0
      %1152 = vmatpush.msra.mxu0 0.0
      %1153 = vmatpush.msra.mxu0 0.0
      %1154 = vmatpush.msra.mxu0 0.0
      %1155 = vmatpush.msra.mxu0 0.0
      %1156 = vmatpush.msra.mxu0 0.0
      %1157 = vmatpush.msra.mxu0 0.0
      %1158 = vmatpush.msra.mxu0 0.0
      %1159 = vmatpush.msra.mxu0 %v1143
      %1160 = vmatmul.f32.gmra.mxu0 %v1121
      %v1161 = vpop.f32.mrf.mxu0
      %v1162 = vadd.f32 0.0, %v1161
      %1163 = vdwg.mxu0
      %v1164 = vmax.f32 %v1141, %v1162
      %1166 = vrot.lane.b32.xlu0 %v1164, 49
      %v1167 = vpop.permute.xlu0 %1166
      %vm1169 = vcmask 433544
      %1170 = vst.msk [vmem:[%s249] sm:$0xff] %vm1169, %v1167
      %p1171 = scmp.lt.s32.totalorder %s19, 1
      %s1172 = scalar_select %p1171, %s19, 1
      %p1173 = scmp.lt.s32.totalorder %s20, 0
      %s1174 = scalar_select %p1173, %s20, 0
      %s1175 = sadd.s32 %s1174, %s1172
      %s1176 = smul.addr %s1175, 8
      %s1177 = scalar_lea.vmem %s4, %s1176
      // Predicated region
      $region37: #{vgg_backbone_forward.10} parent=35 // pred_check
        %p1178 = pneg %p146
      $region38: #{vgg_backbone_forward.10} parent=35 // pred_check_branch
        %1180 = sbr.rel (%p1178) target = $region40
      $region39: #{vgg_backbone_forward.10} parent=35 // pred_region
        _
      $region40: #{vgg_backbone_forward.10} parent=35 // pred_fallthru
        _
    $region36: #{vgg_backbone_forward.10} parent=5 // pred_fallthru
      _
    %p1181 = scmp.le.s32.totalorder 2, %s10
    // Predicated region
    $region41: #{vgg_backbone_forward.10} parent=5 // pred_check
      %p1182 = pneg %p1181
    $region42: #{vgg_backbone_forward.10} parent=5 // pred_check_branch
      %1184 = sbr.rel (%p1182) target = $region44
    $region43: #{vgg_backbone_forward.10} parent=5 // pred_region
      %s1185 = ssub.s32 %s10, 2
      // Predicated region
      $region45: #{vgg_backbone_forward.10} parent=43 // pred_check
        %p1186 = pneg %p152
      $region46: #{vgg_backbone_forward.10} parent=43 // pred_check_branch
        %1188 = sbr.rel (%p1186) target = $region48
      $region47: #{vgg_backbone_forward.10} parent=43 // pred_region
        %p1189 = scmp.lt.s32.totalorder %s21, 1
        %s1190 = scalar_select %p1189, %s21, 1
        %p1191 = scmp.lt.s32.totalorder %s22, 0
        %s1192 = scalar_select %p1191, %s22, 0
        %s1193 = sadd.s32 %s1192, %s1190
        %s1194 = smul.addr %s1193, 8
        %s1195 = scalar_lea.vmem %s4, %s1194
      $region48: #{vgg_backbone_forward.10} parent=43 // pred_fallthru
        _
    $region44: #{vgg_backbone_forward.10} parent=5 // pred_fallthru
      _
  $region6: #{vgg_backbone_forward.10} parent=0 // loop_footer
    %s14 = sadd.s32 1, %s10
  $region7: #{vgg_backbone_forward.10} parent=0 // loop_footer_branch
    %9 = sbr.rel target = $region3
  $region8: #{vgg_backbone_forward.10} parent=0 // loop_exit
    _

// kernel: vgg_backbone_forward.14
$region0: #{vgg_backbone_forward.14}
  #allocation0 [shape = 'u32[]', space=smem, size = 0x4, offset = 0x4, fixed_abs, tag = 'smem constant byte address 0x4 - core index']
  #allocation1 [shape = 'u32[72,128]{1,0:T(1,128)}', space=vmem, size = 0x9000, scoped, tag = 'internal scratch']
  %s0 = inlined_call_operand.vmem [shape: f32[2,32,16], index: 0, kind: input, shape index: {}]
  %s1 = inlined_call_operand.vmem [shape: f32[1,32,1], index: 1, kind: input, shape index: {}]
  %s2 = inlined_call_operand.vmem [shape: f32[1,32,1], index: 2, kind: input, shape index: {}]
  %s3 = inlined_call_operand.vmem [shape: f32[2,32,38], index: 3, kind: output, shape index: {}]
  %s4 = sld [smem:[#allocation0]]
  $region117: #{vgg_backbone_forward.14} parent=0
    _
  %s6 = ssub.s32 1, %s4
  %s7 = scalar_select 0, %s6, %s4
  $region1: #{vgg_backbone_forward.14} parent=0
    #allocation2 [shape = 'u8[32768]{0}', space=vmem, size = 0x8000, scoped, tag = 'input window, operand 0']
    #allocation3 [shape = 'u8[32768]{0}', space=vmem, size = 0x8000, scoped, tag = 'output window, operand 0']
    loop: start=0, step=1, limit=4
    $region2: #{vgg_backbone_forward.14} parent=1 // loop_pre_header
      _
    $region3: #{vgg_backbone_forward.14} parent=1 // loop_header
      %s9 = sphi 0, %s13
      %p10 = scmp.ge.s32.totalorder %s9, 4
      %s19 = sphi 0, %s21
      %s22 = sphi 0, %s19
      %s23 = sphi 0, %s22
      %s39 = sphi 0, %s23
      %s45 = sphi 0, %s47
      %s48 = sphi 0, %s45
      %s49 = sphi 0, %s48
      %s65 = sphi 0, %s49
      %s71 = sphi 0, %s73
      %s74 = sphi 0, %s71
      %s75 = sphi 0, %s74
      %s91 = sphi 0, %s75
      %s97 = sphi 0, %s99
      %s100 = sphi 0, %s97
      %s101 = sphi 0, %s100
      %s117 = sphi 0, %s101
    $region4: #{vgg_backbone_forward.14} parent=1 // loop_header_branch
      %12 = sbr.rel (%p10) target = $region8
    $region5: #{vgg_backbone_forward.14} parent=1 // loop_body
      %s14 = ssub.s32 %s9, 1
      %s15 = ssub.s32 %s9, 2
      %s16 = sadd.s32 %s9, 1
      %s17 = ssub.s32 %s9, %s16
      %p18 = scmp.eq.s32.totalorder %s17, 0
      %s20 = sadd.s32 %s19, 1
      %s21 = scalar_select %p18, %s19, %s20
      %p24 = pneg %p18
      %p25 = scmp.eq.s32.totalorder %s9, 1
      %p26 = por %p24, %p25
      %p27 = scmp.ne.s32.totalorder %s19, %s22
      %p28 = scmp.eq.s32.totalorder %s9, 0
      %p29 = por %p27, %p28
      %p30 = scmp.ne.s32.totalorder %s19, %s22
      %p31 = scmp.eq.s32.totalorder %s14, 1
      %p32 = por %p30, %p31
      %p33 = scmp.ne.s32.totalorder %s22, %s23
      %p34 = scmp.eq.s32.totalorder %s14, 0
      %p35 = por %p33, %p34
      %p36 = scmp.ne.s32.totalorder %s22, %s23
      %p37 = scmp.eq.s32.totalorder %s15, 1
      %p38 = por %p36, %p37
      %p40 = scmp.ne.s32.totalorder %s23, %s39
      %p41 = scmp.eq.s32.totalorder %s15, 0
      %p42 = por %p40, %p41
      %s43 = ssub.s32 %s9, %s16
      %p44 = scmp.eq.s32.totalorder %s43, 0
      %s46 = sadd.s32 %s45, 1
      %s47 = scalar_select %p44, %s45, %s46
      %p50 = pneg %p44
      %p51 = scmp.eq.s32.totalorder %s9, 1
      %p52 = por %p50, %p51
      %p53 = scmp.ne.s32.totalorder %s45, %s48
      %p54 = scmp.eq.s32.totalorder %s9, 0
      %p55 = por %p53, %p54
      %p56 = scmp.ne.s32.totalorder %s45, %s48
      %p57 = scmp.eq.s32.totalorder %s14, 1
      %p58 = por %p56, %p57
      %p59 = scmp.ne.s32.totalorder %s48, %s49
      %p60 = scmp.eq.s32.totalorder %s14, 0
      %p61 = por %p59, %p60
      %p62 = scmp.ne.s32.totalorder %s48, %s49
      %p63 = scmp.eq.s32.totalorder %s15, 1
      %p64 = por %p62, %p63
      %p66 = scmp.ne.s32.totalorder %s49, %s65
      %p67 = scmp.eq.s32.totalorder %s15, 0
      %p68 = por %p66, %p67
      %s69 = ssub.s32 %s9, %s16
      %p70 = scmp.eq.s32.totalorder %s69, 0
      %s72 = sadd.s32 %s71, 1
      %s73 = scalar_select %p70, %s71, %s72
      %p76 = pneg %p70
      %p77 = scmp.eq.s32.totalorder %s9, 1
      %p78 = por %p76, %p77
      %p79 = scmp.ne.s32.totalorder %s71, %s74
      %p80 = scmp.eq.s32.totalorder %s9, 0
      %p81 = por %p79, %p80
      %p82 = scmp.ne.s32.totalorder %s71, %s74
      %p83 = scmp.eq.s32.totalorder %s14, 1
      %p84 = por %p82, %p83
      %p85 = scmp.ne.s32.totalorder %s74, %s75
      %p86 = scmp.eq.s32.totalorder %s14, 0
      %p87 = por %p85, %p86
      %p88 = scmp.ne.s32.totalorder %s74, %s75
      %p89 = scmp.eq.s32.totalorder %s15, 1
      %p90 = por %p88, %p89
      %p92 = scmp.ne.s32.totalorder %s75, %s91
      %p93 = scmp.eq.s32.totalorder %s15, 0
      %p94 = por %p92, %p93
      %s95 = ssub.s32 %s9, %s16
      %p96 = scmp.eq.s32.totalorder %s95, 0
      %s98 = sadd.s32 %s97, 1
      %s99 = scalar_select %p96, %s97, %s98
      %p102 = pneg %p96
      %p103 = scmp.eq.s32.totalorder %s9, 1
      %p104 = por %p102, %p103
      %p105 = scmp.ne.s32.totalorder %s97, %s100
      %p106 = scmp.eq.s32.totalorder %s9, 0
      %p107 = por %p105, %p106
      %p108 = scmp.ne.s32.totalorder %s97, %s100
      %p109 = scmp.eq.s32.totalorder %s14, 1
      %p110 = por %p108, %p109
      %p111 = scmp.ne.s32.totalorder %s100, %s101
      %p112 = scmp.eq.s32.totalorder %s14, 0
      %p113 = por %p111, %p112
      %p114 = scmp.ne.s32.totalorder %s100, %s101
      %p115 = scmp.eq.s32.totalorder %s15, 1
      %p116 = por %p114, %p115
      %p118 = scmp.ne.s32.totalorder %s101, %s117
      %p119 = scmp.eq.s32.totalorder %s15, 0
      %p120 = por %p118, %p119
      %p121 = scmp.le.s32.totalorder 1, %s9
      %p122 = scmp.lt.s32.totalorder %s9, 3
      %p123 = pnand %p121, %p122
      %p124 = pneg %p123
      // Predicated region
      $region9: #{vgg_backbone_forward.14} parent=5 // pred_check
        _
      $region10: #{vgg_backbone_forward.14} parent=5 // pred_check_branch
        %126 = sbr.rel (%p123) target = $region12
      $region11: #{vgg_backbone_forward.14} parent=5 // pred_region
        %s127 = ssub.s32 %s9, 1
      $region12: #{vgg_backbone_forward.14} parent=5 // pred_fallthru
        _
      %p128 = scmp.lt.s32.totalorder %s9, 2
      // Predicated region
      $region13: #{vgg_backbone_forward.14} parent=5 // pred_check
        %p129 = pneg %p128
      $region14: #{vgg_backbone_forward.14} parent=5 // pred_check_branch
        %131 = sbr.rel (%p129) target = $region16
      $region15: #{vgg_backbone_forward.14} parent=5 // pred_region
        // Predicated region
        $region17: #{vgg_backbone_forward.14} parent=15 // pred_check
          %p132 = pneg %p29
        $region18: #{vgg_backbone_forward.14} parent=15 // pred_check_branch
          %134 = sbr.rel (%p132) target = $region20
        $region19: #{vgg_backbone_forward.14} parent=15 // pred_region
          %s135 = sand.u32 %s19, 1
          %s136 = sand.u32 %s19, 1
          %s137 = smul.addr %s136, 32
          %s138 = scalar_lea.vmem [#allocation2], %s137
          %s139 = smul.u32 2, %s9
          %s140 = smul.addr %s139, 8
          %s141 = scalar_lea.vmem %s0, %s140
          // Predicated region
          $region21: #{vgg_backbone_forward.14} parent=19 // pred_check
            _
          $region22: #{vgg_backbone_forward.14} parent=19 // pred_check_branch
            %143 = sbr.rel (0) target = $region24
          $region23: #{vgg_backbone_forward.14} parent=19 // pred_region
            // Predicated region
            $region25: #{vgg_backbone_forward.14} parent=23 // pred_check
              _
            $region26: #{vgg_backbone_forward.14} parent=23 // pred_check_branch
              %145 = sbr.rel (0) target = $region28
            $region27: #{vgg_backbone_forward.14} parent=23 // pred_region
              // Predicated region
              $region40: #{vgg_backbone_forward.14} parent=27 // pred_check
                _
              $region41: #{vgg_backbone_forward.14} parent=27 // pred_check_branch
                %167 = sbr.rel (0) target = $region43
              $region42: #{vgg_backbone_forward.14} parent=27 // pred_region
                loop: start=0, step=1, limit=1
                $region44: #{vgg_backbone_forward.14} parent=42 // loop_pre_header
                  _
                $region45: #{vgg_backbone_forward.14} parent=42 // loop_header
                  %s169 = sphi 0, %s173
                  %p170 = scmp.ge.s32.totalorder %s169, 1
                  %s174 = sphi %s141, %s141
                  %s175 = sphi %s138, %s138
                $region46: #{vgg_backbone_forward.14} parent=42 // loop_header_branch
                  %172 = sbr.rel (%p170) target = $region50
                $region47: #{vgg_backbone_forward.14} parent=42 // loop_body
                  %v176 = vld [vmem:[%s174] sm:$0xff]
                  %177 = vst [vmem:[%s175] sm:$0xff] %v176
                  %v178 = vld [vmem:[%s174 + $0x8] sm:$0xff]
                  %179 = vst [vmem:[%s175 + $0x8] sm:$0xff] %v178
                  %v180 = vld [vmem:[%s174 + $0x20] sm:$0xff]
                  %181 = vst [vmem:[%s175 + $0x10] sm:$0xff] %v180
                  %v182 = vld [vmem:[%s174 + $0x28] sm:$0xff]
                  %183 = vst [vmem:[%s175 + $0x18] sm:$0xff] %v182
                $region48: #{vgg_backbone_forward.14} parent=42 // loop_footer
                  %s173 = sadd.s32 1, %s169
                $region49: #{vgg_backbone_forward.14} parent=42 // loop_footer_branch
                  %168 = sbr.rel target = $region45
                $region50: #{vgg_backbone_forward.14} parent=42 // loop_exit
                  _
              $region43: #{vgg_backbone_forward.14} parent=27 // pred_fallthru
                _
              // Predicated region
              $region51: #{vgg_backbone_forward.14} parent=27 // pred_check
                _
              $region52: #{vgg_backbone_forward.14} parent=27 // pred_check_branch
                %185 = sbr.rel target = $region54
              $region53: #{vgg_backbone_forward.14} parent=27 // pred_region
                _
              $region54: #{vgg_backbone_forward.14} parent=27 // pred_fallthru
                _
            $region28: #{vgg_backbone_forward.14} parent=23 // pred_fallthru
              _
            // Predicated region
            $region29: #{vgg_backbone_forward.14} parent=23 // pred_check
              _
            $region30: #{vgg_backbone_forward.14} parent=23 // pred_check_branch
              %147 = sbr.rel target = $region32
            $region31: #{vgg_backbone_forward.14} parent=23 // pred_region
              %s149 = ssub.s32 256, 1
              loop: start=0, step=1, limit=1
              $region33: #{vgg_backbone_forward.14} parent=31 // loop_pre_header
                _
              $region34: #{vgg_backbone_forward.14} parent=31 // loop_header
                %s151 = sphi 0, %s155
                %p152 = scmp.ge.s32.totalorder %s151, 1
                %s156 = sphi %s141, %s141
                %s157 = sphi %s138, %s138
              $region35: #{vgg_backbone_forward.14} parent=31 // loop_header_branch
                %154 = sbr.rel (%p152) target = $region39
              $region36: #{vgg_backbone_forward.14} parent=31 // loop_body
                %v158 = vld [vmem:[%s156] sm:%s149]
                %159 = vst [vmem:[%s157] sm:%s149] %v158
                %v160 = vld [vmem:[%s156 + $0x8] sm:%s149]
                %161 = vst [vmem:[%s157 + $0x8] sm:%s149] %v160
                %v162 = vld [vmem:[%s156 + $0x20] sm:%s149]
                %163 = vst [vmem:[%s157 + $0x10] sm:%s149] %v162
                %v164 = vld [vmem:[%s156 + $0x28] sm:%s149]
                %165 = vst [vmem:[%s157 + $0x18] sm:%s149] %v164
              $region37: #{vgg_backbone_forward.14} parent=31 // loop_footer
                %s155 = sadd.s32 1, %s151
              $region38: #{vgg_backbone_forward.14} parent=31 // loop_footer_branch
                %150 = sbr.rel target = $region34
              $region39: #{vgg_backbone_forward.14} parent=31 // loop_exit
                _
            $region32: #{vgg_backbone_forward.14} parent=23 // pred_fallthru
              _
          $region24: #{vgg_backbone_forward.14} parent=19 // pred_fallthru
            _
          %186 = vnop
        $region20: #{vgg_backbone_forward.14} parent=15 // pred_fallthru
          _
        // Predicated region
        $region55: #{vgg_backbone_forward.14} parent=15 // pred_check
          %p187 = pneg %p55
        $region56: #{vgg_backbone_forward.14} parent=15 // pred_check_branch
          %189 = sbr.rel (%p187) target = $region58
        $region57: #{vgg_backbone_forward.14} parent=15 // pred_region
          %s190 = smul.u32 2, %s9
          %p191 = scmp.lt.s32.totalorder %s190, 3
          %s192 = scalar_select %p191, %s190, 3
          %s193 = smul.addr %s192, 8
          %s194 = scalar_lea.vmem %s1, %s193
          %s195 = smul.u32 2, %s9
        $region58: #{vgg_backbone_forward.14} parent=15 // pred_fallthru
          _
        // Predicated region
        $region59: #{vgg_backbone_forward.14} parent=15 // pred_check
          %p196 = pneg %p81
        $region60: #{vgg_backbone_forward.14} parent=15 // pred_check_branch
          %198 = sbr.rel (%p196) target = $region62
        $region61: #{vgg_backbone_forward.14} parent=15 // pred_region
          %s199 = smul.u32 2, %s9
          %p200 = scmp.lt.s32.totalorder %s199, 3
          %s201 = scalar_select %p200, %s199, 3
          %s202 = smul.addr %s201, 8
          %s203 = scalar_lea.vmem %s2, %s202
          %s204 = smul.u32 2, %s9
        $region62: #{vgg_backbone_forward.14} parent=15 // pred_fallthru
          _
      $region16: #{vgg_backbone_forward.14} parent=5 // pred_fallthru
        _
      %p205 = scmp.le.s32.totalorder 1, %s9
      %p206 = scmp.lt.s32.totalorder %s9, 3
      %p207 = pnand %p205, %p206
      %p208 = pneg %p207
      // Predicated region
      $region63: #{vgg_backbone_forward.14} parent=5 // pred_check
        _
      $region64: #{vgg_backbone_forward.14} parent=5 // pred_check_branch
        %210 = sbr.rel (%p207) target = $region66
      $region65: #{vgg_backbone_forward.14} parent=5 // pred_region
        %s211 = ssub.s32 %s9, 1
        %s212 = sand.u32 %s22, 1
        %s213 = sand.u32 %s22, 1
        %s214 = smul.addr %s213, 32
        %s215 = scalar_lea.vmem [#allocation2], %s214
        // Predicated region
        $region67: #{vgg_backbone_forward.14} parent=65 // pred_check
          %p216 = pneg %p35
        $region68: #{vgg_backbone_forward.14} parent=65 // pred_check_branch
          %218 = sbr.rel (%p216) target = $region70
        $region69: #{vgg_backbone_forward.14} parent=65 // pred_region
          _
        $region70: #{vgg_backbone_forward.14} parent=65 // pred_fallthru
          _
        %s219 = sand.u32 %s22, 1
        %s220 = sand.u32 %s22, 1
        %s221 = smul.addr %s220, 32
        %s222 = scalar_lea.vmem [#allocation2], %s221
        %p223 = pneg %p35
        %p224 = pneg %p32
        %s225 = smul.u32 2, %s14
        %p226 = scmp.lt.s32.totalorder %s225, 3
        %s227 = scalar_select %p226, %s225, 3
        %s228 = smul.addr %s227, 8
        %s229 = scalar_lea.vmem %s1, %s228
        %p230 = pneg %p61
        %p231 = pneg %p58
        %s232 = smul.u32 2, %s14
        %p233 = scmp.lt.s32.totalorder %s232, 3
        %s234 = scalar_select %p233, %s232, 3
        %s235 = smul.addr %s234, 8
        %s236 = scalar_lea.vmem %s2, %s235
        %p237 = pneg %p87
        %p238 = pneg %p84
        %p239 = pneg %p113
        %p240 = pneg %p110
        %s241 = sand.u32 %s100, 1
        %s242 = sand.u32 %s100, 1
        %s243 = smul.addr %s242, 32
        %s244 = scalar_lea.vmem [#allocation3], %s243
        %s245 = smul.u32 2, %s14
        %s246 = smul.u32 2, %s14
        %p247 = scmp.lt.s32.totalorder %s246, 3
        %s248 = scalar_select %p247, %s246, 3
        %s249 = smul.addr %s248, 8
        %s250 = scalar_lea.vmem %s1, %s249
        %s251 = smul.u32 2, %s14
        %s252 = smul.u32 2, %s14
        %p253 = scmp.lt.s32.totalorder %s252, 3
        %s254 = scalar_select %p253, %s252, 3
        %s255 = smul.addr %s254, 8
        %s256 = scalar_lea.vmem %s2, %s255
        %s257 = smul.u32 2, %s14
        %s258 = smul.u32 2, %s14
        %v259 = vld [vmem:[%s215] sm:$0xff]
        %v260 = vld [vmem:[%s215 + $0x8] sm:$0xff]
        %v261 = vld [vmem:[%s215 + $0x10] sm:$0xff]
        %v262 = vld [vmem:[%s215 + $0x18] sm:$0xff]
        %vm263 = vcmask 130048
        %v264 = vsel %vm263, %v259, 0.0
        %265 = vadd.xlane.f32.xlu0 %v264
        %v266 = vpop.xlane.xlu0 %265
        %v267 = vsel %vm263, %v260, 0.0
        %268 = vadd.xlane.f32.xlu0 %v267
        %v269 = vpop.xlane.xlu0 %268
        %v270 = vsel %vm263, %v261, 0.0
        %271 = vadd.xlane.f32.xlu0 %v270
        %v272 = vpop.xlane.xlu0 %271
        %v273 = vsel %vm263, %v262, 0.0
        %274 = vadd.xlane.f32.xlu0 %v273
        %v275 = vpop.xlane.xlu0 %274
        %v276 = vadd.f32 %v266, %v272
        %v277 = vadd.f32 %v269, %v275
        %v278 = vmul.f32 %v276, 0.03125
        %v279 = vmul.f32 %v277, 0.03125
        %v280 = vsub.f32 %v259, %v278
        %v281 = vsub.f32 %v260, %v279
        %v282 = vsub.f32 %v261, %v278
        %v283 = vsub.f32 %v262, %v279
        %v284 = vmul.f32 %v280, %v280
        %v285 = vmul.f32 %v281, %v281
        %v286 = vmul.f32 %v282, %v282
        %v287 = vmul.f32 %v283, %v283
        %v288 = vsel %vm263, %v284, 0.0
        %289 = vadd.xlane.f32.xlu0 %v288
        %v290 = vpop.xlane.xlu0 %289
        %v291 = vsel %vm263, %v285, 0.0
        %292 = vadd.xlane.f32.xlu0 %v291
        %v293 = vpop.xlane.xlu0 %292
        %v294 = vsel %vm263, %v286, 0.0
        %295 = vadd.xlane.f32.xlu0 %v294
        %v296 = vpop.xlane.xlu0 %295
        %v297 = vsel %vm263, %v287, 0.0
        %298 = vadd.xlane.f32.xlu0 %v297
        %v299 = vpop.xlane.xlu0 %298
        %v300 = vadd.f32 %v290, %v296
        %v301 = vadd.f32 %v293, %v299
        %v302 = vld [vmem:[%s250] sm:$0xff]
        %v303 = vld [vmem:[%s250 + $0x8] sm:$0xff]
        %v304 = vmul.f32 %v300, 0.03125
        %v305 = vmul.f32 %v301, 0.03125
        %v306 = vadd.f32 %v304, 1e-05
        %v307 = vadd.f32 %v305, 1e-05
        %v308 = vrsqrt.pop %v306
        %v309 = vmul.f32 %v308, %v306
        %v310 = vmul.f32 %v309, %v308
        %v311 = vmul.f32 0.5, %v310
        %v312 = vsub.f32 1.5, %v311
        %v313 = vmul.f32 %v308, %v312
        %vm314 = vweird.f32 %v306
        %vm315 = vweird.f32 %v308
        %vm316 = vmor %vm314, %vm315
        %v317 = vsel %vm316, %v308, %v313
        %v318 = vrsqrt.pop %v307
        %v319 = vmul.f32 %v318, %v307
        %v320 = vmul.f32 %v319, %v318
        %v321 = vmul.f32 0.5, %v320
        %v322 = vsub.f32 1.5, %v321
        %v323 = vmul.f32 %v318, %v322
        %vm324 = vweird.f32 %v307
        %vm325 = vweird.f32 %v318
        %vm326 = vmor %vm324, %vm325
        %v327 = vsel %vm326, %v318, %v323
        %v328 = vmul.f32 %v302, %v317
        %v329 = vmul.f32 %v303, %v327
        %331 = vset.pattern.permute.xlu0 0
        %332 = vperm.xlu0 %331, %v328
        %v333 = vpop.permute.xlu0 %332
        %336 = vset.pattern.permute.xlu0 0
        %337 = vperm.xlu0 %336, %v329
        %v338 = vpop.permute.xlu0 %337
        %v340 = vmul.f32 %v280, %v333
        %v341 = vmul.f32 %v281, %v338
        %v342 = vmul.f32 %v282, %v333
        %v343 = vmul.f32 %v283, %v338
        %v344 = vld [vmem:[%s256] sm:$0xff]
        %v345 = vld [vmem:[%s256 + $0x8] sm:$0xff]
        %347 = vset.pattern.permute.xlu0 0
        %348 = vperm.xlu0 %347, %v344
        %v349 = vpop.permute.xlu0 %348
        %352 = vset.pattern.permute.xlu0 0
        %353 = vperm.xlu0 %352, %v345
        %v354 = vpop.permute.xlu0 %353
        %v356 = vadd.f32 %v340, %v349
        %v357 = vadd.f32 %v341, %v354
        %v358 = vadd.f32 %v342, %v349
        %v359 = vadd.f32 %v343, %v354
        %v360 = vmax.f32 %v356, 0.0
        %v361 = vmax.f32 %v357, 0.0
        %v362 = vmax.f32 %v358, 0.0
        %v363 = vmax.f32 %v359, 0.0
        %vm364 = vcmask 310272
        %365 = vst.msk [vmem:[%s244] sm:$0xff] %vm364, 0.0
        %366 = vst.msk [vmem:[%s244 + $0x8] sm:$0xff] %vm364, 0.0
        %367 = vst.msk [vmem:[%s244 + $0x10] sm:$0xff] %vm364, 0.0
        %368 = vst.msk [vmem:[%s244 + $0x18] sm:$0xff] %vm364, 0.0
        %373 = vrot.lane.b32.xlu0 %v360, 7
        %v374 = vpop.permute.xlu0 %373
        %375 = vrot.lane.b32.xlu0 %v361, 7
        %v376 = vpop.permute.xlu0 %375
        %377 = vrot.lane.b32.xlu0 %v362, 7
        %v378 = vpop.permute.xlu0 %377
        %379 = vrot.lane.b32.xlu0 %v363, 7
        %v380 = vpop.permute.xlu0 %379
        %vm385 = vcmask 89144
        %386 = vst.msk [vmem:[%s244] sm:$0xff] %vm385, %v374
        %387 = vst.msk [vmem:[%s244 + $0x8] sm:$0xff] %vm385, %v376
        %388 = vst.msk [vmem:[%s244 + $0x10] sm:$0xff] %vm385, %v378
        %389 = vst.msk [vmem:[%s244 + $0x18] sm:$0xff] %vm385, %v380
        %390 = vrot.lane.b32.xlu0 %v360, 9
        %v391 = vpop.permute.xlu0 %390
        %392 = vrot.lane.b32.xlu0 %v361, 9
        %v393 = vpop.permute.xlu0 %392
        %394 = vrot.lane.b32.xlu0 %v362, 9
        %v395 = vpop.permute.xlu0 %394
        %396 = vrot.lane.b32.xlu0 %v363, 9
        %v397 = vpop.permute.xlu0 %396
        %vm402 = vcmask 138344
        %403 = vst.msk [vmem:[%s244] sm:$0xff] %vm402, %v391
        %404 = vst.msk [vmem:[%s244 + $0x8] sm:$0xff] %vm402, %v393
        %405 = vst.msk [vmem:[%s244 + $0x10] sm:$0xff] %vm402, %v395
        %406 = vst.msk [vmem:[%s244 + $0x18] sm:$0xff] %vm402, %v397
        %407 = vrot.lane.b32.xlu0 %v360, 11
        %v408 = vpop.permute.xlu0 %407
        %409 = vrot.lane.b32.xlu0 %v361, 11
        %v410 = vpop.permute.xlu0 %409
        %411 = vrot.lane.b32.xlu0 %v362, 11
        %v412 = vpop.permute.xlu0 %411
        %413 = vrot.lane.b32.xlu0 %v363, 11
        %v414 = vpop.permute.xlu0 %413
        %vm419 = vcmask 187544
        %420 = vst.msk [vmem:[%s244] sm:$0xff] %vm419, %v408
        %421 = vst.msk [vmem:[%s244 + $0x8] sm:$0xff] %vm419, %v410
        %422 = vst.msk [vmem:[%s244 + $0x10] sm:$0xff] %vm419, %v412
        %423 = vst.msk [vmem:[%s244 + $0x18] sm:$0xff] %vm419, %v414
        %424 = vrot.lane.b32.xlu0 %v360, 13
        %v425 = vpop.permute.xlu0 %424
        %426 = vrot.lane.b32.xlu0 %v361, 13
        %v427 = vpop.permute.xlu0 %426
        %428 = vrot.lane.b32.xlu0 %v362, 13
        %v429 = vpop.permute.xlu0 %428
        %430 = vrot.lane.b32.xlu0 %v363, 13
        %v431 = vpop.permute.xlu0 %430
        %vm436 = vcmask 236744
        %437 = vst.msk [vmem:[%s244] sm:$0xff] %vm436, %v425
        %438 = vst.msk [vmem:[%s244 + $0x8] sm:$0xff] %vm436, %v427
        %439 = vst.msk [vmem:[%s244 + $0x10] sm:$0xff] %vm436, %v429
        %440 = vst.msk [vmem:[%s244 + $0x18] sm:$0xff] %vm436, %v431
        %s441 = sand.u32 %s100, 1
        %s442 = sand.u32 %s100, 1
        %s443 = smul.addr %s442, 32
        %s444 = scalar_lea.vmem [#allocation3], %s443
        // Predicated region
        $region71: #{vgg_backbone_forward.14} parent=65 // pred_check
          %p445 = pneg %p110
        $region72: #{vgg_backbone_forward.14} parent=65 // pred_check_branch
          %447 = sbr.rel (%p445) target = $region74
        $region73: #{vgg_backbone_forward.14} parent=65 // pred_region
          %s448 = smul.u32 2, %s14
          %s449 = smul.addr %s448, 8
          %s450 = scalar_lea.vmem %s3, %s449
          // Predicated region
          $region75: #{vgg_backbone_forward.14} parent=73 // pred_check
            _
          $region76: #{vgg_backbone_forward.14} parent=73 // pred_check_branch
            %452 = sbr.rel (0) target = $region78
          $region77: #{vgg_backbone_forward.14} parent=73 // pred_region
            // Predicated region
            $region79: #{vgg_backbone_forward.14} parent=77 // pred_check
              _
            $region80: #{vgg_backbone_forward.14} parent=77 // pred_check_branch
              %454 = sbr.rel (0) target = $region82
            $region81: #{vgg_backbone_forward.14} parent=77 // pred_region
              // Predicated region
              $region94: #{vgg_backbone_forward.14} parent=81 // pred_check
                _
              $region95: #{vgg_backbone_forward.14} parent=81 // pred_check_branch
                %476 = sbr.rel (0) target = $region97
              $region96: #{vgg_backbone_forward.14} parent=81 // pred_region
                loop: start=0, step=1, limit=1
                $region98: #{vgg_backbone_forward.14} parent=96 // loop_pre_header
                  _
                $region99: #{vgg_backbone_forward.14} parent=96 // loop_header
                  %s478 = sphi 0, %s482
                  %p479 = scmp.ge.s32.totalorder %s478, 1
                  %s483 = sphi %s444, %s444
                  %s484 = sphi %s450, %s450
                $region100: #{vgg_backbone_forward.14} parent=96 // loop_header_branch
                  %481 = sbr.rel (%p479) target = $region104
                $region101: #{vgg_backbone_forward.14} parent=96 // loop_body
                  %v485 = vld [vmem:[%s483] sm:$0xff]
                  %486 = vst [vmem:[%s484] sm:$0xff] %v485
                  %v487 = vld [vmem:[%s483 + $0x8] sm:$0xff]
                  %488 = vst [vmem:[%s484 + $0x8] sm:$0xff] %v487
                  %v489 = vld [vmem:[%s483 + $0x10] sm:$0xff]
                  %490 = vst [vmem:[%s484 + $0x20] sm:$0xff] %v489
                  %v491 = vld [vmem:[%s483 + $0x18] sm:$0xff]
                  %492 = vst [vmem:[%s484 + $0x28] sm:$0xff] %v491
                $region102: #{vgg_backbone_forward.14} parent=96 // loop_footer
                  %s482 = sadd.s32 1, %s478
                $region103: #{vgg_backbone_forward.14} parent=96 // loop_footer_branch
                  %477 = sbr.rel target = $region99
                $region104: #{vgg_backbone_forward.14} parent=96 // loop_exit
                  _
              $region97: #{vgg_backbone_forward.14} parent=81 // pred_fallthru
                _
              // Predicated region
              $region105: #{vgg_backbone_forward.14} parent=81 // pred_check
                _
              $region106: #{vgg_backbone_forward.14} parent=81 // pred_check_branch
                %494 = sbr.rel target = $region108
              $region107: #{vgg_backbone_forward.14} parent=81 // pred_region
                _
              $region108: #{vgg_backbone_forward.14} parent=81 // pred_fallthru
                _
            $region82: #{vgg_backbone_forward.14} parent=77 // pred_fallthru
              _
            // Predicated region
            $region83: #{vgg_backbone_forward.14} parent=77 // pred_check
              _
            $region84: #{vgg_backbone_forward.14} parent=77 // pred_check_branch
              %456 = sbr.rel target = $region86
            $region85: #{vgg_backbone_forward.14} parent=77 // pred_region
              %s458 = ssub.s32 256, 1
              loop: start=0, step=1, limit=1
              $region87: #{vgg_backbone_forward.14} parent=85 // loop_pre_header
                _
              $region88: #{vgg_backbone_forward.14} parent=85 // loop_header
                %s460 = sphi 0, %s464
                %p461 = scmp.ge.s32.totalorder %s460, 1
                %s465 = sphi %s444, %s444
                %s466 = sphi %s450, %s450
              $region89: #{vgg_backbone_forward.14} parent=85 // loop_header_branch
                %463 = sbr.rel (%p461) target = $region93
              $region90: #{vgg_backbone_forward.14} parent=85 // loop_body
                %v467 = vld [vmem:[%s465] sm:%s458]
                %468 = vst [vmem:[%s466] sm:%s458] %v467
                %v469 = vld [vmem:[%s465 + $0x8] sm:%s458]
                %470 = vst [vmem:[%s466 + $0x8] sm:%s458] %v469
                %v471 = vld [vmem:[%s465 + $0x10] sm:%s458]
                %472 = vst [vmem:[%s466 + $0x20] sm:%s458] %v471
                %v473 = vld [vmem:[%s465 + $0x18] sm:%s458]
                %474 = vst [vmem:[%s466 + $0x28] sm:%s458] %v473
              $region91: #{vgg_backbone_forward.14} parent=85 // loop_footer
                %s464 = sadd.s32 1, %s460
              $region92: #{vgg_backbone_forward.14} parent=85 // loop_footer_branch
                %459 = sbr.rel target = $region88
              $region93: #{vgg_backbone_forward.14} parent=85 // loop_exit
                _
            $region86: #{vgg_backbone_forward.14} parent=77 // pred_fallthru
              _
          $region78: #{vgg_backbone_forward.14} parent=73 // pred_fallthru
            _
          %495 = vnop
        $region74: #{vgg_backbone_forward.14} parent=65 // pred_fallthru
          _
      $region66: #{vgg_backbone_forward.14} parent=5 // pred_fallthru
        _
      %p496 = scmp.le.s32.totalorder 2, %s9
      // Predicated region
      $region109: #{vgg_backbone_forward.14} parent=5 // pred_check
        %p497 = pneg %p496
      $region110: #{vgg_backbone_forward.14} parent=5 // pred_check_branch
        %499 = sbr.rel (%p497) target = $region112
      $region111: #{vgg_backbone_forward.14} parent=5 // pred_region
        %s500 = ssub.s32 %s9, 2
        // Predicated region
        $region113: #{vgg_backbone_forward.14} parent=111 // pred_check
          %p501 = pneg %p116
        $region114: #{vgg_backbone_forward.14} parent=111 // pred_check_branch
          %503 = sbr.rel (%p501) target = $region116
        $region115: #{vgg_backbone_forward.14} parent=111 // pred_region
          %s504 = sand.u32 %s101, 1
          %s505 = sand.u32 %s101, 1
          %s506 = smul.addr %s505, 32
          %s507 = scalar_lea.vmem [#allocation3], %s506
        $region116: #{vgg_backbone_forward.14} parent=111 // pred_fallthru
          _
      $region112: #{vgg_backbone_forward.14} parent=5 // pred_fallthru
        _
    $region6: #{vgg_backbone_forward.14} parent=1 // loop_footer
      %s13 = sadd.s32 1, %s9
    $region7: #{vgg_backbone_forward.14} parent=1 // loop_footer_branch
      %8 = sbr.rel target = $region3
    $region8: #{vgg_backbone_forward.14} parent=1 // loop_exit
      _

// kernel: vgg_backbone_forward.13
$region0: #{vgg_backbone_forward.13}
  #allocation0 [shape = 'u32[]', space=smem, size = 0x4, offset = 0x4, fixed_abs, tag = 'smem constant byte address 0x4 - core index']
  #allocation1 [shape = 'u32[72,128]{1,0:T(1,128)}', space=vmem, size = 0x9000, scoped, tag = 'internal scratch']
  #allocation2 [shape = 'bf16[16,38]{1,0:T(8,128)(2,1)}', space=vmem, size = 0x1000, scoped, tag = 'scratch operand']
  %s0 = inlined_call_operand.vmem [shape: f32[2,16,38], index: 0, kind: input, shape index: {}]
  %s1 = inlined_call_operand.vmem [shape: bf16[9,32,16], index: 1, kind: input, shape index: {}]
  %s2 = inlined_call_operand.vmem [shape: f32[32,1], index: 2, kind: input, shape index: {}]
  %s3 = inlined_call_operand.vmem [shape: f32[2,32,16], index: 3, kind: output, shape index: {}]
  %s4 = sld [smem:[#allocation0]]
  $region45: #{vgg_backbone_forward.13} parent=0
    _
  %s6 = ssub.s32 1, %s4
  %s7 = scalar_select 0, %s6, %s4
  loop: start=0, step=1, limit=4
  $region2: #{vgg_backbone_forward.13} parent=0 // loop_pre_header
    _
  $region3: #{vgg_backbone_forward.13} parent=0 // loop_header
    %s9 = sphi 0, %s13
    %p10 = scmp.ge.s32.totalorder %s9, 4
    %s16 = sphi 0, %s28
    %s17 = sphi 0, %s24
    %s18 = sphi 0, %s16
    %s19 = sphi 0, %s17
    %s20 = sphi 0, %s18
    %s21 = sphi 0, %s19
    %s31 = sphi 0, %s33
    %s34 = sphi 0, %s31
    %s35 = sphi 0, %s34
    %s51 = sphi 0, %s35
    %s57 = sphi 0, %s59
    %s60 = sphi 0, %s57
    %s61 = sphi 0, %s60
    %s77 = sphi 0, %s61
    %s83 = sphi 0, %s85
    %s86 = sphi 0, %s83
    %s87 = sphi 0, %s86
    %s103 = sphi 0, %s87
    %s111 = sphi 0, %s113
    %s114 = sphi 0, %s111
    %s115 = sphi 0, %s114
    %s131 = sphi 0, %s115
  $region4: #{vgg_backbone_forward.13} parent=0 // loop_header_branch
    %12 = sbr.rel (%p10) target = $region8
  $region5: #{vgg_backbone_forward.13} parent=0 // loop_body
    %s14 = ssub.s32 %s9, 1
    %s15 = ssub.s32 %s9, 2
    %s22 = sadd.s32 1, %s17
    %p23 = scmp.ge.s32.totalorder %s22, 1
    %s24 = scalar_select %p23, 0, %s22
    %s25 = sadd.s32 1, %s16
    %s26 = scalar_select %p23, %s25, %s16
    %p27 = scmp.ge.s32.totalorder %s26, 2
    %s28 = scalar_select %p27, 0, %s26
    %s29 = ssub.s32 %s16, %s28
    %p30 = scmp.eq.s32.totalorder %s29, 0
    %s32 = sadd.s32 %s31, 1
    %s33 = scalar_select %p30, %s31, %s32
    %p36 = pneg %p30
    %p37 = scmp.eq.s32.totalorder %s9, 1
    %p38 = por %p36, %p37
    %p39 = scmp.ne.s32.totalorder %s31, %s34
    %p40 = scmp.eq.s32.totalorder %s9, 0
    %p41 = por %p39, %p40
    %p42 = scmp.ne.s32.totalorder %s31, %s34
    %p43 = scmp.eq.s32.totalorder %s14, 1
    %p44 = por %p42, %p43
    %p45 = scmp.ne.s32.totalorder %s34, %s35
    %p46 = scmp.eq.s32.totalorder %s14, 0
    %p47 = por %p45, %p46
    %p48 = scmp.ne.s32.totalorder %s34, %s35
    %p49 = scmp.eq.s32.totalorder %s15, 1
    %p50 = por %p48, %p49
    %p52 = scmp.ne.s32.totalorder %s35, %s51
    %p53 = scmp.eq.s32.totalorder %s15, 0
    %p54 = por %p52, %p53
    %s55 = ssub.s32 %s17, %s24
    %p56 = scmp.eq.s32.totalorder %s55, 0
    %s58 = sadd.s32 %s57, 1
    %s59 = scalar_select %p56, %s57, %s58
    %p62 = pneg %p56
    %p63 = scmp.eq.s32.totalorder %s9, 1
    %p64 = por %p62, %p63
    %p65 = scmp.ne.s32.totalorder %s57, %s60
    %p66 = scmp.eq.s32.totalorder %s9, 0
    %p67 = por %p65, %p66
    %p68 = scmp.ne.s32.totalorder %s57, %s60
    %p69 = scmp.eq.s32.totalorder %s14, 1
    %p70 = por %p68, %p69
    %p71 = scmp.ne.s32.totalorder %s60, %s61
    %p72 = scmp.eq.s32.totalorder %s14, 0
    %p73 = por %p71, %p72
    %p74 = scmp.ne.s32.totalorder %s60, %s61
    %p75 = scmp.eq.s32.totalorder %s15, 1
    %p76 = por %p74, %p75
    %p78 = scmp.ne.s32.totalorder %s61, %s77
    %p79 = scmp.eq.s32.totalorder %s15, 0
    %p80 = por %p78, %p79
    %s81 = ssub.s32 %s17, %s24
    %p82 = scmp.eq.s32.totalorder %s81, 0
    %s84 = sadd.s32 %s83, 1
    %s85 = scalar_select %p82, %s83, %s84
    %p88 = pneg %p82
    %p89 = scmp.eq.s32.totalorder %s9, 1
    %p90 = por %p88, %p89
    %p91 = scmp.ne.s32.totalorder %s83, %s86
    %p92 = scmp.eq.s32.totalorder %s9, 0
    %p93 = por %p91, %p92
    %p94 = scmp.ne.s32.totalorder %s83, %s86
    %p95 = scmp.eq.s32.totalorder %s14, 1
    %p96 = por %p94, %p95
    %p97 = scmp.ne.s32.totalorder %s86, %s87
    %p98 = scmp.eq.s32.totalorder %s14, 0
    %p99 = por %p97, %p98
    %p100 = scmp.ne.s32.totalorder %s86, %s87
    %p101 = scmp.eq.s32.totalorder %s15, 1
    %p102 = por %p100, %p101
    %p104 = scmp.ne.s32.totalorder %s87, %s103
    %p105 = scmp.eq.s32.totalorder %s15, 0
    %p106 = por %p104, %p105
    %s107 = ssub.s32 %s16, %s28
    %s108 = ssub.s32 %s17, %s24
    %s109 = sor.u32 %s107, %s108
    %p110 = scmp.eq.s32.totalorder %s109, 0
    %s112 = sadd.s32 %s111, 1
    %s113 = scalar_select %p110, %s111, %s112
    %p116 = pneg %p110
    %p117 = scmp.eq.s32.totalorder %s9, 1
    %p118 = por %p116, %p117
    %p119 = scmp.ne.s32.totalorder %s111, %s114
    %p120 = scmp.eq.s32.totalorder %s9, 0
    %p121 = por %p119, %p120
    %p122 = scmp.ne.s32.totalorder %s111, %s114
    %p123 = scmp.eq.s32.totalorder %s14, 1
    %p124 = por %p122, %p123
    %p125 = scmp.ne.s32.totalorder %s114, %s115
    %p126 = scmp.eq.s32.totalorder %s14, 0
    %p127 = por %p125, %p126
    %p128 = scmp.ne.s32.totalorder %s114, %s115
    %p129 = scmp.eq.s32.totalorder %s15, 1
    %p130 = por %p128, %p129
    %p132 = scmp.ne.s32.totalorder %s115, %s131
    %p133 = scmp.eq.s32.totalorder %s15, 0
    %p134 = por %p132, %p133
    %p135 = scmp.le.s32.totalorder 1, %s9
    %p136 = scmp.lt.s32.totalorder %s9, 3
    %p137 = pnand %p135, %p136
    %p138 = pneg %p137
    // Predicated region
    $region9: #{vgg_backbone_forward.13} parent=5 // pred_check
      _
    $region10: #{vgg_backbone_forward.13} parent=5 // pred_check_branch
      %140 = sbr.rel (%p137) target = $region12
    $region11: #{vgg_backbone_forward.13} parent=5 // pred_region
      %s141 = ssub.s32 %s9, 1
      // Predicated region
      $region13: #{vgg_backbone_forward.13} parent=11 // pred_check
        %p142 = pneg %p73
      $region14: #{vgg_backbone_forward.13} parent=11 // pred_check_branch
        %144 = sbr.rel (%p142) target = $region16
      $region15: #{vgg_backbone_forward.13} parent=11 // pred_region
        %s145 = smul.u32 4, %s19
        %p146 = scmp.lt.s32.totalorder %s145, 3
        %s147 = scalar_select %p146, %s145, 3
        %s148 = smul.addr %s147, 4
        %s149 = scalar_lea.vmem %s1, %s148
        %s150 = smul.u32 4, %s19
      $region16: #{vgg_backbone_forward.13} parent=11 // pred_fallthru
        _
      // Predicated region
      $region17: #{vgg_backbone_forward.13} parent=11 // pred_check
        %p151 = pneg %p99
      $region18: #{vgg_backbone_forward.13} parent=11 // pred_check_branch
        %153 = sbr.rel (%p151) target = $region20
      $region19: #{vgg_backbone_forward.13} parent=11 // pred_region
        %s154 = smul.u32 4, %s19
        %p155 = scmp.lt.s32.totalorder %s154, 3
        %s156 = scalar_select %p155, %s154, 3
        %s157 = smul.addr %s156, 8
        %s158 = scalar_lea.vmem %s2, %s157
        %s159 = smul.u32 4, %s19
      $region20: #{vgg_backbone_forward.13} parent=11 // pred_fallthru
        _
    $region12: #{vgg_backbone_forward.13} parent=5 // pred_fallthru
      _
    %p160 = scmp.lt.s32.totalorder %s9, 2
    // Predicated region
    $region21: #{vgg_backbone_forward.13} parent=5 // pred_check
      %p161 = pneg %p160
    $region22: #{vgg_backbone_forward.13} parent=5 // pred_check_branch
      %163 = sbr.rel (%p161) target = $region24
    $region23: #{vgg_backbone_forward.13} parent=5 // pred_region
      // Predicated region
      $region25: #{vgg_backbone_forward.13} parent=23 // pred_check
        %p164 = pneg %p41
      $region26: #{vgg_backbone_forward.13} parent=23 // pred_check_branch
        %166 = sbr.rel (%p164) target = $region28
      $region27: #{vgg_backbone_forward.13} parent=23 // pred_region
        %p167 = scmp.lt.s32.totalorder %s16, 1
        %s168 = scalar_select %p167, %s16, 1
        %s169 = smul.addr %s168, 2
        %s170 = smul.addr %s169, 8
        %s171 = scalar_lea.vmem %s0, %s170
      $region28: #{vgg_backbone_forward.13} parent=23 // pred_fallthru
        _
    $region24: #{vgg_backbone_forward.13} parent=5 // pred_fallthru
      _
    %p172 = scmp.le.s32.totalorder 1, %s9
    %p173 = scmp.lt.s32.totalorder %s9, 3
    %p174 = pnand %p172, %p173
    %p175 = pneg %p174
    // Predicated region
    $region29: #{vgg_backbone_forward.13} parent=5 // pred_check
      _
    $region30: #{vgg_backbone_forward.13} parent=5 // pred_check_branch
      %177 = sbr.rel (%p174) target = $region32
    $region31: #{vgg_backbone_forward.13} parent=5 // pred_region
      %s178 = ssub.s32 %s9, 1
      %p179 = scmp.lt.s32.totalorder %s18, 1
      %s180 = scalar_select %p179, %s18, 1
      %s181 = smul.addr %s180, 2
      %s182 = smul.addr %s181, 8
      %s183 = scalar_lea.vmem %s0, %s182
      %p184 = pneg %p47
      %p185 = pneg %p44
      %s186 = smul.u32 4, %s19
      %p187 = scmp.lt.s32.totalorder %s186, 3
      %s188 = scalar_select %p187, %s186, 3
      %s189 = smul.addr %s188, 4
      %s190 = scalar_lea.vmem %s1, %s189
      %p191 = pneg %p73
      %p192 = pneg %p70
      %s193 = smul.u32 4, %s19
      %p194 = scmp.lt.s32.totalorder %s193, 3
      %s195 = scalar_select %p194, %s193, 3
      %s196 = smul.addr %s195, 8
      %s197 = scalar_lea.vmem %s2, %s196
      %p198 = pneg %p99
      %p199 = pneg %p96
      %p200 = pneg %p127
      %p201 = pneg %p124
      %s202 = smul.u32 4, %s19
      %p203 = scmp.lt.s32.totalorder %s18, 1
      %s204 = scalar_select %p203, %s18, 1
      %p205 = scmp.lt.s32.totalorder %s202, 3
      %s206 = scalar_select %p205, %s202, 3
      %s207 = smul.addr %s204, 4
      %s208 = sadd.s32 %s206, %s207
      %s209 = smul.addr %s208, 8
      %s210 = scalar_lea.vmem %s3, %s209
      %p211 = scmp.lt.s32.totalorder %s18, 1
      %s212 = scalar_select %p211, %s18, 1
      %s213 = smul.addr %s212, 2
      %s214 = smul.addr %s213, 8
      %s215 = scalar_lea.vmem %s0, %s214
      %s216 = smul.u32 4, %s19
      %p217 = scmp.lt.s32.totalorder %s216, 3
      %s218 = scalar_select %p217, %s216, 3
      %s219 = smul.addr %s218, 4
      %s220 = scalar_lea.vmem %s1, %s219
      %s221 = smul.u32 4, %s19
      %s222 = smul.u32 4, %s19
      %p223 = scmp.lt.s32.totalorder %s222, 3
      %s224 = scalar_select %p223, %s222, 3
      %s225 = smul.addr %s224, 8
      %s226 = scalar_lea.vmem %s2, %s225
      %s227 = smul.u32 4, %s19
      %s228 = smul.u32 4, %s19
      %p229 = scmp.lt.s32.totalorder %s18, 1
      %s230 = scalar_select %p229, %s18, 1
      %p231 = scmp.lt.s32.totalorder %s228, 3
      %s232 = scalar_select %p231, %s228, 3
      %s233 = smul.addr %s230, 4
      %s234 = sadd.s32 %s232, %s233
      %s235 = smul.addr %s234, 8
      %s236 = scalar_lea.vmem %s3, %s235
      %s237 = smul.u32 4, %s19
      %v239 = vld [vmem:[%s215] sm:$0xff]
      %v240 = vld [vmem:[%s215 + $0x8] sm:$0xff]
      %v241 = vpack.c.bf16 %v239, %v239
      %v242 = vpack.c.bf16 %v240, %v240
      %vm243 = vcmask 306176
      %244 = vst.msk [vmem:[#allocation2] sm:$0xf] %vm243, %v241
      %245 = vst.msk [vmem:[#allocation2 + $0x4] sm:$0xf] %vm243, %v242
      %v246 = vld [vmem:[#allocation2] sm:$0xf]
      %v247 = vld [vmem:[#allocation2 + $0x4] sm:$0xf]
      %v248 = vld [vmem:[%s220] sm:$0xf]
      %v249 = vld [vmem:[%s220 + $0x4] sm:$0xf]
      %v250 = vld [vmem:[%s220 + $0x8] sm:$0xf]
      %v251 = vld [vmem:[%s220 + $0xc] sm:$0xf]
      %s252 = scalar_lea.vmem %s220, 16
      %v253 = vld [vmem:[%s252] sm:$0xf]
      %v254 = vld [vmem:[%s252 + $0x4] sm:$0xf]
      %v255 = vld [vmem:[%s252 + $0x8] sm:$0xf]
      %v256 = vld [vmem:[%s252 + $0xc] sm:$0xf]
      %v261 = vunpack.c.l.b16 %v253
      %v262 = vunpack.c.l.b16 %v254
      %v263 = vunpack.c.l.b16 %v255
      %v264 = vunpack.c.l.b16 %v256
      %v265 = vpack.c.b16 %v262, %v261
      %v266 = vpack.c.b16 %v264, %v263
      %v269 = vunpack.c.l.b16 %v246
      %v270 = vunpack.c.l.b16 %v247
      %v271 = vpack.c.b16 %v270, %v269
      %272 = vrot.lane.b32.xlu0 %v271, 127
      %v273 = vpop.permute.xlu0 %272
      %vm275 = vcmask 130048
      %v277 = vsel %vm275, %v265, 0
      %v280 = vsel %vm275, %v266, 0
      %282 = vmatpush.bf16.msra.mxu0 0
      %283 = vmatpush.bf16.msra.mxu0 0
      %284 = vmatpush.bf16.msra.mxu0 0
      %285 = vmatpush.bf16.msra.mxu0 0
      %286 = vmatpush.bf16.msra.mxu0 0
      %287 = vmatpush.bf16.msra.mxu0 0
      %288 = vmatpush.bf16.msra.mxu0 0
      %289 = vmatpush.bf16.msra.mxu0 %v273
      %290 = vmatmul.bf16.gmra.mxu0 %v277
      %v291 = vpop.f32.mrf.mxu0
      %v292 = vadd.f32 0.0, %v291
      %v293 = vpop.f32.mrf.mxu0
      %v294 = vadd.f32 0.0, %v293
      %295 = vmatmul.bf16.gmra.mxu0 %v280
      %v296 = vpop.f32.mrf.mxu0
      %v297 = vadd.f32 0.0, %v296
      %v298 = vpop.f32.mrf.mxu0
      %v299 = vadd.f32 0.0, %v298
      %300 = vdwg.mxu0
      %v305 = vunpack.c.l.b16 %v248
      %v306 = vunpack.c.l.b16 %v249
      %v307 = vunpack.c.l.b16 %v250
      %v308 = vunpack.c.l.b16 %v251
      %v309 = vpack.c.b16 %v306, %v305
      %v310 = vpack.c.b16 %v308, %v307
      %v313 = vsel %vm275, %v309, 0
      %v316 = vsel %vm275, %v310, 0
      %318 = vmatpush.bf16.msra.mxu0 0
      %319 = vmatpush.bf16.msra.mxu0 0
      %320 = vmatpush.bf16.msra.mxu0 0
      %321 = vmatpush.bf16.msra.mxu0 0
      %322 = vmatpush.bf16.msra.mxu0 0
      %323 = vmatpush.bf16.msra.mxu0 0
      %324 = vmatpush.bf16.msra.mxu0 0
      %325 = vmatpush.bf16.msra.mxu0 %v271
      %326 = vmatmul.bf16.gmra.mxu0 %v313
      %v327 = vpop.f32.mrf.mxu0
      %v328 = vadd.f32 %v292, %v327
      %v329 = vpop.f32.mrf.mxu0
      %v330 = vadd.f32 %v294, %v329
      %331 = vmatmul.bf16.gmra.mxu0 %v316
      %v332 = vpop.f32.mrf.mxu0
      %v333 = vadd.f32 %v297, %v332
      %v334 = vpop.f32.mrf.mxu0
      %v335 = vadd.f32 %v299, %v334
      %336 = vdwg.mxu0
      %s337 = scalar_lea.vmem %s220, 32
      %v338 = vld [vmem:[%s337] sm:$0xf]
      %v339 = vld [vmem:[%s337 + $0x4] sm:$0xf]
      %v340 = vld [vmem:[%s337 + $0x8] sm:$0xf]
      %v341 = vld [vmem:[%s337 + $0xc] sm:$0xf]
      %v346 = vunpack.c.l.b16 %v338
      %v347 = vunpack.c.l.b16 %v339
      %v348 = vunpack.c.l.b16 %v340
      %v349 = vunpack.c.l.b16 %v341
      %v350 = vpack.c.b16 %v347, %v346
      %v351 = vpack.c.b16 %v349, %v348
      %352 = vrot.lane.b32.xlu0 %v271, 126
      %v353 = vpop.permute.xlu0 %352
      %v356 = vsel %vm275, %v350, 0
      %v359 = vsel %vm275, %v351, 0
      %361 = vmatpush.bf16.msra.mxu0 0
      %362 = vmatpush.bf16.msra.mxu0 0
      %363 = vmatpush.bf16.msra.mxu0 0
      %364 = vmatpush.bf16.msra.mxu0 0
      %365 = vmatpush.bf16.msra.mxu0 0
      %366 = vmatpush.bf16.msra.mxu0 0
      %367 = vmatpush.bf16.msra.mxu0 0
      %368 = vmatpush.bf16.msra.mxu0 %v353
      %369 = vmatmul.bf16.gmra.mxu0 %v356
      %v370 = vpop.f32.mrf.mxu0
      %v371 = vadd.f32 0.0, %v370
      %v372 = vpop.f32.mrf.mxu0
      %v373 = vadd.f32 0.0, %v372
      %374 = vmatmul.bf16.gmra.mxu0 %v359
      %v375 = vpop.f32.mrf.mxu0
      %v376 = vadd.f32 0.0, %v375
      %v377 = vpop.f32.mrf.mxu0
      %v378 = vadd.f32 0.0, %v377
      %379 = vdwg.mxu0
      %v380 = vadd.f32 %v328, %v371
      %v381 = vadd.f32 %v330, %v373
      %v382 = vadd.f32 %v333, %v376
      %v383 = vadd.f32 %v335, %v378
      %s384 = scalar_lea.vmem %s220, 48
      %v385 = vld [vmem:[%s384] sm:$0xf]
      %v386 = vld [vmem:[%s384 + $0x4] sm:$0xf]
      %v387 = vld [vmem:[%s384 + $0x8] sm:$0xf]
      %v388 = vld [vmem:[%s384 + $0xc] sm:$0xf]
      %v393 = vunpack.c.l.b16 %v385
      %v394 = vunpack.c.l.b16 %v386
      %v395 = vunpack.c.l.b16 %v387
      %v396 = vunpack.c.l.b16 %v388
      %v397 = vpack.c.b16 %v394, %v393
      %v398 = vpack.c.b16 %v396, %v395
      %399 = vrot.lane.b32.xlu0 %v271, 122
      %v400 = vpop.permute.xlu0 %399
      %v403 = vsel %vm275, %v397, 0
      %v406 = vsel %vm275, %v398, 0
      %408 = vmatpush.bf16.msra.mxu0 0
      %409 = vmatpush.bf16.msra.mxu0 0
      %410 = vmatpush.bf16.msra.mxu0 0
      %411 = vmatpush.bf16.msra.mxu0 0
      %412 = vmatpush.bf16.msra.mxu0 0
      %413 = vmatpush.bf16.msra.mxu0 0
      %414 = vmatpush.bf16.msra.mxu0 0
      %415 = vmatpush.bf16.msra.mxu0 %v400
      %416 = vmatmul.bf16.gmra.mxu0 %v403
      %v417 = vpop.f32.mrf.mxu0
      %v418 = vadd.f32 0.0, %v417
      %v419 = vpop.f32.mrf.mxu0
      %v420 = vadd.f32 0.0, %v419
      %421 = vmatmul.bf16.gmra.mxu0 %v406
      %v422 = vpop.f32.mrf.mxu0
      %v423 = vadd.f32 0.0, %v422
      %v424 = vpop.f32.mrf.mxu0
      %v425 = vadd.f32 0.0, %v424
      %426 = vdwg.mxu0
      %v427 = vadd.f32 %v380, %v418
      %v428 = vadd.f32 %v381, %v420
      %v429 = vadd.f32 %v382, %v423
      %v430 = vadd.f32 %v383, %v425
      %s431 = scalar_lea.vmem %s220, 64
      %v432 = vld [vmem:[%s431] sm:$0xf]
      %v433 = vld [vmem:[%s431 + $0x4] sm:$0xf]
      %v434 = vld [vmem:[%s431 + $0x8] sm:$0xf]
      %v435 = vld [vmem:[%s431 + $0xc] sm:$0xf]
      %v440 = vunpack.c.l.b16 %v432
      %v441 = vunpack.c.l.b16 %v433
      %v442 = vunpack.c.l.b16 %v434
      %v443 = vunpack.c.l.b16 %v435
      %v444 = vpack.c.b16 %v441, %v440
      %v445 = vpack.c.b16 %v443, %v442
      %446 = vrot.lane.b32.xlu0 %v271, 121
      %v447 = vpop.permute.xlu0 %446
      %v450 = vsel %vm275, %v444, 0
      %v453 = vsel %vm275, %v445, 0
      %455 = vmatpush.bf16.msra.mxu0 0
      %456 = vmatpush.bf16.msra.mxu0 0
      %457 = vmatpush.bf16.msra.mxu0 0
      %458 = vmatpush.bf16.msra.mxu0 0
      %459 = vmatpush.bf16.msra.mxu0 0
      %460 = vmatpush.bf16.msra.mxu0 0
      %461 = vmatpush.bf16.msra.mxu0 0
      %462 = vmatpush.bf16.msra.mxu0 %v447
      %463 = vmatmul.bf16.gmra.mxu0 %v450
      %v464 = vpop.f32.mrf.mxu0
      %v465 = vadd.f32 0.0, %v464
      %v466 = vpop.f32.mrf.mxu0
      %v467 = vadd.f32 0.0, %v466
      %468 = vmatmul.bf16.gmra.mxu0 %v453
      %v469 = vpop.f32.mrf.mxu0
      %v470 = vadd.f32 0.0, %v469
      %v471 = vpop.f32.mrf.mxu0
      %v472 = vadd.f32 0.0, %v471
      %473 = vdwg.mxu0
      %v474 = vadd.f32 %v427, %v465
      %v475 = vadd.f32 %v428, %v467
      %v476 = vadd.f32 %v429, %v470
      %v477 = vadd.f32 %v430, %v472
      %s478 = scalar_lea.vmem %s220, 80
      %v479 = vld [vmem:[%s478] sm:$0xf]
      %v480 = vld [vmem:[%s478 + $0x4] sm:$0xf]
      %v481 = vld [vmem:[%s478 + $0x8] sm:$0xf]
      %v482 = vld [vmem:[%s478 + $0xc] sm:$0xf]
      %v487 = vunpack.c.l.b16 %v479
      %v488 = vunpack.c.l.b16 %v480
      %v489 = vunpack.c.l.b16 %v481
      %v490 = vunpack.c.l.b16 %v482
      %v491 = vpack.c.b16 %v488, %v487
      %v492 = vpack.c.b16 %v490, %v489
      %493 = vrot.lane.b32.xlu0 %v271, 120
      %v494 = vpop.permute.xlu0 %493
      %v497 = vsel %vm275, %v491, 0
      %v500 = vsel %vm275, %v492, 0
      %502 = vmatpush.bf16.msra.mxu0 0
      %503 = vmatpush.bf16.msra.mxu0 0
      %504 = vmatpush.bf16.msra.mxu0 0
      %505 = vmatpush.bf16.msra.mxu0 0
      %506 = vmatpush.bf16.msra.mxu0 0
      %507 = vmatpush.bf16.msra.mxu0 0
      %508 = vmatpush.bf16.msra.mxu0 0
      %509 = vmatpush.bf16.msra.mxu0 %v494
      %510 = vmatmul.bf16.gmra.mxu0 %v497
      %v511 = vpop.f32.mrf.mxu0
      %v512 = vadd.f32 0.0, %v511
      %v513 = vpop.f32.mrf.mxu0
      %v514 = vadd.f32 0.0, %v513
      %515 = vmatmul.bf16.gmra.mxu0 %v500
      %v516 = vpop.f32.mrf.mxu0
      %v517 = vadd.f32 0.0, %v516
      %v518 = vpop.f32.mrf.mxu0
      %v519 = vadd.f32 0.0, %v518
      %520 = vdwg.mxu0
      %v521 = vadd.f32 %v474, %v512
      %v522 = vadd.f32 %v475, %v514
      %v523 = vadd.f32 %v476, %v517
      %v524 = vadd.f32 %v477, %v519
      %s525 = scalar_lea.vmem %s220, 96
      %v526 = vld [vmem:[%s525] sm:$0xf]
      %v527 = vld [vmem:[%s525 + $0x4] sm:$0xf]
      %v528 = vld [vmem:[%s525 + $0x8] sm:$0xf]
      %v529 = vld [vmem:[%s525 + $0xc] sm:$0xf]
      %v534 = vunpack.c.l.b16 %v526
      %v535 = vunpack.c.l.b16 %v527
      %v536 = vunpack.c.l.b16 %v528
      %v537 = vunpack.c.l.b16 %v529
      %v538 = vpack.c.b16 %v535, %v534
      %v539 = vpack.c.b16 %v537, %v536
      %540 = vrot.lane.b32.xlu0 %v271, 116
      %v541 = vpop.permute.xlu0 %540
      %v544 = vsel %vm275, %v538, 0
      %v547 = vsel %vm275, %v539, 0
      %549 = vmatpush.bf16.msra.mxu0 0
      %550 = vmatpush.bf16.msra.mxu0 0
      %551 = vmatpush.bf16.msra.mxu0 0
      %552 = vmatpush.bf16.msra.mxu0 0
      %553 = vmatpush.bf16.msra.mxu0 0
      %554 = vmatpush.bf16.msra.mxu0 0
      %555 = vmatpush.bf16.msra.mxu0 0
      %556 = vmatpush.bf16.msra.mxu0 %v541
      %557 = vmatmul.bf16.gmra.mxu0 %v544
      %v558 = vpop.f32.mrf.mxu0
      %v559 = vadd.f32 0.0, %v558
      %v560 = vpop.f32.mrf.mxu0
      %v561 = vadd.f32 0.0, %v560
      %562 = vmatmul.bf16.gmra.mxu0 %v547
      %v563 = vpop.f32.mrf.mxu0
      %v564 = vadd.f32 0.0, %v563
      %v565 = vpop.f32.mrf.mxu0
      %v566 = vadd.f32 0.0, %v565
      %567 = vdwg.mxu0
      %v568 = vadd.f32 %v521, %v559
      %v569 = vadd.f32 %v522, %v561
      %v570 = vadd.f32 %v523, %v564
      %v571 = vadd.f32 %v524, %v566
      %s572 = scalar_lea.vmem %s220, 112
      %v573 = vld [vmem:[%s572] sm:$0xf]
      %v574 = vld [vmem:[%s572 + $0x4] sm:$0xf]
      %v575 = vld [vmem:[%s572 + $0x8] sm:$0xf]
      %v576 = vld [vmem:[%s572 + $0xc] sm:$0xf]
      %v581 = vunpack.c.l.b16 %v573
      %v582 = vunpack.c.l.b16 %v574
      %v583 = vunpack.c.l.b16 %v575
      %v584 = vunpack.c.l.b16 %v576
      %v585 = vpack.c.b16 %v582, %v581
      %v586 = vpack.c.b16 %v584, %v583
      %587 = vrot.lane.b32.xlu0 %v271, 115
      %v588 = vpop.permute.xlu0 %587
      %v591 = vsel %vm275, %v585, 0
      %v594 = vsel %vm275, %v586, 0
      %596 = vmatpush.bf16.msra.mxu0 0
      %597 = vmatpush.bf16.msra.mxu0 0
      %598 = vmatpush.bf16.msra.mxu0 0
      %599 = vmatpush.bf16.msra.mxu0 0
      %600 = vmatpush.bf16.msra.mxu0 0
      %601 = vmatpush.bf16.msra.mxu0 0
      %602 = vmatpush.bf16.msra.mxu0 0
      %603 = vmatpush.bf16.msra.mxu0 %v588
      %604 = vmatmul.bf16.gmra.mxu0 %v591
      %v605 = vpop.f32.mrf.mxu0
      %v606 = vadd.f32 0.0, %v605
      %v607 = vpop.f32.mrf.mxu0
      %v608 = vadd.f32 0.0, %v607
      %609 = vmatmul.bf16.gmra.mxu0 %v594
      %v610 = vpop.f32.mrf.mxu0
      %v611 = vadd.f32 0.0, %v610
      %v612 = vpop.f32.mrf.mxu0
      %v613 = vadd.f32 0.0, %v612
      %614 = vdwg.mxu0
      %v615 = vadd.f32 %v568, %v606
      %v616 = vadd.f32 %v569, %v608
      %v617 = vadd.f32 %v570, %v611
      %v618 = vadd.f32 %v571, %v613
      %s619 = scalar_lea.vmem %s220, 128
      %v620 = vld [vmem:[%s619] sm:$0xf]
      %v621 = vld [vmem:[%s619 + $0x4] sm:$0xf]
      %v622 = vld [vmem:[%s619 + $0x8] sm:$0xf]
      %v623 = vld [vmem:[%s619 + $0xc] sm:$0xf]
      %v628 = vunpack.c.l.b16 %v620
      %v629 = vunpack.c.l.b16 %v621
      %v630 = vunpack.c.l.b16 %v622
      %v631 = vunpack.c.l.b16 %v623
      %v632 = vpack.c.b16 %v629, %v628
      %v633 = vpack.c.b16 %v631, %v630
      %634 = vrot.lane.b32.xlu0 %v271, 114
      %v635 = vpop.permute.xlu0 %634
      %v638 = vsel %vm275, %v632, 0
      %v641 = vsel %vm275, %v633, 0
      %643 = vmatpush.bf16.msra.mxu0 0
      %644 = vmatpush.bf16.msra.mxu0 0
      %645 = vmatpush.bf16.msra.mxu0 0
      %646 = vmatpush.bf16.msra.mxu0 0
      %647 = vmatpush.bf16.msra.mxu0 0
      %648 = vmatpush.bf16.msra.mxu0 0
      %649 = vmatpush.bf16.msra.mxu0 0
      %650 = vmatpush.bf16.msra.mxu0 %v635
      %651 = vmatmul.bf16.gmra.mxu0 %v638
      %v652 = vpop.f32.mrf.mxu0
      %v653 = vadd.f32 0.0, %v652
      %v654 = vpop.f32.mrf.mxu0
      %v655 = vadd.f32 0.0, %v654
      %656 = vmatmul.bf16.gmra.mxu0 %v641
      %v657 = vpop.f32.mrf.mxu0
      %v658 = vadd.f32 0.0, %v657
      %v659 = vpop.f32.mrf.mxu0
      %v660 = vadd.f32 0.0, %v659
      %661 = vdwg.mxu0
      %v662 = vadd.f32 %v615, %v653
      %v663 = vadd.f32 %v616, %v655
      %v664 = vadd.f32 %v617, %v658
      %v665 = vadd.f32 %v618, %v660
      %v666 = vld [vmem:[%s226] sm:$0xff]
      %v667 = vld [vmem:[%s226 + $0x8] sm:$0xff]
      %v668 = vld [vmem:[%s226 + $0x10] sm:$0xff]
      %v669 = vld [vmem:[%s226 + $0x18] sm:$0xff]
      %671 = vset.pattern.permute.xlu0 0
      %672 = vperm.xlu0 %671, %v666
      %v673 = vpop.permute.xlu0 %672
      %676 = vset.pattern.permute.xlu0 0
      %677 = vperm.xlu0 %676, %v667
      %v678 = vpop.permute.xlu0 %677
      %681 = vset.pattern.permute.xlu0 0
      %682 = vperm.xlu0 %681, %v668
      %v683 = vpop.permute.xlu0 %682
      %686 = vset.pattern.permute.xlu0 0
      %687 = vperm.xlu0 %686, %v669
      %v688 = vpop.permute.xlu0 %687
      %v690 = vadd.f32 %v662, %v673
      %v691 = vadd.f32 %v663, %v678
      %v692 = vadd.f32 %v664, %v683
      %v693 = vadd.f32 %v665, %v688
      %vm694 = vcmask 31744
      %695 = vst.msk [vmem:[%s236] sm:$0xff] %vm694, %v690
      %696 = vst.msk [vmem:[%s236 + $0x8] sm:$0xff] %vm694, %v691
      %697 = vst.msk [vmem:[%s236 + $0x10] sm:$0xff] %vm694, %v692
      %698 = vst.msk [vmem:[%s236 + $0x18] sm:$0xff] %vm694, %v693
      %703 = vrot.lane.b32.xlu0 %v690, 126
      %v704 = vpop.permute.xlu0 %703
      %705 = vrot.lane.b32.xlu0 %v691, 126
      %v706 = vpop.permute.xlu0 %705
      %707 = vrot.lane.b32.xlu0 %v692, 126
      %v708 = vpop.permute.xlu0 %707
      %709 = vrot.lane.b32.xlu0 %v693, 126
      %v710 = vpop.permute.xlu0 %709
      %vm715 = vcmask 64544
      %716 = vst.msk [vmem:[%s236] sm:$0xff] %vm715, %v704
      %717 = vst.msk [vmem:[%s236 + $0x8] sm:$0xff] %vm715, %v706
      %718 = vst.msk [vmem:[%s236 + $0x10] sm:$0xff] %vm715, %v708
      %719 = vst.msk [vmem:[%s236 + $0x18] sm:$0xff] %vm715, %v710
      %720 = vrot.lane.b32.xlu0 %v690, 124
      %v721 = vpop.permute.xlu0 %720
      %722 = vrot.lane.b32.xlu0 %v691, 124
      %v723 = vpop.permute.xlu0 %722
      %724 = vrot.lane.b32.xlu0 %v692, 124
      %v725 = vpop.permute.xlu0 %724
      %726 = vrot.lane.b32.xlu0 %v693, 124
      %v727 = vpop.permute.xlu0 %726
      %vm732 = vcmask 97344
      %733 = vst.msk [vmem:[%s236] sm:$0xff] %vm732, %v721
      %734 = vst.msk [vmem:[%s236 + $0x8] sm:$0xff] %vm732, %v723
      %735 = vst.msk [vmem:[%s236 + $0x10] sm:$0xff] %vm732, %v725
      %736 = vst.msk [vmem:[%s236 + $0x18] sm:$0xff] %vm732, %v727
      %737 = vrot.lane.b32.xlu0 %v690, 122
      %v738 = vpop.permute.xlu0 %737
      %739 = vrot.lane.b32.xlu0 %v691, 122
      %v740 = vpop.permute.xlu0 %739
      %741 = vrot.lane.b32.xlu0 %v692, 122
      %v742 = vpop.permute.xlu0 %741
      %743 = vrot.lane.b32.xlu0 %v693, 122
      %v744 = vpop.permute.xlu0 %743
      %vm749 = vcmask 130144
      %750 = vst.msk [vmem:[%s236] sm:$0xff] %vm749, %v738
      %751 = vst.msk [vmem:[%s236 + $0x8] sm:$0xff] %vm749, %v740
      %752 = vst.msk [vmem:[%s236 + $0x10] sm:$0xff] %vm749, %v742
      %753 = vst.msk [vmem:[%s236 + $0x18] sm:$0xff] %vm749, %v744
      %s754 = smul.u32 4, %s19
      %p755 = scmp.lt.s32.totalorder %s18, 1
      %s756 = scalar_select %p755, %s18, 1
      %p757 = scmp.lt.s32.totalorder %s754, 3
      %s758 = scalar_select %p757, %s754, 3
      %s759 = smul.addr %s756, 4
      %s760 = sadd.s32 %s758, %s759
      %s761 = smul.addr %s760, 8
      %s762 = scalar_lea.vmem %s3, %s761
      // Predicated region
      $region33: #{vgg_backbone_forward.13} parent=31 // pred_check
        %p763 = pneg %p124
      $region34: #{vgg_backbone_forward.13} parent=31 // pred_check_branch
        %765 = sbr.rel (%p763) target = $region36
      $region35: #{vgg_backbone_forward.13} parent=31 // pred_region
        %s766 = smul.u32 4, %s19
      $region36: #{vgg_backbone_forward.13} parent=31 // pred_fallthru
        _
    $region32: #{vgg_backbone_forward.13} parent=5 // pred_fallthru
      _
    %p767 = scmp.le.s32.totalorder 2, %s9
    // Predicated region
    $region37: #{vgg_backbone_forward.13} parent=5 // pred_check
      %p768 = pneg %p767
    $region38: #{vgg_backbone_forward.13} parent=5 // pred_check_branch
      %770 = sbr.rel (%p768) target = $region40
    $region39: #{vgg_backbone_forward.13} parent=5 // pred_region
      %s771 = ssub.s32 %s9, 2
      // Predicated region
      $region41: #{vgg_backbone_forward.13} parent=39 // pred_check
        %p772 = pneg %p130
      $region42: #{vgg_backbone_forward.13} parent=39 // pred_check_branch
        %774 = sbr.rel (%p772) target = $region44
      $region43: #{vgg_backbone_forward.13} parent=39 // pred_region
        %s775 = smul.u32 4, %s21
        %p776 = scmp.lt.s32.totalorder %s20, 1
        %s777 = scalar_select %p776, %s20, 1
        %p778 = scmp.lt.s32.totalorder %s775, 3
        %s779 = scalar_select %p778, %s775, 3
        %s780 = smul.addr %s777, 4
        %s781 = sadd.s32 %s779, %s780
        %s782 = smul.addr %s781, 8
        %s783 = scalar_lea.vmem %s3, %s782
      $region44: #{vgg_backbone_forward.13} parent=39 // pred_fallthru
        _
    $region40: #{vgg_backbone_forward.13} parent=5 // pred_fallthru
      _
  $region6: #{vgg_backbone_forward.13} parent=0 // loop_footer
    %s13 = sadd.s32 1, %s9
  $region7: #{vgg_backbone_forward.13} parent=0 // loop_footer_branch
    %8 = sbr.rel target = $region3
  $region8: #{vgg_backbone_forward.13} parent=0 // loop_exit
    _

// kernel: vgg_backbone_forward.9
$region0: #{vgg_backbone_forward.9}
  #allocation0 [shape = 'u32[]', space=smem, size = 0x4, offset = 0x4, fixed_abs, tag = 'smem constant byte address 0x4 - core index']
  #allocation1 [shape = 'u32[72,128]{1,0:T(1,128)}', space=vmem, size = 0x9000, scoped, tag = 'internal scratch']
  #allocation2 [shape = 'bf16[4,614]{1,0:T(4,128)(2,1)}', space=vmem, size = 0x1400, scoped, tag = 'scratch operand']
  %s0 = inlined_call_operand.vmem [shape: f32[2,4,614], index: 0, kind: input, shape index: {}]
  %s1 = inlined_call_operand.vmem [shape: bf16[9,4,4], index: 1, kind: input, shape index: {}]
  %s2 = inlined_call_operand.vmem [shape: f32[4,1], index: 2, kind: input, shape index: {}]
  %s3 = inlined_call_operand.vmem [shape: f32[2,16,8], index: 3, kind: input, shape index: {}]
  %s4 = inlined_call_operand.vmem [shape: f32[2,4,182], index: 4, kind: output, shape index: {}]
  %s5 = sld [smem:[#allocation0]]
  $region49: #{vgg_backbone_forward.9} parent=0
    _
  %s7 = ssub.s32 1, %s5
  %s8 = scalar_select 0, %s7, %s5
  loop: start=0, step=1, limit=4
  $region2: #{vgg_backbone_forward.9} parent=0 // loop_pre_header
    _
  $region3: #{vgg_backbone_forward.9} parent=0 // loop_header
    %s10 = sphi 0, %s14
    %p11 = scmp.ge.s32.totalorder %s10, 4
    %s17 = sphi 0, %s29
    %s18 = sphi 0, %s25
    %s19 = sphi 0, %s17
    %s20 = sphi 0, %s18
    %s21 = sphi 0, %s19
    %s22 = sphi 0, %s20
    %s32 = sphi 0, %s34
    %s35 = sphi 0, %s32
    %s36 = sphi 0, %s35
    %s52 = sphi 0, %s36
    %s58 = sphi 0, %s60
    %s61 = sphi 0, %s58
    %s62 = sphi 0, %s61
    %s78 = sphi 0, %s62
    %s84 = sphi 0, %s86
    %s87 = sphi 0, %s84
    %s88 = sphi 0, %s87
    %s104 = sphi 0, %s88
    %s108 = sphi 0, %s108
    %s110 = sphi 0, %s108
    %s111 = sphi 0, %s110
    %s125 = sphi 0, %s111
    %s133 = sphi 0, %s135
    %s136 = sphi 0, %s133
    %s137 = sphi 0, %s136
    %s153 = sphi 0, %s137
  $region4: #{vgg_backbone_forward.9} parent=0 // loop_header_branch
    %13 = sbr.rel (%p11) target = $region8
  $region5: #{vgg_backbone_forward.9} parent=0 // loop_body
    %s15 = ssub.s32 %s10, 1
    %s16 = ssub.s32 %s10, 2
    %s23 = sadd.s32 1, %s18
    %p24 = scmp.ge.s32.totalorder %s23, 1
    %s25 = scalar_select %p24, 0, %s23
    %s26 = sadd.s32 1, %s17
    %s27 = scalar_select %p24, %s26, %s17
    %p28 = scmp.ge.s32.totalorder %s27, 2
    %s29 = scalar_select %p28, 0, %s27
    %s30 = ssub.s32 %s17, %s29
    %p31 = scmp.eq.s32.totalorder %s30, 0
    %s33 = sadd.s32 %s32, 1
    %s34 = scalar_select %p31, %s32, %s33
    %p37 = pneg %p31
    %p38 = scmp.eq.s32.totalorder %s10, 1
    %p39 = por %p37, %p38
    %p40 = scmp.ne.s32.totalorder %s32, %s35
    %p41 = scmp.eq.s32.totalorder %s10, 0
    %p42 = por %p40, %p41
    %p43 = scmp.ne.s32.totalorder %s32, %s35
    %p44 = scmp.eq.s32.totalorder %s15, 1
    %p45 = por %p43, %p44
    %p46 = scmp.ne.s32.totalorder %s35, %s36
    %p47 = scmp.eq.s32.totalorder %s15, 0
    %p48 = por %p46, %p47
    %p49 = scmp.ne.s32.totalorder %s35, %s36
    %p50 = scmp.eq.s32.totalorder %s16, 1
    %p51 = por %p49, %p50
    %p53 = scmp.ne.s32.totalorder %s36, %s52
    %p54 = scmp.eq.s32.totalorder %s16, 0
    %p55 = por %p53, %p54
    %s56 = ssub.s32 %s18, %s25
    %p57 = scmp.eq.s32.totalorder %s56, 0
    %s59 = sadd.s32 %s58, 1
    %s60 = scalar_select %p57, %s58, %s59
    %p63 = pneg %p57
    %p64 = scmp.eq.s32.totalorder %s10, 1
    %p65 = por %p63, %p64
    %p66 = scmp.ne.s32.totalorder %s58, %s61
    %p67 = scmp.eq.s32.totalorder %s10, 0
    %p68 = por %p66, %p67
    %p69 = scmp.ne.s32.totalorder %s58, %s61
    %p70 = scmp.eq.s32.totalorder %s15, 1
    %p71 = por %p69, %p70
    %p72 = scmp.ne.s32.totalorder %s61, %s62
    %p73 = scmp.eq.s32.totalorder %s15, 0
    %p74 = por %p72, %p73
    %p75 = scmp.ne.s32.totalorder %s61, %s62
    %p76 = scmp.eq.s32.totalorder %s16, 1
    %p77 = por %p75, %p76
    %p79 = scmp.ne.s32.totalorder %s62, %s78
    %p80 = scmp.eq.s32.totalorder %s16, 0
    %p81 = por %p79, %p80
    %s82 = ssub.s32 %s18, %s25
    %p83 = scmp.eq.s32.totalorder %s82, 0
    %s85 = sadd.s32 %s84, 1
    %s86 = scalar_select %p83, %s84, %s85
    %p89 = pneg %p83
    %p90 = scmp.eq.s32.totalorder %s10, 1
    %p91 = por %p89, %p90
    %p92 = scmp.ne.s32.totalorder %s84, %s87
    %p93 = scmp.eq.s32.totalorder %s10, 0
    %p94 = por %p92, %p93
    %p95 = scmp.ne.s32.totalorder %s84, %s87
    %p96 = scmp.eq.s32.totalorder %s15, 1
    %p97 = por %p95, %p96
    %p98 = scmp.ne.s32.totalorder %s87, %s88
    %p99 = scmp.eq.s32.totalorder %s15, 0
    %p100 = por %p98, %p99
    %p101 = scmp.ne.s32.totalorder %s87, %s88
    %p102 = scmp.eq.s32.totalorder %s16, 1
    %p103 = por %p101, %p102
    %p105 = scmp.ne.s32.totalorder %s88, %s104
    %p106 = scmp.eq.s32.totalorder %s16, 0
    %p107 = por %p105, %p106
    %s109 = sadd.s32 %s108, 1
    %p112 = scmp.eq.s32.totalorder %s10, 1
    %p113 = scmp.ne.s32.totalorder %s108, %s110
    %p114 = scmp.eq.s32.totalorder %s10, 0
    %p115 = por %p113, %p114
    %p116 = scmp.ne.s32.totalorder %s108, %s110
    %p117 = scmp.eq.s32.totalorder %s15, 1
    %p118 = por %p116, %p117
    %p119 = scmp.ne.s32.totalorder %s110, %s111
    %p120 = scmp.eq.s32.totalorder %s15, 0
    %p121 = por %p119, %p120
    %p122 = scmp.ne.s32.totalorder %s110, %s111
    %p123 = scmp.eq.s32.totalorder %s16, 1
    %p124 = por %p122, %p123
    %p126 = scmp.ne.s32.totalorder %s111, %s125
    %p127 = scmp.eq.s32.totalorder %s16, 0
    %p128 = por %p126, %p127
    %s129 = ssub.s32 %s17, %s29
    %s130 = ssub.s32 %s18, %s25
    %s131 = sor.u32 %s129, %s130
    %p132 = scmp.eq.s32.totalorder %s131, 0
    %s134 = sadd.s32 %s133, 1
    %s135 = scalar_select %p132, %s133, %s134
    %p138 = pneg %p132
    %p139 = scmp.eq.s32.totalorder %s10, 1
    %p140 = por %p138, %p139
    %p141 = scmp.ne.s32.totalorder %s133, %s136
    %p142 = scmp.eq.s32.totalorder %s10, 0
    %p143 = por %p141, %p142
    %p144 = scmp.ne.s32.totalorder %s133, %s136
    %p145 = scmp.eq.s32.totalorder %s15, 1
    %p146 = por %p144, %p145
    %p147 = scmp.ne.s32.totalorder %s136, %s137
    %p148 = scmp.eq.s32.totalorder %s15, 0
    %p149 = por %p147, %p148
    %p150 = scmp.ne.s32.totalorder %s136, %s137
    %p151 = scmp.eq.s32.totalorder %s16, 1
    %p152 = por %p150, %p151
    %p154 = scmp.ne.s32.totalorder %s137, %s153
    %p155 = scmp.eq.s32.totalorder %s16, 0
    %p156 = por %p154, %p155
    %p157 = scmp.le.s32.totalorder 1, %s10
    %p158 = scmp.lt.s32.totalorder %s10, 3
    %p159 = pnand %p157, %p158
    %p160 = pneg %p159
    // Predicated region
    $region9: #{vgg_backbone_forward.9} parent=5 // pred_check
      _
    $region10: #{vgg_backbone_forward.9} parent=5 // pred_check_branch
      %162 = sbr.rel (%p159) target = $region12
    $region11: #{vgg_backbone_forward.9} parent=5 // pred_region
      %s163 = ssub.s32 %s10, 1
      // Predicated region
      $region13: #{vgg_backbone_forward.9} parent=11 // pred_check
        %p164 = pneg %p74
      $region14: #{vgg_backbone_forward.9} parent=11 // pred_check_branch
        %166 = sbr.rel (%p164) target = $region16
      $region15: #{vgg_backbone_forward.9} parent=11 // pred_region
        %p167 = scmp.lt.s32.totalorder %s20, 0
        %s168 = scalar_select %p167, %s20, 0
        %s169 = smul.addr %s168, 2
        %s170 = scalar_lea.vmem %s1, %s169
      $region16: #{vgg_backbone_forward.9} parent=11 // pred_fallthru
        _
      // Predicated region
      $region17: #{vgg_backbone_forward.9} parent=11 // pred_check
        %p171 = pneg %p100
      $region18: #{vgg_backbone_forward.9} parent=11 // pred_check_branch
        %173 = sbr.rel (%p171) target = $region20
      $region19: #{vgg_backbone_forward.9} parent=11 // pred_region
        %p174 = scmp.lt.s32.totalorder %s20, 0
        %s175 = scalar_select %p174, %s20, 0
        %s176 = smul.addr %s175, 4
        %s177 = scalar_lea.vmem %s2, %s176
      $region20: #{vgg_backbone_forward.9} parent=11 // pred_fallthru
        _
      // Predicated region
      $region21: #{vgg_backbone_forward.9} parent=11 // pred_check
        %p178 = pneg %p121
      $region22: #{vgg_backbone_forward.9} parent=11 // pred_check_branch
        %180 = sbr.rel (%p178) target = $region24
      $region23: #{vgg_backbone_forward.9} parent=11 // pred_region
        _
      $region24: #{vgg_backbone_forward.9} parent=11 // pred_fallthru
        _
    $region12: #{vgg_backbone_forward.9} parent=5 // pred_fallthru
      _
    %p181 = scmp.lt.s32.totalorder %s10, 2
    // Predicated region
    $region25: #{vgg_backbone_forward.9} parent=5 // pred_check
      %p182 = pneg %p181
    $region26: #{vgg_backbone_forward.9} parent=5 // pred_check_branch
      %184 = sbr.rel (%p182) target = $region28
    $region27: #{vgg_backbone_forward.9} parent=5 // pred_region
      // Predicated region
      $region29: #{vgg_backbone_forward.9} parent=27 // pred_check
        %p185 = pneg %p42
      $region30: #{vgg_backbone_forward.9} parent=27 // pred_check_branch
        %187 = sbr.rel (%p185) target = $region32
      $region31: #{vgg_backbone_forward.9} parent=27 // pred_region
        %p188 = scmp.lt.s32.totalorder %s17, 1
        %s189 = scalar_select %p188, %s17, 1
        %s190 = smul.addr %s189, 5
        %s191 = smul.addr %s190, 4
        %s192 = scalar_lea.vmem %s0, %s191
      $region32: #{vgg_backbone_forward.9} parent=27 // pred_fallthru
        _
    $region28: #{vgg_backbone_forward.9} parent=5 // pred_fallthru
      _
    %p193 = scmp.le.s32.totalorder 1, %s10
    %p194 = scmp.lt.s32.totalorder %s10, 3
    %p195 = pnand %p193, %p194
    %p196 = pneg %p195
    // Predicated region
    $region33: #{vgg_backbone_forward.9} parent=5 // pred_check
      _
    $region34: #{vgg_backbone_forward.9} parent=5 // pred_check_branch
      %198 = sbr.rel (%p195) target = $region36
    $region35: #{vgg_backbone_forward.9} parent=5 // pred_region
      %s199 = ssub.s32 %s10, 1
      %p200 = scmp.lt.s32.totalorder %s19, 1
      %s201 = scalar_select %p200, %s19, 1
      %s202 = smul.addr %s201, 5
      %s203 = smul.addr %s202, 4
      %s204 = scalar_lea.vmem %s0, %s203
      %p205 = pneg %p48
      %p206 = pneg %p45
      %p207 = scmp.lt.s32.totalorder %s20, 0
      %s208 = scalar_select %p207, %s20, 0
      %s209 = smul.addr %s208, 2
      %s210 = scalar_lea.vmem %s1, %s209
      %p211 = pneg %p74
      %p212 = pneg %p71
      %p213 = scmp.lt.s32.totalorder %s20, 0
      %s214 = scalar_select %p213, %s20, 0
      %s215 = smul.addr %s214, 4
      %s216 = scalar_lea.vmem %s2, %s215
      %p217 = pneg %p100
      %p218 = pneg %p97
      %p219 = pneg %p121
      %p220 = pneg %p118
      %p221 = pneg %p149
      %p222 = pneg %p146
      %p223 = scmp.lt.s32.totalorder %s19, 1
      %s224 = scalar_select %p223, %s19, 1
      %p225 = scmp.lt.s32.totalorder %s20, 0
      %s226 = scalar_select %p225, %s20, 0
      %s227 = smul.addr %s226, 2
      %s228 = smul.addr %s224, 2
      %s229 = sadd.s32 %s227, %s228
      %s230 = smul.addr %s229, 4
      %s231 = scalar_lea.vmem %s4, %s230
      %p232 = scmp.lt.s32.totalorder %s19, 1
      %s233 = scalar_select %p232, %s19, 1
      %s234 = smul.addr %s233, 5
      %s235 = smul.addr %s234, 4
      %s236 = scalar_lea.vmem %s0, %s235
      %p237 = scmp.lt.s32.totalorder %s20, 0
      %s238 = scalar_select %p237, %s20, 0
      %s239 = smul.addr %s238, 2
      %s240 = scalar_lea.vmem %s1, %s239
      %p241 = scmp.lt.s32.totalorder %s20, 0
      %s242 = scalar_select %p241, %s20, 0
      %s243 = smul.addr %s242, 4
      %s244 = scalar_lea.vmem %s2, %s243
      %p245 = scmp.lt.s32.totalorder %s19, 1
      %s246 = scalar_select %p245, %s19, 1
      %p247 = scmp.lt.s32.totalorder %s20, 0
      %s248 = scalar_select %p247, %s20, 0
      %s249 = smul.addr %s248, 2
      %s250 = smul.addr %s246, 2
      %s251 = sadd.s32 %s249, %s250
      %s252 = smul.addr %s251, 4
      %s253 = scalar_lea.vmem %s4, %s252
      %v255 = vld [vmem:[%s236] sm:$0xff]
      %v256 = vld [vmem:[%s236 + $0x8] sm:$0xff]
      %v257 = vld [vmem:[%s236 + $0x10] sm:$0xf]
      %261 = vst [vmem:[#allocation1] ss:$2 sm:$0xff] %v255
      %s262 = scalar_lea.vmem [#allocation1], 16
      %263 = vst [vmem:[%s262] ss:$2 sm:$0xff] %v256
      %s264 = scalar_lea.vmem [#allocation1], 32
      %265 = vst [vmem:[%s264] ss:$2 sm:$0xff] %v257
      %v266 = vld.sshfl [vmem:[#allocation1] sm:$0xff pattern:$0x75316420]
      %v267 = vld.sshfl [vmem:[#allocation1 + $0x8] sm:$0xff pattern:$0x75316420]
      %v268 = vld.sshfl [vmem:[#allocation1 + $0x10] sm:$0xff pattern:$0x75316420]
      %v269 = vld.sshfl [vmem:[#allocation1 + $0x18] sm:$0xff pattern:$0x75316420]
      %v270 = vld.sshfl [vmem:[#allocation1 + $0x20] sm:$0xff pattern:$0x75316420]
      %v276 = vpack.c.bf16 %v267, %v266
      %v277 = vpack.c.bf16 %v269, %v268
      %v278 = vpack.c.bf16 %v270, %v270
      %v282 = vrot.slane %v276, 2
      %v283 = vrot.slane %v277, 4
      %v284 = vrot.slane %v277, 6
      %v285 = vrot.slane %v278, 2
      %vm286 = vcmask 1041408
      %v289 = vsel %vm286, %v276, %v282
      %vm290 = vcmask 1045508
      %v293 = vsel %vm290, %v283, %v284
      %vm294 = vcmask 1043456
      %v295 = vsel %vm294, %v289, %v293
      %v298 = vsel %vm286, %v278, %v285
      %301 = vst [vmem:[#allocation2] sm:$0xff] %v295
      %vm302 = vcmask 828416
      %303 = vst.msk [vmem:[#allocation2 + $0x8] sm:$0x3] %vm302, %v298
      %v304 = vld [vmem:[#allocation2] sm:$0xff]
      %v305 = vld [vmem:[#allocation2 + $0x8] sm:$0x3]
      %v306 = vld [vmem:[%s240] sm:$0x3]
      %s307 = scalar_lea.vmem %s240, 2
      %v308 = vld [vmem:[%s307] sm:$0x3]
      %310 = vst [vmem:[#allocation1] ss:$4 sm:$0xff] %v304
      %s312 = scalar_lea.vmem [#allocation1], 32
      %313 = vst [vmem:[%s312] ss:$4 sm:$0xff] %v305
      %v314 = vld.sshfl [vmem:[#allocation1] sm:$0xff pattern:$0x73625140]
      %v316 = vld.sshfl [vmem:[#allocation1 + $0x8] sm:$0xff pattern:$0x73625140]
      %v318 = vld.sshfl [vmem:[#allocation1 + $0x10] sm:$0xff pattern:$0x73625140]
      %v320 = vld.sshfl [vmem:[#allocation1 + $0x18] sm:$0xff pattern:$0x73625140]
      %v322 = vld.sshfl [vmem:[#allocation1 + $0x20] sm:$0xff pattern:$0x73625140]
      %324 = vrot.lane.b32.xlu0 %v314, 127
      %v325 = vpop.permute.xlu0 %324
      %326 = vrot.lane.b32.xlu0 %v316, 127
      %v327 = vpop.permute.xlu0 %326
      %328 = vrot.lane.b32.xlu0 %v318, 127
      %v329 = vpop.permute.xlu0 %328
      %330 = vrot.lane.b32.xlu0 %v320, 127
      %v331 = vpop.permute.xlu0 %330
      %332 = vrot.lane.b32.xlu0 %v322, 127
      %v333 = vpop.permute.xlu0 %332
      %vm334 = vcmask 1039360
      %v335 = vsel %vm334, %v325, %v327
      %v336 = vsel %vm334, %v327, %v329
      %v337 = vsel %vm334, %v329, %v331
      %v338 = vsel %vm334, %v331, %v333
      %vm339 = vcmask 31744
      %v341 = vsel %vm339, %v308, 0
      %v344 = vsel %vm286, %v335, 0
      %v347 = vsel %vm286, %v336, 0
      %v350 = vsel %vm286, %v337, 0
      %v353 = vsel %vm286, %v338, 0
      %v356 = vsel %vm286, %v333, 0
      %358 = vmatpush.bf16.msra.mxu0 0
      %359 = vmatpush.bf16.msra.mxu0 0
      %360 = vmatpush.bf16.msra.mxu0 0
      %361 = vmatpush.bf16.msra.mxu0 0
      %362 = vmatpush.bf16.msra.mxu0 0
      %363 = vmatpush.bf16.msra.mxu0 0
      %364 = vmatpush.bf16.msra.mxu0 0
      %365 = vmatpush.bf16.msra.mxu0 %v344
      %366 = vmatmul.bf16.gmra.mxu0 %v341
      %v367 = vpop.f32.mrf.mxu0
      %v368 = vadd.f32 0.0, %v367
      %v369 = vpop.f32.mrf.mxu0
      %370 = vdwg.mxu0
      %371 = vmatpush.bf16.msra.mxu0 0
      %372 = vmatpush.bf16.msra.mxu0 0
      %373 = vmatpush.bf16.msra.mxu0 0
      %374 = vmatpush.bf16.msra.mxu0 0
      %375 = vmatpush.bf16.msra.mxu0 0
      %376 = vmatpush.bf16.msra.mxu0 0
      %377 = vmatpush.bf16.msra.mxu0 0
      %378 = vmatpush.bf16.msra.mxu0 %v347
      %379 = vmatmul.bf16.gmra.mxu0 %v341
      %v380 = vpop.f32.mrf.mxu0
      %v381 = vadd.f32 0.0, %v380
      %v382 = vpop.f32.mrf.mxu0
      %383 = vdwg.mxu0
      %384 = vmatpush.bf16.msra.mxu0 0
      %385 = vmatpush.bf16.msra.mxu0 0
      %386 = vmatpush.bf16.msra.mxu0 0
      %387 = vmatpush.bf16.msra.mxu0 0
      %388 = vmatpush.bf16.msra.mxu0 0
      %389 = vmatpush.bf16.msra.mxu0 0
      %390 = vmatpush.bf16.msra.mxu0 0
      %391 = vmatpush.bf16.msra.mxu0 %v350
      %392 = vmatmul.bf16.gmra.mxu0 %v341
      %v393 = vpop.f32.mrf.mxu0
      %v394 = vadd.f32 0.0, %v393
      %v395 = vpop.f32.mrf.mxu0
      %396 = vdwg.mxu0
      %397 = vmatpush.bf16.msra.mxu0 0
      %398 = vmatpush.bf16.msra.mxu0 0
      %399 = vmatpush.bf16.msra.mxu0 0
      %400 = vmatpush.bf16.msra.mxu0 0
      %401 = vmatpush.bf16.msra.mxu0 0
      %402 = vmatpush.bf16.msra.mxu0 0
      %403 = vmatpush.bf16.msra.mxu0 0
      %404 = vmatpush.bf16.msra.mxu0 %v353
      %405 = vmatmul.bf16.gmra.mxu0 %v341
      %v406 = vpop.f32.mrf.mxu0
      %v407 = vadd.f32 0.0, %v406
      %v408 = vpop.f32.mrf.mxu0
      %409 = vdwg.mxu0
      %410 = vmatpush.bf16.msra.mxu0 0
      %411 = vmatpush.bf16.msra.mxu0 0
      %412 = vmatpush.bf16.msra.mxu0 0
      %413 = vmatpush.bf16.msra.mxu0 0
      %414 = vmatpush.bf16.msra.mxu0 0
      %415 = vmatpush.bf16.msra.mxu0 0
      %416 = vmatpush.bf16.msra.mxu0 0
      %417 = vmatpush.bf16.msra.mxu0 %v356
      %418 = vmatmul.bf16.gmra.mxu0 %v341
      %v419 = vpop.f32.mrf.mxu0
      %v420 = vadd.f32 0.0, %v419
      %v421 = vpop.f32.mrf.mxu0
      %422 = vdwg.mxu0
      %423 = vst [vmem:[#allocation1] ss:$4 sm:$0xff] %v304
      %s424 = scalar_lea.vmem [#allocation1], 32
      %425 = vst [vmem:[%s424] ss:$4 sm:$0xff] %v305
      %v426 = vld.sshfl [vmem:[#allocation1] sm:$0xff pattern:$0x73625140]
      %v427 = vld.sshfl [vmem:[#allocation1 + $0x8] sm:$0xff pattern:$0x73625140]
      %v428 = vld.sshfl [vmem:[#allocation1 + $0x10] sm:$0xff pattern:$0x73625140]
      %v429 = vld.sshfl [vmem:[#allocation1 + $0x18] sm:$0xff pattern:$0x73625140]
      %v430 = vld.sshfl [vmem:[#allocation1 + $0x20] sm:$0xff pattern:$0x73625140]
      %v432 = vsel %vm339, %v306, 0
      %v434 = vsel %vm286, %v426, 0
      %v436 = vsel %vm286, %v427, 0
      %v438 = vsel %vm286, %v428, 0
      %v440 = vsel %vm286, %v429, 0
      %v442 = vsel %vm286, %v430, 0
      %444 = vmatpush.bf16.msra.mxu0 0
      %445 = vmatpush.bf16.msra.mxu0 0
      %446 = vmatpush.bf16.msra.mxu0 0
      %447 = vmatpush.bf16.msra.mxu0 0
      %448 = vmatpush.bf16.msra.mxu0 0
      %449 = vmatpush.bf16.msra.mxu0 0
      %450 = vmatpush.bf16.msra.mxu0 0
      %451 = vmatpush.bf16.msra.mxu0 %v434
      %452 = vmatmul.bf16.gmra.mxu0 %v432
      %v453 = vpop.f32.mrf.mxu0
      %v454 = vadd.f32 %v368, %v453
      %v455 = vpop.f32.mrf.mxu0
      %456 = vdwg.mxu0
      %457 = vmatpush.bf16.msra.mxu0 0
      %458 = vmatpush.bf16.msra.mxu0 0
      %459 = vmatpush.bf16.msra.mxu0 0
      %460 = vmatpush.bf16.msra.mxu0 0
      %461 = vmatpush.bf16.msra.mxu0 0
      %462 = vmatpush.bf16.msra.mxu0 0
      %463 = vmatpush.bf16.msra.mxu0 0
      %464 = vmatpush.bf16.msra.mxu0 %v436
      %465 = vmatmul.bf16.gmra.mxu0 %v432
      %v466 = vpop.f32.mrf.mxu0
      %v467 = vadd.f32 %v381, %v466
      %v468 = vpop.f32.mrf.mxu0
      %469 = vdwg.mxu0
      %470 = vmatpush.bf16.msra.mxu0 0
      %471 = vmatpush.bf16.msra.mxu0 0
      %472 = vmatpush.bf16.msra.mxu0 0
      %473 = vmatpush.bf16.msra.mxu0 0
      %474 = vmatpush.bf16.msra.mxu0 0
      %475 = vmatpush.bf16.msra.mxu0 0
      %476 = vmatpush.bf16.msra.mxu0 0
      %477 = vmatpush.bf16.msra.mxu0 %v438
      %478 = vmatmul.bf16.gmra.mxu0 %v432
      %v479 = vpop.f32.mrf.mxu0
      %v480 = vadd.f32 %v394, %v479
      %v481 = vpop.f32.mrf.mxu0
      %482 = vdwg.mxu0
      %483 = vmatpush.bf16.msra.mxu0 0
      %484 = vmatpush.bf16.msra.mxu0 0
      %485 = vmatpush.bf16.msra.mxu0 0
      %486 = vmatpush.bf16.msra.mxu0 0
      %487 = vmatpush.bf16.msra.mxu0 0
      %488 = vmatpush.bf16.msra.mxu0 0
      %489 = vmatpush.bf16.msra.mxu0 0
      %490 = vmatpush.bf16.msra.mxu0 %v440
      %491 = vmatmul.bf16.gmra.mxu0 %v432
      %v492 = vpop.f32.mrf.mxu0
      %v493 = vadd.f32 %v407, %v492
      %v494 = vpop.f32.mrf.mxu0
      %495 = vdwg.mxu0
      %496 = vmatpush.bf16.msra.mxu0 0
      %497 = vmatpush.bf16.msra.mxu0 0
      %498 = vmatpush.bf16.msra.mxu0 0
      %499 = vmatpush.bf16.msra.mxu0 0
      %500 = vmatpush.bf16.msra.mxu0 0
      %501 = vmatpush.bf16.msra.mxu0 0
      %502 = vmatpush.bf16.msra.mxu0 0
      %503 = vmatpush.bf16.msra.mxu0 %v442
      %504 = vmatmul.bf16.gmra.mxu0 %v432
      %v505 = vpop.f32.mrf.mxu0
      %v506 = vadd.f32 %v420, %v505
      %v507 = vpop.f32.mrf.mxu0
      %508 = vdwg.mxu0
      %v509 = vld [vmem:[#allocation2] sm:$0xff]
      %v510 = vld [vmem:[#allocation2 + $0x8] sm:$0x3]
      %s511 = scalar_lea.vmem %s240, 4
      %v512 = vld [vmem:[%s511] sm:$0x3]
      %514 = vst [vmem:[#allocation1] ss:$4 sm:$0xff] %v509
      %s516 = scalar_lea.vmem [#allocation1], 32
      %517 = vst [vmem:[%s516] ss:$4 sm:$0xff] %v510
      %v518 = vld.sshfl [vmem:[#allocation1] sm:$0xff pattern:$0x73625140]
      %v520 = vld.sshfl [vmem:[#allocation1 + $0x8] sm:$0xff pattern:$0x73625140]
      %v522 = vld.sshfl [vmem:[#allocation1 + $0x10] sm:$0xff pattern:$0x73625140]
      %v524 = vld.sshfl [vmem:[#allocation1 + $0x18] sm:$0xff pattern:$0x73625140]
      %v526 = vld.sshfl [vmem:[#allocation1 + $0x20] sm:$0xff pattern:$0x73625140]
      %528 = vrot.lane.b32.xlu0 %v518, 126
      %v529 = vpop.permute.xlu0 %528
      %530 = vrot.lane.b32.xlu0 %v520, 126
      %v531 = vpop.permute.xlu0 %530
      %532 = vrot.lane.b32.xlu0 %v522, 126
      %v533 = vpop.permute.xlu0 %532
      %534 = vrot.lane.b32.xlu0 %v524, 126
      %v535 = vpop.permute.xlu0 %534
      %536 = vrot.lane.b32.xlu0 %v526, 126
      %v537 = vpop.permute.xlu0 %536
      %vm538 = vcmask 1031168
      %v539 = vsel %vm538, %v529, %v531
      %v540 = vsel %vm538, %v531, %v533
      %v541 = vsel %vm538, %v533, %v535
      %v542 = vsel %vm538, %v535, %v537
      %v544 = vsel %vm339, %v512, 0
      %v547 = vsel %vm286, %v539, 0
      %v550 = vsel %vm286, %v540, 0
      %v553 = vsel %vm286, %v541, 0
      %v556 = vsel %vm286, %v542, 0
      %v559 = vsel %vm286, %v537, 0
      %561 = vmatpush.bf16.msra.mxu0 0
      %562 = vmatpush.bf16.msra.mxu0 0
      %563 = vmatpush.bf16.msra.mxu0 0
      %564 = vmatpush.bf16.msra.mxu0 0
      %565 = vmatpush.bf16.msra.mxu0 0
      %566 = vmatpush.bf16.msra.mxu0 0
      %567 = vmatpush.bf16.msra.mxu0 0
      %568 = vmatpush.bf16.msra.mxu0 %v547
      %569 = vmatmul.bf16.gmra.mxu0 %v544
      %v570 = vpop.f32.mrf.mxu0
      %v571 = vadd.f32 0.0, %v570
      %v572 = vpop.f32.mrf.mxu0
      %573 = vdwg.mxu0
      %574 = vmatpush.bf16.msra.mxu0 0
      %575 = vmatpush.bf16.msra.mxu0 0
      %576 = vmatpush.bf16.msra.mxu0 0
      %577 = vmatpush.bf16.msra.mxu0 0
      %578 = vmatpush.bf16.msra.mxu0 0
      %579 = vmatpush.bf16.msra.mxu0 0
      %580 = vmatpush.bf16.msra.mxu0 0
      %581 = vmatpush.bf16.msra.mxu0 %v550
      %582 = vmatmul.bf16.gmra.mxu0 %v544
      %v583 = vpop.f32.mrf.mxu0
      %v584 = vadd.f32 0.0, %v583
      %v585 = vpop.f32.mrf.mxu0
      %586 = vdwg.mxu0
      %587 = vmatpush.bf16.msra.mxu0 0
      %588 = vmatpush.bf16.msra.mxu0 0
      %589 = vmatpush.bf16.msra.mxu0 0
      %590 = vmatpush.bf16.msra.mxu0 0
      %591 = vmatpush.bf16.msra.mxu0 0
      %592 = vmatpush.bf16.msra.mxu0 0
      %593 = vmatpush.bf16.msra.mxu0 0
      %594 = vmatpush.bf16.msra.mxu0 %v553
      %595 = vmatmul.bf16.gmra.mxu0 %v544
      %v596 = vpop.f32.mrf.mxu0
      %v597 = vadd.f32 0.0, %v596
      %v598 = vpop.f32.mrf.mxu0
      %599 = vdwg.mxu0
      %600 = vmatpush.bf16.msra.mxu0 0
      %601 = vmatpush.bf16.msra.mxu0 0
      %602 = vmatpush.bf16.msra.mxu0 0
      %603 = vmatpush.bf16.msra.mxu0 0
      %604 = vmatpush.bf16.msra.mxu0 0
      %605 = vmatpush.bf16.msra.mxu0 0
      %606 = vmatpush.bf16.msra.mxu0 0
      %607 = vmatpush.bf16.msra.mxu0 %v556
      %608 = vmatmul.bf16.gmra.mxu0 %v544
      %v609 = vpop.f32.mrf.mxu0
      %v610 = vadd.f32 0.0, %v609
      %v611 = vpop.f32.mrf.mxu0
      %612 = vdwg.mxu0
      %613 = vmatpush.bf16.msra.mxu0 0
      %614 = vmatpush.bf16.msra.mxu0 0
      %615 = vmatpush.bf16.msra.mxu0 0
      %616 = vmatpush.bf16.msra.mxu0 0
      %617 = vmatpush.bf16.msra.mxu0 0
      %618 = vmatpush.bf16.msra.mxu0 0
      %619 = vmatpush.bf16.msra.mxu0 0
      %620 = vmatpush.bf16.msra.mxu0 %v559
      %621 = vmatmul.bf16.gmra.mxu0 %v544
      %v622 = vpop.f32.mrf.mxu0
      %v623 = vadd.f32 0.0, %v622
      %v624 = vpop.f32.mrf.mxu0
      %625 = vdwg.mxu0
      %v626 = vadd.f32 %v454, %v571
      %v627 = vadd.f32 %v467, %v584
      %v628 = vadd.f32 %v480, %v597
      %v629 = vadd.f32 %v493, %v610
      %v630 = vadd.f32 %v506, %v623
      %v631 = vld [vmem:[#allocation2] sm:$0xff]
      %v632 = vld [vmem:[#allocation2 + $0x8] sm:$0x3]
      %s633 = scalar_lea.vmem %s240, 6
      %v634 = vld [vmem:[%s633] sm:$0x3]
      %636 = vst [vmem:[#allocation1] ss:$4 sm:$0xff] %v631
      %s638 = scalar_lea.vmem [#allocation1], 32
      %639 = vst [vmem:[%s638] ss:$4 sm:$0xff] %v632
      %v640 = vld.sshfl [vmem:[#allocation1] sm:$0xff pattern:$0x73625140]
      %v642 = vld.sshfl [vmem:[#allocation1 + $0x8] sm:$0xff pattern:$0x73625140]
      %v644 = vld.sshfl [vmem:[#allocation1 + $0x10] sm:$0xff pattern:$0x73625140]
      %v646 = vld.sshfl [vmem:[#allocation1 + $0x18] sm:$0xff pattern:$0x73625140]
      %v648 = vld.sshfl [vmem:[#allocation1 + $0x20] sm:$0xff pattern:$0x73625140]
      %650 = vrot.lane.b32.xlu0 %v640, 110
      %v651 = vpop.permute.xlu0 %650
      %652 = vrot.lane.b32.xlu0 %v642, 110
      %v653 = vpop.permute.xlu0 %652
      %654 = vrot.lane.b32.xlu0 %v644, 110
      %v655 = vpop.permute.xlu0 %654
      %656 = vrot.lane.b32.xlu0 %v646, 110
      %v657 = vpop.permute.xlu0 %656
      %658 = vrot.lane.b32.xlu0 %v648, 110
      %v659 = vpop.permute.xlu0 %658
      %vm660 = vcmask 900096
      %v661 = vsel %vm660, %v651, %v653
      %v662 = vsel %vm660, %v653, %v655
      %v663 = vsel %vm660, %v655, %v657
      %v664 = vsel %vm660, %v657, %v659
      %v666 = vsel %vm339, %v634, 0
      %v669 = vsel %vm286, %v661, 0
      %v672 = vsel %vm286, %v662, 0
      %v675 = vsel %vm286, %v663, 0
      %v678 = vsel %vm286, %v664, 0
      %v681 = vsel %vm286, %v659, 0
      %683 = vmatpush.bf16.msra.mxu0 0
      %684 = vmatpush.bf16.msra.mxu0 0
      %685 = vmatpush.bf16.msra.mxu0 0
      %686 = vmatpush.bf16.msra.mxu0 0
      %687 = vmatpush.bf16.msra.mxu0 0
      %688 = vmatpush.bf16.msra.mxu0 0
      %689 = vmatpush.bf16.msra.mxu0 0
      %690 = vmatpush.bf16.msra.mxu0 %v669
      %691 = vmatmul.bf16.gmra.mxu0 %v666
      %v692 = vpop.f32.mrf.mxu0
      %v693 = vadd.f32 0.0, %v692
      %v694 = vpop.f32.mrf.mxu0
      %695 = vdwg.mxu0
      %696 = vmatpush.bf16.msra.mxu0 0
      %697 = vmatpush.bf16.msra.mxu0 0
      %698 = vmatpush.bf16.msra.mxu0 0
      %699 = vmatpush.bf16.msra.mxu0 0
      %700 = vmatpush.bf16.msra.mxu0 0
      %701 = vmatpush.bf16.msra.mxu0 0
      %702 = vmatpush.bf16.msra.mxu0 0
      %703 = vmatpush.bf16.msra.mxu0 %v672
      %704 = vmatmul.bf16.gmra.mxu0 %v666
      %v705 = vpop.f32.mrf.mxu0
      %v706 = vadd.f32 0.0, %v705
      %v707 = vpop.f32.mrf.mxu0
      %708 = vdwg.mxu0
      %709 = vmatpush.bf16.msra.mxu0 0
      %710 = vmatpush.bf16.msra.mxu0 0
      %711 = vmatpush.bf16.msra.mxu0 0
      %712 = vmatpush.bf16.msra.mxu0 0
      %713 = vmatpush.bf16.msra.mxu0 0
      %714 = vmatpush.bf16.msra.mxu0 0
      %715 = vmatpush.bf16.msra.mxu0 0
      %716 = vmatpush.bf16.msra.mxu0 %v675
      %717 = vmatmul.bf16.gmra.mxu0 %v666
      %v718 = vpop.f32.mrf.mxu0
      %v719 = vadd.f32 0.0, %v718
      %v720 = vpop.f32.mrf.mxu0
      %721 = vdwg.mxu0
      %722 = vmatpush.bf16.msra.mxu0 0
      %723 = vmatpush.bf16.msra.mxu0 0
      %724 = vmatpush.bf16.msra.mxu0 0
      %725 = vmatpush.bf16.msra.mxu0 0
      %726 = vmatpush.bf16.msra.mxu0 0
      %727 = vmatpush.bf16.msra.mxu0 0
      %728 = vmatpush.bf16.msra.mxu0 0
      %729 = vmatpush.bf16.msra.mxu0 %v678
      %730 = vmatmul.bf16.gmra.mxu0 %v666
      %v731 = vpop.f32.mrf.mxu0
      %v732 = vadd.f32 0.0, %v731
      %v733 = vpop.f32.mrf.mxu0
      %734 = vdwg.mxu0
      %735 = vmatpush.bf16.msra.mxu0 0
      %736 = vmatpush.bf16.msra.mxu0 0
      %737 = vmatpush.bf16.msra.mxu0 0
      %738 = vmatpush.bf16.msra.mxu0 0
      %739 = vmatpush.bf16.msra.mxu0 0
      %740 = vmatpush.bf16.msra.mxu0 0
      %741 = vmatpush.bf16.msra.mxu0 0
      %742 = vmatpush.bf16.msra.mxu0 %v681
      %743 = vmatmul.bf16.gmra.mxu0 %v666
      %v744 = vpop.f32.mrf.mxu0
      %v745 = vadd.f32 0.0, %v744
      %v746 = vpop.f32.mrf.mxu0
      %747 = vdwg.mxu0
      %v748 = vadd.f32 %v626, %v693
      %v749 = vadd.f32 %v627, %v706
      %v750 = vadd.f32 %v628, %v719
      %v751 = vadd.f32 %v629, %v732
      %v752 = vadd.f32 %v630, %v745
      %v753 = vld [vmem:[#allocation2] sm:$0xff]
      %v754 = vld [vmem:[#allocation2 + $0x8] sm:$0x3]
      %s755 = scalar_lea.vmem %s240, 8
      %v756 = vld [vmem:[%s755] sm:$0x3]
      %758 = vst [vmem:[#allocation1] ss:$4 sm:$0xff] %v753
      %s760 = scalar_lea.vmem [#allocation1], 32
      %761 = vst [vmem:[%s760] ss:$4 sm:$0xff] %v754
      %v762 = vld.sshfl [vmem:[#allocation1] sm:$0xff pattern:$0x73625140]
      %v764 = vld.sshfl [vmem:[#allocation1 + $0x8] sm:$0xff pattern:$0x73625140]
      %v766 = vld.sshfl [vmem:[#allocation1 + $0x10] sm:$0xff pattern:$0x73625140]
      %v768 = vld.sshfl [vmem:[#allocation1 + $0x18] sm:$0xff pattern:$0x73625140]
      %v770 = vld.sshfl [vmem:[#allocation1 + $0x20] sm:$0xff pattern:$0x73625140]
      %772 = vrot.lane.b32.xlu0 %v762, 109
      %v773 = vpop.permute.xlu0 %772
      %774 = vrot.lane.b32.xlu0 %v764, 109
      %v775 = vpop.permute.xlu0 %774
      %776 = vrot.lane.b32.xlu0 %v766, 109
      %v777 = vpop.permute.xlu0 %776
      %778 = vrot.lane.b32.xlu0 %v768, 109
      %v779 = vpop.permute.xlu0 %778
      %780 = vrot.lane.b32.xlu0 %v770, 109
      %v781 = vpop.permute.xlu0 %780
      %vm782 = vcmask 891904
      %v783 = vsel %vm782, %v773, %v775
      %v784 = vsel %vm782, %v775, %v777
      %v785 = vsel %vm782, %v777, %v779
      %v786 = vsel %vm782, %v779, %v781
      %v788 = vsel %vm339, %v756, 0
      %v791 = vsel %vm286, %v783, 0
      %v794 = vsel %vm286, %v784, 0
      %v797 = vsel %vm286, %v785, 0
      %v800 = vsel %vm286, %v786, 0
      %v803 = vsel %vm286, %v781, 0
      %805 = vmatpush.bf16.msra.mxu0 0
      %806 = vmatpush.bf16.msra.mxu0 0
      %807 = vmatpush.bf16.msra.mxu0 0
      %808 = vmatpush.bf16.msra.mxu0 0
      %809 = vmatpush.bf16.msra.mxu0 0
      %810 = vmatpush.bf16.msra.mxu0 0
      %811 = vmatpush.bf16.msra.mxu0 0
      %812 = vmatpush.bf16.msra.mxu0 %v791
      %813 = vmatmul.bf16.gmra.mxu0 %v788
      %v814 = vpop.f32.mrf.mxu0
      %v815 = vadd.f32 0.0, %v814
      %v816 = vpop.f32.mrf.mxu0
      %817 = vdwg.mxu0
      %818 = vmatpush.bf16.msra.mxu0 0
      %819 = vmatpush.bf16.msra.mxu0 0
      %820 = vmatpush.bf16.msra.mxu0 0
      %821 = vmatpush.bf16.msra.mxu0 0
      %822 = vmatpush.bf16.msra.mxu0 0
      %823 = vmatpush.bf16.msra.mxu0 0
      %824 = vmatpush.bf16.msra.mxu0 0
      %825 = vmatpush.bf16.msra.mxu0 %v794
      %826 = vmatmul.bf16.gmra.mxu0 %v788
      %v827 = vpop.f32.mrf.mxu0
      %v828 = vadd.f32 0.0, %v827
      %v829 = vpop.f32.mrf.mxu0
      %830 = vdwg.mxu0
      %831 = vmatpush.bf16.msra.mxu0 0
      %832 = vmatpush.bf16.msra.mxu0 0
      %833 = vmatpush.bf16.msra.mxu0 0
      %834 = vmatpush.bf16.msra.mxu0 0
      %835 = vmatpush.bf16.msra.mxu0 0
      %836 = vmatpush.bf16.msra.mxu0 0
      %837 = vmatpush.bf16.msra.mxu0 0
      %838 = vmatpush.bf16.msra.mxu0 %v797
      %839 = vmatmul.bf16.gmra.mxu0 %v788
      %v840 = vpop.f32.mrf.mxu0
      %v841 = vadd.f32 0.0, %v840
      %v842 = vpop.f32.mrf.mxu0
      %843 = vdwg.mxu0
      %844 = vmatpush.bf16.msra.mxu0 0
      %845 = vmatpush.bf16.msra.mxu0 0
      %846 = vmatpush.bf16.msra.mxu0 0
      %847 = vmatpush.bf16.msra.mxu0 0
      %848 = vmatpush.bf16.msra.mxu0 0
      %849 = vmatpush.bf16.msra.mxu0 0
      %850 = vmatpush.bf16.msra.mxu0 0
      %851 = vmatpush.bf16.msra.mxu0 %v800
      %852 = vmatmul.bf16.gmra.mxu0 %v788
      %v853 = vpop.f32.mrf.mxu0
      %v854 = vadd.f32 0.0, %v853
      %v855 = vpop.f32.mrf.mxu0
      %856 = vdwg.mxu0
      %857 = vmatpush.bf16.msra.mxu0 0
      %858 = vmatpush.bf16.msra.mxu0 0
      %859 = vmatpush.bf16.msra.mxu0 0
      %860 = vmatpush.bf16.msra.mxu0 0
      %861 = vmatpush.bf16.msra.mxu0 0
      %862 = vmatpush.bf16.msra.mxu0 0
      %863 = vmatpush.bf16.msra.mxu0 0
      %864 = vmatpush.bf16.msra.mxu0 %v803
      %865 = vmatmul.bf16.gmra.mxu0 %v788
      %v866 = vpop.f32.mrf.mxu0
      %v867 = vadd.f32 0.0, %v866
      %v868 = vpop.f32.mrf.mxu0
      %869 = vdwg.mxu0
      %v870 = vadd.f32 %v748, %v815
      %v871 = vadd.f32 %v749, %v828
      %v872 = vadd.f32 %v750, %v841
      %v873 = vadd.f32 %v751, %v854
      %v874 = vadd.f32 %v752, %v867
      %v875 = vld [vmem:[#allocation2] sm:$0xff]
      %v876 = vld [vmem:[#allocation2 + $0x8] sm:$0x3]
      %s877 = scalar_lea.vmem %s240, 10
      %v878 = vld [vmem:[%s877] sm:$0x3]
      %880 = vst [vmem:[#allocation1] ss:$4 sm:$0xff] %v875
      %s882 = scalar_lea.vmem [#allocation1], 32
      %883 = vst [vmem:[%s882] ss:$4 sm:$0xff] %v876
      %v884 = vld.sshfl [vmem:[#allocation1] sm:$0xff pattern:$0x73625140]
      %v886 = vld.sshfl [vmem:[#allocation1 + $0x8] sm:$0xff pattern:$0x73625140]
      %v888 = vld.sshfl [vmem:[#allocation1 + $0x10] sm:$0xff pattern:$0x73625140]
      %v890 = vld.sshfl [vmem:[#allocation1 + $0x18] sm:$0xff pattern:$0x73625140]
      %v892 = vld.sshfl [vmem:[#allocation1 + $0x20] sm:$0xff pattern:$0x73625140]
      %894 = vrot.lane.b32.xlu0 %v884, 108
      %v895 = vpop.permute.xlu0 %894
      %896 = vrot.lane.b32.xlu0 %v886, 108
      %v897 = vpop.permute.xlu0 %896
      %898 = vrot.lane.b32.xlu0 %v888, 108
      %v899 = vpop.permute.xlu0 %898
      %900 = vrot.lane.b32.xlu0 %v890, 108
      %v901 = vpop.permute.xlu0 %900
      %902 = vrot.lane.b32.xlu0 %v892, 108
      %v903 = vpop.permute.xlu0 %902
      %vm904 = vcmask 883712
      %v905 = vsel %vm904, %v895, %v897
      %v906 = vsel %vm904, %v897, %v899
      %v907 = vsel %vm904, %v899, %v901
      %v908 = vsel %vm904, %v901, %v903
      %v910 = vsel %vm339, %v878, 0
      %v913 = vsel %vm286, %v905, 0
      %v916 = vsel %vm286, %v906, 0
      %v919 = vsel %vm286, %v907, 0
      %v922 = vsel %vm286, %v908, 0
      %v925 = vsel %vm286, %v903, 0
      %927 = vmatpush.bf16.msra.mxu0 0
      %928 = vmatpush.bf16.msra.mxu0 0
      %929 = vmatpush.bf16.msra.mxu0 0
      %930 = vmatpush.bf16.msra.mxu0 0
      %931 = vmatpush.bf16.msra.mxu0 0
      %932 = vmatpush.bf16.msra.mxu0 0
      %933 = vmatpush.bf16.msra.mxu0 0
      %934 = vmatpush.bf16.msra.mxu0 %v913
      %935 = vmatmul.bf16.gmra.mxu0 %v910
      %v936 = vpop.f32.mrf.mxu0
      %v937 = vadd.f32 0.0, %v936
      %v938 = vpop.f32.mrf.mxu0
      %939 = vdwg.mxu0
      %940 = vmatpush.bf16.msra.mxu0 0
      %941 = vmatpush.bf16.msra.mxu0 0
      %942 = vmatpush.bf16.msra.mxu0 0
      %943 = vmatpush.bf16.msra.mxu0 0
      %944 = vmatpush.bf16.msra.mxu0 0
      %945 = vmatpush.bf16.msra.mxu0 0
      %946 = vmatpush.bf16.msra.mxu0 0
      %947 = vmatpush.bf16.msra.mxu0 %v916
      %948 = vmatmul.bf16.gmra.mxu0 %v910
      %v949 = vpop.f32.mrf.mxu0
      %v950 = vadd.f32 0.0, %v949
      %v951 = vpop.f32.mrf.mxu0
      %952 = vdwg.mxu0
      %953 = vmatpush.bf16.msra.mxu0 0
      %954 = vmatpush.bf16.msra.mxu0 0
      %955 = vmatpush.bf16.msra.mxu0 0
      %956 = vmatpush.bf16.msra.mxu0 0
      %957 = vmatpush.bf16.msra.mxu0 0
      %958 = vmatpush.bf16.msra.mxu0 0
      %959 = vmatpush.bf16.msra.mxu0 0
      %960 = vmatpush.bf16.msra.mxu0 %v919
      %961 = vmatmul.bf16.gmra.mxu0 %v910
      %v962 = vpop.f32.mrf.mxu0
      %v963 = vadd.f32 0.0, %v962
      %v964 = vpop.f32.mrf.mxu0
      %965 = vdwg.mxu0
      %966 = vmatpush.bf16.msra.mxu0 0
      %967 = vmatpush.bf16.msra.mxu0 0
      %968 = vmatpush.bf16.msra.mxu0 0
      %969 = vmatpush.bf16.msra.mxu0 0
      %970 = vmatpush.bf16.msra.mxu0 0
      %971 = vmatpush.bf16.msra.mxu0 0
      %972 = vmatpush.bf16.msra.mxu0 0
      %973 = vmatpush.bf16.msra.mxu0 %v922
      %974 = vmatmul.bf16.gmra.mxu0 %v910
      %v975 = vpop.f32.mrf.mxu0
      %v976 = vadd.f32 0.0, %v975
      %v977 = vpop.f32.mrf.mxu0
      %978 = vdwg.mxu0
      %979 = vmatpush.bf16.msra.mxu0 0
      %980 = vmatpush.bf16.msra.mxu0 0
      %981 = vmatpush.bf16.msra.mxu0 0
      %982 = vmatpush.bf16.msra.mxu0 0
      %983 = vmatpush.bf16.msra.mxu0 0
      %984 = vmatpush.bf16.msra.mxu0 0
      %985 = vmatpush.bf16.msra.mxu0 0
      %986 = vmatpush.bf16.msra.mxu0 %v925
      %987 = vmatmul.bf16.gmra.mxu0 %v910
      %v988 = vpop.f32.mrf.mxu0
      %v989 = vadd.f32 0.0, %v988
      %v990 = vpop.f32.mrf.mxu0
      %991 = vdwg.mxu0
      %v992 = vadd.f32 %v870, %v937
      %v993 = vadd.f32 %v871, %v950
      %v994 = vadd.f32 %v872, %v963
      %v995 = vadd.f32 %v873, %v976
      %v996 = vadd.f32 %v874, %v989
      %v997 = vld [vmem:[#allocation2] sm:$0xff]
      %v998 = vld [vmem:[#allocation2 + $0x8] sm:$0x3]
      %s999 = scalar_lea.vmem %s240, 12
      %v1000 = vld [vmem:[%s999] sm:$0x3]
      %1002 = vst [vmem:[#allocation1] ss:$4 sm:$0xff] %v997
      %s1004 = scalar_lea.vmem [#allocation1], 32
      %1005 = vst [vmem:[%s1004] ss:$4 sm:$0xff] %v998
      %v1006 = vld.sshfl [vmem:[#allocation1] sm:$0xff pattern:$0x73625140]
      %v1008 = vld.sshfl [vmem:[#allocation1 + $0x8] sm:$0xff pattern:$0x73625140]
      %v1010 = vld.sshfl [vmem:[#allocation1 + $0x10] sm:$0xff pattern:$0x73625140]
      %v1012 = vld.sshfl [vmem:[#allocation1 + $0x18] sm:$0xff pattern:$0x73625140]
      %v1014 = vld.sshfl [vmem:[#allocation1 + $0x20] sm:$0xff pattern:$0x73625140]
      %1016 = vrot.lane.b32.xlu0 %v1006, 92
      %v1017 = vpop.permute.xlu0 %1016
      %1018 = vrot.lane.b32.xlu0 %v1008, 92
      %v1019 = vpop.permute.xlu0 %1018
      %1020 = vrot.lane.b32.xlu0 %v1010, 92
      %v1021 = vpop.permute.xlu0 %1020
      %1022 = vrot.lane.b32.xlu0 %v1012, 92
      %v1023 = vpop.permute.xlu0 %1022
      %1024 = vrot.lane.b32.xlu0 %v1014, 92
      %v1025 = vpop.permute.xlu0 %1024
      %vm1026 = vcmask 752640
      %v1027 = vsel %vm1026, %v1017, %v1019
      %v1028 = vsel %vm1026, %v1019, %v1021
      %v1029 = vsel %vm1026, %v1021, %v1023
      %v1030 = vsel %vm1026, %v1023, %v1025
      %v1032 = vsel %vm339, %v1000, 0
      %v1035 = vsel %vm286, %v1027, 0
      %v1038 = vsel %vm286, %v1028, 0
      %v1041 = vsel %vm286, %v1029, 0
      %v1044 = vsel %vm286, %v1030, 0
      %v1047 = vsel %vm286, %v1025, 0
      %1049 = vmatpush.bf16.msra.mxu0 0
      %1050 = vmatpush.bf16.msra.mxu0 0
      %1051 = vmatpush.bf16.msra.mxu0 0
      %1052 = vmatpush.bf16.msra.mxu0 0
      %1053 = vmatpush.bf16.msra.mxu0 0
      %1054 = vmatpush.bf16.msra.mxu0 0
      %1055 = vmatpush.bf16.msra.mxu0 0
      %1056 = vmatpush.bf16.msra.mxu0 %v1035
      %1057 = vmatmul.bf16.gmra.mxu0 %v1032
      %v1058 = vpop.f32.mrf.mxu0
      %v1059 = vadd.f32 0.0, %v1058
      %v1060 = vpop.f32.mrf.mxu0
      %1061 = vdwg.mxu0
      %1062 = vmatpush.bf16.msra.mxu0 0
      %1063 = vmatpush.bf16.msra.mxu0 0
      %1064 = vmatpush.bf16.msra.mxu0 0
      %1065 = vmatpush.bf16.msra.mxu0 0
      %1066 = vmatpush.bf16.msra.mxu0 0
      %1067 = vmatpush.bf16.msra.mxu0 0
      %1068 = vmatpush.bf16.msra.mxu0 0
      %1069 = vmatpush.bf16.msra.mxu0 %v1038
      %1070 = vmatmul.bf16.gmra.mxu0 %v1032
      %v1071 = vpop.f32.mrf.mxu0
      %v1072 = vadd.f32 0.0, %v1071
      %v1073 = vpop.f32.mrf.mxu0
      %1074 = vdwg.mxu0
      %1075 = vmatpush.bf16.msra.mxu0 0
      %1076 = vmatpush.bf16.msra.mxu0 0
      %1077 = vmatpush.bf16.msra.mxu0 0
      %1078 = vmatpush.bf16.msra.mxu0 0
      %1079 = vmatpush.bf16.msra.mxu0 0
      %1080 = vmatpush.bf16.msra.mxu0 0
      %1081 = vmatpush.bf16.msra.mxu0 0
      %1082 = vmatpush.bf16.msra.mxu0 %v1041
      %1083 = vmatmul.bf16.gmra.mxu0 %v1032
      %v1084 = vpop.f32.mrf.mxu0
      %v1085 = vadd.f32 0.0, %v1084
      %v1086 = vpop.f32.mrf.mxu0
      %1087 = vdwg.mxu0
      %1088 = vmatpush.bf16.msra.mxu0 0
      %1089 = vmatpush.bf16.msra.mxu0 0
      %1090 = vmatpush.bf16.msra.mxu0 0
      %1091 = vmatpush.bf16.msra.mxu0 0
      %1092 = vmatpush.bf16.msra.mxu0 0
      %1093 = vmatpush.bf16.msra.mxu0 0
      %1094 = vmatpush.bf16.msra.mxu0 0
      %1095 = vmatpush.bf16.msra.mxu0 %v1044
      %1096 = vmatmul.bf16.gmra.mxu0 %v1032
      %v1097 = vpop.f32.mrf.mxu0
      %v1098 = vadd.f32 0.0, %v1097
      %v1099 = vpop.f32.mrf.mxu0
      %1100 = vdwg.mxu0
      %1101 = vmatpush.bf16.msra.mxu0 0
      %1102 = vmatpush.bf16.msra.mxu0 0
      %1103 = vmatpush.bf16.msra.mxu0 0
      %1104 = vmatpush.bf16.msra.mxu0 0
      %1105 = vmatpush.bf16.msra.mxu0 0
      %1106 = vmatpush.bf16.msra.mxu0 0
      %1107 = vmatpush.bf16.msra.mxu0 0
      %1108 = vmatpush.bf16.msra.mxu0 %v1047
      %1109 = vmatmul.bf16.gmra.mxu0 %v1032
      %v1110 = vpop.f32.mrf.mxu0
      %v1111 = vadd.f32 0.0, %v1110
      %v1112 = vpop.f32.mrf.mxu0
      %1113 = vdwg.mxu0
      %v1114 = vadd.f32 %v992, %v1059
      %v1115 = vadd.f32 %v993, %v1072
      %v1116 = vadd.f32 %v994, %v1085
      %v1117 = vadd.f32 %v995, %v1098
      %v1118 = vadd.f32 %v996, %v1111
      %v1119 = vld [vmem:[#allocation2] sm:$0xff]
      %v1120 = vld [vmem:[#allocation2 + $0x8] sm:$0x3]
      %s1121 = scalar_lea.vmem %s240, 14
      %v1122 = vld [vmem:[%s1121] sm:$0x3]
      %1124 = vst [vmem:[#allocation1] ss:$4 sm:$0xff] %v1119
      %s1126 = scalar_lea.vmem [#allocation1], 32
      %1127 = vst [vmem:[%s1126] ss:$4 sm:$0xff] %v1120
      %v1128 = vld.sshfl [vmem:[#allocation1] sm:$0xff pattern:$0x73625140]
      %v1130 = vld.sshfl [vmem:[#allocation1 + $0x8] sm:$0xff pattern:$0x73625140]
      %v1132 = vld.sshfl [vmem:[#allocation1 + $0x10] sm:$0xff pattern:$0x73625140]
      %v1134 = vld.sshfl [vmem:[#allocation1 + $0x18] sm:$0xff pattern:$0x73625140]
      %v1136 = vld.sshfl [vmem:[#allocation1 + $0x20] sm:$0xff pattern:$0x73625140]
      %1138 = vrot.lane.b32.xlu0 %v1128, 91
      %v1139 = vpop.permute.xlu0 %1138
      %1140 = vrot.lane.b32.xlu0 %v1130, 91
      %v1141 = vpop.permute.xlu0 %1140
      %1142 = vrot.lane.b32.xlu0 %v1132, 91
      %v1143 = vpop.permute.xlu0 %1142
      %1144 = vrot.lane.b32.xlu0 %v1134, 91
      %v1145 = vpop.permute.xlu0 %1144
      %1146 = vrot.lane.b32.xlu0 %v1136, 91
      %v1147 = vpop.permute.xlu0 %1146
      %vm1148 = vcmask 744448
      %v1149 = vsel %vm1148, %v1139, %v1141
      %v1150 = vsel %vm1148, %v1141, %v1143
      %v1151 = vsel %vm1148, %v1143, %v1145
      %v1152 = vsel %vm1148, %v1145, %v1147
      %v1154 = vsel %vm339, %v1122, 0
      %v1157 = vsel %vm286, %v1149, 0
      %v1160 = vsel %vm286, %v1150, 0
      %v1163 = vsel %vm286, %v1151, 0
      %v1166 = vsel %vm286, %v1152, 0
      %v1169 = vsel %vm286, %v1147, 0
      %1171 = vmatpush.bf16.msra.mxu0 0
      %1172 = vmatpush.bf16.msra.mxu0 0
      %1173 = vmatpush.bf16.msra.mxu0 0
      %1174 = vmatpush.bf16.msra.mxu0 0
      %1175 = vmatpush.bf16.msra.mxu0 0
      %1176 = vmatpush.bf16.msra.mxu0 0
      %1177 = vmatpush.bf16.msra.mxu0 0
      %1178 = vmatpush.bf16.msra.mxu0 %v1157
      %1179 = vmatmul.bf16.gmra.mxu0 %v1154
      %v1180 = vpop.f32.mrf.mxu0
      %v1181 = vadd.f32 0.0, %v1180
      %v1182 = vpop.f32.mrf.mxu0
      %1183 = vdwg.mxu0
      %1184 = vmatpush.bf16.msra.mxu0 0
      %1185 = vmatpush.bf16.msra.mxu0 0
      %1186 = vmatpush.bf16.msra.mxu0 0
      %1187 = vmatpush.bf16.msra.mxu0 0
      %1188 = vmatpush.bf16.msra.mxu0 0
      %1189 = vmatpush.bf16.msra.mxu0 0
      %1190 = vmatpush.bf16.msra.mxu0 0
      %1191 = vmatpush.bf16.msra.mxu0 %v1160
      %1192 = vmatmul.bf16.gmra.mxu0 %v1154
      %v1193 = vpop.f32.mrf.mxu0
      %v1194 = vadd.f32 0.0, %v1193
      %v1195 = vpop.f32.mrf.mxu0
      %1196 = vdwg.mxu0
      %1197 = vmatpush.bf16.msra.mxu0 0
      %1198 = vmatpush.bf16.msra.mxu0 0
      %1199 = vmatpush.bf16.msra.mxu0 0
      %1200 = vmatpush.bf16.msra.mxu0 0
      %1201 = vmatpush.bf16.msra.mxu0 0
      %1202 = vmatpush.bf16.msra.mxu0 0
      %1203 = vmatpush.bf16.msra.mxu0 0
      %1204 = vmatpush.bf16.msra.mxu0 %v1163
      %1205 = vmatmul.bf16.gmra.mxu0 %v1154
      %v1206 = vpop.f32.mrf.mxu0
      %v1207 = vadd.f32 0.0, %v1206
      %v1208 = vpop.f32.mrf.mxu0
      %1209 = vdwg.mxu0
      %1210 = vmatpush.bf16.msra.mxu0 0
      %1211 = vmatpush.bf16.msra.mxu0 0
      %1212 = vmatpush.bf16.msra.mxu0 0
      %1213 = vmatpush.bf16.msra.mxu0 0
      %1214 = vmatpush.bf16.msra.mxu0 0
      %1215 = vmatpush.bf16.msra.mxu0 0
      %1216 = vmatpush.bf16.msra.mxu0 0
      %1217 = vmatpush.bf16.msra.mxu0 %v1166
      %1218 = vmatmul.bf16.gmra.mxu0 %v1154
      %v1219 = vpop.f32.mrf.mxu0
      %v1220 = vadd.f32 0.0, %v1219
      %v1221 = vpop.f32.mrf.mxu0
      %1222 = vdwg.mxu0
      %1223 = vmatpush.bf16.msra.mxu0 0
      %1224 = vmatpush.bf16.msra.mxu0 0
      %1225 = vmatpush.bf16.msra.mxu0 0
      %1226 = vmatpush.bf16.msra.mxu0 0
      %1227 = vmatpush.bf16.msra.mxu0 0
      %1228 = vmatpush.bf16.msra.mxu0 0
      %1229 = vmatpush.bf16.msra.mxu0 0
      %1230 = vmatpush.bf16.msra.mxu0 %v1169
      %1231 = vmatmul.bf16.gmra.mxu0 %v1154
      %v1232 = vpop.f32.mrf.mxu0
      %v1233 = vadd.f32 0.0, %v1232
      %v1234 = vpop.f32.mrf.mxu0
      %1235 = vdwg.mxu0
      %v1236 = vadd.f32 %v1114, %v1181
      %v1237 = vadd.f32 %v1115, %v1194
      %v1238 = vadd.f32 %v1116, %v1207
      %v1239 = vadd.f32 %v1117, %v1220
      %v1240 = vadd.f32 %v1118, %v1233
      %v1241 = vld [vmem:[#allocation2] sm:$0xff]
      %v1242 = vld [vmem:[#allocation2 + $0x8] sm:$0x3]
      %s1243 = scalar_lea.vmem %s240, 16
      %v1244 = vld [vmem:[%s1243] sm:$0x3]
      %1246 = vst [vmem:[#allocation1] ss:$4 sm:$0xff] %v1241
      %s1248 = scalar_lea.vmem [#allocation1], 32
      %1249 = vst [vmem:[%s1248] ss:$4 sm:$0xff] %v1242
      %v1250 = vld.sshfl [vmem:[#allocation1] sm:$0xff pattern:$0x73625140]
      %v1252 = vld.sshfl [vmem:[#allocation1 + $0x8] sm:$0xff pattern:$0x73625140]
      %v1254 = vld.sshfl [vmem:[#allocation1 + $0x10] sm:$0xff pattern:$0x73625140]
      %v1256 = vld.sshfl [vmem:[#allocation1 + $0x18] sm:$0xff pattern:$0x73625140]
      %v1258 = vld.sshfl [vmem:[#allocation1 + $0x20] sm:$0xff pattern:$0x73625140]
      %1260 = vrot.lane.b32.xlu0 %v1250, 90
      %v1261 = vpop.permute.xlu0 %1260
      %1262 = vrot.lane.b32.xlu0 %v1252, 90
      %v1263 = vpop.permute.xlu0 %1262
      %1264 = vrot.lane.b32.xlu0 %v1254, 90
      %v1265 = vpop.permute.xlu0 %1264
      %1266 = vrot.lane.b32.xlu0 %v1256, 90
      %v1267 = vpop.permute.xlu0 %1266
      %1268 = vrot.lane.b32.xlu0 %v1258, 90
      %v1269 = vpop.permute.xlu0 %1268
      %vm1270 = vcmask 736256
      %v1271 = vsel %vm1270, %v1261, %v1263
      %v1272 = vsel %vm1270, %v1263, %v1265
      %v1273 = vsel %vm1270, %v1265, %v1267
      %v1274 = vsel %vm1270, %v1267, %v1269
      %v1276 = vsel %vm339, %v1244, 0
      %v1279 = vsel %vm286, %v1271, 0
      %v1282 = vsel %vm286, %v1272, 0
      %v1285 = vsel %vm286, %v1273, 0
      %v1288 = vsel %vm286, %v1274, 0
      %v1291 = vsel %vm286, %v1269, 0
      %1293 = vmatpush.bf16.msra.mxu0 0
      %1294 = vmatpush.bf16.msra.mxu0 0
      %1295 = vmatpush.bf16.msra.mxu0 0
      %1296 = vmatpush.bf16.msra.mxu0 0
      %1297 = vmatpush.bf16.msra.mxu0 0
      %1298 = vmatpush.bf16.msra.mxu0 0
      %1299 = vmatpush.bf16.msra.mxu0 0
      %1300 = vmatpush.bf16.msra.mxu0 %v1279
      %1301 = vmatmul.bf16.gmra.mxu0 %v1276
      %v1302 = vpop.f32.mrf.mxu0
      %v1303 = vadd.f32 0.0, %v1302
      %v1304 = vpop.f32.mrf.mxu0
      %1305 = vdwg.mxu0
      %1306 = vmatpush.bf16.msra.mxu0 0
      %1307 = vmatpush.bf16.msra.mxu0 0
      %1308 = vmatpush.bf16.msra.mxu0 0
      %1309 = vmatpush.bf16.msra.mxu0 0
      %1310 = vmatpush.bf16.msra.mxu0 0
      %1311 = vmatpush.bf16.msra.mxu0 0
      %1312 = vmatpush.bf16.msra.mxu0 0
      %1313 = vmatpush.bf16.msra.mxu0 %v1282
      %1314 = vmatmul.bf16.gmra.mxu0 %v1276
      %v1315 = vpop.f32.mrf.mxu0
      %v1316 = vadd.f32 0.0, %v1315
      %v1317 = vpop.f32.mrf.mxu0
      %1318 = vdwg.mxu0
      %1319 = vmatpush.bf16.msra.mxu0 0
      %1320 = vmatpush.bf16.msra.mxu0 0
      %1321 = vmatpush.bf16.msra.mxu0 0
      %1322 = vmatpush.bf16.msra.mxu0 0
      %1323 = vmatpush.bf16.msra.mxu0 0
      %1324 = vmatpush.bf16.msra.mxu0 0
      %1325 = vmatpush.bf16.msra.mxu0 0
      %1326 = vmatpush.bf16.msra.mxu0 %v1285
      %1327 = vmatmul.bf16.gmra.mxu0 %v1276
      %v1328 = vpop.f32.mrf.mxu0
      %v1329 = vadd.f32 0.0, %v1328
      %v1330 = vpop.f32.mrf.mxu0
      %1331 = vdwg.mxu0
      %1332 = vmatpush.bf16.msra.mxu0 0
      %1333 = vmatpush.bf16.msra.mxu0 0
      %1334 = vmatpush.bf16.msra.mxu0 0
      %1335 = vmatpush.bf16.msra.mxu0 0
      %1336 = vmatpush.bf16.msra.mxu0 0
      %1337 = vmatpush.bf16.msra.mxu0 0
      %1338 = vmatpush.bf16.msra.mxu0 0
      %1339 = vmatpush.bf16.msra.mxu0 %v1288
      %1340 = vmatmul.bf16.gmra.mxu0 %v1276
      %v1341 = vpop.f32.mrf.mxu0
      %v1342 = vadd.f32 0.0, %v1341
      %v1343 = vpop.f32.mrf.mxu0
      %1344 = vdwg.mxu0
      %1345 = vmatpush.bf16.msra.mxu0 0
      %1346 = vmatpush.bf16.msra.mxu0 0
      %1347 = vmatpush.bf16.msra.mxu0 0
      %1348 = vmatpush.bf16.msra.mxu0 0
      %1349 = vmatpush.bf16.msra.mxu0 0
      %1350 = vmatpush.bf16.msra.mxu0 0
      %1351 = vmatpush.bf16.msra.mxu0 0
      %1352 = vmatpush.bf16.msra.mxu0 %v1291
      %1353 = vmatmul.bf16.gmra.mxu0 %v1276
      %v1354 = vpop.f32.mrf.mxu0
      %v1355 = vadd.f32 0.0, %v1354
      %v1356 = vpop.f32.mrf.mxu0
      %1357 = vdwg.mxu0
      %v1358 = vadd.f32 %v1236, %v1303
      %v1359 = vadd.f32 %v1237, %v1316
      %v1360 = vadd.f32 %v1238, %v1329
      %v1361 = vadd.f32 %v1239, %v1342
      %v1362 = vadd.f32 %v1240, %v1355
      %v1363 = vld [vmem:[%s244] sm:$0xf]
      %1365 = vset.pattern.permute.xlu0 0
      %1366 = vperm.xlu0 %1365, %v1363
      %v1367 = vpop.permute.xlu0 %1366
      %v1369 = vadd.f32 %v1358, %v1367
      %v1370 = vadd.f32 %v1359, %v1367
      %v1371 = vadd.f32 %v1360, %v1367
      %v1372 = vadd.f32 %v1361, %v1367
      %v1373 = vadd.f32 %v1362, %v1367
      %v1374 = vmax.f32 %v1369, 0.0
      %v1375 = vmax.f32 %v1370, 0.0
      %v1376 = vmax.f32 %v1371, 0.0
      %v1377 = vmax.f32 %v1372, 0.0
      %v1378 = vmax.f32 %v1373, 0.0
      %vm1379 = vcmask 441348
      %vm1380 = vmor %vm1379, %vm294
      %1381 = vst.msk [vmem:[%s253] sm:$0xff] %vm1380, 0.0
      %1383 = vrot.lane.b32.xlu0 %v1374, 110
      %v1384 = vpop.permute.xlu0 %1383
      %v1386 = vmax.f32 %v1374, %v1384
      %v1387 = vld [vmem:[%s3] sm:$0xff]
      %v1388 = vld [vmem:[%s3 + $0x8] sm:$0xff]
      %vm1389 = vcmask 130048
      %v1391 = vsel %vm1389, %v1386, 0
      %1393 = vmatpush.msra.mxu0 0.0
      %1394 = vmatpush.msra.mxu0 0.0
      %1395 = vmatpush.msra.mxu0 0.0
      %1396 = vmatpush.msra.mxu0 0.0
      %1397 = vmatpush.msra.mxu0 0.0
      %1398 = vmatpush.msra.mxu0 0.0
      %1399 = vmatpush.msra.mxu0 0.0
      %1400 = vmatpush.msra.mxu0 0.0
      %1401 = vmatpush.msra.mxu0 0.0
      %1402 = vmatpush.msra.mxu0 0.0
      %1403 = vmatpush.msra.mxu0 0.0
      %1404 = vmatpush.msra.mxu0 0.0
      %1405 = vmatpush.msra.mxu0 0.0
      %1406 = vmatpush.msra.mxu0 0.0
      %1407 = vmatpush.msra.mxu0 %v1388
      %1408 = vmatpush.msra.mxu0 %v1387
      %1409 = vmatmul.f32.gmra.mxu0 %v1391
      %v1410 = vpop.f32.mrf.mxu0
      %v1411 = vadd.f32 0.0, %v1410
      %1412 = vdwg.mxu0
      %s1413 = scalar_lea.vmem %s3, 16
      %v1414 = vld [vmem:[%s1413] sm:$0xff]
      %v1415 = vld [vmem:[%s1413 + $0x8] sm:$0xff]
      %1416 = vmatpush.msra.mxu0 0.0
      %1417 = vmatpush.msra.mxu0 0.0
      %1418 = vmatpush.msra.mxu0 0.0
      %1419 = vmatpush.msra.mxu0 0.0
      %1420 = vmatpush.msra.mxu0 0.0
      %1421 = vmatpush.msra.mxu0 0.0
      %1422 = vmatpush.msra.mxu0 0.0
      %1423 = vmatpush.msra.mxu0 0.0
      %1424 = vmatpush.msra.mxu0 0.0
      %1425 = vmatpush.msra.mxu0 0.0
      %1426 = vmatpush.msra.mxu0 0.0
      %1427 = vmatpush.msra.mxu0 0.0
      %1428 = vmatpush.msra.mxu0 0.0
      %1429 = vmatpush.msra.mxu0 0.0
      %1430 = vmatpush.msra.mxu0 %v1415
      %1431 = vmatpush.msra.mxu0 %v1414
      %1432 = vmatmul.f32.gmra.mxu0 %v1391
      %v1433 = vpop.f32.mrf.mxu0
      %v1434 = vadd.f32 0.0, %v1433
      %1435 = vdwg.mxu0
      %v1436 = vmax.f32 %v1411, %v1434
      %1438 = vrot.lane.b32.xlu0 %v1436, 11
      %v1439 = vpop.permute.xlu0 %1438
      %vm1441 = vcmask 150616
      %1442 = vst.msk [vmem:[%s253] sm:$0xf] %vm1441, %v1439
      %v1443 = vld [vmem:[%s3] sm:$0xff]
      %v1444 = vld [vmem:[%s3 + $0x8] sm:$0xff]
      %1445 = vrot.lane.b32.xlu0 %v1386, 92
      %v1446 = vpop.permute.xlu0 %1445
      %v1447 = vsel %vm1389, %v1446, 0
      %1449 = vmatpush.msra.mxu0 0.0
      %1450 = vmatpush.msra.mxu0 0.0
      %1451 = vmatpush.msra.mxu0 0.0
      %1452 = vmatpush.msra.mxu0 0.0
      %1453 = vmatpush.msra.mxu0 0.0
      %1454 = vmatpush.msra.mxu0 0.0
      %1455 = vmatpush.msra.mxu0 0.0
      %1456 = vmatpush.msra.mxu0 0.0
      %1457 = vmatpush.msra.mxu0 0.0
      %1458 = vmatpush.msra.mxu0 0.0
      %1459 = vmatpush.msra.mxu0 0.0
      %1460 = vmatpush.msra.mxu0 0.0
      %1461 = vmatpush.msra.mxu0 0.0
      %1462 = vmatpush.msra.mxu0 0.0
      %1463 = vmatpush.msra.mxu0 %v1444
      %1464 = vmatpush.msra.mxu0 %v1443
      %1465 = vmatmul.f32.gmra.mxu0 %v1447
      %v1466 = vpop.f32.mrf.mxu0
      %v1467 = vadd.f32 0.0, %v1466
      %1468 = vdwg.mxu0
      %v1469 = vld [vmem:[%s1413] sm:$0xff]
      %v1470 = vld [vmem:[%s1413 + $0x8] sm:$0xff]
      %1471 = vmatpush.msra.mxu0 0.0
      %1472 = vmatpush.msra.mxu0 0.0
      %1473 = vmatpush.msra.mxu0 0.0
      %1474 = vmatpush.msra.mxu0 0.0
      %1475 = vmatpush.msra.mxu0 0.0
      %1476 = vmatpush.msra.mxu0 0.0
      %1477 = vmatpush.msra.mxu0 0.0
      %1478 = vmatpush.msra.mxu0 0.0
      %1479 = vmatpush.msra.mxu0 0.0
      %1480 = vmatpush.msra.mxu0 0.0
      %1481 = vmatpush.msra.mxu0 0.0
      %1482 = vmatpush.msra.mxu0 0.0
      %1483 = vmatpush.msra.mxu0 0.0
      %1484 = vmatpush.msra.mxu0 0.0
      %1485 = vmatpush.msra.mxu0 %v1470
      %1486 = vmatpush.msra.mxu0 %v1469
      %1487 = vmatmul.f32.gmra.mxu0 %v1447
      %v1488 = vpop.f32.mrf.mxu0
      %v1489 = vadd.f32 0.0, %v1488
      %1490 = vdwg.mxu0
      %v1491 = vmax.f32 %v1467, %v1489
      %1493 = vrot.lane.b32.xlu0 %v1491, 21
      %v1494 = vpop.permute.xlu0 %1493
      %vm1496 = vcmask 232616
      %1497 = vst.msk [vmem:[%s253] sm:$0xf] %vm1496, %v1494
      %v1498 = vld [vmem:[%s3] sm:$0xff]
      %v1499 = vld [vmem:[%s3 + $0x8] sm:$0xff]
      %1500 = vrot.lane.b32.xlu0 %v1386, 56
      %v1501 = vpop.permute.xlu0 %1500
      %v1502 = vsel %vm1389, %v1501, 0
      %1504 = vmatpush.msra.mxu0 0.0
      %1505 = vmatpush.msra.mxu0 0.0
      %1506 = vmatpush.msra.mxu0 0.0
      %1507 = vmatpush.msra.mxu0 0.0
      %1508 = vmatpush.msra.mxu0 0.0
      %1509 = vmatpush.msra.mxu0 0.0
      %1510 = vmatpush.msra.mxu0 0.0
      %1511 = vmatpush.msra.mxu0 0.0
      %1512 = vmatpush.msra.mxu0 0.0
      %1513 = vmatpush.msra.mxu0 0.0
      %1514 = vmatpush.msra.mxu0 0.0
      %1515 = vmatpush.msra.mxu0 0.0
      %1516 = vmatpush.msra.mxu0 0.0
      %1517 = vmatpush.msra.mxu0 0.0
      %1518 = vmatpush.msra.mxu0 %v1499
      %1519 = vmatpush.msra.mxu0 %v1498
      %1520 = vmatmul.f32.gmra.mxu0 %v1502
      %v1521 = vpop.f32.mrf.mxu0
      %v1522 = vadd.f32 0.0, %v1521
      %1523 = vdwg.mxu0
      %v1524 = vld [vmem:[%s1413] sm:$0xff]
      %v1525 = vld [vmem:[%s1413 + $0x8] sm:$0xff]
      %1526 = vmatpush.msra.mxu0 0.0
      %1527 = vmatpush.msra.mxu0 0.0
      %1528 = vmatpush.msra.mxu0 0.0
      %1529 = vmatpush.msra.mxu0 0.0
      %1530 = vmatpush.msra.mxu0 0.0
      %1531 = vmatpush.msra.mxu0 0.0
      %1532 = vmatpush.msra.mxu0 0.0
      %1533 = vmatpush.msra.mxu0 0.0
      %1534 = vmatpush.msra.mxu0 0.0
      %1535 = vmatpush.msra.mxu0 0.0
      %1536 = vmatpush.msra.mxu0 0.0
      %1537 = vmatpush.msra.mxu0 0.0
      %1538 = vmatpush.msra.mxu0 0.0
      %1539 = vmatpush.msra.mxu0 0.0
      %1540 = vmatpush.msra.mxu0 %v1525
      %1541 = vmatpush.msra.mxu0 %v1524
      %1542 = vmatmul.f32.gmra.mxu0 %v1502
      %v1543 = vpop.f32.mrf.mxu0
      %v1544 = vadd.f32 0.0, %v1543
      %1545 = vdwg.mxu0
      %v1546 = vmax.f32 %v1522, %v1544
      %1548 = vrot.lane.b32.xlu0 %v1546, 31
      %v1549 = vpop.permute.xlu0 %1548
      %vm1551 = vcmask 314616
      %1552 = vst.msk [vmem:[%s253] sm:$0xf] %vm1551, %v1549
      %1554 = vrot.lane.b32.xlu0 %v1375, 110
      %v1555 = vpop.permute.xlu0 %1554
      %vm1556 = vcmask 900096
      %v1557 = vsel %vm1556, %v1384, %v1555
      %v1559 = vmax.f32 %v1374, %v1557
      %v1560 = vld [vmem:[%s3] sm:$0xff]
      %v1561 = vld [vmem:[%s3 + $0x8] sm:$0xff]
      %1563 = vrot.lane.b32.xlu0 %v1559, 20
      %v1564 = vpop.permute.xlu0 %1563
      %v1565 = vsel %vm1389, %v1564, 0
      %1567 = vmatpush.msra.mxu0 0.0
      %1568 = vmatpush.msra.mxu0 0.0
      %1569 = vmatpush.msra.mxu0 0.0
      %1570 = vmatpush.msra.mxu0 0.0
      %1571 = vmatpush.msra.mxu0 0.0
      %1572 = vmatpush.msra.mxu0 0.0
      %1573 = vmatpush.msra.mxu0 0.0
      %1574 = vmatpush.msra.mxu0 0.0
      %1575 = vmatpush.msra.mxu0 0.0
      %1576 = vmatpush.msra.mxu0 0.0
      %1577 = vmatpush.msra.mxu0 0.0
      %1578 = vmatpush.msra.mxu0 0.0
      %1579 = vmatpush.msra.mxu0 0.0
      %1580 = vmatpush.msra.mxu0 0.0
      %1581 = vmatpush.msra.mxu0 %v1561
      %1582 = vmatpush.msra.mxu0 %v1560
      %1583 = vmatmul.f32.gmra.mxu0 %v1565
      %v1584 = vpop.f32.mrf.mxu0
      %v1585 = vadd.f32 0.0, %v1584
      %1586 = vdwg.mxu0
      %v1587 = vld [vmem:[%s1413] sm:$0xff]
      %v1588 = vld [vmem:[%s1413 + $0x8] sm:$0xff]
      %1589 = vmatpush.msra.mxu0 0.0
      %1590 = vmatpush.msra.mxu0 0.0
      %1591 = vmatpush.msra.mxu0 0.0
      %1592 = vmatpush.msra.mxu0 0.0
      %1593 = vmatpush.msra.mxu0 0.0
      %1594 = vmatpush.msra.mxu0 0.0
      %1595 = vmatpush.msra.mxu0 0.0
      %1596 = vmatpush.msra.mxu0 0.0
      %1597 = vmatpush.msra.mxu0 0.0
      %1598 = vmatpush.msra.mxu0 0.0
      %1599 = vmatpush.msra.mxu0 0.0
      %1600 = vmatpush.msra.mxu0 0.0
      %1601 = vmatpush.msra.mxu0 0.0
      %1602 = vmatpush.msra.mxu0 0.0
      %1603 = vmatpush.msra.mxu0 %v1588
      %1604 = vmatpush.msra.mxu0 %v1587
      %1605 = vmatmul.f32.gmra.mxu0 %v1565
      %v1606 = vpop.f32.mrf.mxu0
      %v1607 = vadd.f32 0.0, %v1606
      %1608 = vdwg.mxu0
      %v1609 = vmax.f32 %v1585, %v1607
      %1611 = vrot.lane.b32.xlu0 %v1609, 41
      %v1612 = vpop.permute.xlu0 %1611
      %vm1614 = vcmask 396616
      %1615 = vst.msk [vmem:[%s253] sm:$0xf] %vm1614, %v1612
      %v1617 = vmax.f32 %v1375, %v1555
      %v1618 = vld [vmem:[%s3] sm:$0xff]
      %v1619 = vld [vmem:[%s3 + $0x8] sm:$0xff]
      %1621 = vrot.lane.b32.xlu0 %v1617, 112
      %v1622 = vpop.permute.xlu0 %1621
      %v1623 = vsel %vm1389, %v1622, 0
      %1625 = vmatpush.msra.mxu0 0.0
      %1626 = vmatpush.msra.mxu0 0.0
      %1627 = vmatpush.msra.mxu0 0.0
      %1628 = vmatpush.msra.mxu0 0.0
      %1629 = vmatpush.msra.mxu0 0.0
      %1630 = vmatpush.msra.mxu0 0.0
      %1631 = vmatpush.msra.mxu0 0.0
      %1632 = vmatpush.msra.mxu0 0.0
      %1633 = vmatpush.msra.mxu0 0.0
      %1634 = vmatpush.msra.mxu0 0.0
      %1635 = vmatpush.msra.mxu0 0.0
      %1636 = vmatpush.msra.mxu0 0.0
      %1637 = vmatpush.msra.mxu0 0.0
      %1638 = vmatpush.msra.mxu0 0.0
      %1639 = vmatpush.msra.mxu0 %v1619
      %1640 = vmatpush.msra.mxu0 %v1618
      %1641 = vmatmul.f32.gmra.mxu0 %v1623
      %v1642 = vpop.f32.mrf.mxu0
      %v1643 = vadd.f32 0.0, %v1642
      %1644 = vdwg.mxu0
      %v1645 = vld [vmem:[%s1413] sm:$0xff]
      %v1646 = vld [vmem:[%s1413 + $0x8] sm:$0xff]
      %1647 = vmatpush.msra.mxu0 0.0
      %1648 = vmatpush.msra.mxu0 0.0
      %1649 = vmatpush.msra.mxu0 0.0
      %1650 = vmatpush.msra.mxu0 0.0
      %1651 = vmatpush.msra.mxu0 0.0
      %1652 = vmatpush.msra.mxu0 0.0
      %1653 = vmatpush.msra.mxu0 0.0
      %1654 = vmatpush.msra.mxu0 0.0
      %1655 = vmatpush.msra.mxu0 0.0
      %1656 = vmatpush.msra.mxu0 0.0
      %1657 = vmatpush.msra.mxu0 0.0
      %1658 = vmatpush.msra.mxu0 0.0
      %1659 = vmatpush.msra.mxu0 0.0
      %1660 = vmatpush.msra.mxu0 0.0
      %1661 = vmatpush.msra.mxu0 %v1646
      %1662 = vmatpush.msra.mxu0 %v1645
      %1663 = vmatmul.f32.gmra.mxu0 %v1623
      %v1664 = vpop.f32.mrf.mxu0
      %v1665 = vadd.f32 0.0, %v1664
      %1666 = vdwg.mxu0
      %v1667 = vmax.f32 %v1643, %v1665
      %1669 = vrot.lane.b32.xlu0 %v1667, 51
      %v1670 = vpop.permute.xlu0 %1669
      %vm1672 = vcmask 478616
      %1673 = vst.msk [vmem:[%s253] sm:$0xf] %vm1672, %v1670
      %v1674 = vld [vmem:[%s3] sm:$0xff]
      %v1675 = vld [vmem:[%s3 + $0x8] sm:$0xff]
      %1676 = vrot.lane.b32.xlu0 %v1617, 76
      %v1677 = vpop.permute.xlu0 %1676
      %v1678 = vsel %vm1389, %v1677, 0
      %1680 = vmatpush.msra.mxu0 0.0
      %1681 = vmatpush.msra.mxu0 0.0
      %1682 = vmatpush.msra.mxu0 0.0
      %1683 = vmatpush.msra.mxu0 0.0
      %1684 = vmatpush.msra.mxu0 0.0
      %1685 = vmatpush.msra.mxu0 0.0
      %1686 = vmatpush.msra.mxu0 0.0
      %1687 = vmatpush.msra.mxu0 0.0
      %1688 = vmatpush.msra.mxu0 0.0
      %1689 = vmatpush.msra.mxu0 0.0
      %1690 = vmatpush.msra.mxu0 0.0
      %1691 = vmatpush.msra.mxu0 0.0
      %1692 = vmatpush.msra.mxu0 0.0
      %1693 = vmatpush.msra.mxu0 0.0
      %1694 = vmatpush.msra.mxu0 %v1675
      %1695 = vmatpush.msra.mxu0 %v1674
      %1696 = vmatmul.f32.gmra.mxu0 %v1678
      %v1697 = vpop.f32.mrf.mxu0
      %v1698 = vadd.f32 0.0, %v1697
      %1699 = vdwg.mxu0
      %v1700 = vld [vmem:[%s1413] sm:$0xff]
      %v1701 = vld [vmem:[%s1413 + $0x8] sm:$0xff]
      %1702 = vmatpush.msra.mxu0 0.0
      %1703 = vmatpush.msra.mxu0 0.0
      %1704 = vmatpush.msra.mxu0 0.0
      %1705 = vmatpush.msra.mxu0 0.0
      %1706 = vmatpush.msra.mxu0 0.0
      %1707 = vmatpush.msra.mxu0 0.0
      %1708 = vmatpush.msra.mxu0 0.0
      %1709 = vmatpush.msra.mxu0 0.0
      %1710 = vmatpush.msra.mxu0 0.0
      %1711 = vmatpush.msra.mxu0 0.0
      %1712 = vmatpush.msra.mxu0 0.0
      %1713 = vmatpush.msra.mxu0 0.0
      %1714 = vmatpush.msra.mxu0 0.0
      %1715 = vmatpush.msra.mxu0 0.0
      %1716 = vmatpush.msra.mxu0 %v1701
      %1717 = vmatpush.msra.mxu0 %v1700
      %1718 = vmatmul.f32.gmra.mxu0 %v1678
      %v1719 = vpop.f32.mrf.mxu0
      %v1720 = vadd.f32 0.0, %v1719
      %1721 = vdwg.mxu0
      %v1722 = vmax.f32 %v1698, %v1720
      %1724 = vrot.lane.b32.xlu0 %v1722, 61
      %v1725 = vpop.permute.xlu0 %1724
      %vm1727 = vcmask 560616
      %1728 = vst.msk [vmem:[%s253] sm:$0xf] %vm1727, %v1725
      %v1729 = vld [vmem:[%s3] sm:$0xff]
      %v1730 = vld [vmem:[%s3 + $0x8] sm:$0xff]
      %1731 = vrot.lane.b32.xlu0 %v1617, 40
      %v1732 = vpop.permute.xlu0 %1731
      %v1733 = vsel %vm1389, %v1732, 0
      %1735 = vmatpush.msra.mxu0 0.0
      %1736 = vmatpush.msra.mxu0 0.0
      %1737 = vmatpush.msra.mxu0 0.0
      %1738 = vmatpush.msra.mxu0 0.0
      %1739 = vmatpush.msra.mxu0 0.0
      %1740 = vmatpush.msra.mxu0 0.0
      %1741 = vmatpush.msra.mxu0 0.0
      %1742 = vmatpush.msra.mxu0 0.0
      %1743 = vmatpush.msra.mxu0 0.0
      %1744 = vmatpush.msra.mxu0 0.0
      %1745 = vmatpush.msra.mxu0 0.0
      %1746 = vmatpush.msra.mxu0 0.0
      %1747 = vmatpush.msra.mxu0 0.0
      %1748 = vmatpush.msra.mxu0 0.0
      %1749 = vmatpush.msra.mxu0 %v1730
      %1750 = vmatpush.msra.mxu0 %v1729
      %1751 = vmatmul.f32.gmra.mxu0 %v1733
      %v1752 = vpop.f32.mrf.mxu0
      %v1753 = vadd.f32 0.0, %v1752
      %1754 = vdwg.mxu0
      %v1755 = vld [vmem:[%s1413] sm:$0xff]
      %v1756 = vld [vmem:[%s1413 + $0x8] sm:$0xff]
      %1757 = vmatpush.msra.mxu0 0.0
      %1758 = vmatpush.msra.mxu0 0.0
      %1759 = vmatpush.msra.mxu0 0.0
      %1760 = vmatpush.msra.mxu0 0.0
      %1761 = vmatpush.msra.mxu0 0.0
      %1762 = vmatpush.msra.mxu0 0.0
      %1763 = vmatpush.msra.mxu0 0.0
      %1764 = vmatpush.msra.mxu0 0.0
      %1765 = vmatpush.msra.mxu0 0.0
      %1766 = vmatpush.msra.mxu0 0.0
      %1767 = vmatpush.msra.mxu0 0.0
      %1768 = vmatpush.msra.mxu0 0.0
      %1769 = vmatpush.msra.mxu0 0.0
      %1770 = vmatpush.msra.mxu0 0.0
      %1771 = vmatpush.msra.mxu0 %v1756
      %1772 = vmatpush.msra.mxu0 %v1755
      %1773 = vmatmul.f32.gmra.mxu0 %v1733
      %v1774 = vpop.f32.mrf.mxu0
      %v1775 = vadd.f32 0.0, %v1774
      %1776 = vdwg.mxu0
      %v1777 = vmax.f32 %v1753, %v1775
      %1779 = vrot.lane.b32.xlu0 %v1777, 71
      %v1780 = vpop.permute.xlu0 %1779
      %vm1782 = vcmask 642616
      %1783 = vst.msk [vmem:[%s253] sm:$0xf] %vm1782, %v1780
      %1785 = vrot.lane.b32.xlu0 %v1376, 110
      %v1786 = vpop.permute.xlu0 %1785
      %v1788 = vmax.f32 %v1375, %v1786
      %v1789 = vmax.f32 %v1376, %v1786
      %v1790 = vld [vmem:[%s3] sm:$0xff]
      %v1791 = vld [vmem:[%s3 + $0x8] sm:$0xff]
      %1794 = vrot.lane.b32.xlu0 %v1788, 4
      %v1795 = vpop.permute.xlu0 %1794
      %1796 = vrot.lane.b32.xlu0 %v1789, 4
      %v1797 = vpop.permute.xlu0 %1796
      %v1798 = vsel %vm339, %v1795, %v1797
      %v1799 = vsel %vm1389, %v1798, 0
      %1801 = vmatpush.msra.mxu0 0.0
      %1802 = vmatpush.msra.mxu0 0.0
      %1803 = vmatpush.msra.mxu0 0.0
      %1804 = vmatpush.msra.mxu0 0.0
      %1805 = vmatpush.msra.mxu0 0.0
      %1806 = vmatpush.msra.mxu0 0.0
      %1807 = vmatpush.msra.mxu0 0.0
      %1808 = vmatpush.msra.mxu0 0.0
      %1809 = vmatpush.msra.mxu0 0.0
      %1810 = vmatpush.msra.mxu0 0.0
      %1811 = vmatpush.msra.mxu0 0.0
      %1812 = vmatpush.msra.mxu0 0.0
      %1813 = vmatpush.msra.mxu0 0.0
      %1814 = vmatpush.msra.mxu0 0.0
      %1815 = vmatpush.msra.mxu0 %v1791
      %1816 = vmatpush.msra.mxu0 %v1790
      %1817 = vmatmul.f32.gmra.mxu0 %v1799
      %v1818 = vpop.f32.mrf.mxu0
      %v1819 = vadd.f32 0.0, %v1818
      %1820 = vdwg.mxu0
      %v1821 = vld [vmem:[%s1413] sm:$0xff]
      %v1822 = vld [vmem:[%s1413 + $0x8] sm:$0xff]
      %1823 = vmatpush.msra.mxu0 0.0
      %1824 = vmatpush.msra.mxu0 0.0
      %1825 = vmatpush.msra.mxu0 0.0
      %1826 = vmatpush.msra.mxu0 0.0
      %1827 = vmatpush.msra.mxu0 0.0
      %1828 = vmatpush.msra.mxu0 0.0
      %1829 = vmatpush.msra.mxu0 0.0
      %1830 = vmatpush.msra.mxu0 0.0
      %1831 = vmatpush.msra.mxu0 0.0
      %1832 = vmatpush.msra.mxu0 0.0
      %1833 = vmatpush.msra.mxu0 0.0
      %1834 = vmatpush.msra.mxu0 0.0
      %1835 = vmatpush.msra.mxu0 0.0
      %1836 = vmatpush.msra.mxu0 0.0
      %1837 = vmatpush.msra.mxu0 %v1822
      %1838 = vmatpush.msra.mxu0 %v1821
      %1839 = vmatmul.f32.gmra.mxu0 %v1799
      %v1840 = vpop.f32.mrf.mxu0
      %v1841 = vadd.f32 0.0, %v1840
      %1842 = vdwg.mxu0
      %v1843 = vmax.f32 %v1819, %v1841
      %1845 = vrot.lane.b32.xlu0 %v1843, 81
      %v1846 = vpop.permute.xlu0 %1845
      %vm1848 = vcmask 724616
      %1849 = vst.msk [vmem:[%s253] sm:$0xf] %vm1848, %v1846
      %v1850 = vld [vmem:[%s3] sm:$0xff]
      %v1851 = vld [vmem:[%s3 + $0x8] sm:$0xff]
      %1852 = vrot.lane.b32.xlu0 %v1789, 96
      %v1853 = vpop.permute.xlu0 %1852
      %v1854 = vsel %vm1389, %v1853, 0
      %1856 = vmatpush.msra.mxu0 0.0
      %1857 = vmatpush.msra.mxu0 0.0
      %1858 = vmatpush.msra.mxu0 0.0
      %1859 = vmatpush.msra.mxu0 0.0
      %1860 = vmatpush.msra.mxu0 0.0
      %1861 = vmatpush.msra.mxu0 0.0
      %1862 = vmatpush.msra.mxu0 0.0
      %1863 = vmatpush.msra.mxu0 0.0
      %1864 = vmatpush.msra.mxu0 0.0
      %1865 = vmatpush.msra.mxu0 0.0
      %1866 = vmatpush.msra.mxu0 0.0
      %1867 = vmatpush.msra.mxu0 0.0
      %1868 = vmatpush.msra.mxu0 0.0
      %1869 = vmatpush.msra.mxu0 0.0
      %1870 = vmatpush.msra.mxu0 %v1851
      %1871 = vmatpush.msra.mxu0 %v1850
      %1872 = vmatmul.f32.gmra.mxu0 %v1854
      %v1873 = vpop.f32.mrf.mxu0
      %v1874 = vadd.f32 0.0, %v1873
      %1875 = vdwg.mxu0
      %v1876 = vld [vmem:[%s1413] sm:$0xff]
      %v1877 = vld [vmem:[%s1413 + $0x8] sm:$0xff]
      %1878 = vmatpush.msra.mxu0 0.0
      %1879 = vmatpush.msra.mxu0 0.0
      %1880 = vmatpush.msra.mxu0 0.0
      %1881 = vmatpush.msra.mxu0 0.0
      %1882 = vmatpush.msra.mxu0 0.0
      %1883 = vmatpush.msra.mxu0 0.0
      %1884 = vmatpush.msra.mxu0 0.0
      %1885 = vmatpush.msra.mxu0 0.0
      %1886 = vmatpush.msra.mxu0 0.0
      %1887 = vmatpush.msra.mxu0 0.0
      %1888 = vmatpush.msra.mxu0 0.0
      %1889 = vmatpush.msra.mxu0 0.0
      %1890 = vmatpush.msra.mxu0 0.0
      %1891 = vmatpush.msra.mxu0 0.0
      %1892 = vmatpush.msra.mxu0 %v1877
      %1893 = vmatpush.msra.mxu0 %v1876
      %1894 = vmatmul.f32.gmra.mxu0 %v1854
      %v1895 = vpop.f32.mrf.mxu0
      %v1896 = vadd.f32 0.0, %v1895
      %1897 = vdwg.mxu0
      %v1898 = vmax.f32 %v1874, %v1896
      %1900 = vrot.lane.b32.xlu0 %v1898, 91
      %v1901 = vpop.permute.xlu0 %1900
      %vm1903 = vcmask 806616
      %1904 = vst.msk [vmem:[%s253] sm:$0xf] %vm1903, %v1901
      %v1905 = vld [vmem:[%s3] sm:$0xff]
      %v1906 = vld [vmem:[%s3 + $0x8] sm:$0xff]
      %1907 = vrot.lane.b32.xlu0 %v1789, 60
      %v1908 = vpop.permute.xlu0 %1907
      %v1909 = vsel %vm1389, %v1908, 0
      %1911 = vmatpush.msra.mxu0 0.0
      %1912 = vmatpush.msra.mxu0 0.0
      %1913 = vmatpush.msra.mxu0 0.0
      %1914 = vmatpush.msra.mxu0 0.0
      %1915 = vmatpush.msra.mxu0 0.0
      %1916 = vmatpush.msra.mxu0 0.0
      %1917 = vmatpush.msra.mxu0 0.0
      %1918 = vmatpush.msra.mxu0 0.0
      %1919 = vmatpush.msra.mxu0 0.0
      %1920 = vmatpush.msra.mxu0 0.0
      %1921 = vmatpush.msra.mxu0 0.0
      %1922 = vmatpush.msra.mxu0 0.0
      %1923 = vmatpush.msra.mxu0 0.0
      %1924 = vmatpush.msra.mxu0 0.0
      %1925 = vmatpush.msra.mxu0 %v1906
      %1926 = vmatpush.msra.mxu0 %v1905
      %1927 = vmatmul.f32.gmra.mxu0 %v1909
      %v1928 = vpop.f32.mrf.mxu0
      %v1929 = vadd.f32 0.0, %v1928
      %1930 = vdwg.mxu0
      %v1931 = vld [vmem:[%s1413] sm:$0xff]
      %v1932 = vld [vmem:[%s1413 + $0x8] sm:$0xff]
      %1933 = vmatpush.msra.mxu0 0.0
      %1934 = vmatpush.msra.mxu0 0.0
      %1935 = vmatpush.msra.mxu0 0.0
      %1936 = vmatpush.msra.mxu0 0.0
      %1937 = vmatpush.msra.mxu0 0.0
      %1938 = vmatpush.msra.mxu0 0.0
      %1939 = vmatpush.msra.mxu0 0.0
      %1940 = vmatpush.msra.mxu0 0.0
      %1941 = vmatpush.msra.mxu0 0.0
      %1942 = vmatpush.msra.mxu0 0.0
      %1943 = vmatpush.msra.mxu0 0.0
      %1944 = vmatpush.msra.mxu0 0.0
      %1945 = vmatpush.msra.mxu0 0.0
      %1946 = vmatpush.msra.mxu0 0.0
      %1947 = vmatpush.msra.mxu0 %v1932
      %1948 = vmatpush.msra.mxu0 %v1931
      %1949 = vmatmul.f32.gmra.mxu0 %v1909
      %v1950 = vpop.f32.mrf.mxu0
      %v1951 = vadd.f32 0.0, %v1950
      %1952 = vdwg.mxu0
      %v1953 = vmax.f32 %v1929, %v1951
      %1955 = vrot.lane.b32.xlu0 %v1953, 101
      %v1956 = vpop.permute.xlu0 %1955
      %vm1958 = vcmask 888616
      %1959 = vst.msk [vmem:[%s253] sm:$0xf] %vm1958, %v1956
      %1961 = vrot.lane.b32.xlu0 %v1377, 110
      %v1962 = vpop.permute.xlu0 %1961
      %v1963 = vsel %vm1556, %v1786, %v1962
      %v1965 = vmax.f32 %v1376, %v1963
      %v1966 = vld [vmem:[%s3] sm:$0xff]
      %v1967 = vld [vmem:[%s3 + $0x8] sm:$0xff]
      %1969 = vrot.lane.b32.xlu0 %v1965, 24
      %v1970 = vpop.permute.xlu0 %1969
      %v1971 = vsel %vm1389, %v1970, 0
      %1973 = vmatpush.msra.mxu0 0.0
      %1974 = vmatpush.msra.mxu0 0.0
      %1975 = vmatpush.msra.mxu0 0.0
      %1976 = vmatpush.msra.mxu0 0.0
      %1977 = vmatpush.msra.mxu0 0.0
      %1978 = vmatpush.msra.mxu0 0.0
      %1979 = vmatpush.msra.mxu0 0.0
      %1980 = vmatpush.msra.mxu0 0.0
      %1981 = vmatpush.msra.mxu0 0.0
      %1982 = vmatpush.msra.mxu0 0.0
      %1983 = vmatpush.msra.mxu0 0.0
      %1984 = vmatpush.msra.mxu0 0.0
      %1985 = vmatpush.msra.mxu0 0.0
      %1986 = vmatpush.msra.mxu0 0.0
      %1987 = vmatpush.msra.mxu0 %v1967
      %1988 = vmatpush.msra.mxu0 %v1966
      %1989 = vmatmul.f32.gmra.mxu0 %v1971
      %v1990 = vpop.f32.mrf.mxu0
      %v1991 = vadd.f32 0.0, %v1990
      %1992 = vdwg.mxu0
      %v1993 = vld [vmem:[%s1413] sm:$0xff]
      %v1994 = vld [vmem:[%s1413 + $0x8] sm:$0xff]
      %1995 = vmatpush.msra.mxu0 0.0
      %1996 = vmatpush.msra.mxu0 0.0
      %1997 = vmatpush.msra.mxu0 0.0
      %1998 = vmatpush.msra.mxu0 0.0
      %1999 = vmatpush.msra.mxu0 0.0
      %2000 = vmatpush.msra.mxu0 0.0
      %2001 = vmatpush.msra.mxu0 0.0
      %2002 = vmatpush.msra.mxu0 0.0
      %2003 = vmatpush.msra.mxu0 0.0
      %2004 = vmatpush.msra.mxu0 0.0
      %2005 = vmatpush.msra.mxu0 0.0
      %2006 = vmatpush.msra.mxu0 0.0
      %2007 = vmatpush.msra.mxu0 0.0
      %2008 = vmatpush.msra.mxu0 0.0
      %2009 = vmatpush.msra.mxu0 %v1994
      %2010 = vmatpush.msra.mxu0 %v1993
      %2011 = vmatmul.f32.gmra.mxu0 %v1971
      %v2012 = vpop.f32.mrf.mxu0
      %v2013 = vadd.f32 0.0, %v2012
      %2014 = vdwg.mxu0
      %v2015 = vmax.f32 %v1991, %v2013
      %2017 = vrot.lane.b32.xlu0 %v2015, 111
      %v2018 = vpop.permute.xlu0 %2017
      %vm2020 = vcmask 970616
      %2021 = vst.msk [vmem:[%s253] sm:$0xf] %vm2020, %v2018
      %v2023 = vmax.f32 %v1377, %v1962
      %v2024 = vld [vmem:[%s3] sm:$0xff]
      %v2025 = vld [vmem:[%s3 + $0x8] sm:$0xff]
      %2027 = vrot.lane.b32.xlu0 %v2023, 116
      %v2028 = vpop.permute.xlu0 %2027
      %v2029 = vsel %vm1389, %v2028, 0
      %2031 = vmatpush.msra.mxu0 0.0
      %2032 = vmatpush.msra.mxu0 0.0
      %2033 = vmatpush.msra.mxu0 0.0
      %2034 = vmatpush.msra.mxu0 0.0
      %2035 = vmatpush.msra.mxu0 0.0
      %2036 = vmatpush.msra.mxu0 0.0
      %2037 = vmatpush.msra.mxu0 0.0
      %2038 = vmatpush.msra.mxu0 0.0
      %2039 = vmatpush.msra.mxu0 0.0
      %2040 = vmatpush.msra.mxu0 0.0
      %2041 = vmatpush.msra.mxu0 0.0
      %2042 = vmatpush.msra.mxu0 0.0
      %2043 = vmatpush.msra.mxu0 0.0
      %2044 = vmatpush.msra.mxu0 0.0
      %2045 = vmatpush.msra.mxu0 %v2025
      %2046 = vmatpush.msra.mxu0 %v2024
      %2047 = vmatmul.f32.gmra.mxu0 %v2029
      %v2048 = vpop.f32.mrf.mxu0
      %v2049 = vadd.f32 0.0, %v2048
      %2050 = vdwg.mxu0
      %v2051 = vld [vmem:[%s1413] sm:$0xff]
      %v2052 = vld [vmem:[%s1413 + $0x8] sm:$0xff]
      %2053 = vmatpush.msra.mxu0 0.0
      %2054 = vmatpush.msra.mxu0 0.0
      %2055 = vmatpush.msra.mxu0 0.0
      %2056 = vmatpush.msra.mxu0 0.0
      %2057 = vmatpush.msra.mxu0 0.0
      %2058 = vmatpush.msra.mxu0 0.0
      %2059 = vmatpush.msra.mxu0 0.0
      %2060 = vmatpush.msra.mxu0 0.0
      %2061 = vmatpush.msra.mxu0 0.0
      %2062 = vmatpush.msra.mxu0 0.0
      %2063 = vmatpush.msra.mxu0 0.0
      %2064 = vmatpush.msra.mxu0 0.0
      %2065 = vmatpush.msra.mxu0 0.0
      %2066 = vmatpush.msra.mxu0 0.0
      %2067 = vmatpush.msra.mxu0 %v2052
      %2068 = vmatpush.msra.mxu0 %v2051
      %2069 = vmatmul.f32.gmra.mxu0 %v2029
      %v2070 = vpop.f32.mrf.mxu0
      %v2071 = vadd.f32 0.0, %v2070
      %2072 = vdwg.mxu0
      %v2073 = vmax.f32 %v2049, %v2071
      %2075 = vrot.lane.b32.xlu0 %v2073, 121
      %v2076 = vpop.permute.xlu0 %2075
      %v2077 = vrot.slane %v2076, 4
      %vm2078 = vcmask 990208
      %v2079 = vsel %vm2078, %v2077, %v2076
      %vm2081 = vcmask 1044424
      %vm2082 = vcmask 7172
      %vm2083 = vmor %vm2082, %vm2081
      %2084 = vst.msk [vmem:[%s253] sm:$0xff] %vm2083, %v2079
      %v2085 = vld [vmem:[%s3] sm:$0xff]
      %v2086 = vld [vmem:[%s3 + $0x8] sm:$0xff]
      %2087 = vrot.lane.b32.xlu0 %v2023, 80
      %v2088 = vpop.permute.xlu0 %2087
      %v2089 = vsel %vm1389, %v2088, 0
      %2091 = vmatpush.msra.mxu0 0.0
      %2092 = vmatpush.msra.mxu0 0.0
      %2093 = vmatpush.msra.mxu0 0.0
      %2094 = vmatpush.msra.mxu0 0.0
      %2095 = vmatpush.msra.mxu0 0.0
      %2096 = vmatpush.msra.mxu0 0.0
      %2097 = vmatpush.msra.mxu0 0.0
      %2098 = vmatpush.msra.mxu0 0.0
      %2099 = vmatpush.msra.mxu0 0.0
      %2100 = vmatpush.msra.mxu0 0.0
      %2101 = vmatpush.msra.mxu0 0.0
      %2102 = vmatpush.msra.mxu0 0.0
      %2103 = vmatpush.msra.mxu0 0.0
      %2104 = vmatpush.msra.mxu0 0.0
      %2105 = vmatpush.msra.mxu0 %v2086
      %2106 = vmatpush.msra.mxu0 %v2085
      %2107 = vmatmul.f32.gmra.mxu0 %v2089
      %v2108 = vpop.f32.mrf.mxu0
      %v2109 = vadd.f32 0.0, %v2108
      %2110 = vdwg.mxu0
      %v2111 = vld [vmem:[%s1413] sm:$0xff]
      %v2112 = vld [vmem:[%s1413 + $0x8] sm:$0xff]
      %2113 = vmatpush.msra.mxu0 0.0
      %2114 = vmatpush.msra.mxu0 0.0
      %2115 = vmatpush.msra.mxu0 0.0
      %2116 = vmatpush.msra.mxu0 0.0
      %2117 = vmatpush.msra.mxu0 0.0
      %2118 = vmatpush.msra.mxu0 0.0
      %2119 = vmatpush.msra.mxu0 0.0
      %2120 = vmatpush.msra.mxu0 0.0
      %2121 = vmatpush.msra.mxu0 0.0
      %2122 = vmatpush.msra.mxu0 0.0
      %2123 = vmatpush.msra.mxu0 0.0
      %2124 = vmatpush.msra.mxu0 0.0
      %2125 = vmatpush.msra.mxu0 0.0
      %2126 = vmatpush.msra.mxu0 0.0
      %2127 = vmatpush.msra.mxu0 %v2112
      %2128 = vmatpush.msra.mxu0 %v2111
      %2129 = vmatmul.f32.gmra.mxu0 %v2089
      %v2130 = vpop.f32.mrf.mxu0
      %v2131 = vadd.f32 0.0, %v2130
      %2132 = vdwg.mxu0
      %v2133 = vmax.f32 %v2109, %v2131
      %2135 = vrot.lane.b32.xlu0 %v2133, 3
      %v2136 = vpop.permute.xlu0 %2135
      %vm2138 = vcmask 85016
      %2139 = vst.msk [vmem:[%s253 + $0x4] sm:$0xf] %vm2138, %v2136
      %v2140 = vld [vmem:[%s3] sm:$0xff]
      %v2141 = vld [vmem:[%s3 + $0x8] sm:$0xff]
      %2142 = vrot.lane.b32.xlu0 %v2023, 44
      %v2143 = vpop.permute.xlu0 %2142
      %v2144 = vsel %vm1389, %v2143, 0
      %2146 = vmatpush.msra.mxu0 0.0
      %2147 = vmatpush.msra.mxu0 0.0
      %2148 = vmatpush.msra.mxu0 0.0
      %2149 = vmatpush.msra.mxu0 0.0
      %2150 = vmatpush.msra.mxu0 0.0
      %2151 = vmatpush.msra.mxu0 0.0
      %2152 = vmatpush.msra.mxu0 0.0
      %2153 = vmatpush.msra.mxu0 0.0
      %2154 = vmatpush.msra.mxu0 0.0
      %2155 = vmatpush.msra.mxu0 0.0
      %2156 = vmatpush.msra.mxu0 0.0
      %2157 = vmatpush.msra.mxu0 0.0
      %2158 = vmatpush.msra.mxu0 0.0
      %2159 = vmatpush.msra.mxu0 0.0
      %2160 = vmatpush.msra.mxu0 %v2141
      %2161 = vmatpush.msra.mxu0 %v2140
      %2162 = vmatmul.f32.gmra.mxu0 %v2144
      %v2163 = vpop.f32.mrf.mxu0
      %v2164 = vadd.f32 0.0, %v2163
      %2165 = vdwg.mxu0
      %v2166 = vld [vmem:[%s1413] sm:$0xff]
      %v2167 = vld [vmem:[%s1413 + $0x8] sm:$0xff]
      %2168 = vmatpush.msra.mxu0 0.0
      %2169 = vmatpush.msra.mxu0 0.0
      %2170 = vmatpush.msra.mxu0 0.0
      %2171 = vmatpush.msra.mxu0 0.0
      %2172 = vmatpush.msra.mxu0 0.0
      %2173 = vmatpush.msra.mxu0 0.0
      %2174 = vmatpush.msra.mxu0 0.0
      %2175 = vmatpush.msra.mxu0 0.0
      %2176 = vmatpush.msra.mxu0 0.0
      %2177 = vmatpush.msra.mxu0 0.0
      %2178 = vmatpush.msra.mxu0 0.0
      %2179 = vmatpush.msra.mxu0 0.0
      %2180 = vmatpush.msra.mxu0 0.0
      %2181 = vmatpush.msra.mxu0 0.0
      %2182 = vmatpush.msra.mxu0 %v2167
      %2183 = vmatpush.msra.mxu0 %v2166
      %2184 = vmatmul.f32.gmra.mxu0 %v2144
      %v2185 = vpop.f32.mrf.mxu0
      %v2186 = vadd.f32 0.0, %v2185
      %2187 = vdwg.mxu0
      %v2188 = vmax.f32 %v2164, %v2186
      %2190 = vrot.lane.b32.xlu0 %v2188, 13
      %v2191 = vpop.permute.xlu0 %2190
      %vm2193 = vcmask 167016
      %2194 = vst.msk [vmem:[%s253 + $0x4] sm:$0xf] %vm2193, %v2191
      %2196 = vrot.lane.b32.xlu0 %v1378, 110
      %v2197 = vpop.permute.xlu0 %2196
      %v2199 = vmax.f32 %v1377, %v2197
      %v2200 = vmax.f32 %v1378, %v2197
      %v2201 = vld [vmem:[%s3] sm:$0xff]
      %v2202 = vld [vmem:[%s3 + $0x8] sm:$0xff]
      %2205 = vrot.lane.b32.xlu0 %v2199, 8
      %v2206 = vpop.permute.xlu0 %2205
      %2207 = vrot.lane.b32.xlu0 %v2200, 8
      %v2208 = vpop.permute.xlu0 %2207
      %vm2209 = vcmask 64512
      %v2210 = vsel %vm2209, %v2206, %v2208
      %v2211 = vsel %vm1389, %v2210, 0
      %2213 = vmatpush.msra.mxu0 0.0
      %2214 = vmatpush.msra.mxu0 0.0
      %2215 = vmatpush.msra.mxu0 0.0
      %2216 = vmatpush.msra.mxu0 0.0
      %2217 = vmatpush.msra.mxu0 0.0
      %2218 = vmatpush.msra.mxu0 0.0
      %2219 = vmatpush.msra.mxu0 0.0
      %2220 = vmatpush.msra.mxu0 0.0
      %2221 = vmatpush.msra.mxu0 0.0
      %2222 = vmatpush.msra.mxu0 0.0
      %2223 = vmatpush.msra.mxu0 0.0
      %2224 = vmatpush.msra.mxu0 0.0
      %2225 = vmatpush.msra.mxu0 0.0
      %2226 = vmatpush.msra.mxu0 0.0
      %2227 = vmatpush.msra.mxu0 %v2202
      %2228 = vmatpush.msra.mxu0 %v2201
      %2229 = vmatmul.f32.gmra.mxu0 %v2211
      %v2230 = vpop.f32.mrf.mxu0
      %v2231 = vadd.f32 0.0, %v2230
      %2232 = vdwg.mxu0
      %v2233 = vld [vmem:[%s1413] sm:$0xff]
      %v2234 = vld [vmem:[%s1413 + $0x8] sm:$0xff]
      %2235 = vmatpush.msra.mxu0 0.0
      %2236 = vmatpush.msra.mxu0 0.0
      %2237 = vmatpush.msra.mxu0 0.0
      %2238 = vmatpush.msra.mxu0 0.0
      %2239 = vmatpush.msra.mxu0 0.0
      %2240 = vmatpush.msra.mxu0 0.0
      %2241 = vmatpush.msra.mxu0 0.0
      %2242 = vmatpush.msra.mxu0 0.0
      %2243 = vmatpush.msra.mxu0 0.0
      %2244 = vmatpush.msra.mxu0 0.0
      %2245 = vmatpush.msra.mxu0 0.0
      %2246 = vmatpush.msra.mxu0 0.0
      %2247 = vmatpush.msra.mxu0 0.0
      %2248 = vmatpush.msra.mxu0 0.0
      %2249 = vmatpush.msra.mxu0 %v2234
      %2250 = vmatpush.msra.mxu0 %v2233
      %2251 = vmatmul.f32.gmra.mxu0 %v2211
      %v2252 = vpop.f32.mrf.mxu0
      %v2253 = vadd.f32 0.0, %v2252
      %2254 = vdwg.mxu0
      %v2255 = vmax.f32 %v2231, %v2253
      %2257 = vrot.lane.b32.xlu0 %v2255, 23
      %v2258 = vpop.permute.xlu0 %2257
      %vm2260 = vcmask 249016
      %2261 = vst.msk [vmem:[%s253 + $0x4] sm:$0xf] %vm2260, %v2258
      %v2262 = vld [vmem:[%s3] sm:$0xff]
      %v2263 = vld [vmem:[%s3 + $0x8] sm:$0xff]
      %2264 = vrot.lane.b32.xlu0 %v2200, 100
      %v2265 = vpop.permute.xlu0 %2264
      %v2266 = vsel %vm1389, %v2265, 0
      %2268 = vmatpush.msra.mxu0 0.0
      %2269 = vmatpush.msra.mxu0 0.0
      %2270 = vmatpush.msra.mxu0 0.0
      %2271 = vmatpush.msra.mxu0 0.0
      %2272 = vmatpush.msra.mxu0 0.0
      %2273 = vmatpush.msra.mxu0 0.0
      %2274 = vmatpush.msra.mxu0 0.0
      %2275 = vmatpush.msra.mxu0 0.0
      %2276 = vmatpush.msra.mxu0 0.0
      %2277 = vmatpush.msra.mxu0 0.0
      %2278 = vmatpush.msra.mxu0 0.0
      %2279 = vmatpush.msra.mxu0 0.0
      %2280 = vmatpush.msra.mxu0 0.0
      %2281 = vmatpush.msra.mxu0 0.0
      %2282 = vmatpush.msra.mxu0 %v2263
      %2283 = vmatpush.msra.mxu0 %v2262
      %2284 = vmatmul.f32.gmra.mxu0 %v2266
      %v2285 = vpop.f32.mrf.mxu0
      %v2286 = vadd.f32 0.0, %v2285
      %2287 = vdwg.mxu0
      %v2288 = vld [vmem:[%s1413] sm:$0xff]
      %v2289 = vld [vmem:[%s1413 + $0x8] sm:$0xff]
      %2290 = vmatpush.msra.mxu0 0.0
      %2291 = vmatpush.msra.mxu0 0.0
      %2292 = vmatpush.msra.mxu0 0.0
      %2293 = vmatpush.msra.mxu0 0.0
      %2294 = vmatpush.msra.mxu0 0.0
      %2295 = vmatpush.msra.mxu0 0.0
      %2296 = vmatpush.msra.mxu0 0.0
      %2297 = vmatpush.msra.mxu0 0.0
      %2298 = vmatpush.msra.mxu0 0.0
      %2299 = vmatpush.msra.mxu0 0.0
      %2300 = vmatpush.msra.mxu0 0.0
      %2301 = vmatpush.msra.mxu0 0.0
      %2302 = vmatpush.msra.mxu0 0.0
      %2303 = vmatpush.msra.mxu0 0.0
      %2304 = vmatpush.msra.mxu0 %v2289
      %2305 = vmatpush.msra.mxu0 %v2288
      %2306 = vmatmul.f32.gmra.mxu0 %v2266
      %v2307 = vpop.f32.mrf.mxu0
      %v2308 = vadd.f32 0.0, %v2307
      %2309 = vdwg.mxu0
      %v2310 = vmax.f32 %v2286, %v2308
      %2312 = vrot.lane.b32.xlu0 %v2310, 33
      %v2313 = vpop.permute.xlu0 %2312
      %vm2315 = vcmask 331016
      %2316 = vst.msk [vmem:[%s253 + $0x4] sm:$0xf] %vm2315, %v2313
      %p2317 = scmp.lt.s32.totalorder %s19, 1
      %s2318 = scalar_select %p2317, %s19, 1
      %p2319 = scmp.lt.s32.totalorder %s20, 0
      %s2320 = scalar_select %p2319, %s20, 0
      %s2321 = smul.addr %s2320, 2
      %s2322 = smul.addr %s2318, 2
      %s2323 = sadd.s32 %s2321, %s2322
      %s2324 = smul.addr %s2323, 4
      %s2325 = scalar_lea.vmem %s4, %s2324
      // Predicated region
      $region37: #{vgg_backbone_forward.9} parent=35 // pred_check
        %p2326 = pneg %p146
      $region38: #{vgg_backbone_forward.9} parent=35 // pred_check_branch
        %2328 = sbr.rel (%p2326) target = $region40
      $region39: #{vgg_backbone_forward.9} parent=35 // pred_region
        _
      $region40: #{vgg_backbone_forward.9} parent=35 // pred_fallthru
        _
    $region36: #{vgg_backbone_forward.9} parent=5 // pred_fallthru
      _
    %p2329 = scmp.le.s32.totalorder 2, %s10
    // Predicated region
    $region41: #{vgg_backbone_forward.9} parent=5 // pred_check
      %p2330 = pneg %p2329
    $region42: #{vgg_backbone_forward.9} parent=5 // pred_check_branch
      %2332 = sbr.rel (%p2330) target = $region44
    $region43: #{vgg_backbone_forward.9} parent=5 // pred_region
      %s2333 = ssub.s32 %s10, 2
      // Predicated region
      $region45: #{vgg_backbone_forward.9} parent=43 // pred_check
        %p2334 = pneg %p152
      $region46: #{vgg_backbone_forward.9} parent=43 // pred_check_branch
        %2336 = sbr.rel (%p2334) target = $region48
      $region47: #{vgg_backbone_forward.9} parent=43 // pred_region
        %p2337 = scmp.lt.s32.totalorder %s21, 1
        %s2338 = scalar_select %p2337, %s21, 1
        %p2339 = scmp.lt.s32.totalorder %s22, 0
        %s2340 = scalar_select %p2339, %s22, 0
        %s2341 = smul.addr %s2340, 2
        %s2342 = smul.addr %s2338, 2
        %s2343 = sadd.s32 %s2341, %s2342
        %s2344 = smul.addr %s2343, 4
        %s2345 = scalar_lea.vmem %s4, %s2344
      $region48: #{vgg_backbone_forward.9} parent=43 // pred_fallthru
        _
    $region44: #{vgg_backbone_forward.9} parent=5 // pred_fallthru
      _
  $region6: #{vgg_backbone_forward.9} parent=0 // loop_footer
    %s14 = sadd.s32 1, %s10
  $region7: #{vgg_backbone_forward.9} parent=0 // loop_footer_branch
    %9 = sbr.rel target = $region3
  $region8: #{vgg_backbone_forward.9} parent=0 // loop_exit
    _

// kernel: vgg_backbone_forward.16
$region0: #{vgg_backbone_forward.16}
  #allocation0 [shape = 'u32[]', space=smem, size = 0x4, offset = 0x4, fixed_abs, tag = 'smem constant byte address 0x4 - core index']
  #allocation1 [shape = 'u32[72,128]{1,0:T(1,128)}', space=vmem, size = 0x9000, scoped, tag = 'internal scratch']
  %s0 = inlined_call_operand.vmem [shape: f32[2,32,16], index: 0, kind: input, shape index: {}]
  %s1 = inlined_call_operand.vmem [shape: f32[1,32,1], index: 1, kind: input, shape index: {}]
  %s2 = inlined_call_operand.vmem [shape: f32[1,32,1], index: 2, kind: input, shape index: {}]
  %s3 = inlined_call_operand.vmem [shape: f32[2,32,9], index: 3, kind: output, shape index: {}]
  %s4 = sld [smem:[#allocation0]]
  $region117: #{vgg_backbone_forward.16} parent=0
    _
  %s6 = ssub.s32 1, %s4
  %s7 = scalar_select 0, %s6, %s4
  $region1: #{vgg_backbone_forward.16} parent=0
    #allocation2 [shape = 'u8[32768]{0}', space=vmem, size = 0x8000, scoped, tag = 'input window, operand 0']
    #allocation3 [shape = 'u8[32768]{0}', space=vmem, size = 0x8000, scoped, tag = 'output window, operand 0']
    loop: start=0, step=1, limit=4
    $region2: #{vgg_backbone_forward.16} parent=1 // loop_pre_header
      _
    $region3: #{vgg_backbone_forward.16} parent=1 // loop_header
      %s9 = sphi 0, %s13
      %p10 = scmp.ge.s32.totalorder %s9, 4
      %s19 = sphi 0, %s21
      %s22 = sphi 0, %s19
      %s23 = sphi 0, %s22
      %s39 = sphi 0, %s23
      %s45 = sphi 0, %s47
      %s48 = sphi 0, %s45
      %s49 = sphi 0, %s48
      %s65 = sphi 0, %s49
      %s71 = sphi 0, %s73
      %s74 = sphi 0, %s71
      %s75 = sphi 0, %s74
      %s91 = sphi 0, %s75
      %s97 = sphi 0, %s99
      %s100 = sphi 0, %s97
      %s101 = sphi 0, %s100
      %s117 = sphi 0, %s101
    $region4: #{vgg_backbone_forward.16} parent=1 // loop_header_branch
      %12 = sbr.rel (%p10) target = $region8
    $region5: #{vgg_backbone_forward.16} parent=1 // loop_body
      %s14 = ssub.s32 %s9, 1
      %s15 = ssub.s32 %s9, 2
      %s16 = sadd.s32 %s9, 1
      %s17 = ssub.s32 %s9, %s16
      %p18 = scmp.eq.s32.totalorder %s17, 0
      %s20 = sadd.s32 %s19, 1
      %s21 = scalar_select %p18, %s19, %s20
      %p24 = pneg %p18
      %p25 = scmp.eq.s32.totalorder %s9, 1
      %p26 = por %p24, %p25
      %p27 = scmp.ne.s32.totalorder %s19, %s22
      %p28 = scmp.eq.s32.totalorder %s9, 0
      %p29 = por %p27, %p28
      %p30 = scmp.ne.s32.totalorder %s19, %s22
      %p31 = scmp.eq.s32.totalorder %s14, 1
      %p32 = por %p30, %p31
      %p33 = scmp.ne.s32.totalorder %s22, %s23
      %p34 = scmp.eq.s32.totalorder %s14, 0
      %p35 = por %p33, %p34
      %p36 = scmp.ne.s32.totalorder %s22, %s23
      %p37 = scmp.eq.s32.totalorder %s15, 1
      %p38 = por %p36, %p37
      %p40 = scmp.ne.s32.totalorder %s23, %s39
      %p41 = scmp.eq.s32.totalorder %s15, 0
      %p42 = por %p40, %p41
      %s43 = ssub.s32 %s9, %s16
      %p44 = scmp.eq.s32.totalorder %s43, 0
      %s46 = sadd.s32 %s45, 1
      %s47 = scalar_select %p44, %s45, %s46
      %p50 = pneg %p44
      %p51 = scmp.eq.s32.totalorder %s9, 1
      %p52 = por %p50, %p51
      %p53 = scmp.ne.s32.totalorder %s45, %s48
      %p54 = scmp.eq.s32.totalorder %s9, 0
      %p55 = por %p53, %p54
      %p56 = scmp.ne.s32.totalorder %s45, %s48
      %p57 = scmp.eq.s32.totalorder %s14, 1
      %p58 = por %p56, %p57
      %p59 = scmp.ne.s32.totalorder %s48, %s49
      %p60 = scmp.eq.s32.totalorder %s14, 0
      %p61 = por %p59, %p60
      %p62 = scmp.ne.s32.totalorder %s48, %s49
      %p63 = scmp.eq.s32.totalorder %s15, 1
      %p64 = por %p62, %p63
      %p66 = scmp.ne.s32.totalorder %s49, %s65
      %p67 = scmp.eq.s32.totalorder %s15, 0
      %p68 = por %p66, %p67
      %s69 = ssub.s32 %s9, %s16
      %p70 = scmp.eq.s32.totalorder %s69, 0
      %s72 = sadd.s32 %s71, 1
      %s73 = scalar_select %p70, %s71, %s72
      %p76 = pneg %p70
      %p77 = scmp.eq.s32.totalorder %s9, 1
      %p78 = por %p76, %p77
      %p79 = scmp.ne.s32.totalorder %s71, %s74
      %p80 = scmp.eq.s32.totalorder %s9, 0
      %p81 = por %p79, %p80
      %p82 = scmp.ne.s32.totalorder %s71, %s74
      %p83 = scmp.eq.s32.totalorder %s14, 1
      %p84 = por %p82, %p83
      %p85 = scmp.ne.s32.totalorder %s74, %s75
      %p86 = scmp.eq.s32.totalorder %s14, 0
      %p87 = por %p85, %p86
      %p88 = scmp.ne.s32.totalorder %s74, %s75
      %p89 = scmp.eq.s32.totalorder %s15, 1
      %p90 = por %p88, %p89
      %p92 = scmp.ne.s32.totalorder %s75, %s91
      %p93 = scmp.eq.s32.totalorder %s15, 0
      %p94 = por %p92, %p93
      %s95 = ssub.s32 %s9, %s16
      %p96 = scmp.eq.s32.totalorder %s95, 0
      %s98 = sadd.s32 %s97, 1
      %s99 = scalar_select %p96, %s97, %s98
      %p102 = pneg %p96
      %p103 = scmp.eq.s32.totalorder %s9, 1
      %p104 = por %p102, %p103
      %p105 = scmp.ne.s32.totalorder %s97, %s100
      %p106 = scmp.eq.s32.totalorder %s9, 0
      %p107 = por %p105, %p106
      %p108 = scmp.ne.s32.totalorder %s97, %s100
      %p109 = scmp.eq.s32.totalorder %s14, 1
      %p110 = por %p108, %p109
      %p111 = scmp.ne.s32.totalorder %s100, %s101
      %p112 = scmp.eq.s32.totalorder %s14, 0
      %p113 = por %p111, %p112
      %p114 = scmp.ne.s32.totalorder %s100, %s101
      %p115 = scmp.eq.s32.totalorder %s15, 1
      %p116 = por %p114, %p115
      %p118 = scmp.ne.s32.totalorder %s101, %s117
      %p119 = scmp.eq.s32.totalorder %s15, 0
      %p120 = por %p118, %p119
      %p121 = scmp.le.s32.totalorder 1, %s9
      %p122 = scmp.lt.s32.totalorder %s9, 3
      %p123 = pnand %p121, %p122
      %p124 = pneg %p123
      // Predicated region
      $region9: #{vgg_backbone_forward.16} parent=5 // pred_check
        _
      $region10: #{vgg_backbone_forward.16} parent=5 // pred_check_branch
        %126 = sbr.rel (%p123) target = $region12
      $region11: #{vgg_backbone_forward.16} parent=5 // pred_region
        %s127 = ssub.s32 %s9, 1
      $region12: #{vgg_backbone_forward.16} parent=5 // pred_fallthru
        _
      %p128 = scmp.lt.s32.totalorder %s9, 2
      // Predicated region
      $region13: #{vgg_backbone_forward.16} parent=5 // pred_check
        %p129 = pneg %p128
      $region14: #{vgg_backbone_forward.16} parent=5 // pred_check_branch
        %131 = sbr.rel (%p129) target = $region16
      $region15: #{vgg_backbone_forward.16} parent=5 // pred_region
        // Predicated region
        $region17: #{vgg_backbone_forward.16} parent=15 // pred_check
          %p132 = pneg %p29
        $region18: #{vgg_backbone_forward.16} parent=15 // pred_check_branch
          %134 = sbr.rel (%p132) target = $region20
        $region19: #{vgg_backbone_forward.16} parent=15 // pred_region
          %s135 = sand.u32 %s19, 1
          %s136 = sand.u32 %s19, 1
          %s137 = smul.addr %s136, 32
          %s138 = scalar_lea.vmem [#allocation2], %s137
          %s139 = smul.u32 2, %s9
          %s140 = smul.addr %s139, 8
          %s141 = scalar_lea.vmem %s0, %s140
          // Predicated region
          $region21: #{vgg_backbone_forward.16} parent=19 // pred_check
            _
          $region22: #{vgg_backbone_forward.16} parent=19 // pred_check_branch
            %143 = sbr.rel (0) target = $region24
          $region23: #{vgg_backbone_forward.16} parent=19 // pred_region
            // Predicated region
            $region25: #{vgg_backbone_forward.16} parent=23 // pred_check
              _
            $region26: #{vgg_backbone_forward.16} parent=23 // pred_check_branch
              %145 = sbr.rel (0) target = $region28
            $region27: #{vgg_backbone_forward.16} parent=23 // pred_region
              // Predicated region
              $region40: #{vgg_backbone_forward.16} parent=27 // pred_check
                _
              $region41: #{vgg_backbone_forward.16} parent=27 // pred_check_branch
                %167 = sbr.rel (0) target = $region43
              $region42: #{vgg_backbone_forward.16} parent=27 // pred_region
                loop: start=0, step=1, limit=1
                $region44: #{vgg_backbone_forward.16} parent=42 // loop_pre_header
                  _
                $region45: #{vgg_backbone_forward.16} parent=42 // loop_header
                  %s169 = sphi 0, %s173
                  %p170 = scmp.ge.s32.totalorder %s169, 1
                  %s174 = sphi %s141, %s141
                  %s175 = sphi %s138, %s138
                $region46: #{vgg_backbone_forward.16} parent=42 // loop_header_branch
                  %172 = sbr.rel (%p170) target = $region50
                $region47: #{vgg_backbone_forward.16} parent=42 // loop_body
                  %v176 = vld [vmem:[%s174] sm:$0xff]
                  %177 = vst [vmem:[%s175] sm:$0xff] %v176
                  %v178 = vld [vmem:[%s174 + $0x8] sm:$0xff]
                  %179 = vst [vmem:[%s175 + $0x8] sm:$0xff] %v178
                  %v180 = vld [vmem:[%s174 + $0x20] sm:$0xff]
                  %181 = vst [vmem:[%s175 + $0x10] sm:$0xff] %v180
                  %v182 = vld [vmem:[%s174 + $0x28] sm:$0xff]
                  %183 = vst [vmem:[%s175 + $0x18] sm:$0xff] %v182
                $region48: #{vgg_backbone_forward.16} parent=42 // loop_footer
                  %s173 = sadd.s32 1, %s169
                $region49: #{vgg_backbone_forward.16} parent=42 // loop_footer_branch
                  %168 = sbr.rel target = $region45
                $region50: #{vgg_backbone_forward.16} parent=42 // loop_exit
                  _
              $region43: #{vgg_backbone_forward.16} parent=27 // pred_fallthru
                _
              // Predicated region
              $region51: #{vgg_backbone_forward.16} parent=27 // pred_check
                _
              $region52: #{vgg_backbone_forward.16} parent=27 // pred_check_branch
                %185 = sbr.rel target = $region54
              $region53: #{vgg_backbone_forward.16} parent=27 // pred_region
                _
              $region54: #{vgg_backbone_forward.16} parent=27 // pred_fallthru
                _
            $region28: #{vgg_backbone_forward.16} parent=23 // pred_fallthru
              _
            // Predicated region
            $region29: #{vgg_backbone_forward.16} parent=23 // pred_check
              _
            $region30: #{vgg_backbone_forward.16} parent=23 // pred_check_branch
              %147 = sbr.rel target = $region32
            $region31: #{vgg_backbone_forward.16} parent=23 // pred_region
              %s149 = ssub.s32 256, 1
              loop: start=0, step=1, limit=1
              $region33: #{vgg_backbone_forward.16} parent=31 // loop_pre_header
                _
              $region34: #{vgg_backbone_forward.16} parent=31 // loop_header
                %s151 = sphi 0, %s155
                %p152 = scmp.ge.s32.totalorder %s151, 1
                %s156 = sphi %s141, %s141
                %s157 = sphi %s138, %s138
              $region35: #{vgg_backbone_forward.16} parent=31 // loop_header_branch
                %154 = sbr.rel (%p152) target = $region39
              $region36: #{vgg_backbone_forward.16} parent=31 // loop_body
                %v158 = vld [vmem:[%s156] sm:%s149]
                %159 = vst [vmem:[%s157] sm:%s149] %v158
                %v160 = vld [vmem:[%s156 + $0x8] sm:%s149]
                %161 = vst [vmem:[%s157 + $0x8] sm:%s149] %v160
                %v162 = vld [vmem:[%s156 + $0x20] sm:%s149]
                %163 = vst [vmem:[%s157 + $0x10] sm:%s149] %v162
                %v164 = vld [vmem:[%s156 + $0x28] sm:%s149]
                %165 = vst [vmem:[%s157 + $0x18] sm:%s149] %v164
              $region37: #{vgg_backbone_forward.16} parent=31 // loop_footer
                %s155 = sadd.s32 1, %s151
              $region38: #{vgg_backbone_forward.16} parent=31 // loop_footer_branch
                %150 = sbr.rel target = $region34
              $region39: #{vgg_backbone_forward.16} parent=31 // loop_exit
                _
            $region32: #{vgg_backbone_forward.16} parent=23 // pred_fallthru
              _
          $region24: #{vgg_backbone_forward.16} parent=19 // pred_fallthru
            _
          %186 = vnop
        $region20: #{vgg_backbone_forward.16} parent=15 // pred_fallthru
          _
        // Predicated region
        $region55: #{vgg_backbone_forward.16} parent=15 // pred_check
          %p187 = pneg %p55
        $region56: #{vgg_backbone_forward.16} parent=15 // pred_check_branch
          %189 = sbr.rel (%p187) target = $region58
        $region57: #{vgg_backbone_forward.16} parent=15 // pred_region
          %s190 = smul.u32 2, %s9
          %p191 = scmp.lt.s32.totalorder %s190, 3
          %s192 = scalar_select %p191, %s190, 3
          %s193 = smul.addr %s192, 8
          %s194 = scalar_lea.vmem %s1, %s193
          %s195 = smul.u32 2, %s9
        $region58: #{vgg_backbone_forward.16} parent=15 // pred_fallthru
          _
        // Predicated region
        $region59: #{vgg_backbone_forward.16} parent=15 // pred_check
          %p196 = pneg %p81
        $region60: #{vgg_backbone_forward.16} parent=15 // pred_check_branch
          %198 = sbr.rel (%p196) target = $region62
        $region61: #{vgg_backbone_forward.16} parent=15 // pred_region
          %s199 = smul.u32 2, %s9
          %p200 = scmp.lt.s32.totalorder %s199, 3
          %s201 = scalar_select %p200, %s199, 3
          %s202 = smul.addr %s201, 8
          %s203 = scalar_lea.vmem %s2, %s202
          %s204 = smul.u32 2, %s9
        $region62: #{vgg_backbone_forward.16} parent=15 // pred_fallthru
          _
      $region16: #{vgg_backbone_forward.16} parent=5 // pred_fallthru
        _
      %p205 = scmp.le.s32.totalorder 1, %s9
      %p206 = scmp.lt.s32.totalorder %s9, 3
      %p207 = pnand %p205, %p206
      %p208 = pneg %p207
      // Predicated region
      $region63: #{vgg_backbone_forward.16} parent=5 // pred_check
        _
      $region64: #{vgg_backbone_forward.16} parent=5 // pred_check_branch
        %210 = sbr.rel (%p207) target = $region66
      $region65: #{vgg_backbone_forward.16} parent=5 // pred_region
        %s211 = ssub.s32 %s9, 1
        %s212 = sand.u32 %s22, 1
        %s213 = sand.u32 %s22, 1
        %s214 = smul.addr %s213, 32
        %s215 = scalar_lea.vmem [#allocation2], %s214
        // Predicated region
        $region67: #{vgg_backbone_forward.16} parent=65 // pred_check
          %p216 = pneg %p35
        $region68: #{vgg_backbone_forward.16} parent=65 // pred_check_branch
          %218 = sbr.rel (%p216) target = $region70
        $region69: #{vgg_backbone_forward.16} parent=65 // pred_region
          _
        $region70: #{vgg_backbone_forward.16} parent=65 // pred_fallthru
          _
        %s219 = sand.u32 %s22, 1
        %s220 = sand.u32 %s22, 1
        %s221 = smul.addr %s220, 32
        %s222 = scalar_lea.vmem [#allocation2], %s221
        %p223 = pneg %p35
        %p224 = pneg %p32
        %s225 = smul.u32 2, %s14
        %p226 = scmp.lt.s32.totalorder %s225, 3
        %s227 = scalar_select %p226, %s225, 3
        %s228 = smul.addr %s227, 8
        %s229 = scalar_lea.vmem %s1, %s228
        %p230 = pneg %p61
        %p231 = pneg %p58
        %s232 = smul.u32 2, %s14
        %p233 = scmp.lt.s32.totalorder %s232, 3
        %s234 = scalar_select %p233, %s232, 3
        %s235 = smul.addr %s234, 8
        %s236 = scalar_lea.vmem %s2, %s235
        %p237 = pneg %p87
        %p238 = pneg %p84
        %p239 = pneg %p113
        %p240 = pneg %p110
        %s241 = sand.u32 %s100, 1
        %s242 = sand.u32 %s100, 1
        %s243 = smul.addr %s242, 32
        %s244 = scalar_lea.vmem [#allocation3], %s243
        %s245 = smul.u32 2, %s14
        %s246 = smul.u32 2, %s14
        %p247 = scmp.lt.s32.totalorder %s246, 3
        %s248 = scalar_select %p247, %s246, 3
        %s249 = smul.addr %s248, 8
        %s250 = scalar_lea.vmem %s1, %s249
        %s251 = smul.u32 2, %s14
        %s252 = smul.u32 2, %s14
        %p253 = scmp.lt.s32.totalorder %s252, 3
        %s254 = scalar_select %p253, %s252, 3
        %s255 = smul.addr %s254, 8
        %s256 = scalar_lea.vmem %s2, %s255
        %s257 = smul.u32 2, %s14
        %s258 = smul.u32 2, %s14
        %v259 = vld [vmem:[%s215] sm:$0xff]
        %v260 = vld [vmem:[%s215 + $0x8] sm:$0xff]
        %v261 = vld [vmem:[%s215 + $0x10] sm:$0xff]
        %v262 = vld [vmem:[%s215 + $0x18] sm:$0xff]
        %vm263 = vcmask 130048
        %v264 = vsel %vm263, %v259, 0.0
        %265 = vadd.xlane.f32.xlu0 %v264
        %v266 = vpop.xlane.xlu0 %265
        %v267 = vsel %vm263, %v260, 0.0
        %268 = vadd.xlane.f32.xlu0 %v267
        %v269 = vpop.xlane.xlu0 %268
        %v270 = vsel %vm263, %v261, 0.0
        %271 = vadd.xlane.f32.xlu0 %v270
        %v272 = vpop.xlane.xlu0 %271
        %v273 = vsel %vm263, %v262, 0.0
        %274 = vadd.xlane.f32.xlu0 %v273
        %v275 = vpop.xlane.xlu0 %274
        %v276 = vadd.f32 %v266, %v272
        %v277 = vadd.f32 %v269, %v275
        %v278 = vmul.f32 %v276, 0.03125
        %v279 = vmul.f32 %v277, 0.03125
        %v280 = vsub.f32 %v259, %v278
        %v281 = vsub.f32 %v260, %v279
        %v282 = vsub.f32 %v261, %v278
        %v283 = vsub.f32 %v262, %v279
        %v284 = vmul.f32 %v280, %v280
        %v285 = vmul.f32 %v281, %v281
        %v286 = vmul.f32 %v282, %v282
        %v287 = vmul.f32 %v283, %v283
        %v288 = vsel %vm263, %v284, 0.0
        %289 = vadd.xlane.f32.xlu0 %v288
        %v290 = vpop.xlane.xlu0 %289
        %v291 = vsel %vm263, %v285, 0.0
        %292 = vadd.xlane.f32.xlu0 %v291
        %v293 = vpop.xlane.xlu0 %292
        %v294 = vsel %vm263, %v286, 0.0
        %295 = vadd.xlane.f32.xlu0 %v294
        %v296 = vpop.xlane.xlu0 %295
        %v297 = vsel %vm263, %v287, 0.0
        %298 = vadd.xlane.f32.xlu0 %v297
        %v299 = vpop.xlane.xlu0 %298
        %v300 = vadd.f32 %v290, %v296
        %v301 = vadd.f32 %v293, %v299
        %v302 = vld [vmem:[%s250] sm:$0xff]
        %v303 = vld [vmem:[%s250 + $0x8] sm:$0xff]
        %v304 = vmul.f32 %v300, 0.03125
        %v305 = vmul.f32 %v301, 0.03125
        %v306 = vadd.f32 %v304, 1e-05
        %v307 = vadd.f32 %v305, 1e-05
        %v308 = vrsqrt.pop %v306
        %v309 = vmul.f32 %v308, %v306
        %v310 = vmul.f32 %v309, %v308
        %v311 = vmul.f32 0.5, %v310
        %v312 = vsub.f32 1.5, %v311
        %v313 = vmul.f32 %v308, %v312
        %vm314 = vweird.f32 %v306
        %vm315 = vweird.f32 %v308
        %vm316 = vmor %vm314, %vm315
        %v317 = vsel %vm316, %v308, %v313
        %v318 = vrsqrt.pop %v307
        %v319 = vmul.f32 %v318, %v307
        %v320 = vmul.f32 %v319, %v318
        %v321 = vmul.f32 0.5, %v320
        %v322 = vsub.f32 1.5, %v321
        %v323 = vmul.f32 %v318, %v322
        %vm324 = vweird.f32 %v307
        %vm325 = vweird.f32 %v318
        %vm326 = vmor %vm324, %vm325
        %v327 = vsel %vm326, %v318, %v323
        %v328 = vmul.f32 %v302, %v317
        %v329 = vmul.f32 %v303, %v327
        %331 = vset.pattern.permute.xlu0 0
        %332 = vperm.xlu0 %331, %v328
        %v333 = vpop.permute.xlu0 %332
        %336 = vset.pattern.permute.xlu0 0
        %337 = vperm.xlu0 %336, %v329
        %v338 = vpop.permute.xlu0 %337
        %v340 = vmul.f32 %v280, %v333
        %v341 = vmul.f32 %v281, %v338
        %v342 = vmul.f32 %v282, %v333
        %v343 = vmul.f32 %v283, %v338
        %v344 = vld [vmem:[%s256] sm:$0xff]
        %v345 = vld [vmem:[%s256 + $0x8] sm:$0xff]
        %347 = vset.pattern.permute.xlu0 0
        %348 = vperm.xlu0 %347, %v344
        %v349 = vpop.permute.xlu0 %348
        %352 = vset.pattern.permute.xlu0 0
        %353 = vperm.xlu0 %352, %v345
        %v354 = vpop.permute.xlu0 %353
        %v356 = vadd.f32 %v340, %v349
        %v357 = vadd.f32 %v341, %v354
        %v358 = vadd.f32 %v342, %v349
        %v359 = vadd.f32 %v343, %v354
        %v360 = vmax.f32 %v356, 0.0
        %v361 = vmax.f32 %v357, 0.0
        %v362 = vmax.f32 %v358, 0.0
        %v363 = vmax.f32 %v359, 0.0
        %vm364 = vcmask 72704
        %365 = vst.msk [vmem:[%s244] sm:$0xff] %vm364, 0.0
        %366 = vst.msk [vmem:[%s244 + $0x8] sm:$0xff] %vm364, 0.0
        %367 = vst.msk [vmem:[%s244 + $0x10] sm:$0xff] %vm364, 0.0
        %368 = vst.msk [vmem:[%s244 + $0x18] sm:$0xff] %vm364, 0.0
        %373 = vrot.lane.b32.xlu0 %v360, 124
        %v374 = vpop.permute.xlu0 %373
        %375 = vrot.lane.b32.xlu0 %v361, 124
        %v376 = vpop.permute.xlu0 %375
        %377 = vrot.lane.b32.xlu0 %v362, 124
        %v378 = vpop.permute.xlu0 %377
        %379 = vrot.lane.b32.xlu0 %v363, 124
        %v380 = vpop.permute.xlu0 %379
        %v385 = vmax.f32 %v360, %v374
        %v386 = vmax.f32 %v361, %v376
        %v387 = vmax.f32 %v362, %v378
        %v388 = vmax.f32 %v363, %v380
        %vm389 = vcmask 31744
        %390 = vst.msk [vmem:[%s244] sm:$0xff] %vm389, %v385
        %391 = vst.msk [vmem:[%s244 + $0x8] sm:$0xff] %vm389, %v386
        %392 = vst.msk [vmem:[%s244 + $0x10] sm:$0xff] %vm389, %v387
        %393 = vst.msk [vmem:[%s244 + $0x18] sm:$0xff] %vm389, %v388
        %398 = vrot.lane.b32.xlu0 %v385, 124
        %v399 = vpop.permute.xlu0 %398
        %400 = vrot.lane.b32.xlu0 %v386, 124
        %v401 = vpop.permute.xlu0 %400
        %402 = vrot.lane.b32.xlu0 %v387, 124
        %v403 = vpop.permute.xlu0 %402
        %404 = vrot.lane.b32.xlu0 %v388, 124
        %v405 = vpop.permute.xlu0 %404
        %vm410 = vcmask 64544
        %411 = vst.msk [vmem:[%s244] sm:$0xff] %vm410, %v399
        %412 = vst.msk [vmem:[%s244 + $0x8] sm:$0xff] %vm410, %v401
        %413 = vst.msk [vmem:[%s244 + $0x10] sm:$0xff] %vm410, %v403
        %414 = vst.msk [vmem:[%s244 + $0x18] sm:$0xff] %vm410, %v405
        %s415 = sand.u32 %s100, 1
        %s416 = sand.u32 %s100, 1
        %s417 = smul.addr %s416, 32
        %s418 = scalar_lea.vmem [#allocation3], %s417
        // Predicated region
        $region71: #{vgg_backbone_forward.16} parent=65 // pred_check
          %p419 = pneg %p110
        $region72: #{vgg_backbone_forward.16} parent=65 // pred_check_branch
          %421 = sbr.rel (%p419) target = $region74
        $region73: #{vgg_backbone_forward.16} parent=65 // pred_region
          %s422 = smul.u32 2, %s14
          %s423 = smul.addr %s422, 8
          %s424 = scalar_lea.vmem %s3, %s423
          // Predicated region
          $region75: #{vgg_backbone_forward.16} parent=73 // pred_check
            _
          $region76: #{vgg_backbone_forward.16} parent=73 // pred_check_branch
            %426 = sbr.rel (0) target = $region78
          $region77: #{vgg_backbone_forward.16} parent=73 // pred_region
            // Predicated region
            $region79: #{vgg_backbone_forward.16} parent=77 // pred_check
              _
            $region80: #{vgg_backbone_forward.16} parent=77 // pred_check_branch
              %428 = sbr.rel (0) target = $region82
            $region81: #{vgg_backbone_forward.16} parent=77 // pred_region
              // Predicated region
              $region94: #{vgg_backbone_forward.16} parent=81 // pred_check
                _
              $region95: #{vgg_backbone_forward.16} parent=81 // pred_check_branch
                %450 = sbr.rel (0) target = $region97
              $region96: #{vgg_backbone_forward.16} parent=81 // pred_region
                loop: start=0, step=1, limit=1
                $region98: #{vgg_backbone_forward.16} parent=96 // loop_pre_header
                  _
                $region99: #{vgg_backbone_forward.16} parent=96 // loop_header
                  %s452 = sphi 0, %s456
                  %p453 = scmp.ge.s32.totalorder %s452, 1
                  %s457 = sphi %s418, %s418
                  %s458 = sphi %s424, %s424
                $region100: #{vgg_backbone_forward.16} parent=96 // loop_header_branch
                  %455 = sbr.rel (%p453) target = $region104
                $region101: #{vgg_backbone_forward.16} parent=96 // loop_body
                  %v459 = vld [vmem:[%s457] sm:$0xff]
                  %460 = vst [vmem:[%s458] sm:$0xff] %v459
                  %v461 = vld [vmem:[%s457 + $0x8] sm:$0xff]
                  %462 = vst [vmem:[%s458 + $0x8] sm:$0xff] %v461
                  %v463 = vld [vmem:[%s457 + $0x10] sm:$0xff]
                  %464 = vst [vmem:[%s458 + $0x20] sm:$0xff] %v463
                  %v465 = vld [vmem:[%s457 + $0x18] sm:$0xff]
                  %466 = vst [vmem:[%s458 + $0x28] sm:$0xff] %v465
                $region102: #{vgg_backbone_forward.16} parent=96 // loop_footer
                  %s456 = sadd.s32 1, %s452
                $region103: #{vgg_backbone_forward.16} parent=96 // loop_footer_branch
                  %451 = sbr.rel target = $region99
                $region104: #{vgg_backbone_forward.16} parent=96 // loop_exit
                  _
              $region97: #{vgg_backbone_forward.16} parent=81 // pred_fallthru
                _
              // Predicated region
              $region105: #{vgg_backbone_forward.16} parent=81 // pred_check
                _
              $region106: #{vgg_backbone_forward.16} parent=81 // pred_check_branch
                %468 = sbr.rel target = $region108
              $region107: #{vgg_backbone_forward.16} parent=81 // pred_region
                _
              $region108: #{vgg_backbone_forward.16} parent=81 // pred_fallthru
                _
            $region82: #{vgg_backbone_forward.16} parent=77 // pred_fallthru
              _
            // Predicated region
            $region83: #{vgg_backbone_forward.16} parent=77 // pred_check
              _
            $region84: #{vgg_backbone_forward.16} parent=77 // pred_check_branch
              %430 = sbr.rel target = $region86
            $region85: #{vgg_backbone_forward.16} parent=77 // pred_region
              %s432 = ssub.s32 256, 1
              loop: start=0, step=1, limit=1
              $region87: #{vgg_backbone_forward.16} parent=85 // loop_pre_header
                _
              $region88: #{vgg_backbone_forward.16} parent=85 // loop_header
                %s434 = sphi 0, %s438
                %p435 = scmp.ge.s32.totalorder %s434, 1
                %s439 = sphi %s418, %s418
                %s440 = sphi %s424, %s424
              $region89: #{vgg_backbone_forward.16} parent=85 // loop_header_branch
                %437 = sbr.rel (%p435) target = $region93
              $region90: #{vgg_backbone_forward.16} parent=85 // loop_body
                %v441 = vld [vmem:[%s439] sm:%s432]
                %442 = vst [vmem:[%s440] sm:%s432] %v441
                %v443 = vld [vmem:[%s439 + $0x8] sm:%s432]
                %444 = vst [vmem:[%s440 + $0x8] sm:%s432] %v443
                %v445 = vld [vmem:[%s439 + $0x10] sm:%s432]
                %446 = vst [vmem:[%s440 + $0x20] sm:%s432] %v445
                %v447 = vld [vmem:[%s439 + $0x18] sm:%s432]
                %448 = vst [vmem:[%s440 + $0x28] sm:%s432] %v447
              $region91: #{vgg_backbone_forward.16} parent=85 // loop_footer
                %s438 = sadd.s32 1, %s434
              $region92: #{vgg_backbone_forward.16} parent=85 // loop_footer_branch
                %433 = sbr.rel target = $region88
              $region93: #{vgg_backbone_forward.16} parent=85 // loop_exit
                _
            $region86: #{vgg_backbone_forward.16} parent=77 // pred_fallthru
              _
          $region78: #{vgg_backbone_forward.16} parent=73 // pred_fallthru
            _
          %469 = vnop
        $region74: #{vgg_backbone_forward.16} parent=65 // pred_fallthru
          _
      $region66: #{vgg_backbone_forward.16} parent=5 // pred_fallthru
        _
      %p470 = scmp.le.s32.totalorder 2, %s9
      // Predicated region
      $region109: #{vgg_backbone_forward.16} parent=5 // pred_check
        %p471 = pneg %p470
      $region110: #{vgg_backbone_forward.16} parent=5 // pred_check_branch
        %473 = sbr.rel (%p471) target = $region112
      $region111: #{vgg_backbone_forward.16} parent=5 // pred_region
        %s474 = ssub.s32 %s9, 2
        // Predicated region
        $region113: #{vgg_backbone_forward.16} parent=111 // pred_check
          %p475 = pneg %p116
        $region114: #{vgg_backbone_forward.16} parent=111 // pred_check_branch
          %477 = sbr.rel (%p475) target = $region116
        $region115: #{vgg_backbone_forward.16} parent=111 // pred_region
          %s478 = sand.u32 %s101, 1
          %s479 = sand.u32 %s101, 1
          %s480 = smul.addr %s479, 32
          %s481 = scalar_lea.vmem [#allocation3], %s480
        $region116: #{vgg_backbone_forward.16} parent=111 // pred_fallthru
          _
      $region112: #{vgg_backbone_forward.16} parent=5 // pred_fallthru
        _
    $region6: #{vgg_backbone_forward.16} parent=1 // loop_footer
      %s13 = sadd.s32 1, %s9
    $region7: #{vgg_backbone_forward.16} parent=1 // loop_footer_branch
      %8 = sbr.rel target = $region3
    $region8: #{vgg_backbone_forward.16} parent=1 // loop_exit
      _

// kernel: vgg_backbone_forward.15
$region0: #{vgg_backbone_forward.15}
  #allocation0 [shape = 'u32[]', space=smem, size = 0x4, offset = 0x4, fixed_abs, tag = 'smem constant byte address 0x4 - core index']
  #allocation1 [shape = 'u32[72,128]{1,0:T(1,128)}', space=vmem, size = 0x9000, scoped, tag = 'internal scratch']
  #allocation2 [shape = 'bf16[32,38]{1,0:T(8,128)(2,1)}', space=vmem, size = 0x2000, scoped, tag = 'scratch operand']
  %s0 = inlined_call_operand.vmem [shape: f32[2,32,38], index: 0, kind: input, shape index: {}]
  %s1 = inlined_call_operand.vmem [shape: bf16[9,32,32], index: 1, kind: input, shape index: {}]
  %s2 = inlined_call_operand.vmem [shape: f32[32,1], index: 2, kind: input, shape index: {}]
  %s3 = inlined_call_operand.vmem [shape: f32[2,32,16], index: 3, kind: output, shape index: {}]
  %s4 = sld [smem:[#allocation0]]
  $region45: #{vgg_backbone_forward.15} parent=0
    _
  %s6 = ssub.s32 1, %s4
  %s7 = scalar_select 0, %s6, %s4
  loop: start=0, step=1, limit=4
  $region2: #{vgg_backbone_forward.15} parent=0 // loop_pre_header
    _
  $region3: #{vgg_backbone_forward.15} parent=0 // loop_header
    %s9 = sphi 0, %s13
    %p10 = scmp.ge.s32.totalorder %s9, 4
    %s16 = sphi 0, %s28
    %s17 = sphi 0, %s24
    %s18 = sphi 0, %s16
    %s19 = sphi 0, %s17
    %s20 = sphi 0, %s18
    %s21 = sphi 0, %s19
    %s31 = sphi 0, %s33
    %s34 = sphi 0, %s31
    %s35 = sphi 0, %s34
    %s51 = sphi 0, %s35
    %s57 = sphi 0, %s59
    %s60 = sphi 0, %s57
    %s61 = sphi 0, %s60
    %s77 = sphi 0, %s61
    %s83 = sphi 0, %s85
    %s86 = sphi 0, %s83
    %s87 = sphi 0, %s86
    %s103 = sphi 0, %s87
    %s111 = sphi 0, %s113
    %s114 = sphi 0, %s111
    %s115 = sphi 0, %s114
    %s131 = sphi 0, %s115
  $region4: #{vgg_backbone_forward.15} parent=0 // loop_header_branch
    %12 = sbr.rel (%p10) target = $region8
  $region5: #{vgg_backbone_forward.15} parent=0 // loop_body
    %s14 = ssub.s32 %s9, 1
    %s15 = ssub.s32 %s9, 2
    %s22 = sadd.s32 1, %s17
    %p23 = scmp.ge.s32.totalorder %s22, 1
    %s24 = scalar_select %p23, 0, %s22
    %s25 = sadd.s32 1, %s16
    %s26 = scalar_select %p23, %s25, %s16
    %p27 = scmp.ge.s32.totalorder %s26, 2
    %s28 = scalar_select %p27, 0, %s26
    %s29 = ssub.s32 %s16, %s28
    %p30 = scmp.eq.s32.totalorder %s29, 0
    %s32 = sadd.s32 %s31, 1
    %s33 = scalar_select %p30, %s31, %s32
    %p36 = pneg %p30
    %p37 = scmp.eq.s32.totalorder %s9, 1
    %p38 = por %p36, %p37
    %p39 = scmp.ne.s32.totalorder %s31, %s34
    %p40 = scmp.eq.s32.totalorder %s9, 0
    %p41 = por %p39, %p40
    %p42 = scmp.ne.s32.totalorder %s31, %s34
    %p43 = scmp.eq.s32.totalorder %s14, 1
    %p44 = por %p42, %p43
    %p45 = scmp.ne.s32.totalorder %s34, %s35
    %p46 = scmp.eq.s32.totalorder %s14, 0
    %p47 = por %p45, %p46
    %p48 = scmp.ne.s32.totalorder %s34, %s35
    %p49 = scmp.eq.s32.totalorder %s15, 1
    %p50 = por %p48, %p49
    %p52 = scmp.ne.s32.totalorder %s35, %s51
    %p53 = scmp.eq.s32.totalorder %s15, 0
    %p54 = por %p52, %p53
    %s55 = ssub.s32 %s17, %s24
    %p56 = scmp.eq.s32.totalorder %s55, 0
    %s58 = sadd.s32 %s57, 1
    %s59 = scalar_select %p56, %s57, %s58
    %p62 = pneg %p56
    %p63 = scmp.eq.s32.totalorder %s9, 1
    %p64 = por %p62, %p63
    %p65 = scmp.ne.s32.totalorder %s57, %s60
    %p66 = scmp.eq.s32.totalorder %s9, 0
    %p67 = por %p65, %p66
    %p68 = scmp.ne.s32.totalorder %s57, %s60
    %p69 = scmp.eq.s32.totalorder %s14, 1
    %p70 = por %p68, %p69
    %p71 = scmp.ne.s32.totalorder %s60, %s61
    %p72 = scmp.eq.s32.totalorder %s14, 0
    %p73 = por %p71, %p72
    %p74 = scmp.ne.s32.totalorder %s60, %s61
    %p75 = scmp.eq.s32.totalorder %s15, 1
    %p76 = por %p74, %p75
    %p78 = scmp.ne.s32.totalorder %s61, %s77
    %p79 = scmp.eq.s32.totalorder %s15, 0
    %p80 = por %p78, %p79
    %s81 = ssub.s32 %s17, %s24
    %p82 = scmp.eq.s32.totalorder %s81, 0
    %s84 = sadd.s32 %s83, 1
    %s85 = scalar_select %p82, %s83, %s84
    %p88 = pneg %p82
    %p89 = scmp.eq.s32.totalorder %s9, 1
    %p90 = por %p88, %p89
    %p91 = scmp.ne.s32.totalorder %s83, %s86
    %p92 = scmp.eq.s32.totalorder %s9, 0
    %p93 = por %p91, %p92
    %p94 = scmp.ne.s32.totalorder %s83, %s86
    %p95 = scmp.eq.s32.totalorder %s14, 1
    %p96 = por %p94, %p95
    %p97 = scmp.ne.s32.totalorder %s86, %s87
    %p98 = scmp.eq.s32.totalorder %s14, 0
    %p99 = por %p97, %p98
    %p100 = scmp.ne.s32.totalorder %s86, %s87
    %p101 = scmp.eq.s32.totalorder %s15, 1
    %p102 = por %p100, %p101
    %p104 = scmp.ne.s32.totalorder %s87, %s103
    %p105 = scmp.eq.s32.totalorder %s15, 0
    %p106 = por %p104, %p105
    %s107 = ssub.s32 %s16, %s28
    %s108 = ssub.s32 %s17, %s24
    %s109 = sor.u32 %s107, %s108
    %p110 = scmp.eq.s32.totalorder %s109, 0
    %s112 = sadd.s32 %s111, 1
    %s113 = scalar_select %p110, %s111, %s112
    %p116 = pneg %p110
    %p117 = scmp.eq.s32.totalorder %s9, 1
    %p118 = por %p116, %p117
    %p119 = scmp.ne.s32.totalorder %s111, %s114
    %p120 = scmp.eq.s32.totalorder %s9, 0
    %p121 = por %p119, %p120
    %p122 = scmp.ne.s32.totalorder %s111, %s114
    %p123 = scmp.eq.s32.totalorder %s14, 1
    %p124 = por %p122, %p123
    %p125 = scmp.ne.s32.totalorder %s114, %s115
    %p126 = scmp.eq.s32.totalorder %s14, 0
    %p127 = por %p125, %p126
    %p128 = scmp.ne.s32.totalorder %s114, %s115
    %p129 = scmp.eq.s32.totalorder %s15, 1
    %p130 = por %p128, %p129
    %p132 = scmp.ne.s32.totalorder %s115, %s131
    %p133 = scmp.eq.s32.totalorder %s15, 0
    %p134 = por %p132, %p133
    %p135 = scmp.le.s32.totalorder 1, %s9
    %p136 = scmp.lt.s32.totalorder %s9, 3
    %p137 = pnand %p135, %p136
    %p138 = pneg %p137
    // Predicated region
    $region9: #{vgg_backbone_forward.15} parent=5 // pred_check
      _
    $region10: #{vgg_backbone_forward.15} parent=5 // pred_check_branch
      %140 = sbr.rel (%p137) target = $region12
    $region11: #{vgg_backbone_forward.15} parent=5 // pred_region
      %s141 = ssub.s32 %s9, 1
      // Predicated region
      $region13: #{vgg_backbone_forward.15} parent=11 // pred_check
        %p142 = pneg %p73
      $region14: #{vgg_backbone_forward.15} parent=11 // pred_check_branch
        %144 = sbr.rel (%p142) target = $region16
      $region15: #{vgg_backbone_forward.15} parent=11 // pred_region
        %s145 = smul.u32 4, %s19
        %p146 = scmp.lt.s32.totalorder %s145, 3
        %s147 = scalar_select %p146, %s145, 3
        %s148 = smul.addr %s147, 4
        %s149 = scalar_lea.vmem %s1, %s148
        %s150 = smul.u32 4, %s19
      $region16: #{vgg_backbone_forward.15} parent=11 // pred_fallthru
        _
      // Predicated region
      $region17: #{vgg_backbone_forward.15} parent=11 // pred_check
        %p151 = pneg %p99
      $region18: #{vgg_backbone_forward.15} parent=11 // pred_check_branch
        %153 = sbr.rel (%p151) target = $region20
      $region19: #{vgg_backbone_forward.15} parent=11 // pred_region
        %s154 = smul.u32 4, %s19
        %p155 = scmp.lt.s32.totalorder %s154, 3
        %s156 = scalar_select %p155, %s154, 3
        %s157 = smul.addr %s156, 8
        %s158 = scalar_lea.vmem %s2, %s157
        %s159 = smul.u32 4, %s19
      $region20: #{vgg_backbone_forward.15} parent=11 // pred_fallthru
        _
    $region12: #{vgg_backbone_forward.15} parent=5 // pred_fallthru
      _
    %p160 = scmp.lt.s32.totalorder %s9, 2
    // Predicated region
    $region21: #{vgg_backbone_forward.15} parent=5 // pred_check
      %p161 = pneg %p160
    $region22: #{vgg_backbone_forward.15} parent=5 // pred_check_branch
      %163 = sbr.rel (%p161) target = $region24
    $region23: #{vgg_backbone_forward.15} parent=5 // pred_region
      // Predicated region
      $region25: #{vgg_backbone_forward.15} parent=23 // pred_check
        %p164 = pneg %p41
      $region26: #{vgg_backbone_forward.15} parent=23 // pred_check_branch
        %166 = sbr.rel (%p164) target = $region28
      $region27: #{vgg_backbone_forward.15} parent=23 // pred_region
        %p167 = scmp.lt.s32.totalorder %s16, 1
        %s168 = scalar_select %p167, %s16, 1
        %s169 = smul.addr %s168, 4
        %s170 = smul.addr %s169, 8
        %s171 = scalar_lea.vmem %s0, %s170
      $region28: #{vgg_backbone_forward.15} parent=23 // pred_fallthru
        _
    $region24: #{vgg_backbone_forward.15} parent=5 // pred_fallthru
      _
    %p172 = scmp.le.s32.totalorder 1, %s9
    %p173 = scmp.lt.s32.totalorder %s9, 3
    %p174 = pnand %p172, %p173
    %p175 = pneg %p174
    // Predicated region
    $region29: #{vgg_backbone_forward.15} parent=5 // pred_check
      _
    $region30: #{vgg_backbone_forward.15} parent=5 // pred_check_branch
      %177 = sbr.rel (%p174) target = $region32
    $region31: #{vgg_backbone_forward.15} parent=5 // pred_region
      %s178 = ssub.s32 %s9, 1
      %p179 = scmp.lt.s32.totalorder %s18, 1
      %s180 = scalar_select %p179, %s18, 1
      %s181 = smul.addr %s180, 4
      %s182 = smul.addr %s181, 8
      %s183 = scalar_lea.vmem %s0, %s182
      %p184 = pneg %p47
      %p185 = pneg %p44
      %s186 = smul.u32 4, %s19
      %p187 = scmp.lt.s32.totalorder %s186, 3
      %s188 = scalar_select %p187, %s186, 3
      %s189 = smul.addr %s188, 4
      %s190 = scalar_lea.vmem %s1, %s189
      %p191 = pneg %p73
      %p192 = pneg %p70
      %s193 = smul.u32 4, %s19
      %p194 = scmp.lt.s32.totalorder %s193, 3
      %s195 = scalar_select %p194, %s193, 3
      %s196 = smul.addr %s195, 8
      %s197 = scalar_lea.vmem %s2, %s196
      %p198 = pneg %p99
      %p199 = pneg %p96
      %p200 = pneg %p127
      %p201 = pneg %p124
      %s202 = smul.u32 4, %s19
      %p203 = scmp.lt.s32.totalorder %s18, 1
      %s204 = scalar_select %p203, %s18, 1
      %p205 = scmp.lt.s32.totalorder %s202, 3
      %s206 = scalar_select %p205, %s202, 3
      %s207 = smul.addr %s204, 4
      %s208 = sadd.s32 %s206, %s207
      %s209 = smul.addr %s208, 8
      %s210 = scalar_lea.vmem %s3, %s209
      %p211 = scmp.lt.s32.totalorder %s18, 1
      %s212 = scalar_select %p211, %s18, 1
      %s213 = smul.addr %s212, 4
      %s214 = smul.addr %s213, 8
      %s215 = scalar_lea.vmem %s0, %s214
      %s216 = smul.u32 4, %s19
      %p217 = scmp.lt.s32.totalorder %s216, 3
      %s218 = scalar_select %p217, %s216, 3
      %s219 = smul.addr %s218, 4
      %s220 = scalar_lea.vmem %s1, %s219
      %s221 = smul.u32 4, %s19
      %s222 = smul.u32 4, %s19
      %p223 = scmp.lt.s32.totalorder %s222, 3
      %s224 = scalar_select %p223, %s222, 3
      %s225 = smul.addr %s224, 8
      %s226 = scalar_lea.vmem %s2, %s225
      %s227 = smul.u32 4, %s19
      %s228 = smul.u32 4, %s19
      %p229 = scmp.lt.s32.totalorder %s18, 1
      %s230 = scalar_select %p229, %s18, 1
      %p231 = scmp.lt.s32.totalorder %s228, 3
      %s232 = scalar_select %p231, %s228, 3
      %s233 = smul.addr %s230, 4
      %s234 = sadd.s32 %s232, %s233
      %s235 = smul.addr %s234, 8
      %s236 = scalar_lea.vmem %s3, %s235
      %s237 = smul.u32 4, %s19
      %v239 = vld [vmem:[%s215] sm:$0xff]
      %v240 = vld [vmem:[%s215 + $0x8] sm:$0xff]
      %v241 = vld [vmem:[%s215 + $0x10] sm:$0xff]
      %v242 = vld [vmem:[%s215 + $0x18] sm:$0xff]
      %v243 = vpack.c.bf16 %v239, %v239
      %v244 = vpack.c.bf16 %v240, %v240
      %v245 = vpack.c.bf16 %v241, %v241
      %v246 = vpack.c.bf16 %v242, %v242
      %vm247 = vcmask 306176
      %248 = vst.msk [vmem:[#allocation2] sm:$0xf] %vm247, %v243
      %249 = vst.msk [vmem:[#allocation2 + $0x4] sm:$0xf] %vm247, %v244
      %250 = vst.msk [vmem:[#allocation2 + $0x8] sm:$0xf] %vm247, %v245
      %251 = vst.msk [vmem:[#allocation2 + $0xc] sm:$0xf] %vm247, %v246
      %v252 = vld [vmem:[#allocation2] sm:$0xf]
      %v253 = vld [vmem:[#allocation2 + $0x4] sm:$0xf]
      %v254 = vld [vmem:[#allocation2 + $0x8] sm:$0xf]
      %v255 = vld [vmem:[#allocation2 + $0xc] sm:$0xf]
      %v256 = vld [vmem:[%s220] sm:$0xf]
      %v257 = vld [vmem:[%s220 + $0x4] sm:$0xf]
      %v258 = vld [vmem:[%s220 + $0x8] sm:$0xf]
      %v259 = vld [vmem:[%s220 + $0xc] sm:$0xf]
      %s260 = scalar_lea.vmem %s220, 16
      %v261 = vld [vmem:[%s260] sm:$0xf]
      %v262 = vld [vmem:[%s260 + $0x4] sm:$0xf]
      %v263 = vld [vmem:[%s260 + $0x8] sm:$0xf]
      %v264 = vld [vmem:[%s260 + $0xc] sm:$0xf]
      %v269 = vunpack.c.l.b16 %v261
      %v270 = vunpack.c.l.b16 %v262
      %v271 = vunpack.c.l.b16 %v263
      %v272 = vunpack.c.l.b16 %v264
      %v273 = vpack.c.b16 %v270, %v269
      %v274 = vpack.c.b16 %v272, %v271
      %v279 = vunpack.c.l.b16 %v252
      %v280 = vunpack.c.l.b16 %v253
      %v281 = vunpack.c.l.b16 %v254
      %v282 = vunpack.c.l.b16 %v255
      %v283 = vpack.c.b16 %v280, %v279
      %v284 = vpack.c.b16 %v282, %v281
      %285 = vrot.lane.b32.xlu0 %v283, 127
      %v286 = vpop.permute.xlu0 %285
      %287 = vrot.lane.b32.xlu0 %v284, 127
      %v288 = vpop.permute.xlu0 %287
      %vm291 = vcmask 261120
      %v293 = vsel %vm291, %v273, 0
      %v296 = vsel %vm291, %v274, 0
      %298 = vmatpush.bf16.msra.mxu0 0
      %299 = vmatpush.bf16.msra.mxu0 0
      %300 = vmatpush.bf16.msra.mxu0 0
      %301 = vmatpush.bf16.msra.mxu0 0
      %302 = vmatpush.bf16.msra.mxu0 0
      %303 = vmatpush.bf16.msra.mxu0 0
      %304 = vmatpush.bf16.msra.mxu0 %v288
      %305 = vmatpush.bf16.msra.mxu0 %v286
      %306 = vmatmul.bf16.gmra.mxu0 %v293
      %v307 = vpop.f32.mrf.mxu0
      %v308 = vadd.f32 0.0, %v307
      %v309 = vpop.f32.mrf.mxu0
      %v310 = vadd.f32 0.0, %v309
      %311 = vmatmul.bf16.gmra.mxu0 %v296
      %v312 = vpop.f32.mrf.mxu0
      %v313 = vadd.f32 0.0, %v312
      %v314 = vpop.f32.mrf.mxu0
      %v315 = vadd.f32 0.0, %v314
      %316 = vdwg.mxu0
      %v321 = vunpack.c.l.b16 %v256
      %v322 = vunpack.c.l.b16 %v257
      %v323 = vunpack.c.l.b16 %v258
      %v324 = vunpack.c.l.b16 %v259
      %v325 = vpack.c.b16 %v322, %v321
      %v326 = vpack.c.b16 %v324, %v323
      %v330 = vsel %vm291, %v325, 0
      %v333 = vsel %vm291, %v326, 0
      %335 = vmatpush.bf16.msra.mxu0 0
      %336 = vmatpush.bf16.msra.mxu0 0
      %337 = vmatpush.bf16.msra.mxu0 0
      %338 = vmatpush.bf16.msra.mxu0 0
      %339 = vmatpush.bf16.msra.mxu0 0
      %340 = vmatpush.bf16.msra.mxu0 0
      %341 = vmatpush.bf16.msra.mxu0 %v284
      %342 = vmatpush.bf16.msra.mxu0 %v283
      %343 = vmatmul.bf16.gmra.mxu0 %v330
      %v344 = vpop.f32.mrf.mxu0
      %v345 = vadd.f32 %v308, %v344
      %v346 = vpop.f32.mrf.mxu0
      %v347 = vadd.f32 %v310, %v346
      %348 = vmatmul.bf16.gmra.mxu0 %v333
      %v349 = vpop.f32.mrf.mxu0
      %v350 = vadd.f32 %v313, %v349
      %v351 = vpop.f32.mrf.mxu0
      %v352 = vadd.f32 %v315, %v351
      %353 = vdwg.mxu0
      %s354 = scalar_lea.vmem %s220, 32
      %v355 = vld [vmem:[%s354] sm:$0xf]
      %v356 = vld [vmem:[%s354 + $0x4] sm:$0xf]
      %v357 = vld [vmem:[%s354 + $0x8] sm:$0xf]
      %v358 = vld [vmem:[%s354 + $0xc] sm:$0xf]
      %v363 = vunpack.c.l.b16 %v355
      %v364 = vunpack.c.l.b16 %v356
      %v365 = vunpack.c.l.b16 %v357
      %v366 = vunpack.c.l.b16 %v358
      %v367 = vpack.c.b16 %v364, %v363
      %v368 = vpack.c.b16 %v366, %v365
      %369 = vrot.lane.b32.xlu0 %v283, 126
      %v370 = vpop.permute.xlu0 %369
      %371 = vrot.lane.b32.xlu0 %v284, 126
      %v372 = vpop.permute.xlu0 %371
      %v376 = vsel %vm291, %v367, 0
      %v379 = vsel %vm291, %v368, 0
      %381 = vmatpush.bf16.msra.mxu0 0
      %382 = vmatpush.bf16.msra.mxu0 0
      %383 = vmatpush.bf16.msra.mxu0 0
      %384 = vmatpush.bf16.msra.mxu0 0
      %385 = vmatpush.bf16.msra.mxu0 0
      %386 = vmatpush.bf16.msra.mxu0 0
      %387 = vmatpush.bf16.msra.mxu0 %v372
      %388 = vmatpush.bf16.msra.mxu0 %v370
      %389 = vmatmul.bf16.gmra.mxu0 %v376
      %v390 = vpop.f32.mrf.mxu0
      %v391 = vadd.f32 0.0, %v390
      %v392 = vpop.f32.mrf.mxu0
      %v393 = vadd.f32 0.0, %v392
      %394 = vmatmul.bf16.gmra.mxu0 %v379
      %v395 = vpop.f32.mrf.mxu0
      %v396 = vadd.f32 0.0, %v395
      %v397 = vpop.f32.mrf.mxu0
      %v398 = vadd.f32 0.0, %v397
      %399 = vdwg.mxu0
      %v400 = vadd.f32 %v345, %v391
      %v401 = vadd.f32 %v347, %v393
      %v402 = vadd.f32 %v350, %v396
      %v403 = vadd.f32 %v352, %v398
      %s404 = scalar_lea.vmem %s220, 48
      %v405 = vld [vmem:[%s404] sm:$0xf]
      %v406 = vld [vmem:[%s404 + $0x4] sm:$0xf]
      %v407 = vld [vmem:[%s404 + $0x8] sm:$0xf]
      %v408 = vld [vmem:[%s404 + $0xc] sm:$0xf]
      %v413 = vunpack.c.l.b16 %v405
      %v414 = vunpack.c.l.b16 %v406
      %v415 = vunpack.c.l.b16 %v407
      %v416 = vunpack.c.l.b16 %v408
      %v417 = vpack.c.b16 %v414, %v413
      %v418 = vpack.c.b16 %v416, %v415
      %419 = vrot.lane.b32.xlu0 %v283, 122
      %v420 = vpop.permute.xlu0 %419
      %421 = vrot.lane.b32.xlu0 %v284, 122
      %v422 = vpop.permute.xlu0 %421
      %v426 = vsel %vm291, %v417, 0
      %v429 = vsel %vm291, %v418, 0
      %431 = vmatpush.bf16.msra.mxu0 0
      %432 = vmatpush.bf16.msra.mxu0 0
      %433 = vmatpush.bf16.msra.mxu0 0
      %434 = vmatpush.bf16.msra.mxu0 0
      %435 = vmatpush.bf16.msra.mxu0 0
      %436 = vmatpush.bf16.msra.mxu0 0
      %437 = vmatpush.bf16.msra.mxu0 %v422
      %438 = vmatpush.bf16.msra.mxu0 %v420
      %439 = vmatmul.bf16.gmra.mxu0 %v426
      %v440 = vpop.f32.mrf.mxu0
      %v441 = vadd.f32 0.0, %v440
      %v442 = vpop.f32.mrf.mxu0
      %v443 = vadd.f32 0.0, %v442
      %444 = vmatmul.bf16.gmra.mxu0 %v429
      %v445 = vpop.f32.mrf.mxu0
      %v446 = vadd.f32 0.0, %v445
      %v447 = vpop.f32.mrf.mxu0
      %v448 = vadd.f32 0.0, %v447
      %449 = vdwg.mxu0
      %v450 = vadd.f32 %v400, %v441
      %v451 = vadd.f32 %v401, %v443
      %v452 = vadd.f32 %v402, %v446
      %v453 = vadd.f32 %v403, %v448
      %s454 = scalar_lea.vmem %s220, 64
      %v455 = vld [vmem:[%s454] sm:$0xf]
      %v456 = vld [vmem:[%s454 + $0x4] sm:$0xf]
      %v457 = vld [vmem:[%s454 + $0x8] sm:$0xf]
      %v458 = vld [vmem:[%s454 + $0xc] sm:$0xf]
      %v463 = vunpack.c.l.b16 %v455
      %v464 = vunpack.c.l.b16 %v456
      %v465 = vunpack.c.l.b16 %v457
      %v466 = vunpack.c.l.b16 %v458
      %v467 = vpack.c.b16 %v464, %v463
      %v468 = vpack.c.b16 %v466, %v465
      %469 = vrot.lane.b32.xlu0 %v283, 121
      %v470 = vpop.permute.xlu0 %469
      %471 = vrot.lane.b32.xlu0 %v284, 121
      %v472 = vpop.permute.xlu0 %471
      %v476 = vsel %vm291, %v467, 0
      %v479 = vsel %vm291, %v468, 0
      %481 = vmatpush.bf16.msra.mxu0 0
      %482 = vmatpush.bf16.msra.mxu0 0
      %483 = vmatpush.bf16.msra.mxu0 0
      %484 = vmatpush.bf16.msra.mxu0 0
      %485 = vmatpush.bf16.msra.mxu0 0
      %486 = vmatpush.bf16.msra.mxu0 0
      %487 = vmatpush.bf16.msra.mxu0 %v472
      %488 = vmatpush.bf16.msra.mxu0 %v470
      %489 = vmatmul.bf16.gmra.mxu0 %v476
      %v490 = vpop.f32.mrf.mxu0
      %v491 = vadd.f32 0.0, %v490
      %v492 = vpop.f32.mrf.mxu0
      %v493 = vadd.f32 0.0, %v492
      %494 = vmatmul.bf16.gmra.mxu0 %v479
      %v495 = vpop.f32.mrf.mxu0
      %v496 = vadd.f32 0.0, %v495
      %v497 = vpop.f32.mrf.mxu0
      %v498 = vadd.f32 0.0, %v497
      %499 = vdwg.mxu0
      %v500 = vadd.f32 %v450, %v491
      %v501 = vadd.f32 %v451, %v493
      %v502 = vadd.f32 %v452, %v496
      %v503 = vadd.f32 %v453, %v498
      %s504 = scalar_lea.vmem %s220, 80
      %v505 = vld [vmem:[%s504] sm:$0xf]
      %v506 = vld [vmem:[%s504 + $0x4] sm:$0xf]
      %v507 = vld [vmem:[%s504 + $0x8] sm:$0xf]
      %v508 = vld [vmem:[%s504 + $0xc] sm:$0xf]
      %v513 = vunpack.c.l.b16 %v505
      %v514 = vunpack.c.l.b16 %v506
      %v515 = vunpack.c.l.b16 %v507
      %v516 = vunpack.c.l.b16 %v508
      %v517 = vpack.c.b16 %v514, %v513
      %v518 = vpack.c.b16 %v516, %v515
      %519 = vrot.lane.b32.xlu0 %v283, 120
      %v520 = vpop.permute.xlu0 %519
      %521 = vrot.lane.b32.xlu0 %v284, 120
      %v522 = vpop.permute.xlu0 %521
      %v526 = vsel %vm291, %v517, 0
      %v529 = vsel %vm291, %v518, 0
      %531 = vmatpush.bf16.msra.mxu0 0
      %532 = vmatpush.bf16.msra.mxu0 0
      %533 = vmatpush.bf16.msra.mxu0 0
      %534 = vmatpush.bf16.msra.mxu0 0
      %535 = vmatpush.bf16.msra.mxu0 0
      %536 = vmatpush.bf16.msra.mxu0 0
      %537 = vmatpush.bf16.msra.mxu0 %v522
      %538 = vmatpush.bf16.msra.mxu0 %v520
      %539 = vmatmul.bf16.gmra.mxu0 %v526
      %v540 = vpop.f32.mrf.mxu0
      %v541 = vadd.f32 0.0, %v540
      %v542 = vpop.f32.mrf.mxu0
      %v543 = vadd.f32 0.0, %v542
      %544 = vmatmul.bf16.gmra.mxu0 %v529
      %v545 = vpop.f32.mrf.mxu0
      %v546 = vadd.f32 0.0, %v545
      %v547 = vpop.f32.mrf.mxu0
      %v548 = vadd.f32 0.0, %v547
      %549 = vdwg.mxu0
      %v550 = vadd.f32 %v500, %v541
      %v551 = vadd.f32 %v501, %v543
      %v552 = vadd.f32 %v502, %v546
      %v553 = vadd.f32 %v503, %v548
      %s554 = scalar_lea.vmem %s220, 96
      %v555 = vld [vmem:[%s554] sm:$0xf]
      %v556 = vld [vmem:[%s554 + $0x4] sm:$0xf]
      %v557 = vld [vmem:[%s554 + $0x8] sm:$0xf]
      %v558 = vld [vmem:[%s554 + $0xc] sm:$0xf]
      %v563 = vunpack.c.l.b16 %v555
      %v564 = vunpack.c.l.b16 %v556
      %v565 = vunpack.c.l.b16 %v557
      %v566 = vunpack.c.l.b16 %v558
      %v567 = vpack.c.b16 %v564, %v563
      %v568 = vpack.c.b16 %v566, %v565
      %569 = vrot.lane.b32.xlu0 %v283, 116
      %v570 = vpop.permute.xlu0 %569
      %571 = vrot.lane.b32.xlu0 %v284, 116
      %v572 = vpop.permute.xlu0 %571
      %v576 = vsel %vm291, %v567, 0
      %v579 = vsel %vm291, %v568, 0
      %581 = vmatpush.bf16.msra.mxu0 0
      %582 = vmatpush.bf16.msra.mxu0 0
      %583 = vmatpush.bf16.msra.mxu0 0
      %584 = vmatpush.bf16.msra.mxu0 0
      %585 = vmatpush.bf16.msra.mxu0 0
      %586 = vmatpush.bf16.msra.mxu0 0
      %587 = vmatpush.bf16.msra.mxu0 %v572
      %588 = vmatpush.bf16.msra.mxu0 %v570
      %589 = vmatmul.bf16.gmra.mxu0 %v576
      %v590 = vpop.f32.mrf.mxu0
      %v591 = vadd.f32 0.0, %v590
      %v592 = vpop.f32.mrf.mxu0
      %v593 = vadd.f32 0.0, %v592
      %594 = vmatmul.bf16.gmra.mxu0 %v579
      %v595 = vpop.f32.mrf.mxu0
      %v596 = vadd.f32 0.0, %v595
      %v597 = vpop.f32.mrf.mxu0
      %v598 = vadd.f32 0.0, %v597
      %599 = vdwg.mxu0
      %v600 = vadd.f32 %v550, %v591
      %v601 = vadd.f32 %v551, %v593
      %v602 = vadd.f32 %v552, %v596
      %v603 = vadd.f32 %v553, %v598
      %s604 = scalar_lea.vmem %s220, 112
      %v605 = vld [vmem:[%s604] sm:$0xf]
      %v606 = vld [vmem:[%s604 + $0x4] sm:$0xf]
      %v607 = vld [vmem:[%s604 + $0x8] sm:$0xf]
      %v608 = vld [vmem:[%s604 + $0xc] sm:$0xf]
      %v613 = vunpack.c.l.b16 %v605
      %v614 = vunpack.c.l.b16 %v606
      %v615 = vunpack.c.l.b16 %v607
      %v616 = vunpack.c.l.b16 %v608
      %v617 = vpack.c.b16 %v614, %v613
      %v618 = vpack.c.b16 %v616, %v615
      %619 = vrot.lane.b32.xlu0 %v283, 115
      %v620 = vpop.permute.xlu0 %619
      %621 = vrot.lane.b32.xlu0 %v284, 115
      %v622 = vpop.permute.xlu0 %621
      %v626 = vsel %vm291, %v617, 0
      %v629 = vsel %vm291, %v618, 0
      %631 = vmatpush.bf16.msra.mxu0 0
      %632 = vmatpush.bf16.msra.mxu0 0
      %633 = vmatpush.bf16.msra.mxu0 0
      %634 = vmatpush.bf16.msra.mxu0 0
      %635 = vmatpush.bf16.msra.mxu0 0
      %636 = vmatpush.bf16.msra.mxu0 0
      %637 = vmatpush.bf16.msra.mxu0 %v622
      %638 = vmatpush.bf16.msra.mxu0 %v620
      %639 = vmatmul.bf16.gmra.mxu0 %v626
      %v640 = vpop.f32.mrf.mxu0
      %v641 = vadd.f32 0.0, %v640
      %v642 = vpop.f32.mrf.mxu0
      %v643 = vadd.f32 0.0, %v642
      %644 = vmatmul.bf16.gmra.mxu0 %v629
      %v645 = vpop.f32.mrf.mxu0
      %v646 = vadd.f32 0.0, %v645
      %v647 = vpop.f32.mrf.mxu0
      %v648 = vadd.f32 0.0, %v647
      %649 = vdwg.mxu0
      %v650 = vadd.f32 %v600, %v641
      %v651 = vadd.f32 %v601, %v643
      %v652 = vadd.f32 %v602, %v646
      %v653 = vadd.f32 %v603, %v648
      %s654 = scalar_lea.vmem %s220, 128
      %v655 = vld [vmem:[%s654] sm:$0xf]
      %v656 = vld [vmem:[%s654 + $0x4] sm:$0xf]
      %v657 = vld [vmem:[%s654 + $0x8] sm:$0xf]
      %v658 = vld [vmem:[%s654 + $0xc] sm:$0xf]
      %v663 = vunpack.c.l.b16 %v655
      %v664 = vunpack.c.l.b16 %v656
      %v665 = vunpack.c.l.b16 %v657
      %v666 = vunpack.c.l.b16 %v658
      %v667 = vpack.c.b16 %v664, %v663
      %v668 = vpack.c.b16 %v666, %v665
      %669 = vrot.lane.b32.xlu0 %v283, 114
      %v670 = vpop.permute.xlu0 %669
      %671 = vrot.lane.b32.xlu0 %v284, 114
      %v672 = vpop.permute.xlu0 %671
      %v676 = vsel %vm291, %v667, 0
      %v679 = vsel %vm291, %v668, 0
      %681 = vmatpush.bf16.msra.mxu0 0
      %682 = vmatpush.bf16.msra.mxu0 0
      %683 = vmatpush.bf16.msra.mxu0 0
      %684 = vmatpush.bf16.msra.mxu0 0
      %685 = vmatpush.bf16.msra.mxu0 0
      %686 = vmatpush.bf16.msra.mxu0 0
      %687 = vmatpush.bf16.msra.mxu0 %v672
      %688 = vmatpush.bf16.msra.mxu0 %v670
      %689 = vmatmul.bf16.gmra.mxu0 %v676
      %v690 = vpop.f32.mrf.mxu0
      %v691 = vadd.f32 0.0, %v690
      %v692 = vpop.f32.mrf.mxu0
      %v693 = vadd.f32 0.0, %v692
      %694 = vmatmul.bf16.gmra.mxu0 %v679
      %v695 = vpop.f32.mrf.mxu0
      %v696 = vadd.f32 0.0, %v695
      %v697 = vpop.f32.mrf.mxu0
      %v698 = vadd.f32 0.0, %v697
      %699 = vdwg.mxu0
      %v700 = vadd.f32 %v650, %v691
      %v701 = vadd.f32 %v651, %v693
      %v702 = vadd.f32 %v652, %v696
      %v703 = vadd.f32 %v653, %v698
      %v704 = vld [vmem:[%s226] sm:$0xff]
      %v705 = vld [vmem:[%s226 + $0x8] sm:$0xff]
      %v706 = vld [vmem:[%s226 + $0x10] sm:$0xff]
      %v707 = vld [vmem:[%s226 + $0x18] sm:$0xff]
      %709 = vset.pattern.permute.xlu0 0
      %710 = vperm.xlu0 %709, %v704
      %v711 = vpop.permute.xlu0 %710
      %714 = vset.pattern.permute.xlu0 0
      %715 = vperm.xlu0 %714, %v705
      %v716 = vpop.permute.xlu0 %715
      %719 = vset.pattern.permute.xlu0 0
      %720 = vperm.xlu0 %719, %v706
      %v721 = vpop.permute.xlu0 %720
      %724 = vset.pattern.permute.xlu0 0
      %725 = vperm.xlu0 %724, %v707
      %v726 = vpop.permute.xlu0 %725
      %v728 = vadd.f32 %v700, %v711
      %v729 = vadd.f32 %v701, %v716
      %v730 = vadd.f32 %v702, %v721
      %v731 = vadd.f32 %v703, %v726
      %vm732 = vcmask 31744
      %733 = vst.msk [vmem:[%s236] sm:$0xff] %vm732, %v728
      %734 = vst.msk [vmem:[%s236 + $0x8] sm:$0xff] %vm732, %v729
      %735 = vst.msk [vmem:[%s236 + $0x10] sm:$0xff] %vm732, %v730
      %736 = vst.msk [vmem:[%s236 + $0x18] sm:$0xff] %vm732, %v731
      %741 = vrot.lane.b32.xlu0 %v728, 126
      %v742 = vpop.permute.xlu0 %741
      %743 = vrot.lane.b32.xlu0 %v729, 126
      %v744 = vpop.permute.xlu0 %743
      %745 = vrot.lane.b32.xlu0 %v730, 126
      %v746 = vpop.permute.xlu0 %745
      %747 = vrot.lane.b32.xlu0 %v731, 126
      %v748 = vpop.permute.xlu0 %747
      %vm753 = vcmask 64544
      %754 = vst.msk [vmem:[%s236] sm:$0xff] %vm753, %v742
      %755 = vst.msk [vmem:[%s236 + $0x8] sm:$0xff] %vm753, %v744
      %756 = vst.msk [vmem:[%s236 + $0x10] sm:$0xff] %vm753, %v746
      %757 = vst.msk [vmem:[%s236 + $0x18] sm:$0xff] %vm753, %v748
      %758 = vrot.lane.b32.xlu0 %v728, 124
      %v759 = vpop.permute.xlu0 %758
      %760 = vrot.lane.b32.xlu0 %v729, 124
      %v761 = vpop.permute.xlu0 %760
      %762 = vrot.lane.b32.xlu0 %v730, 124
      %v763 = vpop.permute.xlu0 %762
      %764 = vrot.lane.b32.xlu0 %v731, 124
      %v765 = vpop.permute.xlu0 %764
      %vm770 = vcmask 97344
      %771 = vst.msk [vmem:[%s236] sm:$0xff] %vm770, %v759
      %772 = vst.msk [vmem:[%s236 + $0x8] sm:$0xff] %vm770, %v761
      %773 = vst.msk [vmem:[%s236 + $0x10] sm:$0xff] %vm770, %v763
      %774 = vst.msk [vmem:[%s236 + $0x18] sm:$0xff] %vm770, %v765
      %775 = vrot.lane.b32.xlu0 %v728, 122
      %v776 = vpop.permute.xlu0 %775
      %777 = vrot.lane.b32.xlu0 %v729, 122
      %v778 = vpop.permute.xlu0 %777
      %779 = vrot.lane.b32.xlu0 %v730, 122
      %v780 = vpop.permute.xlu0 %779
      %781 = vrot.lane.b32.xlu0 %v731, 122
      %v782 = vpop.permute.xlu0 %781
      %vm787 = vcmask 130144
      %788 = vst.msk [vmem:[%s236] sm:$0xff] %vm787, %v776
      %789 = vst.msk [vmem:[%s236 + $0x8] sm:$0xff] %vm787, %v778
      %790 = vst.msk [vmem:[%s236 + $0x10] sm:$0xff] %vm787, %v780
      %791 = vst.msk [vmem:[%s236 + $0x18] sm:$0xff] %vm787, %v782
      %s792 = smul.u32 4, %s19
      %p793 = scmp.lt.s32.totalorder %s18, 1
      %s794 = scalar_select %p793, %s18, 1
      %p795 = scmp.lt.s32.totalorder %s792, 3
      %s796 = scalar_select %p795, %s792, 3
      %s797 = smul.addr %s794, 4
      %s798 = sadd.s32 %s796, %s797
      %s799 = smul.addr %s798, 8
      %s800 = scalar_lea.vmem %s3, %s799
      // Predicated region
      $region33: #{vgg_backbone_forward.15} parent=31 // pred_check
        %p801 = pneg %p124
      $region34: #{vgg_backbone_forward.15} parent=31 // pred_check_branch
        %803 = sbr.rel (%p801) target = $region36
      $region35: #{vgg_backbone_forward.15} parent=31 // pred_region
        %s804 = smul.u32 4, %s19
      $region36: #{vgg_backbone_forward.15} parent=31 // pred_fallthru
        _
    $region32: #{vgg_backbone_forward.15} parent=5 // pred_fallthru
      _
    %p805 = scmp.le.s32.totalorder 2, %s9
    // Predicated region
    $region37: #{vgg_backbone_forward.15} parent=5 // pred_check
      %p806 = pneg %p805
    $region38: #{vgg_backbone_forward.15} parent=5 // pred_check_branch
      %808 = sbr.rel (%p806) target = $region40
    $region39: #{vgg_backbone_forward.15} parent=5 // pred_region
      %s809 = ssub.s32 %s9, 2
      // Predicated region
      $region41: #{vgg_backbone_forward.15} parent=39 // pred_check
        %p810 = pneg %p130
      $region42: #{vgg_backbone_forward.15} parent=39 // pred_check_branch
        %812 = sbr.rel (%p810) target = $region44
      $region43: #{vgg_backbone_forward.15} parent=39 // pred_region
        %s813 = smul.u32 4, %s21
        %p814 = scmp.lt.s32.totalorder %s20, 1
        %s815 = scalar_select %p814, %s20, 1
        %p816 = scmp.lt.s32.totalorder %s813, 3
        %s817 = scalar_select %p816, %s813, 3
        %s818 = smul.addr %s815, 4
        %s819 = sadd.s32 %s817, %s818
        %s820 = smul.addr %s819, 8
        %s821 = scalar_lea.vmem %s3, %s820
      $region44: #{vgg_backbone_forward.15} parent=39 // pred_fallthru
        _
    $region40: #{vgg_backbone_forward.15} parent=5 // pred_fallthru
      _
  $region6: #{vgg_backbone_forward.15} parent=0 // loop_footer
    %s13 = sadd.s32 1, %s9
  $region7: #{vgg_backbone_forward.15} parent=0 // loop_footer_branch
    %8 = sbr.rel target = $region3
  $region8: #{vgg_backbone_forward.15} parent=0 // loop_exit
    _

// kernel: vgg_backbone_forward.17
$region0: #{vgg_backbone_forward.17}
  #allocation0 [shape = 'u32[]', space=smem, size = 0x4, offset = 0x4, fixed_abs, tag = 'smem constant byte address 0x4 - core index']
  #allocation1 [shape = 'u32[72,128]{1,0:T(1,128)}', space=vmem, size = 0x9000, scoped, tag = 'internal scratch']
  #allocation2 [shape = 'bf16[32,9]{1,0:T(8,128)(2,1)}', space=vmem, size = 0x2000, scoped, tag = 'scratch operand']
  %s0 = inlined_call_operand.vmem [shape: f32[2,32,9], index: 0, kind: input, shape index: {}]
  %s1 = inlined_call_operand.vmem [shape: bf16[4,32,32], index: 1, kind: input, shape index: {}]
  %s2 = inlined_call_operand.vmem [shape: f32[32,1], index: 2, kind: input, shape index: {}]
  %s3 = inlined_call_operand.vmem [shape: f32[2,32,3], index: 3, kind: output, shape index: {}]
  %s4 = sld [smem:[#allocation0]]
  $region45: #{vgg_backbone_forward.17} parent=0
    _
  %s6 = ssub.s32 1, %s4
  %s7 = scalar_select 0, %s6, %s4
  loop: start=0, step=1, limit=4
  $region2: #{vgg_backbone_forward.17} parent=0 // loop_pre_header
    _
  $region3: #{vgg_backbone_forward.17} parent=0 // loop_header
    %s9 = sphi 0, %s13
    %p10 = scmp.ge.s32.totalorder %s9, 4
    %s16 = sphi 0, %s28
    %s17 = sphi 0, %s24
    %s18 = sphi 0, %s16
    %s19 = sphi 0, %s17
    %s20 = sphi 0, %s18
    %s21 = sphi 0, %s19
    %s31 = sphi 0, %s33
    %s34 = sphi 0, %s31
    %s35 = sphi 0, %s34
    %s51 = sphi 0, %s35
    %s57 = sphi 0, %s59
    %s60 = sphi 0, %s57
    %s61 = sphi 0, %s60
    %s77 = sphi 0, %s61
    %s83 = sphi 0, %s85
    %s86 = sphi 0, %s83
    %s87 = sphi 0, %s86
    %s103 = sphi 0, %s87
    %s111 = sphi 0, %s113
    %s114 = sphi 0, %s111
    %s115 = sphi 0, %s114
    %s131 = sphi 0, %s115
  $region4: #{vgg_backbone_forward.17} parent=0 // loop_header_branch
    %12 = sbr.rel (%p10) target = $region8
  $region5: #{vgg_backbone_forward.17} parent=0 // loop_body
    %s14 = ssub.s32 %s9, 1
    %s15 = ssub.s32 %s9, 2
    %s22 = sadd.s32 1, %s17
    %p23 = scmp.ge.s32.totalorder %s22, 1
    %s24 = scalar_select %p23, 0, %s22
    %s25 = sadd.s32 1, %s16
    %s26 = scalar_select %p23, %s25, %s16
    %p27 = scmp.ge.s32.totalorder %s26, 2
    %s28 = scalar_select %p27, 0, %s26
    %s29 = ssub.s32 %s16, %s28
    %p30 = scmp.eq.s32.totalorder %s29, 0
    %s32 = sadd.s32 %s31, 1
    %s33 = scalar_select %p30, %s31, %s32
    %p36 = pneg %p30
    %p37 = scmp.eq.s32.totalorder %s9, 1
    %p38 = por %p36, %p37
    %p39 = scmp.ne.s32.totalorder %s31, %s34
    %p40 = scmp.eq.s32.totalorder %s9, 0
    %p41 = por %p39, %p40
    %p42 = scmp.ne.s32.totalorder %s31, %s34
    %p43 = scmp.eq.s32.totalorder %s14, 1
    %p44 = por %p42, %p43
    %p45 = scmp.ne.s32.totalorder %s34, %s35
    %p46 = scmp.eq.s32.totalorder %s14, 0
    %p47 = por %p45, %p46
    %p48 = scmp.ne.s32.totalorder %s34, %s35
    %p49 = scmp.eq.s32.totalorder %s15, 1
    %p50 = por %p48, %p49
    %p52 = scmp.ne.s32.totalorder %s35, %s51
    %p53 = scmp.eq.s32.totalorder %s15, 0
    %p54 = por %p52, %p53
    %s55 = ssub.s32 %s17, %s24
    %p56 = scmp.eq.s32.totalorder %s55, 0
    %s58 = sadd.s32 %s57, 1
    %s59 = scalar_select %p56, %s57, %s58
    %p62 = pneg %p56
    %p63 = scmp.eq.s32.totalorder %s9, 1
    %p64 = por %p62, %p63
    %p65 = scmp.ne.s32.totalorder %s57, %s60
    %p66 = scmp.eq.s32.totalorder %s9, 0
    %p67 = por %p65, %p66
    %p68 = scmp.ne.s32.totalorder %s57, %s60
    %p69 = scmp.eq.s32.totalorder %s14, 1
    %p70 = por %p68, %p69
    %p71 = scmp.ne.s32.totalorder %s60, %s61
    %p72 = scmp.eq.s32.totalorder %s14, 0
    %p73 = por %p71, %p72
    %p74 = scmp.ne.s32.totalorder %s60, %s61
    %p75 = scmp.eq.s32.totalorder %s15, 1
    %p76 = por %p74, %p75
    %p78 = scmp.ne.s32.totalorder %s61, %s77
    %p79 = scmp.eq.s32.totalorder %s15, 0
    %p80 = por %p78, %p79
    %s81 = ssub.s32 %s17, %s24
    %p82 = scmp.eq.s32.totalorder %s81, 0
    %s84 = sadd.s32 %s83, 1
    %s85 = scalar_select %p82, %s83, %s84
    %p88 = pneg %p82
    %p89 = scmp.eq.s32.totalorder %s9, 1
    %p90 = por %p88, %p89
    %p91 = scmp.ne.s32.totalorder %s83, %s86
    %p92 = scmp.eq.s32.totalorder %s9, 0
    %p93 = por %p91, %p92
    %p94 = scmp.ne.s32.totalorder %s83, %s86
    %p95 = scmp.eq.s32.totalorder %s14, 1
    %p96 = por %p94, %p95
    %p97 = scmp.ne.s32.totalorder %s86, %s87
    %p98 = scmp.eq.s32.totalorder %s14, 0
    %p99 = por %p97, %p98
    %p100 = scmp.ne.s32.totalorder %s86, %s87
    %p101 = scmp.eq.s32.totalorder %s15, 1
    %p102 = por %p100, %p101
    %p104 = scmp.ne.s32.totalorder %s87, %s103
    %p105 = scmp.eq.s32.totalorder %s15, 0
    %p106 = por %p104, %p105
    %s107 = ssub.s32 %s16, %s28
    %s108 = ssub.s32 %s17, %s24
    %s109 = sor.u32 %s107, %s108
    %p110 = scmp.eq.s32.totalorder %s109, 0
    %s112 = sadd.s32 %s111, 1
    %s113 = scalar_select %p110, %s111, %s112
    %p116 = pneg %p110
    %p117 = scmp.eq.s32.totalorder %s9, 1
    %p118 = por %p116, %p117
    %p119 = scmp.ne.s32.totalorder %s111, %s114
    %p120 = scmp.eq.s32.totalorder %s9, 0
    %p121 = por %p119, %p120
    %p122 = scmp.ne.s32.totalorder %s111, %s114
    %p123 = scmp.eq.s32.totalorder %s14, 1
    %p124 = por %p122, %p123
    %p125 = scmp.ne.s32.totalorder %s114, %s115
    %p126 = scmp.eq.s32.totalorder %s14, 0
    %p127 = por %p125, %p126
    %p128 = scmp.ne.s32.totalorder %s114, %s115
    %p129 = scmp.eq.s32.totalorder %s15, 1
    %p130 = por %p128, %p129
    %p132 = scmp.ne.s32.totalorder %s115, %s131
    %p133 = scmp.eq.s32.totalorder %s15, 0
    %p134 = por %p132, %p133
    %p135 = scmp.le.s32.totalorder 1, %s9
    %p136 = scmp.lt.s32.totalorder %s9, 3
    %p137 = pnand %p135, %p136
    %p138 = pneg %p137
    // Predicated region
    $region9: #{vgg_backbone_forward.17} parent=5 // pred_check
      _
    $region10: #{vgg_backbone_forward.17} parent=5 // pred_check_branch
      %140 = sbr.rel (%p137) target = $region12
    $region11: #{vgg_backbone_forward.17} parent=5 // pred_region
      %s141 = ssub.s32 %s9, 1
      // Predicated region
      $region13: #{vgg_backbone_forward.17} parent=11 // pred_check
        %p142 = pneg %p73
      $region14: #{vgg_backbone_forward.17} parent=11 // pred_check_branch
        %144 = sbr.rel (%p142) target = $region16
      $region15: #{vgg_backbone_forward.17} parent=11 // pred_region
        %s145 = smul.u32 4, %s19
        %p146 = scmp.lt.s32.totalorder %s145, 3
        %s147 = scalar_select %p146, %s145, 3
        %s148 = smul.addr %s147, 4
        %s149 = scalar_lea.vmem %s1, %s148
        %s150 = smul.u32 4, %s19
      $region16: #{vgg_backbone_forward.17} parent=11 // pred_fallthru
        _
      // Predicated region
      $region17: #{vgg_backbone_forward.17} parent=11 // pred_check
        %p151 = pneg %p99
      $region18: #{vgg_backbone_forward.17} parent=11 // pred_check_branch
        %153 = sbr.rel (%p151) target = $region20
      $region19: #{vgg_backbone_forward.17} parent=11 // pred_region
        %s154 = smul.u32 4, %s19
        %p155 = scmp.lt.s32.totalorder %s154, 3
        %s156 = scalar_select %p155, %s154, 3
        %s157 = smul.addr %s156, 8
        %s158 = scalar_lea.vmem %s2, %s157
        %s159 = smul.u32 4, %s19
      $region20: #{vgg_backbone_forward.17} parent=11 // pred_fallthru
        _
    $region12: #{vgg_backbone_forward.17} parent=5 // pred_fallthru
      _
    %p160 = scmp.lt.s32.totalorder %s9, 2
    // Predicated region
    $region21: #{vgg_backbone_forward.17} parent=5 // pred_check
      %p161 = pneg %p160
    $region22: #{vgg_backbone_forward.17} parent=5 // pred_check_branch
      %163 = sbr.rel (%p161) target = $region24
    $region23: #{vgg_backbone_forward.17} parent=5 // pred_region
      // Predicated region
      $region25: #{vgg_backbone_forward.17} parent=23 // pred_check
        %p164 = pneg %p41
      $region26: #{vgg_backbone_forward.17} parent=23 // pred_check_branch
        %166 = sbr.rel (%p164) target = $region28
      $region27: #{vgg_backbone_forward.17} parent=23 // pred_region
        %p167 = scmp.lt.s32.totalorder %s16, 1
        %s168 = scalar_select %p167, %s16, 1
        %s169 = smul.addr %s168, 4
        %s170 = smul.addr %s169, 8
        %s171 = scalar_lea.vmem %s0, %s170
      $region28: #{vgg_backbone_forward.17} parent=23 // pred_fallthru
        _
    $region24: #{vgg_backbone_forward.17} parent=5 // pred_fallthru
      _
    %p172 = scmp.le.s32.totalorder 1, %s9
    %p173 = scmp.lt.s32.totalorder %s9, 3
    %p174 = pnand %p172, %p173
    %p175 = pneg %p174
    // Predicated region
    $region29: #{vgg_backbone_forward.17} parent=5 // pred_check
      _
    $region30: #{vgg_backbone_forward.17} parent=5 // pred_check_branch
      %177 = sbr.rel (%p174) target = $region32
    $region31: #{vgg_backbone_forward.17} parent=5 // pred_region
      %s178 = ssub.s32 %s9, 1
      %p179 = scmp.lt.s32.totalorder %s18, 1
      %s180 = scalar_select %p179, %s18, 1
      %s181 = smul.addr %s180, 4
      %s182 = smul.addr %s181, 8
      %s183 = scalar_lea.vmem %s0, %s182
      %p184 = pneg %p47
      %p185 = pneg %p44
      %s186 = smul.u32 4, %s19
      %p187 = scmp.lt.s32.totalorder %s186, 3
      %s188 = scalar_select %p187, %s186, 3
      %s189 = smul.addr %s188, 4
      %s190 = scalar_lea.vmem %s1, %s189
      %p191 = pneg %p73
      %p192 = pneg %p70
      %s193 = smul.u32 4, %s19
      %p194 = scmp.lt.s32.totalorder %s193, 3
      %s195 = scalar_select %p194, %s193, 3
      %s196 = smul.addr %s195, 8
      %s197 = scalar_lea.vmem %s2, %s196
      %p198 = pneg %p99
      %p199 = pneg %p96
      %p200 = pneg %p127
      %p201 = pneg %p124
      %s202 = smul.u32 4, %s19
      %p203 = scmp.lt.s32.totalorder %s18, 1
      %s204 = scalar_select %p203, %s18, 1
      %p205 = scmp.lt.s32.totalorder %s202, 3
      %s206 = scalar_select %p205, %s202, 3
      %s207 = smul.addr %s204, 4
      %s208 = sadd.s32 %s206, %s207
      %s209 = smul.addr %s208, 8
      %s210 = scalar_lea.vmem %s3, %s209
      %p211 = scmp.lt.s32.totalorder %s18, 1
      %s212 = scalar_select %p211, %s18, 1
      %s213 = smul.addr %s212, 4
      %s214 = smul.addr %s213, 8
      %s215 = scalar_lea.vmem %s0, %s214
      %s216 = smul.u32 4, %s19
      %p217 = scmp.lt.s32.totalorder %s216, 3
      %s218 = scalar_select %p217, %s216, 3
      %s219 = smul.addr %s218, 4
      %s220 = scalar_lea.vmem %s1, %s219
      %s221 = smul.u32 4, %s19
      %s222 = smul.u32 4, %s19
      %p223 = scmp.lt.s32.totalorder %s222, 3
      %s224 = scalar_select %p223, %s222, 3
      %s225 = smul.addr %s224, 8
      %s226 = scalar_lea.vmem %s2, %s225
      %s227 = smul.u32 4, %s19
      %s228 = smul.u32 4, %s19
      %p229 = scmp.lt.s32.totalorder %s18, 1
      %s230 = scalar_select %p229, %s18, 1
      %p231 = scmp.lt.s32.totalorder %s228, 3
      %s232 = scalar_select %p231, %s228, 3
      %s233 = smul.addr %s230, 4
      %s234 = sadd.s32 %s232, %s233
      %s235 = smul.addr %s234, 8
      %s236 = scalar_lea.vmem %s3, %s235
      %s237 = smul.u32 4, %s19
      %v239 = vld [vmem:[%s215] sm:$0xff]
      %v240 = vld [vmem:[%s215 + $0x8] sm:$0xff]
      %v241 = vld [vmem:[%s215 + $0x10] sm:$0xff]
      %v242 = vld [vmem:[%s215 + $0x18] sm:$0xff]
      %v243 = vpack.c.bf16 %v239, %v239
      %v244 = vpack.c.bf16 %v240, %v240
      %v245 = vpack.c.bf16 %v241, %v241
      %v246 = vpack.c.bf16 %v242, %v242
      %vm247 = vcmask 68608
      %248 = vst.msk [vmem:[#allocation2] sm:$0xf] %vm247, %v243
      %249 = vst.msk [vmem:[#allocation2 + $0x4] sm:$0xf] %vm247, %v244
      %250 = vst.msk [vmem:[#allocation2 + $0x8] sm:$0xf] %vm247, %v245
      %251 = vst.msk [vmem:[#allocation2 + $0xc] sm:$0xf] %vm247, %v246
      %v252 = vld [vmem:[#allocation2] sm:$0xf]
      %v253 = vld [vmem:[#allocation2 + $0x4] sm:$0xf]
      %v254 = vld [vmem:[#allocation2 + $0x8] sm:$0xf]
      %v255 = vld [vmem:[#allocation2 + $0xc] sm:$0xf]
      %v256 = vld [vmem:[%s220] sm:$0xf]
      %v257 = vld [vmem:[%s220 + $0x4] sm:$0xf]
      %v258 = vld [vmem:[%s220 + $0x8] sm:$0xf]
      %v259 = vld [vmem:[%s220 + $0xc] sm:$0xf]
      %s260 = scalar_lea.vmem %s220, 16
      %v261 = vld [vmem:[%s260] sm:$0xf]
      %v262 = vld [vmem:[%s260 + $0x4] sm:$0xf]
      %v263 = vld [vmem:[%s260 + $0x8] sm:$0xf]
      %v264 = vld [vmem:[%s260 + $0xc] sm:$0xf]
      %v269 = vunpack.c.l.b16 %v261
      %v270 = vunpack.c.l.b16 %v262
      %v271 = vunpack.c.l.b16 %v263
      %v272 = vunpack.c.l.b16 %v264
      %v273 = vpack.c.b16 %v270, %v269
      %v274 = vpack.c.b16 %v272, %v271
      %v279 = vunpack.c.l.b16 %v252
      %v280 = vunpack.c.l.b16 %v253
      %v281 = vunpack.c.l.b16 %v254
      %v282 = vunpack.c.l.b16 %v255
      %v283 = vpack.c.b16 %v280, %v279
      %v284 = vpack.c.b16 %v282, %v281
      %285 = vrot.lane.b32.xlu0 %v283, 127
      %v286 = vpop.permute.xlu0 %285
      %287 = vrot.lane.b32.xlu0 %v284, 127
      %v288 = vpop.permute.xlu0 %287
      %vm291 = vcmask 261120
      %v293 = vsel %vm291, %v273, 0
      %v296 = vsel %vm291, %v274, 0
      %298 = vmatpush.bf16.msra.mxu0 0
      %299 = vmatpush.bf16.msra.mxu0 0
      %300 = vmatpush.bf16.msra.mxu0 0
      %301 = vmatpush.bf16.msra.mxu0 0
      %302 = vmatpush.bf16.msra.mxu0 0
      %303 = vmatpush.bf16.msra.mxu0 0
      %304 = vmatpush.bf16.msra.mxu0 %v288
      %305 = vmatpush.bf16.msra.mxu0 %v286
      %306 = vmatmul.bf16.gmra.mxu0 %v293
      %v307 = vpop.f32.mrf.mxu0
      %v308 = vadd.f32 0.0, %v307
      %v309 = vpop.f32.mrf.mxu0
      %v310 = vadd.f32 0.0, %v309
      %311 = vmatmul.bf16.gmra.mxu0 %v296
      %v312 = vpop.f32.mrf.mxu0
      %v313 = vadd.f32 0.0, %v312
      %v314 = vpop.f32.mrf.mxu0
      %v315 = vadd.f32 0.0, %v314
      %316 = vdwg.mxu0
      %v321 = vunpack.c.l.b16 %v256
      %v322 = vunpack.c.l.b16 %v257
      %v323 = vunpack.c.l.b16 %v258
      %v324 = vunpack.c.l.b16 %v259
      %v325 = vpack.c.b16 %v322, %v321
      %v326 = vpack.c.b16 %v324, %v323
      %v330 = vsel %vm291, %v325, 0
      %v333 = vsel %vm291, %v326, 0
      %335 = vmatpush.bf16.msra.mxu0 0
      %336 = vmatpush.bf16.msra.mxu0 0
      %337 = vmatpush.bf16.msra.mxu0 0
      %338 = vmatpush.bf16.msra.mxu0 0
      %339 = vmatpush.bf16.msra.mxu0 0
      %340 = vmatpush.bf16.msra.mxu0 0
      %341 = vmatpush.bf16.msra.mxu0 %v284
      %342 = vmatpush.bf16.msra.mxu0 %v283
      %343 = vmatmul.bf16.gmra.mxu0 %v330
      %v344 = vpop.f32.mrf.mxu0
      %v345 = vadd.f32 %v308, %v344
      %v346 = vpop.f32.mrf.mxu0
      %v347 = vadd.f32 %v310, %v346
      %348 = vmatmul.bf16.gmra.mxu0 %v333
      %v349 = vpop.f32.mrf.mxu0
      %v350 = vadd.f32 %v313, %v349
      %v351 = vpop.f32.mrf.mxu0
      %v352 = vadd.f32 %v315, %v351
      %353 = vdwg.mxu0
      %s354 = scalar_lea.vmem %s220, 32
      %v355 = vld [vmem:[%s354] sm:$0xf]
      %v356 = vld [vmem:[%s354 + $0x4] sm:$0xf]
      %v357 = vld [vmem:[%s354 + $0x8] sm:$0xf]
      %v358 = vld [vmem:[%s354 + $0xc] sm:$0xf]
      %v363 = vunpack.c.l.b16 %v355
      %v364 = vunpack.c.l.b16 %v356
      %v365 = vunpack.c.l.b16 %v357
      %v366 = vunpack.c.l.b16 %v358
      %v367 = vpack.c.b16 %v364, %v363
      %v368 = vpack.c.b16 %v366, %v365
      %369 = vrot.lane.b32.xlu0 %v283, 124
      %v370 = vpop.permute.xlu0 %369
      %371 = vrot.lane.b32.xlu0 %v284, 124
      %v372 = vpop.permute.xlu0 %371
      %v376 = vsel %vm291, %v367, 0
      %v379 = vsel %vm291, %v368, 0
      %381 = vmatpush.bf16.msra.mxu0 0
      %382 = vmatpush.bf16.msra.mxu0 0
      %383 = vmatpush.bf16.msra.mxu0 0
      %384 = vmatpush.bf16.msra.mxu0 0
      %385 = vmatpush.bf16.msra.mxu0 0
      %386 = vmatpush.bf16.msra.mxu0 0
      %387 = vmatpush.bf16.msra.mxu0 %v372
      %388 = vmatpush.bf16.msra.mxu0 %v370
      %389 = vmatmul.bf16.gmra.mxu0 %v376
      %v390 = vpop.f32.mrf.mxu0
      %v391 = vadd.f32 0.0, %v390
      %v392 = vpop.f32.mrf.mxu0
      %v393 = vadd.f32 0.0, %v392
      %394 = vmatmul.bf16.gmra.mxu0 %v379
      %v395 = vpop.f32.mrf.mxu0
      %v396 = vadd.f32 0.0, %v395
      %v397 = vpop.f32.mrf.mxu0
      %v398 = vadd.f32 0.0, %v397
      %399 = vdwg.mxu0
      %v400 = vadd.f32 %v345, %v391
      %v401 = vadd.f32 %v347, %v393
      %v402 = vadd.f32 %v350, %v396
      %v403 = vadd.f32 %v352, %v398
      %s404 = scalar_lea.vmem %s220, 48
      %v405 = vld [vmem:[%s404] sm:$0xf]
      %v406 = vld [vmem:[%s404 + $0x4] sm:$0xf]
      %v407 = vld [vmem:[%s404 + $0x8] sm:$0xf]
      %v408 = vld [vmem:[%s404 + $0xc] sm:$0xf]
      %v413 = vunpack.c.l.b16 %v405
      %v414 = vunpack.c.l.b16 %v406
      %v415 = vunpack.c.l.b16 %v407
      %v416 = vunpack.c.l.b16 %v408
      %v417 = vpack.c.b16 %v414, %v413
      %v418 = vpack.c.b16 %v416, %v415
      %419 = vrot.lane.b32.xlu0 %v283, 123
      %v420 = vpop.permute.xlu0 %419
      %421 = vrot.lane.b32.xlu0 %v284, 123
      %v422 = vpop.permute.xlu0 %421
      %v426 = vsel %vm291, %v417, 0
      %v429 = vsel %vm291, %v418, 0
      %431 = vmatpush.bf16.msra.mxu0 0
      %432 = vmatpush.bf16.msra.mxu0 0
      %433 = vmatpush.bf16.msra.mxu0 0
      %434 = vmatpush.bf16.msra.mxu0 0
      %435 = vmatpush.bf16.msra.mxu0 0
      %436 = vmatpush.bf16.msra.mxu0 0
      %437 = vmatpush.bf16.msra.mxu0 %v422
      %438 = vmatpush.bf16.msra.mxu0 %v420
      %439 = vmatmul.bf16.gmra.mxu0 %v426
      %v440 = vpop.f32.mrf.mxu0
      %v441 = vadd.f32 0.0, %v440
      %v442 = vpop.f32.mrf.mxu0
      %v443 = vadd.f32 0.0, %v442
      %444 = vmatmul.bf16.gmra.mxu0 %v429
      %v445 = vpop.f32.mrf.mxu0
      %v446 = vadd.f32 0.0, %v445
      %v447 = vpop.f32.mrf.mxu0
      %v448 = vadd.f32 0.0, %v447
      %449 = vdwg.mxu0
      %v450 = vadd.f32 %v400, %v441
      %v451 = vadd.f32 %v401, %v443
      %v452 = vadd.f32 %v402, %v446
      %v453 = vadd.f32 %v403, %v448
      %v454 = vld [vmem:[%s226] sm:$0xff]
      %v455 = vld [vmem:[%s226 + $0x8] sm:$0xff]
      %v456 = vld [vmem:[%s226 + $0x10] sm:$0xff]
      %v457 = vld [vmem:[%s226 + $0x18] sm:$0xff]
      %459 = vset.pattern.permute.xlu0 0
      %460 = vperm.xlu0 %459, %v454
      %v461 = vpop.permute.xlu0 %460
      %464 = vset.pattern.permute.xlu0 0
      %465 = vperm.xlu0 %464, %v455
      %v466 = vpop.permute.xlu0 %465
      %469 = vset.pattern.permute.xlu0 0
      %470 = vperm.xlu0 %469, %v456
      %v471 = vpop.permute.xlu0 %470
      %474 = vset.pattern.permute.xlu0 0
      %475 = vperm.xlu0 %474, %v457
      %v476 = vpop.permute.xlu0 %475
      %v478 = vadd.f32 %v450, %v461
      %v479 = vadd.f32 %v451, %v466
      %v480 = vadd.f32 %v452, %v471
      %v481 = vadd.f32 %v453, %v476
      %v482 = vmax.f32 %v478, 0.0
      %v483 = vmax.f32 %v479, 0.0
      %v484 = vmax.f32 %v480, 0.0
      %v485 = vmax.f32 %v481, 0.0
      %vm486 = vcmask 23552
      %487 = vst.msk [vmem:[%s236] sm:$0xff] %vm486, %v482
      %488 = vst.msk [vmem:[%s236 + $0x8] sm:$0xff] %vm486, %v483
      %489 = vst.msk [vmem:[%s236 + $0x10] sm:$0xff] %vm486, %v484
      %490 = vst.msk [vmem:[%s236 + $0x18] sm:$0xff] %vm486, %v485
      %s491 = smul.u32 4, %s19
      %p492 = scmp.lt.s32.totalorder %s18, 1
      %s493 = scalar_select %p492, %s18, 1
      %p494 = scmp.lt.s32.totalorder %s491, 3
      %s495 = scalar_select %p494, %s491, 3
      %s496 = smul.addr %s493, 4
      %s497 = sadd.s32 %s495, %s496
      %s498 = smul.addr %s497, 8
      %s499 = scalar_lea.vmem %s3, %s498
      // Predicated region
      $region33: #{vgg_backbone_forward.17} parent=31 // pred_check
        %p500 = pneg %p124
      $region34: #{vgg_backbone_forward.17} parent=31 // pred_check_branch
        %502 = sbr.rel (%p500) target = $region36
      $region35: #{vgg_backbone_forward.17} parent=31 // pred_region
        %s503 = smul.u32 4, %s19
      $region36: #{vgg_backbone_forward.17} parent=31 // pred_fallthru
        _
    $region32: #{vgg_backbone_forward.17} parent=5 // pred_fallthru
      _
    %p504 = scmp.le.s32.totalorder 2, %s9
    // Predicated region
    $region37: #{vgg_backbone_forward.17} parent=5 // pred_check
      %p505 = pneg %p504
    $region38: #{vgg_backbone_forward.17} parent=5 // pred_check_branch
      %507 = sbr.rel (%p505) target = $region40
    $region39: #{vgg_backbone_forward.17} parent=5 // pred_region
      %s508 = ssub.s32 %s9, 2
      // Predicated region
      $region41: #{vgg_backbone_forward.17} parent=39 // pred_check
        %p509 = pneg %p130
      $region42: #{vgg_backbone_forward.17} parent=39 // pred_check_branch
        %511 = sbr.rel (%p509) target = $region44
      $region43: #{vgg_backbone_forward.17} parent=39 // pred_region
        %s512 = smul.u32 4, %s21
        %p513 = scmp.lt.s32.totalorder %s20, 1
        %s514 = scalar_select %p513, %s20, 1
        %p515 = scmp.lt.s32.totalorder %s512, 3
        %s516 = scalar_select %p515, %s512, 3
        %s517 = smul.addr %s514, 4
        %s518 = sadd.s32 %s516, %s517
        %s519 = smul.addr %s518, 8
        %s520 = scalar_lea.vmem %s3, %s519
      $region44: #{vgg_backbone_forward.17} parent=39 // pred_fallthru
        _
    $region40: #{vgg_backbone_forward.17} parent=5 // pred_fallthru
      _
  $region6: #{vgg_backbone_forward.17} parent=0 // loop_footer
    %s13 = sadd.s32 1, %s9
  $region7: #{vgg_backbone_forward.17} parent=0 // loop_footer_branch
    %8 = sbr.rel target = $region3
  $region8: #{vgg_backbone_forward.17} parent=0 // loop_exit
    _

</llo_original>
